<compile_context>
chip_gen: v7x
topology: tpu7x:2x2x1
jax: 0.10.0
libtpu: 0.0.40
codegen_flags: <defaults>
</compile_context>

<pallas_src>
import numpy as np
import jax
import jax.numpy as jnp
from jax.experimental import pallas as pl
from jax.experimental.pallas import tpu as pltpu


# ----------------------------------------------------------------------------
# Geometry constants (CIFAR-10 LeNet: 3x32x32 input, 5x5 convs).
# ----------------------------------------------------------------------------
_K = 5                                     # conv kernel size
_IMG = 32                                  # input spatial side
_PAD = 2                                   # conv1 padding
_PIMG = _IMG + 2 * _PAD                    # 36: padded side
_PFLAT = _PIMG * _PIMG                     # 1296: flattened padded input
_C1_VALID = (_IMG - 1) * _PIMG + _IMG      # 1148: flat span covering all 32x32 outputs
_P1 = _IMG // 2                            # 16: pool1 side
_P1_FLAT = _P1 * _P1                       # 256
_C2_OUT = _P1 - _K + 1                     # 12: conv2 output side
_C2_VALID = (_C2_OUT - 1) * _P1 + _C2_OUT  # 188: flat span covering all 12x12 outputs
_P2 = _C2_OUT // 2                         # 6: pool2 side
_P2_FLAT = _P2 * _P2                       # 36
_FEAT = 16 * _P2_FLAT                      # 576: classifier input
_NCPAD = 128                               # lane-padded class dim for the output store
_B_TILE = 8                                # images per grid step (multiple of 8)


# ----------------------------------------------------------------------------
# Fused Pallas kernel: one tile of B_TILE images end to end.
# Layout: (batch, channel) on sublanes, flattened spatial on lanes.
# ----------------------------------------------------------------------------
def _lenet_fused_kernel(x_ref, w1_ref, b1_ref, w2_ref, b2_ref,
                        pool1_ref, pool2_ref,
                        wf1_ref, bf1_ref, wf2_ref, bf2_ref, wf3_ref, bf3_ref,
                        o_ref):
    f32, bf16 = jnp.float32, jnp.bfloat16
    B = o_ref.shape[0]                              # B_TILE
    X = x_ref[...]                                  # (B*3, 1296) f32, zero-padded images

    # ---- conv1 (5x5, pad 2) + tanh: one stacked-K matmul for the whole tile ----
    # stack1[t*B*3 + b*3 + ci, s] = X[b*3+ci, s + ki*36 + kj],  t = ki*5 + kj
    stack1 = jnp.concatenate(
        [X[:, (ki * _PIMG + kj):(ki * _PIMG + kj) + _C1_VALID]
         for ki in range(_K) for kj in range(_K)], axis=0)            # (25*B*3, 1148)
    pre1 = jnp.dot(w1_ref[...], stack1.astype(bf16),
                   preferred_element_type=f32) + b1_ref[...]          # (B*6, 1148) f32
    a1 = jnp.tanh(pre1)

    # ---- avgpool 2x2 as matmul with a constant 0 / 0.25 matrix ----
    p1 = jnp.dot(a1.astype(bf16), pool1_ref[...],
                 preferred_element_type=f32)                          # (B*6, 256) f32

    # ---- conv2 (5x5, valid) + tanh: stacked-K matmul ----
    stack2 = jnp.concatenate(
        [p1[:, (ki * _P1 + kj):(ki * _P1 + kj) + _C2_VALID]
         for ki in range(_K) for kj in range(_K)], axis=0)            # (25*B*6, 188)
    pre2 = jnp.dot(w2_ref[...], stack2.astype(bf16),
                   preferred_element_type=f32) + b2_ref[...]          # (B*16, 188) f32
    a2 = jnp.tanh(pre2)

    # ---- avgpool 2x2 ----
    p2 = jnp.dot(a2.astype(bf16), pool2_ref[...],
                 preferred_element_type=f32)                          # (B*16, 36) f32

    # ---- torch.flatten(x, 1) on NCHW: channel-major lane concat -> (B, 576) ----
    p2r = p2.reshape(B, 16, _P2_FLAT)
    feat = jnp.concatenate([p2r[:, c, :] for c in range(16)], axis=1).astype(bf16)

    # ---- classifier (batched over the tile) ----
    h = jnp.tanh(jnp.dot(feat, wf1_ref[...],
                         preferred_element_type=f32) + bf1_ref[...])
    h = jnp.tanh(jnp.dot(h.astype(bf16), wf2_ref[...],
                         preferred_element_type=f32) + bf2_ref[...])
    logits = jnp.dot(h.astype(bf16), wf3_ref[...],
                     preferred_element_type=f32) + bf3_ref[...]       # (B, 128) f32

    # Lane-dense (B_TILE, 128) unmasked store; wrapper slices cols :num_classes.
    o_ref[...] = logits.astype(o_ref.dtype)


# ----------------------------------------------------------------------------
# One-time parameter preparation (nothing is permuted/cast on the hot path).
# ----------------------------------------------------------------------------
def _avgpool_matrix(valid_span, row_stride, out_side):
    """(valid_span, out_side^2) matrix with 0.25 at the 4 taps of each 2x2 window."""
    m = np.zeros((valid_span, out_side * out_side), np.float32)
    for oh in range(out_side):
        for ow in range(out_side):
            for di in range(2):
                for dj in range(2):
                    m[(2 * oh + di) * row_stride + (2 * ow + dj),
                      oh * out_side + ow] = 0.25
    return m


def prepare_kernel_params(params, num_classes=10, b_tile=_B_TILE):
    """Convert torch-layout params into kernel-ready operands (call once)."""
    assert b_tile % 8 == 0, "b_tile must be a multiple of 8 (sublane alignment)"
    f32, bf16 = jnp.float32, jnp.bfloat16

    w1 = np.asarray(params["conv1_w"], np.float32).transpose(0, 2, 3, 1).reshape(6, 75)
    w2 = np.asarray(params["conv2_w"], np.float32).transpose(0, 2, 3, 1).reshape(16, 150)

    # Per-tap block-diagonal conv weights (batch on the diagonal):
    #   w1bd[b*6+co, t*(B*3) + b*3 + ci] = w1[co, t*3+ci]
    w1bd = np.zeros((b_tile * 6, 25 * b_tile * 3), np.float32)
    w2bd = np.zeros((b_tile * 16, 25 * b_tile * 6), np.float32)
    for b in range(b_tile):
        for t in range(25):
            w1bd[b * 6:(b + 1) * 6,
                 t * b_tile * 3 + b * 3: t * b_tile * 3 + (b + 1) * 3] = w1[:, t * 3:(t + 1) * 3]
            w2bd[b * 16:(b + 1) * 16,
                 t * b_tile * 6 + b * 6: t * b_tile * 6 + (b + 1) * 6] = w2[:, t * 6:(t + 1) * 6]

    b1 = np.tile(np.asarray(params["conv1_b"], np.float32), b_tile).reshape(b_tile * 6, 1)
    b2 = np.tile(np.asarray(params["conv2_b"], np.float32), b_tile).reshape(b_tile * 16, 1)

    wf3 = np.zeros((84, _NCPAD), np.float32)
    wf3[:, :num_classes] = np.asarray(params["fc3_w"], np.float32).T
    bf3 = np.zeros((1, _NCPAD), np.float32)
    bf3[0, :num_classes] = np.asarray(params["fc3_b"], np.float32)

    return {
        "w1bd": jnp.asarray(w1bd, bf16), "b1bd": jnp.asarray(b1, f32),
        "w2bd": jnp.asarray(w2bd, bf16), "b2bd": jnp.asarray(b2, f32),
        "pool1": jnp.asarray(_avgpool_matrix(_C1_VALID, _PIMG, _P1), bf16),  # (1148, 256)
        "pool2": jnp.asarray(_avgpool_matrix(_C2_VALID, _P1, _P2), bf16),    # (188, 36)
        "wf1": jnp.asarray(np.asarray(params["fc1_w"], np.float32).T, bf16),  # (576, 120)
        "bf1": jnp.asarray(np.asarray(params["fc1_b"], np.float32).reshape(1, -1), f32),
        "wf2": jnp.asarray(np.asarray(params["fc2_w"], np.float32).T, bf16),  # (120, 84)
        "bf2": jnp.asarray(np.asarray(params["fc2_b"], np.float32).reshape(1, -1), f32),
        "wf3": jnp.asarray(wf3, bf16), "bf3": jnp.asarray(bf3, f32),          # (84,128), (1,128)
    }


# ----------------------------------------------------------------------------
# Forward wrapper: one fused pallas_call, grid over batch tiles.
# ----------------------------------------------------------------------------
def lenet_forward(kparams, x_nchw, num_classes=10):
    B, C, H, W = x_nchw.shape
    assert (C, H, W) == (3, _IMG, _IMG), (C, H, W)
    bt = kparams["w1bd"].shape[0] // 6                                # B_TILE (static)
    num_tiles = pl.cdiv(B, bt)
    B_pad = num_tiles * bt

    # Pad batch to a tile multiple and spatially pad for conv1 (padding=2).
    # TODO(synk): this writes a padded copy to HBM; could be fused via input fusion.
    xp = jnp.pad(x_nchw.astype(jnp.float32),
                 ((0, B_pad - B), (0, 0), (_PAD, _PAD), (_PAD, _PAD)))  # (B_pad,3,36,36)
    xflat = xp.reshape(B_pad * 3, _PFLAT)                               # (B_pad*3, 1296)

    # Advisory cost estimate.
    flops_tile = 2 * ((bt * 6) * (25 * bt * 3) * _C1_VALID
                      + (bt * 6) * _C1_VALID * _P1_FLAT
                      + (bt * 16) * (25 * bt * 6) * _C2_VALID
                      + (bt * 16) * _C2_VALID * _P2_FLAT
                      + bt * (_FEAT * 120 + 120 * 84 + 84 * _NCPAD))
    trans_tile = (bt * 6) * _C1_VALID + (bt * 16) * _C2_VALID + bt * (120 + 84)
    weight_bytes = sum(int(np.prod(v.shape)) * v.dtype.itemsize for v in kparams.values())
    cost = pl.CostEstimate(
        flops=int(num_tiles * flops_tile),
        transcendentals=int(num_tiles * trans_tile),
        bytes_accessed=int(weight_bytes + B_pad * 4 * (3 * _PFLAT + _NCPAD)))

    def full_spec(a):
        return pl.BlockSpec(a.shape, lambda i, _n=a.ndim: (0,) * _n)

    out = pl.pallas_call(
        _lenet_fused_kernel,
        out_shape=jax.ShapeDtypeStruct((B_pad, _NCPAD), jnp.float32),
        grid=(num_tiles,),
        in_specs=[
            pl.BlockSpec((bt * 3, _PFLAT), lambda i: (i, 0)),   # padded image tile
            full_spec(kparams["w1bd"]), full_spec(kparams["b1bd"]),
            full_spec(kparams["w2bd"]), full_spec(kparams["b2bd"]),
            full_spec(kparams["pool1"]), full_spec(kparams["pool2"]),
            full_spec(kparams["wf1"]), full_spec(kparams["bf1"]),
            full_spec(kparams["wf2"]), full_spec(kparams["bf2"]),
            full_spec(kparams["wf3"]), full_spec(kparams["bf3"]),
        ],
        out_specs=pl.BlockSpec((bt, _NCPAD), lambda i: (i, 0)),
        compiler_params=pltpu.CompilerParams(dimension_semantics=("parallel",)),
        cost_estimate=cost,
    )(xflat, kparams["w1bd"], kparams["b1bd"], kparams["w2bd"], kparams["b2bd"],
      kparams["pool1"], kparams["pool2"],
      kparams["wf1"], kparams["bf1"], kparams["wf2"], kparams["bf2"],
      kparams["wf3"], kparams["bf3"])
    return out[:B, :num_classes]


# ----------------------------------------------------------------------------
# Parameters (torch-layout) + pure-JAX reference for validation.
# ----------------------------------------------------------------------------
def init_lenet_params(key, num_classes=10):
    keys = jax.random.split(key, 10)

    def init(k, shape, fan_in):
        bound = 1.0 / jnp.sqrt(jnp.float32(fan_in))
        return jax.random.uniform(k, shape, jnp.float32, -bound, bound)

    return {
        "conv1_w": init(keys[0], (6, 3, 5, 5), 3 * 25),
        "conv1_b": init(keys[1], (6,), 3 * 25),
        "conv2_w": init(keys[2], (16, 6, 5, 5), 6 * 25),
        "conv2_b": init(keys[3], (16,), 6 * 25),
        "fc1_w": init(keys[4], (120, 16 * 6 * 6), 16 * 6 * 6),
        "fc1_b": init(keys[5], (120,), 16 * 6 * 6),
        "fc2_w": init(keys[6], (84, 120), 120),
        "fc2_b": init(keys[7], (84,), 120),
        "fc3_w": init(keys[8], (num_classes, 84), 84),
        "fc3_b": init(keys[9], (num_classes,), 84),
    }


def lenet_reference(params, x):
    """Pure-JAX NCHW reference matching the PyTorch module."""
    hi = jax.lax.Precision.HIGHEST
    B = x.shape[0]
    y = jax.lax.conv_general_dilated(
        x.astype(jnp.float32), params["conv1_w"], (1, 1), ((2, 2), (2, 2)),
        dimension_numbers=("NCHW", "OIHW", "NCHW"), precision=hi)
    y = jnp.tanh(y + params["conv1_b"][None, :, None, None])
    y = y.reshape(B, 6, 16, 2, 16, 2).mean(axis=(3, 5))
    y = jax.lax.conv_general_dilated(
        y, params["conv2_w"], (1, 1), ((0, 0), (0, 0)),
        dimension_numbers=("NCHW", "OIHW", "NCHW"), precision=hi)
    y = jnp.tanh(y + params["conv2_b"][None, :, None, None])
    y = y.reshape(B, 16, 6, 2, 6, 2).mean(axis=(3, 5))
    y = y.reshape(B, 16 * 6 * 6)
    y = jnp.tanh(jnp.dot(y, params["fc1_w"].T, precision=hi) + params["fc1_b"])
    y = jnp.tanh(jnp.dot(y, params["fc2_w"].T, precision=hi) + params["fc2_b"])
    return jnp.dot(y, params["fc3_w"].T, precision=hi) + params["fc3_b"]


if __name__ == "__main__":
    key = jax.random.PRNGKey(0)
    pkey, xkey = jax.random.split(key)
    params = init_lenet_params(pkey, num_classes=10)
    kparams = prepare_kernel_params(params, num_classes=10, b_tile=_B_TILE)  # one-time

    # CIFAR-10-shaped input (the classifier requires 3x32x32). Batch of 10
    # exercises both batch padding (10 -> 16) and a multi-step (2-step) grid.
    x = jax.random.normal(xkey, (10, 3, 32, 32), jnp.float32)

    fwd = jax.jit(lenet_forward)
    out = jax.block_until_ready(fwd(kparams, x))
    assert out.shape == (10, 10), out.shape
    assert bool(jnp.all(jnp.isfinite(out)))

    ref = lenet_reference(params, x)
    max_diff = float(jnp.max(jnp.abs(out - ref)))
    assert bool(jnp.allclose(out, ref, atol=3e-2, rtol=3e-2)), f"max diff {max_diff}"

    print("KERNEL_OK")
</pallas_src>

<mosaic_0001>
module attributes {stable_mosaic.version = 11 : i64} {
  func.func @_lenet_fused_kernel(%arg0: i32, %arg1: memref<24x1296xf32, #tpu.memory_space<vmem>>, %arg2: memref<48x600xbf16, #tpu.memory_space<vmem>>, %arg3: memref<48x1xf32, #tpu.memory_space<vmem>>, %arg4: memref<128x1200xbf16, #tpu.memory_space<vmem>>, %arg5: memref<128x1xf32, #tpu.memory_space<vmem>>, %arg6: memref<1148x256xbf16, #tpu.memory_space<vmem>>, %arg7: memref<188x36xbf16, #tpu.memory_space<vmem>>, %arg8: memref<576x120xbf16, #tpu.memory_space<vmem>>, %arg9: memref<1x120xf32, #tpu.memory_space<vmem>>, %arg10: memref<120x84xbf16, #tpu.memory_space<vmem>>, %arg11: memref<1x84xf32, #tpu.memory_space<vmem>>, %arg12: memref<84x128xbf16, #tpu.memory_space<vmem>>, %arg13: memref<1x128xf32, #tpu.memory_space<vmem>>, %arg14: memref<8x128xf32, #tpu.memory_space<vmem>>) attributes {dimension_semantics = [#tpu.dimension_semantics<parallel>], iteration_bounds = array<i64: 2>, scalar_prefetch = 0 : i64, scratch_operands = 0 : i64, tpu.core_type = #tpu.core_type<tc>, window_params = [{transform_indices = @transform_0, window_bounds = array<i64: 24, 1296>}, {pipeline_mode = #tpu.pipeline_mode<synchronous>, transform_indices = @transform_1, window_bounds = array<i64: 48, 600>}, {pipeline_mode = #tpu.pipeline_mode<synchronous>, transform_indices = @transform_2, window_bounds = array<i64: 48, 1>}, {pipeline_mode = #tpu.pipeline_mode<synchronous>, transform_indices = @transform_3, window_bounds = array<i64: 128, 1200>}, {pipeline_mode = #tpu.pipeline_mode<synchronous>, transform_indices = @transform_4, window_bounds = array<i64: 128, 1>}, {pipeline_mode = #tpu.pipeline_mode<synchronous>, transform_indices = @transform_5, window_bounds = array<i64: 1148, 256>}, {pipeline_mode = #tpu.pipeline_mode<synchronous>, transform_indices = @transform_6, window_bounds = array<i64: 188, 36>}, {pipeline_mode = #tpu.pipeline_mode<synchronous>, transform_indices = @transform_7, window_bounds = array<i64: 576, 120>}, {pipeline_mode = #tpu.pipeline_mode<synchronous>, transform_indices = @transform_8, window_bounds = array<i64: 1, 120>}, {pipeline_mode = #tpu.pipeline_mode<synchronous>, transform_indices = @transform_9, window_bounds = array<i64: 120, 84>}, {pipeline_mode = #tpu.pipeline_mode<synchronous>, transform_indices = @transform_10, window_bounds = array<i64: 1, 84>}, {pipeline_mode = #tpu.pipeline_mode<synchronous>, transform_indices = @transform_11, window_bounds = array<i64: 84, 128>}, {pipeline_mode = #tpu.pipeline_mode<synchronous>, transform_indices = @transform_12, window_bounds = array<i64: 1, 128>}, {transform_indices = @transform_13, window_bounds = array<i64: 8, 128>}]} {
    %c0 = arith.constant 0 : index
    %c0_0 = arith.constant 0 : index
    %0 = vector.load %arg1[%c0, %c0_0] : memref<24x1296xf32, #tpu.memory_space<vmem>>, vector<24x1296xf32>
    %1 = vector.extract_strided_slice %0 {offsets = [0, 0], sizes = [24, 1148], strides = [1, 1]} : vector<24x1296xf32> to vector<24x1148xf32>
    %2 = vector.extract_strided_slice %0 {offsets = [0, 1], sizes = [24, 1148], strides = [1, 1]} : vector<24x1296xf32> to vector<24x1148xf32>
    %3 = vector.extract_strided_slice %0 {offsets = [0, 2], sizes = [24, 1148], strides = [1, 1]} : vector<24x1296xf32> to vector<24x1148xf32>
    %4 = vector.extract_strided_slice %0 {offsets = [0, 3], sizes = [24, 1148], strides = [1, 1]} : vector<24x1296xf32> to vector<24x1148xf32>
    %5 = vector.extract_strided_slice %0 {offsets = [0, 4], sizes = [24, 1148], strides = [1, 1]} : vector<24x1296xf32> to vector<24x1148xf32>
    %6 = vector.extract_strided_slice %0 {offsets = [0, 36], sizes = [24, 1148], strides = [1, 1]} : vector<24x1296xf32> to vector<24x1148xf32>
    %7 = vector.extract_strided_slice %0 {offsets = [0, 37], sizes = [24, 1148], strides = [1, 1]} : vector<24x1296xf32> to vector<24x1148xf32>
    %8 = vector.extract_strided_slice %0 {offsets = [0, 38], sizes = [24, 1148], strides = [1, 1]} : vector<24x1296xf32> to vector<24x1148xf32>
    %9 = vector.extract_strided_slice %0 {offsets = [0, 39], sizes = [24, 1148], strides = [1, 1]} : vector<24x1296xf32> to vector<24x1148xf32>
    %10 = vector.extract_strided_slice %0 {offsets = [0, 40], sizes = [24, 1148], strides = [1, 1]} : vector<24x1296xf32> to vector<24x1148xf32>
    %11 = vector.extract_strided_slice %0 {offsets = [0, 72], sizes = [24, 1148], strides = [1, 1]} : vector<24x1296xf32> to vector<24x1148xf32>
    %12 = vector.extract_strided_slice %0 {offsets = [0, 73], sizes = [24, 1148], strides = [1, 1]} : vector<24x1296xf32> to vector<24x1148xf32>
    %13 = vector.extract_strided_slice %0 {offsets = [0, 74], sizes = [24, 1148], strides = [1, 1]} : vector<24x1296xf32> to vector<24x1148xf32>
    %14 = vector.extract_strided_slice %0 {offsets = [0, 75], sizes = [24, 1148], strides = [1, 1]} : vector<24x1296xf32> to vector<24x1148xf32>
    %15 = vector.extract_strided_slice %0 {offsets = [0, 76], sizes = [24, 1148], strides = [1, 1]} : vector<24x1296xf32> to vector<24x1148xf32>
    %16 = vector.extract_strided_slice %0 {offsets = [0, 108], sizes = [24, 1148], strides = [1, 1]} : vector<24x1296xf32> to vector<24x1148xf32>
    %17 = vector.extract_strided_slice %0 {offsets = [0, 109], sizes = [24, 1148], strides = [1, 1]} : vector<24x1296xf32> to vector<24x1148xf32>
    %18 = vector.extract_strided_slice %0 {offsets = [0, 110], sizes = [24, 1148], strides = [1, 1]} : vector<24x1296xf32> to vector<24x1148xf32>
    %19 = vector.extract_strided_slice %0 {offsets = [0, 111], sizes = [24, 1148], strides = [1, 1]} : vector<24x1296xf32> to vector<24x1148xf32>
    %20 = vector.extract_strided_slice %0 {offsets = [0, 112], sizes = [24, 1148], strides = [1, 1]} : vector<24x1296xf32> to vector<24x1148xf32>
    %21 = vector.extract_strided_slice %0 {offsets = [0, 144], sizes = [24, 1148], strides = [1, 1]} : vector<24x1296xf32> to vector<24x1148xf32>
    %22 = vector.extract_strided_slice %0 {offsets = [0, 145], sizes = [24, 1148], strides = [1, 1]} : vector<24x1296xf32> to vector<24x1148xf32>
    %23 = vector.extract_strided_slice %0 {offsets = [0, 146], sizes = [24, 1148], strides = [1, 1]} : vector<24x1296xf32> to vector<24x1148xf32>
    %24 = vector.extract_strided_slice %0 {offsets = [0, 147], sizes = [24, 1148], strides = [1, 1]} : vector<24x1296xf32> to vector<24x1148xf32>
    %25 = vector.extract_strided_slice %0 {offsets = [0, 148], sizes = [24, 1148], strides = [1, 1]} : vector<24x1296xf32> to vector<24x1148xf32>
    %26 = tpu.concatenate %1, %2, %3, %4, %5, %6, %7, %8, %9, %10, %11, %12, %13, %14, %15, %16 in 0 : vector<24x1148xf32>, vector<24x1148xf32>, vector<24x1148xf32>, vector<24x1148xf32>, vector<24x1148xf32>, vector<24x1148xf32>, vector<24x1148xf32>, vector<24x1148xf32>, vector<24x1148xf32>, vector<24x1148xf32>, vector<24x1148xf32>, vector<24x1148xf32>, vector<24x1148xf32>, vector<24x1148xf32>, vector<24x1148xf32>, vector<24x1148xf32> -> vector<384x1148xf32>
    %27 = tpu.concatenate %17, %18, %19, %20, %21, %22, %23, %24, %25 in 0 : vector<24x1148xf32>, vector<24x1148xf32>, vector<24x1148xf32>, vector<24x1148xf32>, vector<24x1148xf32>, vector<24x1148xf32>, vector<24x1148xf32>, vector<24x1148xf32>, vector<24x1148xf32> -> vector<216x1148xf32>
    %28 = tpu.concatenate %26, %27 in 0 : vector<384x1148xf32>, vector<216x1148xf32> -> vector<600x1148xf32>
    %c0_1 = arith.constant 0 : index
    %c0_2 = arith.constant 0 : index
    %29 = vector.load %arg2[%c0_1, %c0_2] : memref<48x600xbf16, #tpu.memory_space<vmem>>, vector<48x600xbf16>
    %30 = arith.truncf %28 : vector<600x1148xf32> to vector<600x1148xbf16>
    %cst = arith.constant dense<0.000000e+00> : vector<48x1148xf32>
    %31 = tpu.matmul %29, %30, %cst {dimension_numbers = #tpu.dot_dimension_numbers<[1], [0], [0], [1], [0, 0, 1, 1], [], []>} : vector<48x600xbf16>, vector<600x1148xbf16>, vector<48x1148xf32> -> vector<48x1148xf32>
    %c0_3 = arith.constant 0 : index
    %c0_4 = arith.constant 0 : index
    %32 = vector.load %arg3[%c0_3, %c0_4] : memref<48x1xf32, #tpu.memory_space<vmem>>, vector<48x1xf32>
    %33 = vector.broadcast %32 : vector<48x1xf32> to vector<48x1148xf32>
    %34 = arith.addf %31, %33 : vector<48x1148xf32>
    %35 = math.tanh %34 : vector<48x1148xf32>
    %36 = arith.truncf %35 : vector<48x1148xf32> to vector<48x1148xbf16>
    %c0_5 = arith.constant 0 : index
    %c0_6 = arith.constant 0 : index
    %37 = vector.load %arg6[%c0_5, %c0_6] : memref<1148x256xbf16, #tpu.memory_space<vmem>>, vector<1148x256xbf16>
    %cst_7 = arith.constant dense<0.000000e+00> : vector<48x256xf32>
    %38 = tpu.matmul %36, %37, %cst_7 {dimension_numbers = #tpu.dot_dimension_numbers<[1], [0], [0], [1], [0, 0, 1, 1], [], []>} : vector<48x1148xbf16>, vector<1148x256xbf16>, vector<48x256xf32> -> vector<48x256xf32>
    %39 = vector.extract_strided_slice %38 {offsets = [0, 0], sizes = [48, 188], strides = [1, 1]} : vector<48x256xf32> to vector<48x188xf32>
    %40 = vector.extract_strided_slice %38 {offsets = [0, 1], sizes = [48, 188], strides = [1, 1]} : vector<48x256xf32> to vector<48x188xf32>
    %41 = vector.extract_strided_slice %38 {offsets = [0, 2], sizes = [48, 188], strides = [1, 1]} : vector<48x256xf32> to vector<48x188xf32>
    %42 = vector.extract_strided_slice %38 {offsets = [0, 3], sizes = [48, 188], strides = [1, 1]} : vector<48x256xf32> to vector<48x188xf32>
    %43 = vector.extract_strided_slice %38 {offsets = [0, 4], sizes = [48, 188], strides = [1, 1]} : vector<48x256xf32> to vector<48x188xf32>
    %44 = vector.extract_strided_slice %38 {offsets = [0, 16], sizes = [48, 188], strides = [1, 1]} : vector<48x256xf32> to vector<48x188xf32>
    %45 = vector.extract_strided_slice %38 {offsets = [0, 17], sizes = [48, 188], strides = [1, 1]} : vector<48x256xf32> to vector<48x188xf32>
    %46 = vector.extract_strided_slice %38 {offsets = [0, 18], sizes = [48, 188], strides = [1, 1]} : vector<48x256xf32> to vector<48x188xf32>
    %47 = vector.extract_strided_slice %38 {offsets = [0, 19], sizes = [48, 188], strides = [1, 1]} : vector<48x256xf32> to vector<48x188xf32>
    %48 = vector.extract_strided_slice %38 {offsets = [0, 20], sizes = [48, 188], strides = [1, 1]} : vector<48x256xf32> to vector<48x188xf32>
    %49 = vector.extract_strided_slice %38 {offsets = [0, 32], sizes = [48, 188], strides = [1, 1]} : vector<48x256xf32> to vector<48x188xf32>
    %50 = vector.extract_strided_slice %38 {offsets = [0, 33], sizes = [48, 188], strides = [1, 1]} : vector<48x256xf32> to vector<48x188xf32>
    %51 = vector.extract_strided_slice %38 {offsets = [0, 34], sizes = [48, 188], strides = [1, 1]} : vector<48x256xf32> to vector<48x188xf32>
    %52 = vector.extract_strided_slice %38 {offsets = [0, 35], sizes = [48, 188], strides = [1, 1]} : vector<48x256xf32> to vector<48x188xf32>
    %53 = vector.extract_strided_slice %38 {offsets = [0, 36], sizes = [48, 188], strides = [1, 1]} : vector<48x256xf32> to vector<48x188xf32>
    %54 = vector.extract_strided_slice %38 {offsets = [0, 48], sizes = [48, 188], strides = [1, 1]} : vector<48x256xf32> to vector<48x188xf32>
    %55 = vector.extract_strided_slice %38 {offsets = [0, 49], sizes = [48, 188], strides = [1, 1]} : vector<48x256xf32> to vector<48x188xf32>
    %56 = vector.extract_strided_slice %38 {offsets = [0, 50], sizes = [48, 188], strides = [1, 1]} : vector<48x256xf32> to vector<48x188xf32>
    %57 = vector.extract_strided_slice %38 {offsets = [0, 51], sizes = [48, 188], strides = [1, 1]} : vector<48x256xf32> to vector<48x188xf32>
    %58 = vector.extract_strided_slice %38 {offsets = [0, 52], sizes = [48, 188], strides = [1, 1]} : vector<48x256xf32> to vector<48x188xf32>
    %59 = vector.extract_strided_slice %38 {offsets = [0, 64], sizes = [48, 188], strides = [1, 1]} : vector<48x256xf32> to vector<48x188xf32>
    %60 = vector.extract_strided_slice %38 {offsets = [0, 65], sizes = [48, 188], strides = [1, 1]} : vector<48x256xf32> to vector<48x188xf32>
    %61 = vector.extract_strided_slice %38 {offsets = [0, 66], sizes = [48, 188], strides = [1, 1]} : vector<48x256xf32> to vector<48x188xf32>
    %62 = vector.extract_strided_slice %38 {offsets = [0, 67], sizes = [48, 188], strides = [1, 1]} : vector<48x256xf32> to vector<48x188xf32>
    %63 = vector.extract_strided_slice %38 {offsets = [0, 68], sizes = [48, 188], strides = [1, 1]} : vector<48x256xf32> to vector<48x188xf32>
    %64 = tpu.concatenate %39, %40, %41, %42, %43, %44, %45, %46, %47, %48, %49, %50, %51, %52, %53, %54 in 0 : vector<48x188xf32>, vector<48x188xf32>, vector<48x188xf32>, vector<48x188xf32>, vector<48x188xf32>, vector<48x188xf32>, vector<48x188xf32>, vector<48x188xf32>, vector<48x188xf32>, vector<48x188xf32>, vector<48x188xf32>, vector<48x188xf32>, vector<48x188xf32>, vector<48x188xf32>, vector<48x188xf32>, vector<48x188xf32> -> vector<768x188xf32>
    %65 = tpu.concatenate %55, %56, %57, %58, %59, %60, %61, %62, %63 in 0 : vector<48x188xf32>, vector<48x188xf32>, vector<48x188xf32>, vector<48x188xf32>, vector<48x188xf32>, vector<48x188xf32>, vector<48x188xf32>, vector<48x188xf32>, vector<48x188xf32> -> vector<432x188xf32>
    %66 = tpu.concatenate %64, %65 in 0 : vector<768x188xf32>, vector<432x188xf32> -> vector<1200x188xf32>
    %c0_8 = arith.constant 0 : index
    %c0_9 = arith.constant 0 : index
    %67 = vector.load %arg4[%c0_8, %c0_9] : memref<128x1200xbf16, #tpu.memory_space<vmem>>, vector<128x1200xbf16>
    %68 = arith.truncf %66 : vector<1200x188xf32> to vector<1200x188xbf16>
    %cst_10 = arith.constant dense<0.000000e+00> : vector<128x188xf32>
    %69 = tpu.matmul %67, %68, %cst_10 {dimension_numbers = #tpu.dot_dimension_numbers<[1], [0], [0], [1], [0, 0, 1, 1], [], []>} : vector<128x1200xbf16>, vector<1200x188xbf16>, vector<128x188xf32> -> vector<128x188xf32>
    %c0_11 = arith.constant 0 : index
    %c0_12 = arith.constant 0 : index
    %70 = vector.load %arg5[%c0_11, %c0_12] : memref<128x1xf32, #tpu.memory_space<vmem>>, vector<128x1xf32>
    %71 = vector.broadcast %70 : vector<128x1xf32> to vector<128x188xf32>
    %72 = arith.addf %69, %71 : vector<128x188xf32>
    %73 = math.tanh %72 : vector<128x188xf32>
    %74 = arith.truncf %73 : vector<128x188xf32> to vector<128x188xbf16>
    %c0_13 = arith.constant 0 : index
    %c0_14 = arith.constant 0 : index
    %75 = vector.load %arg7[%c0_13, %c0_14] : memref<188x36xbf16, #tpu.memory_space<vmem>>, vector<188x36xbf16>
    %cst_15 = arith.constant dense<0.000000e+00> : vector<128x36xf32>
    %76 = tpu.matmul %74, %75, %cst_15 {dimension_numbers = #tpu.dot_dimension_numbers<[1], [0], [0], [1], [0, 0, 1, 1], [], []>} : vector<128x188xbf16>, vector<188x36xbf16>, vector<128x36xf32> -> vector<128x36xf32>
    %77 = vector.shape_cast %76 : vector<128x36xf32> to vector<8x16x36xf32>
    %78 = vector.extract_strided_slice %77 {offsets = [0, 0, 0], sizes = [8, 1, 36], strides = [1, 1, 1]} : vector<8x16x36xf32> to vector<8x1x36xf32>
    %79 = vector.shape_cast %78 : vector<8x1x36xf32> to vector<8x36xf32>
    %80 = vector.extract_strided_slice %77 {offsets = [0, 1, 0], sizes = [8, 1, 36], strides = [1, 1, 1]} : vector<8x16x36xf32> to vector<8x1x36xf32>
    %81 = vector.shape_cast %80 : vector<8x1x36xf32> to vector<8x36xf32>
    %82 = vector.extract_strided_slice %77 {offsets = [0, 2, 0], sizes = [8, 1, 36], strides = [1, 1, 1]} : vector<8x16x36xf32> to vector<8x1x36xf32>
    %83 = vector.shape_cast %82 : vector<8x1x36xf32> to vector<8x36xf32>
    %84 = vector.extract_strided_slice %77 {offsets = [0, 3, 0], sizes = [8, 1, 36], strides = [1, 1, 1]} : vector<8x16x36xf32> to vector<8x1x36xf32>
    %85 = vector.shape_cast %84 : vector<8x1x36xf32> to vector<8x36xf32>
    %86 = vector.extract_strided_slice %77 {offsets = [0, 4, 0], sizes = [8, 1, 36], strides = [1, 1, 1]} : vector<8x16x36xf32> to vector<8x1x36xf32>
    %87 = vector.shape_cast %86 : vector<8x1x36xf32> to vector<8x36xf32>
    %88 = vector.extract_strided_slice %77 {offsets = [0, 5, 0], sizes = [8, 1, 36], strides = [1, 1, 1]} : vector<8x16x36xf32> to vector<8x1x36xf32>
    %89 = vector.shape_cast %88 : vector<8x1x36xf32> to vector<8x36xf32>
    %90 = vector.extract_strided_slice %77 {offsets = [0, 6, 0], sizes = [8, 1, 36], strides = [1, 1, 1]} : vector<8x16x36xf32> to vector<8x1x36xf32>
    %91 = vector.shape_cast %90 : vector<8x1x36xf32> to vector<8x36xf32>
    %92 = vector.extract_strided_slice %77 {offsets = [0, 7, 0], sizes = [8, 1, 36], strides = [1, 1, 1]} : vector<8x16x36xf32> to vector<8x1x36xf32>
    %93 = vector.shape_cast %92 : vector<8x1x36xf32> to vector<8x36xf32>
    %94 = vector.extract_strided_slice %77 {offsets = [0, 8, 0], sizes = [8, 1, 36], strides = [1, 1, 1]} : vector<8x16x36xf32> to vector<8x1x36xf32>
    %95 = vector.shape_cast %94 : vector<8x1x36xf32> to vector<8x36xf32>
    %96 = vector.extract_strided_slice %77 {offsets = [0, 9, 0], sizes = [8, 1, 36], strides = [1, 1, 1]} : vector<8x16x36xf32> to vector<8x1x36xf32>
    %97 = vector.shape_cast %96 : vector<8x1x36xf32> to vector<8x36xf32>
    %98 = vector.extract_strided_slice %77 {offsets = [0, 10, 0], sizes = [8, 1, 36], strides = [1, 1, 1]} : vector<8x16x36xf32> to vector<8x1x36xf32>
    %99 = vector.shape_cast %98 : vector<8x1x36xf32> to vector<8x36xf32>
    %100 = vector.extract_strided_slice %77 {offsets = [0, 11, 0], sizes = [8, 1, 36], strides = [1, 1, 1]} : vector<8x16x36xf32> to vector<8x1x36xf32>
    %101 = vector.shape_cast %100 : vector<8x1x36xf32> to vector<8x36xf32>
    %102 = vector.extract_strided_slice %77 {offsets = [0, 12, 0], sizes = [8, 1, 36], strides = [1, 1, 1]} : vector<8x16x36xf32> to vector<8x1x36xf32>
    %103 = vector.shape_cast %102 : vector<8x1x36xf32> to vector<8x36xf32>
    %104 = vector.extract_strided_slice %77 {offsets = [0, 13, 0], sizes = [8, 1, 36], strides = [1, 1, 1]} : vector<8x16x36xf32> to vector<8x1x36xf32>
    %105 = vector.shape_cast %104 : vector<8x1x36xf32> to vector<8x36xf32>
    %106 = vector.extract_strided_slice %77 {offsets = [0, 14, 0], sizes = [8, 1, 36], strides = [1, 1, 1]} : vector<8x16x36xf32> to vector<8x1x36xf32>
    %107 = vector.shape_cast %106 : vector<8x1x36xf32> to vector<8x36xf32>
    %108 = vector.extract_strided_slice %77 {offsets = [0, 15, 0], sizes = [8, 1, 36], strides = [1, 1, 1]} : vector<8x16x36xf32> to vector<8x1x36xf32>
    %109 = vector.shape_cast %108 : vector<8x1x36xf32> to vector<8x36xf32>
    %110 = tpu.concatenate %79, %81, %83, %85, %87, %89, %91, %93, %95, %97, %99, %101, %103, %105, %107, %109 in 1 : vector<8x36xf32>, vector<8x36xf32>, vector<8x36xf32>, vector<8x36xf32>, vector<8x36xf32>, vector<8x36xf32>, vector<8x36xf32>, vector<8x36xf32>, vector<8x36xf32>, vector<8x36xf32>, vector<8x36xf32>, vector<8x36xf32>, vector<8x36xf32>, vector<8x36xf32>, vector<8x36xf32>, vector<8x36xf32> -> vector<8x576xf32>
    %111 = arith.truncf %110 : vector<8x576xf32> to vector<8x576xbf16>
    %c0_16 = arith.constant 0 : index
    %c0_17 = arith.constant 0 : index
    %112 = vector.load %arg8[%c0_16, %c0_17] : memref<576x120xbf16, #tpu.memory_space<vmem>>, vector<576x120xbf16>
    %cst_18 = arith.constant dense<0.000000e+00> : vector<8x120xf32>
    %113 = tpu.matmul %111, %112, %cst_18 {dimension_numbers = #tpu.dot_dimension_numbers<[1], [0], [0], [1], [0, 0, 1, 1], [], []>} : vector<8x576xbf16>, vector<576x120xbf16>, vector<8x120xf32> -> vector<8x120xf32>
    %c0_19 = arith.constant 0 : index
    %c0_20 = arith.constant 0 : index
    %114 = vector.load %arg9[%c0_19, %c0_20] : memref<1x120xf32, #tpu.memory_space<vmem>>, vector<1x120xf32>
    %115 = vector.broadcast %114 : vector<1x120xf32> to vector<8x120xf32>
    %116 = arith.addf %113, %115 : vector<8x120xf32>
    %117 = math.tanh %116 : vector<8x120xf32>
    %118 = arith.truncf %117 : vector<8x120xf32> to vector<8x120xbf16>
    %c0_21 = arith.constant 0 : index
    %c0_22 = arith.constant 0 : index
    %119 = vector.load %arg10[%c0_21, %c0_22] : memref<120x84xbf16, #tpu.memory_space<vmem>>, vector<120x84xbf16>
    %cst_23 = arith.constant dense<0.000000e+00> : vector<8x84xf32>
    %120 = tpu.matmul %118, %119, %cst_23 {dimension_numbers = #tpu.dot_dimension_numbers<[1], [0], [0], [1], [0, 0, 1, 1], [], []>} : vector<8x120xbf16>, vector<120x84xbf16>, vector<8x84xf32> -> vector<8x84xf32>
    %c0_24 = arith.constant 0 : index
    %c0_25 = arith.constant 0 : index
    %121 = vector.load %arg11[%c0_24, %c0_25] : memref<1x84xf32, #tpu.memory_space<vmem>>, vector<1x84xf32>
    %122 = vector.broadcast %121 : vector<1x84xf32> to vector<8x84xf32>
    %123 = arith.addf %120, %122 : vector<8x84xf32>
    %124 = math.tanh %123 : vector<8x84xf32>
    %125 = arith.truncf %124 : vector<8x84xf32> to vector<8x84xbf16>
    %c0_26 = arith.constant 0 : index
    %c0_27 = arith.constant 0 : index
    %126 = vector.load %arg12[%c0_26, %c0_27] : memref<84x128xbf16, #tpu.memory_space<vmem>>, vector<84x128xbf16>
    %cst_28 = arith.constant dense<0.000000e+00> : vector<8x128xf32>
    %127 = tpu.matmul %125, %126, %cst_28 {dimension_numbers = #tpu.dot_dimension_numbers<[1], [0], [0], [1], [0, 0, 1, 1], [], []>} : vector<8x84xbf16>, vector<84x128xbf16>, vector<8x128xf32> -> vector<8x128xf32>
    %c0_29 = arith.constant 0 : index
    %c0_30 = arith.constant 0 : index
    %128 = vector.load %arg13[%c0_29, %c0_30] : memref<1x128xf32, #tpu.memory_space<vmem>>, vector<1x128xf32>
    %129 = vector.broadcast %128 : vector<1x128xf32> to vector<8x128xf32>
    %130 = arith.addf %127, %129 : vector<8x128xf32>
    %c0_31 = arith.constant 0 : index
    %c0_32 = arith.constant 0 : index
    %131 = vector.load %arg14[%c0_31, %c0_32] : memref<8x128xf32, #tpu.memory_space<vmem>>, vector<8x128xf32>
    tpu.vector_store %arg14[%c0_31, %c0_32], %130 {strides = array<i32>} : memref<8x128xf32, #tpu.memory_space<vmem>>, vector<8x128xf32>,
    return
  }
  func.func @transform_0(%arg0: i32) -> (i32, i32) {
    %c0_i32 = arith.constant 0 : i32
    %c0_i32_0 = arith.constant 0 : i32
    return %arg0, %c0_i32 : i32, i32
  }
  func.func @transform_1(%arg0: i32) -> (i32, i32) {
    %c0_i32 = arith.constant 0 : i32
    %c0_i32_0 = arith.constant 0 : i32
    %c0_i32_1 = arith.constant 0 : i32
    return %c0_i32, %c0_i32_0 : i32, i32
  }
  func.func @transform_2(%arg0: i32) -> (i32, i32) {
    %c0_i32 = arith.constant 0 : i32
    %c0_i32_0 = arith.constant 0 : i32
    %c0_i32_1 = arith.constant 0 : i32
    return %c0_i32, %c0_i32_0 : i32, i32
  }
  func.func @transform_3(%arg0: i32) -> (i32, i32) {
    %c0_i32 = arith.constant 0 : i32
    %c0_i32_0 = arith.constant 0 : i32
    %c0_i32_1 = arith.constant 0 : i32
    return %c0_i32, %c0_i32_0 : i32, i32
  }
  func.func @transform_4(%arg0: i32) -> (i32, i32) {
    %c0_i32 = arith.constant 0 : i32
    %c0_i32_0 = arith.constant 0 : i32
    %c0_i32_1 = arith.constant 0 : i32
    return %c0_i32, %c0_i32_0 : i32, i32
  }
  func.func @transform_5(%arg0: i32) -> (i32, i32) {
    %c0_i32 = arith.constant 0 : i32
    %c0_i32_0 = arith.constant 0 : i32
    %c0_i32_1 = arith.constant 0 : i32
    return %c0_i32, %c0_i32_0 : i32, i32
  }
  func.func @transform_6(%arg0: i32) -> (i32, i32) {
    %c0_i32 = arith.constant 0 : i32
    %c0_i32_0 = arith.constant 0 : i32
    %c0_i32_1 = arith.constant 0 : i32
    return %c0_i32, %c0_i32_0 : i32, i32
  }
  func.func @transform_7(%arg0: i32) -> (i32, i32) {
    %c0_i32 = arith.constant 0 : i32
    %c0_i32_0 = arith.constant 0 : i32
    %c0_i32_1 = arith.constant 0 : i32
    return %c0_i32, %c0_i32_0 : i32, i32
  }
  func.func @transform_8(%arg0: i32) -> (i32, i32) {
    %c0_i32 = arith.constant 0 : i32
    %c0_i32_0 = arith.constant 0 : i32
    %c0_i32_1 = arith.constant 0 : i32
    return %c0_i32, %c0_i32_0 : i32, i32
  }
  func.func @transform_9(%arg0: i32) -> (i32, i32) {
    %c0_i32 = arith.constant 0 : i32
    %c0_i32_0 = arith.constant 0 : i32
    %c0_i32_1 = arith.constant 0 : i32
    return %c0_i32, %c0_i32_0 : i32, i32
  }
  func.func @transform_10(%arg0: i32) -> (i32, i32) {
    %c0_i32 = arith.constant 0 : i32
    %c0_i32_0 = arith.constant 0 : i32
    %c0_i32_1 = arith.constant 0 : i32
    return %c0_i32, %c0_i32_0 : i32, i32
  }
  func.func @transform_11(%arg0: i32) -> (i32, i32) {
    %c0_i32 = arith.constant 0 : i32
    %c0_i32_0 = arith.constant 0 : i32
    %c0_i32_1 = arith.constant 0 : i32
    return %c0_i32, %c0_i32_0 : i32, i32
  }
  func.func @transform_12(%arg0: i32) -> (i32, i32) {
    %c0_i32 = arith.constant 0 : i32
    %c0_i32_0 = arith.constant 0 : i32
    %c0_i32_1 = arith.constant 0 : i32
    return %c0_i32, %c0_i32_0 : i32, i32
  }
  func.func @transform_13(%arg0: i32) -> (i32, i32) {
    %c0_i32 = arith.constant 0 : i32
    %c0_i32_0 = arith.constant 0 : i32
    return %arg0, %c0_i32 : i32, i32
  }
}

</mosaic_0001>

<llo_original>
// kernel: lenet_forward.1
$region0: #{lenet_forward.1}
  #allocation0 [shape = 'u32[]', space=smem, size = 0x4, offset = 0x4, fixed_abs, tag = 'smem constant byte address 0x4 - core index']
  #allocation1 [shape = 'u32[144,128]{1,0:T(1,128)}', space=vmem, size = 0x12000, scoped, tag = 'internal scratch']
  %s0 = inlined_call_operand.vmem [shape: f32[48,1296], index: 0, kind: input, shape index: {}]
  %s1 = inlined_call_operand.vmem [shape: bf16[48,600], index: 1, kind: input, shape index: {}]
  %s2 = inlined_call_operand.vmem [shape: f32[48,1], index: 2, kind: input, shape index: {}]
  %s3 = inlined_call_operand.vmem [shape: bf16[128,1200], index: 3, kind: input, shape index: {}]
  %s4 = inlined_call_operand.vmem [shape: f32[128,1], index: 4, kind: input, shape index: {}]
  %s5 = inlined_call_operand.vmem [shape: bf16[1148,256], index: 5, kind: input, shape index: {}]
  %s6 = inlined_call_operand.vmem [shape: bf16[188,36], index: 6, kind: input, shape index: {}]
  %s7 = inlined_call_operand.vmem [shape: bf16[576,120], index: 7, kind: input, shape index: {}]
  %s8 = inlined_call_operand.vmem [shape: f32[1,120], index: 8, kind: input, shape index: {}]
  %s9 = inlined_call_operand.vmem [shape: bf16[120,84], index: 9, kind: input, shape index: {}]
  %s10 = inlined_call_operand.vmem [shape: f32[1,84], index: 10, kind: input, shape index: {}]
  %s11 = inlined_call_operand.vmem [shape: bf16[84,128], index: 11, kind: input, shape index: {}]
  %s12 = inlined_call_operand.vmem [shape: f32[1,128], index: 12, kind: input, shape index: {}]
  %s13 = inlined_call_operand.hbm [shape: f32[16,128], index: 13, kind: output, shape index: {}]
  %s14 = sld [smem:[#allocation0]]
  $region85: #{lenet_forward.1} parent=0
    _
  %s16 = ssub.s32 1, %s14
  %s17 = scalar_select 0, %s16, %s14
  $region1: #{lenet_forward.1} parent=0
    #allocation2 [shape = 'u8[8192]{0}', space=vmem, size = 0x2000, scoped, tag = 'output window, operand 0']
    #allocation3 [shape = 's32[2]{0}', space=sflag, size = 0x8, scoped, tag = 'scoped memory for lenet_forward.1']
    %18 = vsyncpa [#allocation3], 0
    %s19 = scalar_lea.sflag [#allocation3], 1
    %20 = vsyncpa %s19, 0
    loop: start=0, step=1, limit=4
    $region2: #{lenet_forward.1} parent=1 // loop_pre_header
      _
    $region3: #{lenet_forward.1} parent=1 // loop_header
      %s22 = sphi 0, %s26
      %p23 = scmp.ge.s32.totalorder %s22, 4
      %s32 = sphi 0, %s34
      %s35 = sphi 0, %s32
      %s36 = sphi 0, %s35
      %s52 = sphi 0, %s36
      %s56 = sphi 0, %s56
      %s58 = sphi 0, %s56
      %s59 = sphi 0, %s58
      %s73 = sphi 0, %s59
      %s77 = sphi 0, %s77
      %s79 = sphi 0, %s77
      %s80 = sphi 0, %s79
      %s94 = sphi 0, %s80
      %s98 = sphi 0, %s98
      %s100 = sphi 0, %s98
      %s101 = sphi 0, %s100
      %s115 = sphi 0, %s101
      %s119 = sphi 0, %s119
      %s121 = sphi 0, %s119
      %s122 = sphi 0, %s121
      %s136 = sphi 0, %s122
      %s140 = sphi 0, %s140
      %s142 = sphi 0, %s140
      %s143 = sphi 0, %s142
      %s157 = sphi 0, %s143
      %s161 = sphi 0, %s161
      %s163 = sphi 0, %s161
      %s164 = sphi 0, %s163
      %s178 = sphi 0, %s164
      %s182 = sphi 0, %s182
      %s184 = sphi 0, %s182
      %s185 = sphi 0, %s184
      %s199 = sphi 0, %s185
      %s203 = sphi 0, %s203
      %s205 = sphi 0, %s203
      %s206 = sphi 0, %s205
      %s220 = sphi 0, %s206
      %s224 = sphi 0, %s224
      %s226 = sphi 0, %s224
      %s227 = sphi 0, %s226
      %s241 = sphi 0, %s227
      %s245 = sphi 0, %s245
      %s247 = sphi 0, %s245
      %s248 = sphi 0, %s247
      %s262 = sphi 0, %s248
      %s266 = sphi 0, %s266
      %s268 = sphi 0, %s266
      %s269 = sphi 0, %s268
      %s283 = sphi 0, %s269
      %s287 = sphi 0, %s287
      %s289 = sphi 0, %s287
      %s290 = sphi 0, %s289
      %s304 = sphi 0, %s290
      %s310 = sphi 0, %s312
      %s313 = sphi 0, %s310
      %s314 = sphi 0, %s313
      %s330 = sphi 0, %s314
    $region4: #{lenet_forward.1} parent=1 // loop_header_branch
      %25 = sbr.rel (%p23) target = $region8
    $region5: #{lenet_forward.1} parent=1 // loop_body
      %s27 = ssub.s32 %s22, 1
      %s28 = ssub.s32 %s22, 2
      %s29 = sadd.s32 %s22, 1
      %s30 = ssub.s32 %s22, %s29
      %p31 = scmp.eq.s32.totalorder %s30, 0
      %s33 = sadd.s32 %s32, 1
      %s34 = scalar_select %p31, %s32, %s33
      %p37 = pneg %p31
      %p38 = scmp.eq.s32.totalorder %s22, 1
      %p39 = por %p37, %p38
      %p40 = scmp.ne.s32.totalorder %s32, %s35
      %p41 = scmp.eq.s32.totalorder %s22, 0
      %p42 = por %p40, %p41
      %p43 = scmp.ne.s32.totalorder %s32, %s35
      %p44 = scmp.eq.s32.totalorder %s27, 1
      %p45 = por %p43, %p44
      %p46 = scmp.ne.s32.totalorder %s35, %s36
      %p47 = scmp.eq.s32.totalorder %s27, 0
      %p48 = por %p46, %p47
      %p49 = scmp.ne.s32.totalorder %s35, %s36
      %p50 = scmp.eq.s32.totalorder %s28, 1
      %p51 = por %p49, %p50
      %p53 = scmp.ne.s32.totalorder %s36, %s52
      %p54 = scmp.eq.s32.totalorder %s28, 0
      %p55 = por %p53, %p54
      %s57 = sadd.s32 %s56, 1
      %p60 = scmp.eq.s32.totalorder %s22, 1
      %p61 = scmp.ne.s32.totalorder %s56, %s58
      %p62 = scmp.eq.s32.totalorder %s22, 0
      %p63 = por %p61, %p62
      %p64 = scmp.ne.s32.totalorder %s56, %s58
      %p65 = scmp.eq.s32.totalorder %s27, 1
      %p66 = por %p64, %p65
      %p67 = scmp.ne.s32.totalorder %s58, %s59
      %p68 = scmp.eq.s32.totalorder %s27, 0
      %p69 = por %p67, %p68
      %p70 = scmp.ne.s32.totalorder %s58, %s59
      %p71 = scmp.eq.s32.totalorder %s28, 1
      %p72 = por %p70, %p71
      %p74 = scmp.ne.s32.totalorder %s59, %s73
      %p75 = scmp.eq.s32.totalorder %s28, 0
      %p76 = por %p74, %p75
      %s78 = sadd.s32 %s77, 1
      %p81 = scmp.eq.s32.totalorder %s22, 1
      %p82 = scmp.ne.s32.totalorder %s77, %s79
      %p83 = scmp.eq.s32.totalorder %s22, 0
      %p84 = por %p82, %p83
      %p85 = scmp.ne.s32.totalorder %s77, %s79
      %p86 = scmp.eq.s32.totalorder %s27, 1
      %p87 = por %p85, %p86
      %p88 = scmp.ne.s32.totalorder %s79, %s80
      %p89 = scmp.eq.s32.totalorder %s27, 0
      %p90 = por %p88, %p89
      %p91 = scmp.ne.s32.totalorder %s79, %s80
      %p92 = scmp.eq.s32.totalorder %s28, 1
      %p93 = por %p91, %p92
      %p95 = scmp.ne.s32.totalorder %s80, %s94
      %p96 = scmp.eq.s32.totalorder %s28, 0
      %p97 = por %p95, %p96
      %s99 = sadd.s32 %s98, 1
      %p102 = scmp.eq.s32.totalorder %s22, 1
      %p103 = scmp.ne.s32.totalorder %s98, %s100
      %p104 = scmp.eq.s32.totalorder %s22, 0
      %p105 = por %p103, %p104
      %p106 = scmp.ne.s32.totalorder %s98, %s100
      %p107 = scmp.eq.s32.totalorder %s27, 1
      %p108 = por %p106, %p107
      %p109 = scmp.ne.s32.totalorder %s100, %s101
      %p110 = scmp.eq.s32.totalorder %s27, 0
      %p111 = por %p109, %p110
      %p112 = scmp.ne.s32.totalorder %s100, %s101
      %p113 = scmp.eq.s32.totalorder %s28, 1
      %p114 = por %p112, %p113
      %p116 = scmp.ne.s32.totalorder %s101, %s115
      %p117 = scmp.eq.s32.totalorder %s28, 0
      %p118 = por %p116, %p117
      %s120 = sadd.s32 %s119, 1
      %p123 = scmp.eq.s32.totalorder %s22, 1
      %p124 = scmp.ne.s32.totalorder %s119, %s121
      %p125 = scmp.eq.s32.totalorder %s22, 0
      %p126 = por %p124, %p125
      %p127 = scmp.ne.s32.totalorder %s119, %s121
      %p128 = scmp.eq.s32.totalorder %s27, 1
      %p129 = por %p127, %p128
      %p130 = scmp.ne.s32.totalorder %s121, %s122
      %p131 = scmp.eq.s32.totalorder %s27, 0
      %p132 = por %p130, %p131
      %p133 = scmp.ne.s32.totalorder %s121, %s122
      %p134 = scmp.eq.s32.totalorder %s28, 1
      %p135 = por %p133, %p134
      %p137 = scmp.ne.s32.totalorder %s122, %s136
      %p138 = scmp.eq.s32.totalorder %s28, 0
      %p139 = por %p137, %p138
      %s141 = sadd.s32 %s140, 1
      %p144 = scmp.eq.s32.totalorder %s22, 1
      %p145 = scmp.ne.s32.totalorder %s140, %s142
      %p146 = scmp.eq.s32.totalorder %s22, 0
      %p147 = por %p145, %p146
      %p148 = scmp.ne.s32.totalorder %s140, %s142
      %p149 = scmp.eq.s32.totalorder %s27, 1
      %p150 = por %p148, %p149
      %p151 = scmp.ne.s32.totalorder %s142, %s143
      %p152 = scmp.eq.s32.totalorder %s27, 0
      %p153 = por %p151, %p152
      %p154 = scmp.ne.s32.totalorder %s142, %s143
      %p155 = scmp.eq.s32.totalorder %s28, 1
      %p156 = por %p154, %p155
      %p158 = scmp.ne.s32.totalorder %s143, %s157
      %p159 = scmp.eq.s32.totalorder %s28, 0
      %p160 = por %p158, %p159
      %s162 = sadd.s32 %s161, 1
      %p165 = scmp.eq.s32.totalorder %s22, 1
      %p166 = scmp.ne.s32.totalorder %s161, %s163
      %p167 = scmp.eq.s32.totalorder %s22, 0
      %p168 = por %p166, %p167
      %p169 = scmp.ne.s32.totalorder %s161, %s163
      %p170 = scmp.eq.s32.totalorder %s27, 1
      %p171 = por %p169, %p170
      %p172 = scmp.ne.s32.totalorder %s163, %s164
      %p173 = scmp.eq.s32.totalorder %s27, 0
      %p174 = por %p172, %p173
      %p175 = scmp.ne.s32.totalorder %s163, %s164
      %p176 = scmp.eq.s32.totalorder %s28, 1
      %p177 = por %p175, %p176
      %p179 = scmp.ne.s32.totalorder %s164, %s178
      %p180 = scmp.eq.s32.totalorder %s28, 0
      %p181 = por %p179, %p180
      %s183 = sadd.s32 %s182, 1
      %p186 = scmp.eq.s32.totalorder %s22, 1
      %p187 = scmp.ne.s32.totalorder %s182, %s184
      %p188 = scmp.eq.s32.totalorder %s22, 0
      %p189 = por %p187, %p188
      %p190 = scmp.ne.s32.totalorder %s182, %s184
      %p191 = scmp.eq.s32.totalorder %s27, 1
      %p192 = por %p190, %p191
      %p193 = scmp.ne.s32.totalorder %s184, %s185
      %p194 = scmp.eq.s32.totalorder %s27, 0
      %p195 = por %p193, %p194
      %p196 = scmp.ne.s32.totalorder %s184, %s185
      %p197 = scmp.eq.s32.totalorder %s28, 1
      %p198 = por %p196, %p197
      %p200 = scmp.ne.s32.totalorder %s185, %s199
      %p201 = scmp.eq.s32.totalorder %s28, 0
      %p202 = por %p200, %p201
      %s204 = sadd.s32 %s203, 1
      %p207 = scmp.eq.s32.totalorder %s22, 1
      %p208 = scmp.ne.s32.totalorder %s203, %s205
      %p209 = scmp.eq.s32.totalorder %s22, 0
      %p210 = por %p208, %p209
      %p211 = scmp.ne.s32.totalorder %s203, %s205
      %p212 = scmp.eq.s32.totalorder %s27, 1
      %p213 = por %p211, %p212
      %p214 = scmp.ne.s32.totalorder %s205, %s206
      %p215 = scmp.eq.s32.totalorder %s27, 0
      %p216 = por %p214, %p215
      %p217 = scmp.ne.s32.totalorder %s205, %s206
      %p218 = scmp.eq.s32.totalorder %s28, 1
      %p219 = por %p217, %p218
      %p221 = scmp.ne.s32.totalorder %s206, %s220
      %p222 = scmp.eq.s32.totalorder %s28, 0
      %p223 = por %p221, %p222
      %s225 = sadd.s32 %s224, 1
      %p228 = scmp.eq.s32.totalorder %s22, 1
      %p229 = scmp.ne.s32.totalorder %s224, %s226
      %p230 = scmp.eq.s32.totalorder %s22, 0
      %p231 = por %p229, %p230
      %p232 = scmp.ne.s32.totalorder %s224, %s226
      %p233 = scmp.eq.s32.totalorder %s27, 1
      %p234 = por %p232, %p233
      %p235 = scmp.ne.s32.totalorder %s226, %s227
      %p236 = scmp.eq.s32.totalorder %s27, 0
      %p237 = por %p235, %p236
      %p238 = scmp.ne.s32.totalorder %s226, %s227
      %p239 = scmp.eq.s32.totalorder %s28, 1
      %p240 = por %p238, %p239
      %p242 = scmp.ne.s32.totalorder %s227, %s241
      %p243 = scmp.eq.s32.totalorder %s28, 0
      %p244 = por %p242, %p243
      %s246 = sadd.s32 %s245, 1
      %p249 = scmp.eq.s32.totalorder %s22, 1
      %p250 = scmp.ne.s32.totalorder %s245, %s247
      %p251 = scmp.eq.s32.totalorder %s22, 0
      %p252 = por %p250, %p251
      %p253 = scmp.ne.s32.totalorder %s245, %s247
      %p254 = scmp.eq.s32.totalorder %s27, 1
      %p255 = por %p253, %p254
      %p256 = scmp.ne.s32.totalorder %s247, %s248
      %p257 = scmp.eq.s32.totalorder %s27, 0
      %p258 = por %p256, %p257
      %p259 = scmp.ne.s32.totalorder %s247, %s248
      %p260 = scmp.eq.s32.totalorder %s28, 1
      %p261 = por %p259, %p260
      %p263 = scmp.ne.s32.totalorder %s248, %s262
      %p264 = scmp.eq.s32.totalorder %s28, 0
      %p265 = por %p263, %p264
      %s267 = sadd.s32 %s266, 1
      %p270 = scmp.eq.s32.totalorder %s22, 1
      %p271 = scmp.ne.s32.totalorder %s266, %s268
      %p272 = scmp.eq.s32.totalorder %s22, 0
      %p273 = por %p271, %p272
      %p274 = scmp.ne.s32.totalorder %s266, %s268
      %p275 = scmp.eq.s32.totalorder %s27, 1
      %p276 = por %p274, %p275
      %p277 = scmp.ne.s32.totalorder %s268, %s269
      %p278 = scmp.eq.s32.totalorder %s27, 0
      %p279 = por %p277, %p278
      %p280 = scmp.ne.s32.totalorder %s268, %s269
      %p281 = scmp.eq.s32.totalorder %s28, 1
      %p282 = por %p280, %p281
      %p284 = scmp.ne.s32.totalorder %s269, %s283
      %p285 = scmp.eq.s32.totalorder %s28, 0
      %p286 = por %p284, %p285
      %s288 = sadd.s32 %s287, 1
      %p291 = scmp.eq.s32.totalorder %s22, 1
      %p292 = scmp.ne.s32.totalorder %s287, %s289
      %p293 = scmp.eq.s32.totalorder %s22, 0
      %p294 = por %p292, %p293
      %p295 = scmp.ne.s32.totalorder %s287, %s289
      %p296 = scmp.eq.s32.totalorder %s27, 1
      %p297 = por %p295, %p296
      %p298 = scmp.ne.s32.totalorder %s289, %s290
      %p299 = scmp.eq.s32.totalorder %s27, 0
      %p300 = por %p298, %p299
      %p301 = scmp.ne.s32.totalorder %s289, %s290
      %p302 = scmp.eq.s32.totalorder %s28, 1
      %p303 = por %p301, %p302
      %p305 = scmp.ne.s32.totalorder %s290, %s304
      %p306 = scmp.eq.s32.totalorder %s28, 0
      %p307 = por %p305, %p306
      %s308 = ssub.s32 %s22, %s29
      %p309 = scmp.eq.s32.totalorder %s308, 0
      %s311 = sadd.s32 %s310, 1
      %s312 = scalar_select %p309, %s310, %s311
      %p315 = pneg %p309
      %p316 = scmp.eq.s32.totalorder %s22, 1
      %p317 = por %p315, %p316
      %p318 = scmp.ne.s32.totalorder %s310, %s313
      %p319 = scmp.eq.s32.totalorder %s22, 0
      %p320 = por %p318, %p319
      %p321 = scmp.ne.s32.totalorder %s310, %s313
      %p322 = scmp.eq.s32.totalorder %s27, 1
      %p323 = por %p321, %p322
      %p324 = scmp.ne.s32.totalorder %s313, %s314
      %p325 = scmp.eq.s32.totalorder %s27, 0
      %p326 = por %p324, %p325
      %p327 = scmp.ne.s32.totalorder %s313, %s314
      %p328 = scmp.eq.s32.totalorder %s28, 1
      %p329 = por %p327, %p328
      %p331 = scmp.ne.s32.totalorder %s314, %s330
      %p332 = scmp.eq.s32.totalorder %s28, 0
      %p333 = por %p331, %p332
      %p334 = scmp.le.s32.totalorder 1, %s22
      %p335 = scmp.lt.s32.totalorder %s22, 3
      %p336 = pnand %p334, %p335
      %p337 = pneg %p336
      // Predicated region
      $region9: #{lenet_forward.1} parent=5 // pred_check
        _
      $region10: #{lenet_forward.1} parent=5 // pred_check_branch
        %339 = sbr.rel (%p336) target = $region12
      $region11: #{lenet_forward.1} parent=5 // pred_region
        %s340 = ssub.s32 %s22, 1
        // Predicated region
        $region13: #{lenet_forward.1} parent=11 // pred_check
          %p341 = pneg %p69
        $region14: #{lenet_forward.1} parent=11 // pred_check_branch
          %343 = sbr.rel (%p341) target = $region16
        $region15: #{lenet_forward.1} parent=11 // pred_region
          _
        $region16: #{lenet_forward.1} parent=11 // pred_fallthru
          _
        // Predicated region
        $region17: #{lenet_forward.1} parent=11 // pred_check
          %p344 = pneg %p90
        $region18: #{lenet_forward.1} parent=11 // pred_check_branch
          %346 = sbr.rel (%p344) target = $region20
        $region19: #{lenet_forward.1} parent=11 // pred_region
          _
        $region20: #{lenet_forward.1} parent=11 // pred_fallthru
          _
        // Predicated region
        $region21: #{lenet_forward.1} parent=11 // pred_check
          %p347 = pneg %p111
        $region22: #{lenet_forward.1} parent=11 // pred_check_branch
          %349 = sbr.rel (%p347) target = $region24
        $region23: #{lenet_forward.1} parent=11 // pred_region
          _
        $region24: #{lenet_forward.1} parent=11 // pred_fallthru
          _
        // Predicated region
        $region25: #{lenet_forward.1} parent=11 // pred_check
          %p350 = pneg %p132
        $region26: #{lenet_forward.1} parent=11 // pred_check_branch
          %352 = sbr.rel (%p350) target = $region28
        $region27: #{lenet_forward.1} parent=11 // pred_region
          _
        $region28: #{lenet_forward.1} parent=11 // pred_fallthru
          _
        // Predicated region
        $region29: #{lenet_forward.1} parent=11 // pred_check
          %p353 = pneg %p153
        $region30: #{lenet_forward.1} parent=11 // pred_check_branch
          %355 = sbr.rel (%p353) target = $region32
        $region31: #{lenet_forward.1} parent=11 // pred_region
          _
        $region32: #{lenet_forward.1} parent=11 // pred_fallthru
          _
        // Predicated region
        $region33: #{lenet_forward.1} parent=11 // pred_check
          %p356 = pneg %p174
        $region34: #{lenet_forward.1} parent=11 // pred_check_branch
          %358 = sbr.rel (%p356) target = $region36
        $region35: #{lenet_forward.1} parent=11 // pred_region
          _
        $region36: #{lenet_forward.1} parent=11 // pred_fallthru
          _
        // Predicated region
        $region37: #{lenet_forward.1} parent=11 // pred_check
          %p359 = pneg %p195
        $region38: #{lenet_forward.1} parent=11 // pred_check_branch
          %361 = sbr.rel (%p359) target = $region40
        $region39: #{lenet_forward.1} parent=11 // pred_region
          _
        $region40: #{lenet_forward.1} parent=11 // pred_fallthru
          _
        // Predicated region
        $region41: #{lenet_forward.1} parent=11 // pred_check
          %p362 = pneg %p216
        $region42: #{lenet_forward.1} parent=11 // pred_check_branch
          %364 = sbr.rel (%p362) target = $region44
        $region43: #{lenet_forward.1} parent=11 // pred_region
          _
        $region44: #{lenet_forward.1} parent=11 // pred_fallthru
          _
        // Predicated region
        $region45: #{lenet_forward.1} parent=11 // pred_check
          %p365 = pneg %p237
        $region46: #{lenet_forward.1} parent=11 // pred_check_branch
          %367 = sbr.rel (%p365) target = $region48
        $region47: #{lenet_forward.1} parent=11 // pred_region
          _
        $region48: #{lenet_forward.1} parent=11 // pred_fallthru
          _
        // Predicated region
        $region49: #{lenet_forward.1} parent=11 // pred_check
          %p368 = pneg %p258
        $region50: #{lenet_forward.1} parent=11 // pred_check_branch
          %370 = sbr.rel (%p368) target = $region52
        $region51: #{lenet_forward.1} parent=11 // pred_region
          _
        $region52: #{lenet_forward.1} parent=11 // pred_fallthru
          _
        // Predicated region
        $region53: #{lenet_forward.1} parent=11 // pred_check
          %p371 = pneg %p279
        $region54: #{lenet_forward.1} parent=11 // pred_check_branch
          %373 = sbr.rel (%p371) target = $region56
        $region55: #{lenet_forward.1} parent=11 // pred_region
          _
        $region56: #{lenet_forward.1} parent=11 // pred_fallthru
          _
        // Predicated region
        $region57: #{lenet_forward.1} parent=11 // pred_check
          %p374 = pneg %p300
        $region58: #{lenet_forward.1} parent=11 // pred_check_branch
          %376 = sbr.rel (%p374) target = $region60
        $region59: #{lenet_forward.1} parent=11 // pred_region
          _
        $region60: #{lenet_forward.1} parent=11 // pred_fallthru
          _
      $region12: #{lenet_forward.1} parent=5 // pred_fallthru
        _
      %p377 = scmp.lt.s32.totalorder %s22, 2
      // Predicated region
      $region61: #{lenet_forward.1} parent=5 // pred_check
        %p378 = pneg %p377
      $region62: #{lenet_forward.1} parent=5 // pred_check_branch
        %380 = sbr.rel (%p378) target = $region64
      $region63: #{lenet_forward.1} parent=5 // pred_region
        // Predicated region
        $region65: #{lenet_forward.1} parent=63 // pred_check
          %p381 = pneg %p42
        $region66: #{lenet_forward.1} parent=63 // pred_check_branch
          %383 = sbr.rel (%p381) target = $region68
        $region67: #{lenet_forward.1} parent=63 // pred_region
          %s384 = smul.u32 3, %s22
          %p385 = scmp.lt.s32.totalorder %s384, 5
          %s386 = scalar_select %p385, %s384, 5
          %s387 = smul.addr %s386, 11
          %s388 = smul.addr %s387, 8
          %s389 = scalar_lea.vmem %s0, %s388
          %s390 = smul.u32 3, %s22
        $region68: #{lenet_forward.1} parent=63 // pred_fallthru
          _
      $region64: #{lenet_forward.1} parent=5 // pred_fallthru
        _
      %p391 = scmp.le.s32.totalorder 1, %s22
      %p392 = scmp.lt.s32.totalorder %s22, 3
      %p393 = pnand %p391, %p392
      %p394 = pneg %p393
      // Predicated region
      $region69: #{lenet_forward.1} parent=5 // pred_check
        _
      $region70: #{lenet_forward.1} parent=5 // pred_check_branch
        %396 = sbr.rel (%p393) target = $region72
      $region71: #{lenet_forward.1} parent=5 // pred_region
        %s397 = ssub.s32 %s22, 1
        %s398 = smul.u32 3, %s27
        %p399 = scmp.lt.s32.totalorder %s398, 5
        %s400 = scalar_select %p399, %s398, 5
        %s401 = smul.addr %s400, 11
        %s402 = smul.addr %s401, 8
        %s403 = scalar_lea.vmem %s0, %s402
        %p404 = pneg %p48
        %p405 = pneg %p45
        %p406 = pneg %p69
        %p407 = pneg %p66
        %p408 = pneg %p90
        %p409 = pneg %p87
        %p410 = pneg %p111
        %p411 = pneg %p108
        %p412 = pneg %p132
        %p413 = pneg %p129
        %p414 = pneg %p153
        %p415 = pneg %p150
        %p416 = pneg %p174
        %p417 = pneg %p171
        %p418 = pneg %p195
        %p419 = pneg %p192
        %p420 = pneg %p216
        %p421 = pneg %p213
        %p422 = pneg %p237
        %p423 = pneg %p234
        %p424 = pneg %p258
        %p425 = pneg %p255
        %p426 = pneg %p279
        %p427 = pneg %p276
        %p428 = pneg %p300
        %p429 = pneg %p297
        %p430 = pneg %p326
        %p431 = pneg %p323
        %s432 = sand.u32 %s313, 1
        %s433 = scalar_lea.sflag [#allocation3], %s432
        %s434 = sand.u32 %s313, 1
        %s435 = smul.addr %s434, 8
        %s436 = scalar_lea.vmem [#allocation2], %s435
        %s437 = smul.u32 3, %s27
        %p438 = scmp.lt.s32.totalorder %s437, 5
        %s439 = scalar_select %p438, %s437, 5
        %s440 = smul.addr %s439, 11
        %s441 = smul.addr %s440, 8
        %s442 = scalar_lea.vmem %s0, %s441
        %s443 = smul.u32 3, %s27
        %v445 = vld [vmem:[%s442] sm:$0xff]
        %v446 = vld [vmem:[%s442 + $0x8] sm:$0xff]
        %v447 = vld [vmem:[%s442 + $0x10] sm:$0xff]
        %v448 = vld [vmem:[%s442 + $0x18] sm:$0xff]
        %v449 = vld [vmem:[%s442 + $0x20] sm:$0xff]
        %v450 = vld [vmem:[%s442 + $0x28] sm:$0xff]
        %v451 = vld [vmem:[%s442 + $0x30] sm:$0xff]
        %v452 = vld [vmem:[%s442 + $0x38] sm:$0xff]
        %v453 = vld [vmem:[%s442 + $0x40] sm:$0xff]
        %v454 = vld [vmem:[%s442 + $0x48] sm:$0xff]
        %v455 = vld [vmem:[%s442 + $0x50] sm:$0xff]
        %v456 = vld [vmem:[%s442 + $0x58] sm:$0xff]
        %v457 = vld [vmem:[%s442 + $0x60] sm:$0xff]
        %v458 = vld [vmem:[%s442 + $0x68] sm:$0xff]
        %v459 = vld [vmem:[%s442 + $0x70] sm:$0xff]
        %v460 = vld [vmem:[%s442 + $0x78] sm:$0xff]
        %v461 = vld [vmem:[%s442 + $0x80] sm:$0xff]
        %v462 = vld [vmem:[%s442 + $0x88] sm:$0xff]
        %v463 = vld [vmem:[%s442 + $0x90] sm:$0xff]
        %v464 = vld [vmem:[%s442 + $0x98] sm:$0xff]
        %v465 = vld [vmem:[%s442 + $0xa0] sm:$0xff]
        %v466 = vld [vmem:[%s442 + $0xa8] sm:$0xff]
        %v467 = vld [vmem:[%s442 + $0xb0] sm:$0xff]
        %v468 = vld [vmem:[%s442 + $0xb8] sm:$0xff]
        %v469 = vld [vmem:[%s442 + $0xc0] sm:$0xff]
        %v470 = vld [vmem:[%s442 + $0xc8] sm:$0xff]
        %v471 = vld [vmem:[%s442 + $0xd0] sm:$0xff]
        %v472 = vld [vmem:[%s442 + $0xd8] sm:$0xff]
        %v473 = vld [vmem:[%s442 + $0xe0] sm:$0xff]
        %v474 = vld [vmem:[%s442 + $0xe8] sm:$0xff]
        %v475 = vld [vmem:[%s442 + $0xf0] sm:$0xff]
        %v476 = vld [vmem:[%s442 + $0xf8] sm:$0xff]
        %v477 = vld [vmem:[%s442 + $0x100] sm:$0xff]
        %505 = vrot.lane.b32.xlu0 %v445, 127
        %v506 = vpop.permute.xlu0 %505
        %507 = vrot.lane.b32.xlu0 %v446, 127
        %v508 = vpop.permute.xlu0 %507
        %509 = vrot.lane.b32.xlu0 %v447, 127
        %v510 = vpop.permute.xlu0 %509
        %511 = vrot.lane.b32.xlu0 %v448, 127
        %v512 = vpop.permute.xlu0 %511
        %513 = vrot.lane.b32.xlu0 %v449, 127
        %v514 = vpop.permute.xlu0 %513
        %515 = vrot.lane.b32.xlu0 %v450, 127
        %v516 = vpop.permute.xlu0 %515
        %517 = vrot.lane.b32.xlu0 %v451, 127
        %v518 = vpop.permute.xlu0 %517
        %519 = vrot.lane.b32.xlu0 %v452, 127
        %v520 = vpop.permute.xlu0 %519
        %521 = vrot.lane.b32.xlu0 %v453, 127
        %v522 = vpop.permute.xlu0 %521
        %523 = vrot.lane.b32.xlu0 %v456, 127
        %v524 = vpop.permute.xlu0 %523
        %525 = vrot.lane.b32.xlu0 %v457, 127
        %v526 = vpop.permute.xlu0 %525
        %527 = vrot.lane.b32.xlu0 %v458, 127
        %v528 = vpop.permute.xlu0 %527
        %529 = vrot.lane.b32.xlu0 %v459, 127
        %v530 = vpop.permute.xlu0 %529
        %531 = vrot.lane.b32.xlu0 %v460, 127
        %v532 = vpop.permute.xlu0 %531
        %533 = vrot.lane.b32.xlu0 %v461, 127
        %v534 = vpop.permute.xlu0 %533
        %535 = vrot.lane.b32.xlu0 %v462, 127
        %v536 = vpop.permute.xlu0 %535
        %537 = vrot.lane.b32.xlu0 %v463, 127
        %v538 = vpop.permute.xlu0 %537
        %539 = vrot.lane.b32.xlu0 %v464, 127
        %v540 = vpop.permute.xlu0 %539
        %541 = vrot.lane.b32.xlu0 %v467, 127
        %v542 = vpop.permute.xlu0 %541
        %543 = vrot.lane.b32.xlu0 %v468, 127
        %v544 = vpop.permute.xlu0 %543
        %545 = vrot.lane.b32.xlu0 %v469, 127
        %v546 = vpop.permute.xlu0 %545
        %547 = vrot.lane.b32.xlu0 %v470, 127
        %v548 = vpop.permute.xlu0 %547
        %549 = vrot.lane.b32.xlu0 %v471, 127
        %v550 = vpop.permute.xlu0 %549
        %551 = vrot.lane.b32.xlu0 %v472, 127
        %v552 = vpop.permute.xlu0 %551
        %553 = vrot.lane.b32.xlu0 %v473, 127
        %v554 = vpop.permute.xlu0 %553
        %555 = vrot.lane.b32.xlu0 %v474, 127
        %v556 = vpop.permute.xlu0 %555
        %557 = vrot.lane.b32.xlu0 %v475, 127
        %v558 = vpop.permute.xlu0 %557
        %vm559 = vcmask 1039360
        %v560 = vsel %vm559, %v506, %v508
        %v561 = vsel %vm559, %v508, %v510
        %v562 = vsel %vm559, %v510, %v512
        %v563 = vsel %vm559, %v512, %v514
        %v564 = vsel %vm559, %v514, %v516
        %v565 = vsel %vm559, %v516, %v518
        %v566 = vsel %vm559, %v518, %v520
        %v567 = vsel %vm559, %v520, %v522
        %v568 = vsel %vm559, %v524, %v526
        %v569 = vsel %vm559, %v526, %v528
        %v570 = vsel %vm559, %v528, %v530
        %v571 = vsel %vm559, %v530, %v532
        %v572 = vsel %vm559, %v532, %v534
        %v573 = vsel %vm559, %v534, %v536
        %v574 = vsel %vm559, %v536, %v538
        %v575 = vsel %vm559, %v538, %v540
        %v576 = vsel %vm559, %v542, %v544
        %v577 = vsel %vm559, %v544, %v546
        %v578 = vsel %vm559, %v546, %v548
        %v579 = vsel %vm559, %v548, %v550
        %v580 = vsel %vm559, %v550, %v552
        %v581 = vsel %vm559, %v552, %v554
        %v582 = vsel %vm559, %v554, %v556
        %v583 = vsel %vm559, %v556, %v558
        %611 = vrot.lane.b32.xlu0 %v445, 126
        %v612 = vpop.permute.xlu0 %611
        %613 = vrot.lane.b32.xlu0 %v446, 126
        %v614 = vpop.permute.xlu0 %613
        %615 = vrot.lane.b32.xlu0 %v447, 126
        %v616 = vpop.permute.xlu0 %615
        %617 = vrot.lane.b32.xlu0 %v448, 126
        %v618 = vpop.permute.xlu0 %617
        %619 = vrot.lane.b32.xlu0 %v449, 126
        %v620 = vpop.permute.xlu0 %619
        %621 = vrot.lane.b32.xlu0 %v450, 126
        %v622 = vpop.permute.xlu0 %621
        %623 = vrot.lane.b32.xlu0 %v451, 126
        %v624 = vpop.permute.xlu0 %623
        %625 = vrot.lane.b32.xlu0 %v452, 126
        %v626 = vpop.permute.xlu0 %625
        %627 = vrot.lane.b32.xlu0 %v453, 126
        %v628 = vpop.permute.xlu0 %627
        %629 = vrot.lane.b32.xlu0 %v456, 126
        %v630 = vpop.permute.xlu0 %629
        %631 = vrot.lane.b32.xlu0 %v457, 126
        %v632 = vpop.permute.xlu0 %631
        %633 = vrot.lane.b32.xlu0 %v458, 126
        %v634 = vpop.permute.xlu0 %633
        %635 = vrot.lane.b32.xlu0 %v459, 126
        %v636 = vpop.permute.xlu0 %635
        %637 = vrot.lane.b32.xlu0 %v460, 126
        %v638 = vpop.permute.xlu0 %637
        %639 = vrot.lane.b32.xlu0 %v461, 126
        %v640 = vpop.permute.xlu0 %639
        %641 = vrot.lane.b32.xlu0 %v462, 126
        %v642 = vpop.permute.xlu0 %641
        %643 = vrot.lane.b32.xlu0 %v463, 126
        %v644 = vpop.permute.xlu0 %643
        %645 = vrot.lane.b32.xlu0 %v464, 126
        %v646 = vpop.permute.xlu0 %645
        %647 = vrot.lane.b32.xlu0 %v467, 126
        %v648 = vpop.permute.xlu0 %647
        %649 = vrot.lane.b32.xlu0 %v468, 126
        %v650 = vpop.permute.xlu0 %649
        %651 = vrot.lane.b32.xlu0 %v469, 126
        %v652 = vpop.permute.xlu0 %651
        %653 = vrot.lane.b32.xlu0 %v470, 126
        %v654 = vpop.permute.xlu0 %653
        %655 = vrot.lane.b32.xlu0 %v471, 126
        %v656 = vpop.permute.xlu0 %655
        %657 = vrot.lane.b32.xlu0 %v472, 126
        %v658 = vpop.permute.xlu0 %657
        %659 = vrot.lane.b32.xlu0 %v473, 126
        %v660 = vpop.permute.xlu0 %659
        %661 = vrot.lane.b32.xlu0 %v474, 126
        %v662 = vpop.permute.xlu0 %661
        %663 = vrot.lane.b32.xlu0 %v475, 126
        %v664 = vpop.permute.xlu0 %663
        %vm665 = vcmask 1031168
        %v666 = vsel %vm665, %v612, %v614
        %v667 = vsel %vm665, %v614, %v616
        %v668 = vsel %vm665, %v616, %v618
        %v669 = vsel %vm665, %v618, %v620
        %v670 = vsel %vm665, %v620, %v622
        %v671 = vsel %vm665, %v622, %v624
        %v672 = vsel %vm665, %v624, %v626
        %v673 = vsel %vm665, %v626, %v628
        %v674 = vsel %vm665, %v630, %v632
        %v675 = vsel %vm665, %v632, %v634
        %v676 = vsel %vm665, %v634, %v636
        %v677 = vsel %vm665, %v636, %v638
        %v678 = vsel %vm665, %v638, %v640
        %v679 = vsel %vm665, %v640, %v642
        %v680 = vsel %vm665, %v642, %v644
        %v681 = vsel %vm665, %v644, %v646
        %v682 = vsel %vm665, %v648, %v650
        %v683 = vsel %vm665, %v650, %v652
        %v684 = vsel %vm665, %v652, %v654
        %v685 = vsel %vm665, %v654, %v656
        %v686 = vsel %vm665, %v656, %v658
        %v687 = vsel %vm665, %v658, %v660
        %v688 = vsel %vm665, %v660, %v662
        %v689 = vsel %vm665, %v662, %v664
        %717 = vrot.lane.b32.xlu0 %v445, 125
        %v718 = vpop.permute.xlu0 %717
        %719 = vrot.lane.b32.xlu0 %v446, 125
        %v720 = vpop.permute.xlu0 %719
        %721 = vrot.lane.b32.xlu0 %v447, 125
        %v722 = vpop.permute.xlu0 %721
        %723 = vrot.lane.b32.xlu0 %v448, 125
        %v724 = vpop.permute.xlu0 %723
        %725 = vrot.lane.b32.xlu0 %v449, 125
        %v726 = vpop.permute.xlu0 %725
        %727 = vrot.lane.b32.xlu0 %v450, 125
        %v728 = vpop.permute.xlu0 %727
        %729 = vrot.lane.b32.xlu0 %v451, 125
        %v730 = vpop.permute.xlu0 %729
        %731 = vrot.lane.b32.xlu0 %v452, 125
        %v732 = vpop.permute.xlu0 %731
        %733 = vrot.lane.b32.xlu0 %v453, 125
        %v734 = vpop.permute.xlu0 %733
        %735 = vrot.lane.b32.xlu0 %v456, 125
        %v736 = vpop.permute.xlu0 %735
        %737 = vrot.lane.b32.xlu0 %v457, 125
        %v738 = vpop.permute.xlu0 %737
        %739 = vrot.lane.b32.xlu0 %v458, 125
        %v740 = vpop.permute.xlu0 %739
        %741 = vrot.lane.b32.xlu0 %v459, 125
        %v742 = vpop.permute.xlu0 %741
        %743 = vrot.lane.b32.xlu0 %v460, 125
        %v744 = vpop.permute.xlu0 %743
        %745 = vrot.lane.b32.xlu0 %v461, 125
        %v746 = vpop.permute.xlu0 %745
        %747 = vrot.lane.b32.xlu0 %v462, 125
        %v748 = vpop.permute.xlu0 %747
        %749 = vrot.lane.b32.xlu0 %v463, 125
        %v750 = vpop.permute.xlu0 %749
        %751 = vrot.lane.b32.xlu0 %v464, 125
        %v752 = vpop.permute.xlu0 %751
        %753 = vrot.lane.b32.xlu0 %v467, 125
        %v754 = vpop.permute.xlu0 %753
        %755 = vrot.lane.b32.xlu0 %v468, 125
        %v756 = vpop.permute.xlu0 %755
        %757 = vrot.lane.b32.xlu0 %v469, 125
        %v758 = vpop.permute.xlu0 %757
        %759 = vrot.lane.b32.xlu0 %v470, 125
        %v760 = vpop.permute.xlu0 %759
        %761 = vrot.lane.b32.xlu0 %v471, 125
        %v762 = vpop.permute.xlu0 %761
        %763 = vrot.lane.b32.xlu0 %v472, 125
        %v764 = vpop.permute.xlu0 %763
        %765 = vrot.lane.b32.xlu0 %v473, 125
        %v766 = vpop.permute.xlu0 %765
        %767 = vrot.lane.b32.xlu0 %v474, 125
        %v768 = vpop.permute.xlu0 %767
        %769 = vrot.lane.b32.xlu0 %v475, 125
        %v770 = vpop.permute.xlu0 %769
        %vm771 = vcmask 1022976
        %v772 = vsel %vm771, %v718, %v720
        %v773 = vsel %vm771, %v720, %v722
        %v774 = vsel %vm771, %v722, %v724
        %v775 = vsel %vm771, %v724, %v726
        %v776 = vsel %vm771, %v726, %v728
        %v777 = vsel %vm771, %v728, %v730
        %v778 = vsel %vm771, %v730, %v732
        %v779 = vsel %vm771, %v732, %v734
        %v780 = vsel %vm771, %v736, %v738
        %v781 = vsel %vm771, %v738, %v740
        %v782 = vsel %vm771, %v740, %v742
        %v783 = vsel %vm771, %v742, %v744
        %v784 = vsel %vm771, %v744, %v746
        %v785 = vsel %vm771, %v746, %v748
        %v786 = vsel %vm771, %v748, %v750
        %v787 = vsel %vm771, %v750, %v752
        %v788 = vsel %vm771, %v754, %v756
        %v789 = vsel %vm771, %v756, %v758
        %v790 = vsel %vm771, %v758, %v760
        %v791 = vsel %vm771, %v760, %v762
        %v792 = vsel %vm771, %v762, %v764
        %v793 = vsel %vm771, %v764, %v766
        %v794 = vsel %vm771, %v766, %v768
        %v795 = vsel %vm771, %v768, %v770
        %823 = vrot.lane.b32.xlu0 %v445, 124
        %v824 = vpop.permute.xlu0 %823
        %825 = vrot.lane.b32.xlu0 %v446, 124
        %v826 = vpop.permute.xlu0 %825
        %827 = vrot.lane.b32.xlu0 %v447, 124
        %v828 = vpop.permute.xlu0 %827
        %829 = vrot.lane.b32.xlu0 %v448, 124
        %v830 = vpop.permute.xlu0 %829
        %831 = vrot.lane.b32.xlu0 %v449, 124
        %v832 = vpop.permute.xlu0 %831
        %833 = vrot.lane.b32.xlu0 %v450, 124
        %v834 = vpop.permute.xlu0 %833
        %835 = vrot.lane.b32.xlu0 %v451, 124
        %v836 = vpop.permute.xlu0 %835
        %837 = vrot.lane.b32.xlu0 %v452, 124
        %v838 = vpop.permute.xlu0 %837
        %839 = vrot.lane.b32.xlu0 %v453, 124
        %v840 = vpop.permute.xlu0 %839
        %841 = vrot.lane.b32.xlu0 %v456, 124
        %v842 = vpop.permute.xlu0 %841
        %843 = vrot.lane.b32.xlu0 %v457, 124
        %v844 = vpop.permute.xlu0 %843
        %845 = vrot.lane.b32.xlu0 %v458, 124
        %v846 = vpop.permute.xlu0 %845
        %847 = vrot.lane.b32.xlu0 %v459, 124
        %v848 = vpop.permute.xlu0 %847
        %849 = vrot.lane.b32.xlu0 %v460, 124
        %v850 = vpop.permute.xlu0 %849
        %851 = vrot.lane.b32.xlu0 %v461, 124
        %v852 = vpop.permute.xlu0 %851
        %853 = vrot.lane.b32.xlu0 %v462, 124
        %v854 = vpop.permute.xlu0 %853
        %855 = vrot.lane.b32.xlu0 %v463, 124
        %v856 = vpop.permute.xlu0 %855
        %857 = vrot.lane.b32.xlu0 %v464, 124
        %v858 = vpop.permute.xlu0 %857
        %859 = vrot.lane.b32.xlu0 %v467, 124
        %v860 = vpop.permute.xlu0 %859
        %861 = vrot.lane.b32.xlu0 %v468, 124
        %v862 = vpop.permute.xlu0 %861
        %863 = vrot.lane.b32.xlu0 %v469, 124
        %v864 = vpop.permute.xlu0 %863
        %865 = vrot.lane.b32.xlu0 %v470, 124
        %v866 = vpop.permute.xlu0 %865
        %867 = vrot.lane.b32.xlu0 %v471, 124
        %v868 = vpop.permute.xlu0 %867
        %869 = vrot.lane.b32.xlu0 %v472, 124
        %v870 = vpop.permute.xlu0 %869
        %871 = vrot.lane.b32.xlu0 %v473, 124
        %v872 = vpop.permute.xlu0 %871
        %873 = vrot.lane.b32.xlu0 %v474, 124
        %v874 = vpop.permute.xlu0 %873
        %875 = vrot.lane.b32.xlu0 %v475, 124
        %v876 = vpop.permute.xlu0 %875
        %vm877 = vcmask 1014784
        %v878 = vsel %vm877, %v824, %v826
        %v879 = vsel %vm877, %v826, %v828
        %v880 = vsel %vm877, %v828, %v830
        %v881 = vsel %vm877, %v830, %v832
        %v882 = vsel %vm877, %v832, %v834
        %v883 = vsel %vm877, %v834, %v836
        %v884 = vsel %vm877, %v836, %v838
        %v885 = vsel %vm877, %v838, %v840
        %v886 = vsel %vm877, %v842, %v844
        %v887 = vsel %vm877, %v844, %v846
        %v888 = vsel %vm877, %v846, %v848
        %v889 = vsel %vm877, %v848, %v850
        %v890 = vsel %vm877, %v850, %v852
        %v891 = vsel %vm877, %v852, %v854
        %v892 = vsel %vm877, %v854, %v856
        %v893 = vsel %vm877, %v856, %v858
        %v894 = vsel %vm877, %v860, %v862
        %v895 = vsel %vm877, %v862, %v864
        %v896 = vsel %vm877, %v864, %v866
        %v897 = vsel %vm877, %v866, %v868
        %v898 = vsel %vm877, %v868, %v870
        %v899 = vsel %vm877, %v870, %v872
        %v900 = vsel %vm877, %v872, %v874
        %v901 = vsel %vm877, %v874, %v876
        %932 = vrot.lane.b32.xlu0 %v445, 92
        %v933 = vpop.permute.xlu0 %932
        %934 = vrot.lane.b32.xlu0 %v446, 92
        %v935 = vpop.permute.xlu0 %934
        %936 = vrot.lane.b32.xlu0 %v447, 92
        %v937 = vpop.permute.xlu0 %936
        %938 = vrot.lane.b32.xlu0 %v448, 92
        %v939 = vpop.permute.xlu0 %938
        %940 = vrot.lane.b32.xlu0 %v449, 92
        %v941 = vpop.permute.xlu0 %940
        %942 = vrot.lane.b32.xlu0 %v450, 92
        %v943 = vpop.permute.xlu0 %942
        %944 = vrot.lane.b32.xlu0 %v451, 92
        %v945 = vpop.permute.xlu0 %944
        %946 = vrot.lane.b32.xlu0 %v452, 92
        %v947 = vpop.permute.xlu0 %946
        %948 = vrot.lane.b32.xlu0 %v453, 92
        %v949 = vpop.permute.xlu0 %948
        %950 = vrot.lane.b32.xlu0 %v454, 92
        %v951 = vpop.permute.xlu0 %950
        %952 = vrot.lane.b32.xlu0 %v456, 92
        %v953 = vpop.permute.xlu0 %952
        %954 = vrot.lane.b32.xlu0 %v457, 92
        %v955 = vpop.permute.xlu0 %954
        %956 = vrot.lane.b32.xlu0 %v458, 92
        %v957 = vpop.permute.xlu0 %956
        %958 = vrot.lane.b32.xlu0 %v459, 92
        %v959 = vpop.permute.xlu0 %958
        %960 = vrot.lane.b32.xlu0 %v460, 92
        %v961 = vpop.permute.xlu0 %960
        %962 = vrot.lane.b32.xlu0 %v461, 92
        %v963 = vpop.permute.xlu0 %962
        %964 = vrot.lane.b32.xlu0 %v462, 92
        %v965 = vpop.permute.xlu0 %964
        %966 = vrot.lane.b32.xlu0 %v463, 92
        %v967 = vpop.permute.xlu0 %966
        %968 = vrot.lane.b32.xlu0 %v464, 92
        %v969 = vpop.permute.xlu0 %968
        %970 = vrot.lane.b32.xlu0 %v465, 92
        %v971 = vpop.permute.xlu0 %970
        %972 = vrot.lane.b32.xlu0 %v467, 92
        %v973 = vpop.permute.xlu0 %972
        %974 = vrot.lane.b32.xlu0 %v468, 92
        %v975 = vpop.permute.xlu0 %974
        %976 = vrot.lane.b32.xlu0 %v469, 92
        %v977 = vpop.permute.xlu0 %976
        %978 = vrot.lane.b32.xlu0 %v470, 92
        %v979 = vpop.permute.xlu0 %978
        %980 = vrot.lane.b32.xlu0 %v471, 92
        %v981 = vpop.permute.xlu0 %980
        %982 = vrot.lane.b32.xlu0 %v472, 92
        %v983 = vpop.permute.xlu0 %982
        %984 = vrot.lane.b32.xlu0 %v473, 92
        %v985 = vpop.permute.xlu0 %984
        %986 = vrot.lane.b32.xlu0 %v474, 92
        %v987 = vpop.permute.xlu0 %986
        %988 = vrot.lane.b32.xlu0 %v475, 92
        %v989 = vpop.permute.xlu0 %988
        %990 = vrot.lane.b32.xlu0 %v476, 92
        %v991 = vpop.permute.xlu0 %990
        %vm992 = vcmask 752640
        %v993 = vsel %vm992, %v933, %v935
        %v994 = vsel %vm992, %v935, %v937
        %v995 = vsel %vm992, %v937, %v939
        %v996 = vsel %vm992, %v939, %v941
        %v997 = vsel %vm992, %v941, %v943
        %v998 = vsel %vm992, %v943, %v945
        %v999 = vsel %vm992, %v945, %v947
        %v1000 = vsel %vm992, %v947, %v949
        %v1001 = vsel %vm992, %v949, %v951
        %v1002 = vsel %vm992, %v953, %v955
        %v1003 = vsel %vm992, %v955, %v957
        %v1004 = vsel %vm992, %v957, %v959
        %v1005 = vsel %vm992, %v959, %v961
        %v1006 = vsel %vm992, %v961, %v963
        %v1007 = vsel %vm992, %v963, %v965
        %v1008 = vsel %vm992, %v965, %v967
        %v1009 = vsel %vm992, %v967, %v969
        %v1010 = vsel %vm992, %v969, %v971
        %v1011 = vsel %vm992, %v973, %v975
        %v1012 = vsel %vm992, %v975, %v977
        %v1013 = vsel %vm992, %v977, %v979
        %v1014 = vsel %vm992, %v979, %v981
        %v1015 = vsel %vm992, %v981, %v983
        %v1016 = vsel %vm992, %v983, %v985
        %v1017 = vsel %vm992, %v985, %v987
        %v1018 = vsel %vm992, %v987, %v989
        %v1019 = vsel %vm992, %v989, %v991
        %1047 = vrot.lane.b32.xlu0 %v445, 91
        %v1048 = vpop.permute.xlu0 %1047
        %1049 = vrot.lane.b32.xlu0 %v446, 91
        %v1050 = vpop.permute.xlu0 %1049
        %1051 = vrot.lane.b32.xlu0 %v447, 91
        %v1052 = vpop.permute.xlu0 %1051
        %1053 = vrot.lane.b32.xlu0 %v448, 91
        %v1054 = vpop.permute.xlu0 %1053
        %1055 = vrot.lane.b32.xlu0 %v449, 91
        %v1056 = vpop.permute.xlu0 %1055
        %1057 = vrot.lane.b32.xlu0 %v450, 91
        %v1058 = vpop.permute.xlu0 %1057
        %1059 = vrot.lane.b32.xlu0 %v451, 91
        %v1060 = vpop.permute.xlu0 %1059
        %1061 = vrot.lane.b32.xlu0 %v452, 91
        %v1062 = vpop.permute.xlu0 %1061
        %1063 = vrot.lane.b32.xlu0 %v453, 91
        %v1064 = vpop.permute.xlu0 %1063
        %1065 = vrot.lane.b32.xlu0 %v454, 91
        %v1066 = vpop.permute.xlu0 %1065
        %1067 = vrot.lane.b32.xlu0 %v456, 91
        %v1068 = vpop.permute.xlu0 %1067
        %1069 = vrot.lane.b32.xlu0 %v457, 91
        %v1070 = vpop.permute.xlu0 %1069
        %1071 = vrot.lane.b32.xlu0 %v458, 91
        %v1072 = vpop.permute.xlu0 %1071
        %1073 = vrot.lane.b32.xlu0 %v459, 91
        %v1074 = vpop.permute.xlu0 %1073
        %1075 = vrot.lane.b32.xlu0 %v460, 91
        %v1076 = vpop.permute.xlu0 %1075
        %1077 = vrot.lane.b32.xlu0 %v461, 91
        %v1078 = vpop.permute.xlu0 %1077
        %1079 = vrot.lane.b32.xlu0 %v462, 91
        %v1080 = vpop.permute.xlu0 %1079
        %1081 = vrot.lane.b32.xlu0 %v463, 91
        %v1082 = vpop.permute.xlu0 %1081
        %1083 = vrot.lane.b32.xlu0 %v464, 91
        %v1084 = vpop.permute.xlu0 %1083
        %1085 = vrot.lane.b32.xlu0 %v465, 91
        %v1086 = vpop.permute.xlu0 %1085
        %1087 = vrot.lane.b32.xlu0 %v467, 91
        %v1088 = vpop.permute.xlu0 %1087
        %1089 = vrot.lane.b32.xlu0 %v468, 91
        %v1090 = vpop.permute.xlu0 %1089
        %1091 = vrot.lane.b32.xlu0 %v469, 91
        %v1092 = vpop.permute.xlu0 %1091
        %1093 = vrot.lane.b32.xlu0 %v470, 91
        %v1094 = vpop.permute.xlu0 %1093
        %1095 = vrot.lane.b32.xlu0 %v471, 91
        %v1096 = vpop.permute.xlu0 %1095
        %1097 = vrot.lane.b32.xlu0 %v472, 91
        %v1098 = vpop.permute.xlu0 %1097
        %1099 = vrot.lane.b32.xlu0 %v473, 91
        %v1100 = vpop.permute.xlu0 %1099
        %1101 = vrot.lane.b32.xlu0 %v474, 91
        %v1102 = vpop.permute.xlu0 %1101
        %1103 = vrot.lane.b32.xlu0 %v475, 91
        %v1104 = vpop.permute.xlu0 %1103
        %1105 = vrot.lane.b32.xlu0 %v476, 91
        %v1106 = vpop.permute.xlu0 %1105
        %vm1107 = vcmask 744448
        %v1108 = vsel %vm1107, %v1048, %v1050
        %v1109 = vsel %vm1107, %v1050, %v1052
        %v1110 = vsel %vm1107, %v1052, %v1054
        %v1111 = vsel %vm1107, %v1054, %v1056
        %v1112 = vsel %vm1107, %v1056, %v1058
        %v1113 = vsel %vm1107, %v1058, %v1060
        %v1114 = vsel %vm1107, %v1060, %v1062
        %v1115 = vsel %vm1107, %v1062, %v1064
        %v1116 = vsel %vm1107, %v1064, %v1066
        %v1117 = vsel %vm1107, %v1068, %v1070
        %v1118 = vsel %vm1107, %v1070, %v1072
        %v1119 = vsel %vm1107, %v1072, %v1074
        %v1120 = vsel %vm1107, %v1074, %v1076
        %v1121 = vsel %vm1107, %v1076, %v1078
        %v1122 = vsel %vm1107, %v1078, %v1080
        %v1123 = vsel %vm1107, %v1080, %v1082
        %v1124 = vsel %vm1107, %v1082, %v1084
        %v1125 = vsel %vm1107, %v1084, %v1086
        %v1126 = vsel %vm1107, %v1088, %v1090
        %v1127 = vsel %vm1107, %v1090, %v1092
        %v1128 = vsel %vm1107, %v1092, %v1094
        %v1129 = vsel %vm1107, %v1094, %v1096
        %v1130 = vsel %vm1107, %v1096, %v1098
        %v1131 = vsel %vm1107, %v1098, %v1100
        %v1132 = vsel %vm1107, %v1100, %v1102
        %v1133 = vsel %vm1107, %v1102, %v1104
        %v1134 = vsel %vm1107, %v1104, %v1106
        %1162 = vrot.lane.b32.xlu0 %v445, 90
        %v1163 = vpop.permute.xlu0 %1162
        %1164 = vrot.lane.b32.xlu0 %v446, 90
        %v1165 = vpop.permute.xlu0 %1164
        %1166 = vrot.lane.b32.xlu0 %v447, 90
        %v1167 = vpop.permute.xlu0 %1166
        %1168 = vrot.lane.b32.xlu0 %v448, 90
        %v1169 = vpop.permute.xlu0 %1168
        %1170 = vrot.lane.b32.xlu0 %v449, 90
        %v1171 = vpop.permute.xlu0 %1170
        %1172 = vrot.lane.b32.xlu0 %v450, 90
        %v1173 = vpop.permute.xlu0 %1172
        %1174 = vrot.lane.b32.xlu0 %v451, 90
        %v1175 = vpop.permute.xlu0 %1174
        %1176 = vrot.lane.b32.xlu0 %v452, 90
        %v1177 = vpop.permute.xlu0 %1176
        %1178 = vrot.lane.b32.xlu0 %v453, 90
        %v1179 = vpop.permute.xlu0 %1178
        %1180 = vrot.lane.b32.xlu0 %v454, 90
        %v1181 = vpop.permute.xlu0 %1180
        %1182 = vrot.lane.b32.xlu0 %v456, 90
        %v1183 = vpop.permute.xlu0 %1182
        %1184 = vrot.lane.b32.xlu0 %v457, 90
        %v1185 = vpop.permute.xlu0 %1184
        %1186 = vrot.lane.b32.xlu0 %v458, 90
        %v1187 = vpop.permute.xlu0 %1186
        %1188 = vrot.lane.b32.xlu0 %v459, 90
        %v1189 = vpop.permute.xlu0 %1188
        %1190 = vrot.lane.b32.xlu0 %v460, 90
        %v1191 = vpop.permute.xlu0 %1190
        %1192 = vrot.lane.b32.xlu0 %v461, 90
        %v1193 = vpop.permute.xlu0 %1192
        %1194 = vrot.lane.b32.xlu0 %v462, 90
        %v1195 = vpop.permute.xlu0 %1194
        %1196 = vrot.lane.b32.xlu0 %v463, 90
        %v1197 = vpop.permute.xlu0 %1196
        %1198 = vrot.lane.b32.xlu0 %v464, 90
        %v1199 = vpop.permute.xlu0 %1198
        %1200 = vrot.lane.b32.xlu0 %v465, 90
        %v1201 = vpop.permute.xlu0 %1200
        %1202 = vrot.lane.b32.xlu0 %v467, 90
        %v1203 = vpop.permute.xlu0 %1202
        %1204 = vrot.lane.b32.xlu0 %v468, 90
        %v1205 = vpop.permute.xlu0 %1204
        %1206 = vrot.lane.b32.xlu0 %v469, 90
        %v1207 = vpop.permute.xlu0 %1206
        %1208 = vrot.lane.b32.xlu0 %v470, 90
        %v1209 = vpop.permute.xlu0 %1208
        %1210 = vrot.lane.b32.xlu0 %v471, 90
        %v1211 = vpop.permute.xlu0 %1210
        %1212 = vrot.lane.b32.xlu0 %v472, 90
        %v1213 = vpop.permute.xlu0 %1212
        %1214 = vrot.lane.b32.xlu0 %v473, 90
        %v1215 = vpop.permute.xlu0 %1214
        %1216 = vrot.lane.b32.xlu0 %v474, 90
        %v1217 = vpop.permute.xlu0 %1216
        %1218 = vrot.lane.b32.xlu0 %v475, 90
        %v1219 = vpop.permute.xlu0 %1218
        %1220 = vrot.lane.b32.xlu0 %v476, 90
        %v1221 = vpop.permute.xlu0 %1220
        %vm1222 = vcmask 736256
        %v1223 = vsel %vm1222, %v1163, %v1165
        %v1224 = vsel %vm1222, %v1165, %v1167
        %v1225 = vsel %vm1222, %v1167, %v1169
        %v1226 = vsel %vm1222, %v1169, %v1171
        %v1227 = vsel %vm1222, %v1171, %v1173
        %v1228 = vsel %vm1222, %v1173, %v1175
        %v1229 = vsel %vm1222, %v1175, %v1177
        %v1230 = vsel %vm1222, %v1177, %v1179
        %v1231 = vsel %vm1222, %v1179, %v1181
        %v1232 = vsel %vm1222, %v1183, %v1185
        %v1233 = vsel %vm1222, %v1185, %v1187
        %v1234 = vsel %vm1222, %v1187, %v1189
        %v1235 = vsel %vm1222, %v1189, %v1191
        %v1236 = vsel %vm1222, %v1191, %v1193
        %v1237 = vsel %vm1222, %v1193, %v1195
        %v1238 = vsel %vm1222, %v1195, %v1197
        %v1239 = vsel %vm1222, %v1197, %v1199
        %v1240 = vsel %vm1222, %v1199, %v1201
        %v1241 = vsel %vm1222, %v1203, %v1205
        %v1242 = vsel %vm1222, %v1205, %v1207
        %v1243 = vsel %vm1222, %v1207, %v1209
        %v1244 = vsel %vm1222, %v1209, %v1211
        %v1245 = vsel %vm1222, %v1211, %v1213
        %v1246 = vsel %vm1222, %v1213, %v1215
        %v1247 = vsel %vm1222, %v1215, %v1217
        %v1248 = vsel %vm1222, %v1217, %v1219
        %v1249 = vsel %vm1222, %v1219, %v1221
        %1277 = vrot.lane.b32.xlu0 %v445, 89
        %v1278 = vpop.permute.xlu0 %1277
        %1279 = vrot.lane.b32.xlu0 %v446, 89
        %v1280 = vpop.permute.xlu0 %1279
        %1281 = vrot.lane.b32.xlu0 %v447, 89
        %v1282 = vpop.permute.xlu0 %1281
        %1283 = vrot.lane.b32.xlu0 %v448, 89
        %v1284 = vpop.permute.xlu0 %1283
        %1285 = vrot.lane.b32.xlu0 %v449, 89
        %v1286 = vpop.permute.xlu0 %1285
        %1287 = vrot.lane.b32.xlu0 %v450, 89
        %v1288 = vpop.permute.xlu0 %1287
        %1289 = vrot.lane.b32.xlu0 %v451, 89
        %v1290 = vpop.permute.xlu0 %1289
        %1291 = vrot.lane.b32.xlu0 %v452, 89
        %v1292 = vpop.permute.xlu0 %1291
        %1293 = vrot.lane.b32.xlu0 %v453, 89
        %v1294 = vpop.permute.xlu0 %1293
        %1295 = vrot.lane.b32.xlu0 %v454, 89
        %v1296 = vpop.permute.xlu0 %1295
        %1297 = vrot.lane.b32.xlu0 %v456, 89
        %v1298 = vpop.permute.xlu0 %1297
        %1299 = vrot.lane.b32.xlu0 %v457, 89
        %v1300 = vpop.permute.xlu0 %1299
        %1301 = vrot.lane.b32.xlu0 %v458, 89
        %v1302 = vpop.permute.xlu0 %1301
        %1303 = vrot.lane.b32.xlu0 %v459, 89
        %v1304 = vpop.permute.xlu0 %1303
        %1305 = vrot.lane.b32.xlu0 %v460, 89
        %v1306 = vpop.permute.xlu0 %1305
        %1307 = vrot.lane.b32.xlu0 %v461, 89
        %v1308 = vpop.permute.xlu0 %1307
        %1309 = vrot.lane.b32.xlu0 %v462, 89
        %v1310 = vpop.permute.xlu0 %1309
        %1311 = vrot.lane.b32.xlu0 %v463, 89
        %v1312 = vpop.permute.xlu0 %1311
        %1313 = vrot.lane.b32.xlu0 %v464, 89
        %v1314 = vpop.permute.xlu0 %1313
        %1315 = vrot.lane.b32.xlu0 %v465, 89
        %v1316 = vpop.permute.xlu0 %1315
        %1317 = vrot.lane.b32.xlu0 %v467, 89
        %v1318 = vpop.permute.xlu0 %1317
        %1319 = vrot.lane.b32.xlu0 %v468, 89
        %v1320 = vpop.permute.xlu0 %1319
        %1321 = vrot.lane.b32.xlu0 %v469, 89
        %v1322 = vpop.permute.xlu0 %1321
        %1323 = vrot.lane.b32.xlu0 %v470, 89
        %v1324 = vpop.permute.xlu0 %1323
        %1325 = vrot.lane.b32.xlu0 %v471, 89
        %v1326 = vpop.permute.xlu0 %1325
        %1327 = vrot.lane.b32.xlu0 %v472, 89
        %v1328 = vpop.permute.xlu0 %1327
        %1329 = vrot.lane.b32.xlu0 %v473, 89
        %v1330 = vpop.permute.xlu0 %1329
        %1331 = vrot.lane.b32.xlu0 %v474, 89
        %v1332 = vpop.permute.xlu0 %1331
        %1333 = vrot.lane.b32.xlu0 %v475, 89
        %v1334 = vpop.permute.xlu0 %1333
        %1335 = vrot.lane.b32.xlu0 %v476, 89
        %v1336 = vpop.permute.xlu0 %1335
        %vm1337 = vcmask 728064
        %v1338 = vsel %vm1337, %v1278, %v1280
        %v1339 = vsel %vm1337, %v1280, %v1282
        %v1340 = vsel %vm1337, %v1282, %v1284
        %v1341 = vsel %vm1337, %v1284, %v1286
        %v1342 = vsel %vm1337, %v1286, %v1288
        %v1343 = vsel %vm1337, %v1288, %v1290
        %v1344 = vsel %vm1337, %v1290, %v1292
        %v1345 = vsel %vm1337, %v1292, %v1294
        %v1346 = vsel %vm1337, %v1294, %v1296
        %v1347 = vsel %vm1337, %v1298, %v1300
        %v1348 = vsel %vm1337, %v1300, %v1302
        %v1349 = vsel %vm1337, %v1302, %v1304
        %v1350 = vsel %vm1337, %v1304, %v1306
        %v1351 = vsel %vm1337, %v1306, %v1308
        %v1352 = vsel %vm1337, %v1308, %v1310
        %v1353 = vsel %vm1337, %v1310, %v1312
        %v1354 = vsel %vm1337, %v1312, %v1314
        %v1355 = vsel %vm1337, %v1314, %v1316
        %v1356 = vsel %vm1337, %v1318, %v1320
        %v1357 = vsel %vm1337, %v1320, %v1322
        %v1358 = vsel %vm1337, %v1322, %v1324
        %v1359 = vsel %vm1337, %v1324, %v1326
        %v1360 = vsel %vm1337, %v1326, %v1328
        %v1361 = vsel %vm1337, %v1328, %v1330
        %v1362 = vsel %vm1337, %v1330, %v1332
        %v1363 = vsel %vm1337, %v1332, %v1334
        %v1364 = vsel %vm1337, %v1334, %v1336
        %1392 = vrot.lane.b32.xlu0 %v445, 88
        %v1393 = vpop.permute.xlu0 %1392
        %1394 = vrot.lane.b32.xlu0 %v446, 88
        %v1395 = vpop.permute.xlu0 %1394
        %1396 = vrot.lane.b32.xlu0 %v447, 88
        %v1397 = vpop.permute.xlu0 %1396
        %1398 = vrot.lane.b32.xlu0 %v448, 88
        %v1399 = vpop.permute.xlu0 %1398
        %1400 = vrot.lane.b32.xlu0 %v449, 88
        %v1401 = vpop.permute.xlu0 %1400
        %1402 = vrot.lane.b32.xlu0 %v450, 88
        %v1403 = vpop.permute.xlu0 %1402
        %1404 = vrot.lane.b32.xlu0 %v451, 88
        %v1405 = vpop.permute.xlu0 %1404
        %1406 = vrot.lane.b32.xlu0 %v452, 88
        %v1407 = vpop.permute.xlu0 %1406
        %1408 = vrot.lane.b32.xlu0 %v453, 88
        %v1409 = vpop.permute.xlu0 %1408
        %1410 = vrot.lane.b32.xlu0 %v454, 88
        %v1411 = vpop.permute.xlu0 %1410
        %1412 = vrot.lane.b32.xlu0 %v456, 88
        %v1413 = vpop.permute.xlu0 %1412
        %1414 = vrot.lane.b32.xlu0 %v457, 88
        %v1415 = vpop.permute.xlu0 %1414
        %1416 = vrot.lane.b32.xlu0 %v458, 88
        %v1417 = vpop.permute.xlu0 %1416
        %1418 = vrot.lane.b32.xlu0 %v459, 88
        %v1419 = vpop.permute.xlu0 %1418
        %1420 = vrot.lane.b32.xlu0 %v460, 88
        %v1421 = vpop.permute.xlu0 %1420
        %1422 = vrot.lane.b32.xlu0 %v461, 88
        %v1423 = vpop.permute.xlu0 %1422
        %1424 = vrot.lane.b32.xlu0 %v462, 88
        %v1425 = vpop.permute.xlu0 %1424
        %1426 = vrot.lane.b32.xlu0 %v463, 88
        %v1427 = vpop.permute.xlu0 %1426
        %1428 = vrot.lane.b32.xlu0 %v464, 88
        %v1429 = vpop.permute.xlu0 %1428
        %1430 = vrot.lane.b32.xlu0 %v465, 88
        %v1431 = vpop.permute.xlu0 %1430
        %1432 = vrot.lane.b32.xlu0 %v467, 88
        %v1433 = vpop.permute.xlu0 %1432
        %1434 = vrot.lane.b32.xlu0 %v468, 88
        %v1435 = vpop.permute.xlu0 %1434
        %1436 = vrot.lane.b32.xlu0 %v469, 88
        %v1437 = vpop.permute.xlu0 %1436
        %1438 = vrot.lane.b32.xlu0 %v470, 88
        %v1439 = vpop.permute.xlu0 %1438
        %1440 = vrot.lane.b32.xlu0 %v471, 88
        %v1441 = vpop.permute.xlu0 %1440
        %1442 = vrot.lane.b32.xlu0 %v472, 88
        %v1443 = vpop.permute.xlu0 %1442
        %1444 = vrot.lane.b32.xlu0 %v473, 88
        %v1445 = vpop.permute.xlu0 %1444
        %1446 = vrot.lane.b32.xlu0 %v474, 88
        %v1447 = vpop.permute.xlu0 %1446
        %1448 = vrot.lane.b32.xlu0 %v475, 88
        %v1449 = vpop.permute.xlu0 %1448
        %1450 = vrot.lane.b32.xlu0 %v476, 88
        %v1451 = vpop.permute.xlu0 %1450
        %vm1452 = vcmask 719872
        %v1453 = vsel %vm1452, %v1393, %v1395
        %v1454 = vsel %vm1452, %v1395, %v1397
        %v1455 = vsel %vm1452, %v1397, %v1399
        %v1456 = vsel %vm1452, %v1399, %v1401
        %v1457 = vsel %vm1452, %v1401, %v1403
        %v1458 = vsel %vm1452, %v1403, %v1405
        %v1459 = vsel %vm1452, %v1405, %v1407
        %v1460 = vsel %vm1452, %v1407, %v1409
        %v1461 = vsel %vm1452, %v1409, %v1411
        %v1462 = vsel %vm1452, %v1413, %v1415
        %v1463 = vsel %vm1452, %v1415, %v1417
        %v1464 = vsel %vm1452, %v1417, %v1419
        %v1465 = vsel %vm1452, %v1419, %v1421
        %v1466 = vsel %vm1452, %v1421, %v1423
        %v1467 = vsel %vm1452, %v1423, %v1425
        %v1468 = vsel %vm1452, %v1425, %v1427
        %v1469 = vsel %vm1452, %v1427, %v1429
        %v1470 = vsel %vm1452, %v1429, %v1431
        %v1471 = vsel %vm1452, %v1433, %v1435
        %v1472 = vsel %vm1452, %v1435, %v1437
        %v1473 = vsel %vm1452, %v1437, %v1439
        %v1474 = vsel %vm1452, %v1439, %v1441
        %v1475 = vsel %vm1452, %v1441, %v1443
        %v1476 = vsel %vm1452, %v1443, %v1445
        %v1477 = vsel %vm1452, %v1445, %v1447
        %v1478 = vsel %vm1452, %v1447, %v1449
        %v1479 = vsel %vm1452, %v1449, %v1451
        %1507 = vrot.lane.b32.xlu0 %v445, 56
        %v1508 = vpop.permute.xlu0 %1507
        %1509 = vrot.lane.b32.xlu0 %v446, 56
        %v1510 = vpop.permute.xlu0 %1509
        %1511 = vrot.lane.b32.xlu0 %v447, 56
        %v1512 = vpop.permute.xlu0 %1511
        %1513 = vrot.lane.b32.xlu0 %v448, 56
        %v1514 = vpop.permute.xlu0 %1513
        %1515 = vrot.lane.b32.xlu0 %v449, 56
        %v1516 = vpop.permute.xlu0 %1515
        %1517 = vrot.lane.b32.xlu0 %v450, 56
        %v1518 = vpop.permute.xlu0 %1517
        %1519 = vrot.lane.b32.xlu0 %v451, 56
        %v1520 = vpop.permute.xlu0 %1519
        %1521 = vrot.lane.b32.xlu0 %v452, 56
        %v1522 = vpop.permute.xlu0 %1521
        %1523 = vrot.lane.b32.xlu0 %v453, 56
        %v1524 = vpop.permute.xlu0 %1523
        %1525 = vrot.lane.b32.xlu0 %v454, 56
        %v1526 = vpop.permute.xlu0 %1525
        %1527 = vrot.lane.b32.xlu0 %v456, 56
        %v1528 = vpop.permute.xlu0 %1527
        %1529 = vrot.lane.b32.xlu0 %v457, 56
        %v1530 = vpop.permute.xlu0 %1529
        %1531 = vrot.lane.b32.xlu0 %v458, 56
        %v1532 = vpop.permute.xlu0 %1531
        %1533 = vrot.lane.b32.xlu0 %v459, 56
        %v1534 = vpop.permute.xlu0 %1533
        %1535 = vrot.lane.b32.xlu0 %v460, 56
        %v1536 = vpop.permute.xlu0 %1535
        %1537 = vrot.lane.b32.xlu0 %v461, 56
        %v1538 = vpop.permute.xlu0 %1537
        %1539 = vrot.lane.b32.xlu0 %v462, 56
        %v1540 = vpop.permute.xlu0 %1539
        %1541 = vrot.lane.b32.xlu0 %v463, 56
        %v1542 = vpop.permute.xlu0 %1541
        %1543 = vrot.lane.b32.xlu0 %v464, 56
        %v1544 = vpop.permute.xlu0 %1543
        %1545 = vrot.lane.b32.xlu0 %v465, 56
        %v1546 = vpop.permute.xlu0 %1545
        %1547 = vrot.lane.b32.xlu0 %v467, 56
        %v1548 = vpop.permute.xlu0 %1547
        %1549 = vrot.lane.b32.xlu0 %v468, 56
        %v1550 = vpop.permute.xlu0 %1549
        %1551 = vrot.lane.b32.xlu0 %v469, 56
        %v1552 = vpop.permute.xlu0 %1551
        %1553 = vrot.lane.b32.xlu0 %v470, 56
        %v1554 = vpop.permute.xlu0 %1553
        %1555 = vrot.lane.b32.xlu0 %v471, 56
        %v1556 = vpop.permute.xlu0 %1555
        %1557 = vrot.lane.b32.xlu0 %v472, 56
        %v1558 = vpop.permute.xlu0 %1557
        %1559 = vrot.lane.b32.xlu0 %v473, 56
        %v1560 = vpop.permute.xlu0 %1559
        %1561 = vrot.lane.b32.xlu0 %v474, 56
        %v1562 = vpop.permute.xlu0 %1561
        %1563 = vrot.lane.b32.xlu0 %v475, 56
        %v1564 = vpop.permute.xlu0 %1563
        %1565 = vrot.lane.b32.xlu0 %v476, 56
        %v1566 = vpop.permute.xlu0 %1565
        %vm1567 = vcmask 457728
        %v1568 = vsel %vm1567, %v1508, %v1510
        %v1569 = vsel %vm1567, %v1510, %v1512
        %v1570 = vsel %vm1567, %v1512, %v1514
        %v1571 = vsel %vm1567, %v1514, %v1516
        %v1572 = vsel %vm1567, %v1516, %v1518
        %v1573 = vsel %vm1567, %v1518, %v1520
        %v1574 = vsel %vm1567, %v1520, %v1522
        %v1575 = vsel %vm1567, %v1522, %v1524
        %v1576 = vsel %vm1567, %v1524, %v1526
        %v1577 = vsel %vm1567, %v1528, %v1530
        %v1578 = vsel %vm1567, %v1530, %v1532
        %v1579 = vsel %vm1567, %v1532, %v1534
        %v1580 = vsel %vm1567, %v1534, %v1536
        %v1581 = vsel %vm1567, %v1536, %v1538
        %v1582 = vsel %vm1567, %v1538, %v1540
        %v1583 = vsel %vm1567, %v1540, %v1542
        %v1584 = vsel %vm1567, %v1542, %v1544
        %v1585 = vsel %vm1567, %v1544, %v1546
        %v1586 = vsel %vm1567, %v1548, %v1550
        %v1587 = vsel %vm1567, %v1550, %v1552
        %v1588 = vsel %vm1567, %v1552, %v1554
        %v1589 = vsel %vm1567, %v1554, %v1556
        %v1590 = vsel %vm1567, %v1556, %v1558
        %v1591 = vsel %vm1567, %v1558, %v1560
        %v1592 = vsel %vm1567, %v1560, %v1562
        %v1593 = vsel %vm1567, %v1562, %v1564
        %v1594 = vsel %vm1567, %v1564, %v1566
        %1622 = vrot.lane.b32.xlu0 %v445, 55
        %v1623 = vpop.permute.xlu0 %1622
        %1624 = vrot.lane.b32.xlu0 %v446, 55
        %v1625 = vpop.permute.xlu0 %1624
        %1626 = vrot.lane.b32.xlu0 %v447, 55
        %v1627 = vpop.permute.xlu0 %1626
        %1628 = vrot.lane.b32.xlu0 %v448, 55
        %v1629 = vpop.permute.xlu0 %1628
        %1630 = vrot.lane.b32.xlu0 %v449, 55
        %v1631 = vpop.permute.xlu0 %1630
        %1632 = vrot.lane.b32.xlu0 %v450, 55
        %v1633 = vpop.permute.xlu0 %1632
        %1634 = vrot.lane.b32.xlu0 %v451, 55
        %v1635 = vpop.permute.xlu0 %1634
        %1636 = vrot.lane.b32.xlu0 %v452, 55
        %v1637 = vpop.permute.xlu0 %1636
        %1638 = vrot.lane.b32.xlu0 %v453, 55
        %v1639 = vpop.permute.xlu0 %1638
        %1640 = vrot.lane.b32.xlu0 %v454, 55
        %v1641 = vpop.permute.xlu0 %1640
        %1642 = vrot.lane.b32.xlu0 %v456, 55
        %v1643 = vpop.permute.xlu0 %1642
        %1644 = vrot.lane.b32.xlu0 %v457, 55
        %v1645 = vpop.permute.xlu0 %1644
        %1646 = vrot.lane.b32.xlu0 %v458, 55
        %v1647 = vpop.permute.xlu0 %1646
        %1648 = vrot.lane.b32.xlu0 %v459, 55
        %v1649 = vpop.permute.xlu0 %1648
        %1650 = vrot.lane.b32.xlu0 %v460, 55
        %v1651 = vpop.permute.xlu0 %1650
        %1652 = vrot.lane.b32.xlu0 %v461, 55
        %v1653 = vpop.permute.xlu0 %1652
        %1654 = vrot.lane.b32.xlu0 %v462, 55
        %v1655 = vpop.permute.xlu0 %1654
        %1656 = vrot.lane.b32.xlu0 %v463, 55
        %v1657 = vpop.permute.xlu0 %1656
        %1658 = vrot.lane.b32.xlu0 %v464, 55
        %v1659 = vpop.permute.xlu0 %1658
        %1660 = vrot.lane.b32.xlu0 %v465, 55
        %v1661 = vpop.permute.xlu0 %1660
        %1662 = vrot.lane.b32.xlu0 %v467, 55
        %v1663 = vpop.permute.xlu0 %1662
        %1664 = vrot.lane.b32.xlu0 %v468, 55
        %v1665 = vpop.permute.xlu0 %1664
        %1666 = vrot.lane.b32.xlu0 %v469, 55
        %v1667 = vpop.permute.xlu0 %1666
        %1668 = vrot.lane.b32.xlu0 %v470, 55
        %v1669 = vpop.permute.xlu0 %1668
        %1670 = vrot.lane.b32.xlu0 %v471, 55
        %v1671 = vpop.permute.xlu0 %1670
        %1672 = vrot.lane.b32.xlu0 %v472, 55
        %v1673 = vpop.permute.xlu0 %1672
        %1674 = vrot.lane.b32.xlu0 %v473, 55
        %v1675 = vpop.permute.xlu0 %1674
        %1676 = vrot.lane.b32.xlu0 %v474, 55
        %v1677 = vpop.permute.xlu0 %1676
        %1678 = vrot.lane.b32.xlu0 %v475, 55
        %v1679 = vpop.permute.xlu0 %1678
        %1680 = vrot.lane.b32.xlu0 %v476, 55
        %v1681 = vpop.permute.xlu0 %1680
        %vm1682 = vcmask 449536
        %v1683 = vsel %vm1682, %v1623, %v1625
        %v1684 = vsel %vm1682, %v1625, %v1627
        %v1685 = vsel %vm1682, %v1627, %v1629
        %v1686 = vsel %vm1682, %v1629, %v1631
        %v1687 = vsel %vm1682, %v1631, %v1633
        %v1688 = vsel %vm1682, %v1633, %v1635
        %v1689 = vsel %vm1682, %v1635, %v1637
        %v1690 = vsel %vm1682, %v1637, %v1639
        %v1691 = vsel %vm1682, %v1639, %v1641
        %v1692 = vsel %vm1682, %v1643, %v1645
        %v1693 = vsel %vm1682, %v1645, %v1647
        %v1694 = vsel %vm1682, %v1647, %v1649
        %v1695 = vsel %vm1682, %v1649, %v1651
        %v1696 = vsel %vm1682, %v1651, %v1653
        %v1697 = vsel %vm1682, %v1653, %v1655
        %v1698 = vsel %vm1682, %v1655, %v1657
        %v1699 = vsel %vm1682, %v1657, %v1659
        %v1700 = vsel %vm1682, %v1659, %v1661
        %v1701 = vsel %vm1682, %v1663, %v1665
        %v1702 = vsel %vm1682, %v1665, %v1667
        %v1703 = vsel %vm1682, %v1667, %v1669
        %v1704 = vsel %vm1682, %v1669, %v1671
        %v1705 = vsel %vm1682, %v1671, %v1673
        %v1706 = vsel %vm1682, %v1673, %v1675
        %v1707 = vsel %vm1682, %v1675, %v1677
        %v1708 = vsel %vm1682, %v1677, %v1679
        %v1709 = vsel %vm1682, %v1679, %v1681
        %1737 = vrot.lane.b32.xlu0 %v445, 54
        %v1738 = vpop.permute.xlu0 %1737
        %1739 = vrot.lane.b32.xlu0 %v446, 54
        %v1740 = vpop.permute.xlu0 %1739
        %1741 = vrot.lane.b32.xlu0 %v447, 54
        %v1742 = vpop.permute.xlu0 %1741
        %1743 = vrot.lane.b32.xlu0 %v448, 54
        %v1744 = vpop.permute.xlu0 %1743
        %1745 = vrot.lane.b32.xlu0 %v449, 54
        %v1746 = vpop.permute.xlu0 %1745
        %1747 = vrot.lane.b32.xlu0 %v450, 54
        %v1748 = vpop.permute.xlu0 %1747
        %1749 = vrot.lane.b32.xlu0 %v451, 54
        %v1750 = vpop.permute.xlu0 %1749
        %1751 = vrot.lane.b32.xlu0 %v452, 54
        %v1752 = vpop.permute.xlu0 %1751
        %1753 = vrot.lane.b32.xlu0 %v453, 54
        %v1754 = vpop.permute.xlu0 %1753
        %1755 = vrot.lane.b32.xlu0 %v454, 54
        %v1756 = vpop.permute.xlu0 %1755
        %1757 = vrot.lane.b32.xlu0 %v456, 54
        %v1758 = vpop.permute.xlu0 %1757
        %1759 = vrot.lane.b32.xlu0 %v457, 54
        %v1760 = vpop.permute.xlu0 %1759
        %1761 = vrot.lane.b32.xlu0 %v458, 54
        %v1762 = vpop.permute.xlu0 %1761
        %1763 = vrot.lane.b32.xlu0 %v459, 54
        %v1764 = vpop.permute.xlu0 %1763
        %1765 = vrot.lane.b32.xlu0 %v460, 54
        %v1766 = vpop.permute.xlu0 %1765
        %1767 = vrot.lane.b32.xlu0 %v461, 54
        %v1768 = vpop.permute.xlu0 %1767
        %1769 = vrot.lane.b32.xlu0 %v462, 54
        %v1770 = vpop.permute.xlu0 %1769
        %1771 = vrot.lane.b32.xlu0 %v463, 54
        %v1772 = vpop.permute.xlu0 %1771
        %1773 = vrot.lane.b32.xlu0 %v464, 54
        %v1774 = vpop.permute.xlu0 %1773
        %1775 = vrot.lane.b32.xlu0 %v465, 54
        %v1776 = vpop.permute.xlu0 %1775
        %1777 = vrot.lane.b32.xlu0 %v467, 54
        %v1778 = vpop.permute.xlu0 %1777
        %1779 = vrot.lane.b32.xlu0 %v468, 54
        %v1780 = vpop.permute.xlu0 %1779
        %1781 = vrot.lane.b32.xlu0 %v469, 54
        %v1782 = vpop.permute.xlu0 %1781
        %1783 = vrot.lane.b32.xlu0 %v470, 54
        %v1784 = vpop.permute.xlu0 %1783
        %1785 = vrot.lane.b32.xlu0 %v471, 54
        %v1786 = vpop.permute.xlu0 %1785
        %1787 = vrot.lane.b32.xlu0 %v472, 54
        %v1788 = vpop.permute.xlu0 %1787
        %1789 = vrot.lane.b32.xlu0 %v473, 54
        %v1790 = vpop.permute.xlu0 %1789
        %1791 = vrot.lane.b32.xlu0 %v474, 54
        %v1792 = vpop.permute.xlu0 %1791
        %1793 = vrot.lane.b32.xlu0 %v475, 54
        %v1794 = vpop.permute.xlu0 %1793
        %1795 = vrot.lane.b32.xlu0 %v476, 54
        %v1796 = vpop.permute.xlu0 %1795
        %vm1797 = vcmask 441344
        %v1798 = vsel %vm1797, %v1738, %v1740
        %v1799 = vsel %vm1797, %v1740, %v1742
        %v1800 = vsel %vm1797, %v1742, %v1744
        %v1801 = vsel %vm1797, %v1744, %v1746
        %v1802 = vsel %vm1797, %v1746, %v1748
        %v1803 = vsel %vm1797, %v1748, %v1750
        %v1804 = vsel %vm1797, %v1750, %v1752
        %v1805 = vsel %vm1797, %v1752, %v1754
        %v1806 = vsel %vm1797, %v1754, %v1756
        %v1807 = vsel %vm1797, %v1758, %v1760
        %v1808 = vsel %vm1797, %v1760, %v1762
        %v1809 = vsel %vm1797, %v1762, %v1764
        %v1810 = vsel %vm1797, %v1764, %v1766
        %v1811 = vsel %vm1797, %v1766, %v1768
        %v1812 = vsel %vm1797, %v1768, %v1770
        %v1813 = vsel %vm1797, %v1770, %v1772
        %v1814 = vsel %vm1797, %v1772, %v1774
        %v1815 = vsel %vm1797, %v1774, %v1776
        %v1816 = vsel %vm1797, %v1778, %v1780
        %v1817 = vsel %vm1797, %v1780, %v1782
        %v1818 = vsel %vm1797, %v1782, %v1784
        %v1819 = vsel %vm1797, %v1784, %v1786
        %v1820 = vsel %vm1797, %v1786, %v1788
        %v1821 = vsel %vm1797, %v1788, %v1790
        %v1822 = vsel %vm1797, %v1790, %v1792
        %v1823 = vsel %vm1797, %v1792, %v1794
        %v1824 = vsel %vm1797, %v1794, %v1796
        %1852 = vrot.lane.b32.xlu0 %v445, 53
        %v1853 = vpop.permute.xlu0 %1852
        %1854 = vrot.lane.b32.xlu0 %v446, 53
        %v1855 = vpop.permute.xlu0 %1854
        %1856 = vrot.lane.b32.xlu0 %v447, 53
        %v1857 = vpop.permute.xlu0 %1856
        %1858 = vrot.lane.b32.xlu0 %v448, 53
        %v1859 = vpop.permute.xlu0 %1858
        %1860 = vrot.lane.b32.xlu0 %v449, 53
        %v1861 = vpop.permute.xlu0 %1860
        %1862 = vrot.lane.b32.xlu0 %v450, 53
        %v1863 = vpop.permute.xlu0 %1862
        %1864 = vrot.lane.b32.xlu0 %v451, 53
        %v1865 = vpop.permute.xlu0 %1864
        %1866 = vrot.lane.b32.xlu0 %v452, 53
        %v1867 = vpop.permute.xlu0 %1866
        %1868 = vrot.lane.b32.xlu0 %v453, 53
        %v1869 = vpop.permute.xlu0 %1868
        %1870 = vrot.lane.b32.xlu0 %v454, 53
        %v1871 = vpop.permute.xlu0 %1870
        %1872 = vrot.lane.b32.xlu0 %v456, 53
        %v1873 = vpop.permute.xlu0 %1872
        %1874 = vrot.lane.b32.xlu0 %v457, 53
        %v1875 = vpop.permute.xlu0 %1874
        %1876 = vrot.lane.b32.xlu0 %v458, 53
        %v1877 = vpop.permute.xlu0 %1876
        %1878 = vrot.lane.b32.xlu0 %v459, 53
        %v1879 = vpop.permute.xlu0 %1878
        %1880 = vrot.lane.b32.xlu0 %v460, 53
        %v1881 = vpop.permute.xlu0 %1880
        %1882 = vrot.lane.b32.xlu0 %v461, 53
        %v1883 = vpop.permute.xlu0 %1882
        %1884 = vrot.lane.b32.xlu0 %v462, 53
        %v1885 = vpop.permute.xlu0 %1884
        %1886 = vrot.lane.b32.xlu0 %v463, 53
        %v1887 = vpop.permute.xlu0 %1886
        %1888 = vrot.lane.b32.xlu0 %v464, 53
        %v1889 = vpop.permute.xlu0 %1888
        %1890 = vrot.lane.b32.xlu0 %v465, 53
        %v1891 = vpop.permute.xlu0 %1890
        %1892 = vrot.lane.b32.xlu0 %v467, 53
        %v1893 = vpop.permute.xlu0 %1892
        %1894 = vrot.lane.b32.xlu0 %v468, 53
        %v1895 = vpop.permute.xlu0 %1894
        %1896 = vrot.lane.b32.xlu0 %v469, 53
        %v1897 = vpop.permute.xlu0 %1896
        %1898 = vrot.lane.b32.xlu0 %v470, 53
        %v1899 = vpop.permute.xlu0 %1898
        %1900 = vrot.lane.b32.xlu0 %v471, 53
        %v1901 = vpop.permute.xlu0 %1900
        %1902 = vrot.lane.b32.xlu0 %v472, 53
        %v1903 = vpop.permute.xlu0 %1902
        %1904 = vrot.lane.b32.xlu0 %v473, 53
        %v1905 = vpop.permute.xlu0 %1904
        %1906 = vrot.lane.b32.xlu0 %v474, 53
        %v1907 = vpop.permute.xlu0 %1906
        %1908 = vrot.lane.b32.xlu0 %v475, 53
        %v1909 = vpop.permute.xlu0 %1908
        %1910 = vrot.lane.b32.xlu0 %v476, 53
        %v1911 = vpop.permute.xlu0 %1910
        %vm1912 = vcmask 433152
        %v1913 = vsel %vm1912, %v1853, %v1855
        %v1914 = vsel %vm1912, %v1855, %v1857
        %v1915 = vsel %vm1912, %v1857, %v1859
        %v1916 = vsel %vm1912, %v1859, %v1861
        %v1917 = vsel %vm1912, %v1861, %v1863
        %v1918 = vsel %vm1912, %v1863, %v1865
        %v1919 = vsel %vm1912, %v1865, %v1867
        %v1920 = vsel %vm1912, %v1867, %v1869
        %v1921 = vsel %vm1912, %v1869, %v1871
        %v1922 = vsel %vm1912, %v1873, %v1875
        %v1923 = vsel %vm1912, %v1875, %v1877
        %v1924 = vsel %vm1912, %v1877, %v1879
        %v1925 = vsel %vm1912, %v1879, %v1881
        %v1926 = vsel %vm1912, %v1881, %v1883
        %v1927 = vsel %vm1912, %v1883, %v1885
        %v1928 = vsel %vm1912, %v1885, %v1887
        %v1929 = vsel %vm1912, %v1887, %v1889
        %v1930 = vsel %vm1912, %v1889, %v1891
        %v1931 = vsel %vm1912, %v1893, %v1895
        %v1932 = vsel %vm1912, %v1895, %v1897
        %v1933 = vsel %vm1912, %v1897, %v1899
        %v1934 = vsel %vm1912, %v1899, %v1901
        %v1935 = vsel %vm1912, %v1901, %v1903
        %v1936 = vsel %vm1912, %v1903, %v1905
        %v1937 = vsel %vm1912, %v1905, %v1907
        %v1938 = vsel %vm1912, %v1907, %v1909
        %v1939 = vsel %vm1912, %v1909, %v1911
        %1967 = vrot.lane.b32.xlu0 %v445, 52
        %v1968 = vpop.permute.xlu0 %1967
        %1969 = vrot.lane.b32.xlu0 %v446, 52
        %v1970 = vpop.permute.xlu0 %1969
        %1971 = vrot.lane.b32.xlu0 %v447, 52
        %v1972 = vpop.permute.xlu0 %1971
        %1973 = vrot.lane.b32.xlu0 %v448, 52
        %v1974 = vpop.permute.xlu0 %1973
        %1975 = vrot.lane.b32.xlu0 %v449, 52
        %v1976 = vpop.permute.xlu0 %1975
        %1977 = vrot.lane.b32.xlu0 %v450, 52
        %v1978 = vpop.permute.xlu0 %1977
        %1979 = vrot.lane.b32.xlu0 %v451, 52
        %v1980 = vpop.permute.xlu0 %1979
        %1981 = vrot.lane.b32.xlu0 %v452, 52
        %v1982 = vpop.permute.xlu0 %1981
        %1983 = vrot.lane.b32.xlu0 %v453, 52
        %v1984 = vpop.permute.xlu0 %1983
        %1985 = vrot.lane.b32.xlu0 %v454, 52
        %v1986 = vpop.permute.xlu0 %1985
        %1987 = vrot.lane.b32.xlu0 %v456, 52
        %v1988 = vpop.permute.xlu0 %1987
        %1989 = vrot.lane.b32.xlu0 %v457, 52
        %v1990 = vpop.permute.xlu0 %1989
        %1991 = vrot.lane.b32.xlu0 %v458, 52
        %v1992 = vpop.permute.xlu0 %1991
        %1993 = vrot.lane.b32.xlu0 %v459, 52
        %v1994 = vpop.permute.xlu0 %1993
        %1995 = vrot.lane.b32.xlu0 %v460, 52
        %v1996 = vpop.permute.xlu0 %1995
        %1997 = vrot.lane.b32.xlu0 %v461, 52
        %v1998 = vpop.permute.xlu0 %1997
        %1999 = vrot.lane.b32.xlu0 %v462, 52
        %v2000 = vpop.permute.xlu0 %1999
        %2001 = vrot.lane.b32.xlu0 %v463, 52
        %v2002 = vpop.permute.xlu0 %2001
        %2003 = vrot.lane.b32.xlu0 %v464, 52
        %v2004 = vpop.permute.xlu0 %2003
        %2005 = vrot.lane.b32.xlu0 %v465, 52
        %v2006 = vpop.permute.xlu0 %2005
        %2007 = vrot.lane.b32.xlu0 %v467, 52
        %v2008 = vpop.permute.xlu0 %2007
        %2009 = vrot.lane.b32.xlu0 %v468, 52
        %v2010 = vpop.permute.xlu0 %2009
        %2011 = vrot.lane.b32.xlu0 %v469, 52
        %v2012 = vpop.permute.xlu0 %2011
        %2013 = vrot.lane.b32.xlu0 %v470, 52
        %v2014 = vpop.permute.xlu0 %2013
        %2015 = vrot.lane.b32.xlu0 %v471, 52
        %v2016 = vpop.permute.xlu0 %2015
        %2017 = vrot.lane.b32.xlu0 %v472, 52
        %v2018 = vpop.permute.xlu0 %2017
        %2019 = vrot.lane.b32.xlu0 %v473, 52
        %v2020 = vpop.permute.xlu0 %2019
        %2021 = vrot.lane.b32.xlu0 %v474, 52
        %v2022 = vpop.permute.xlu0 %2021
        %2023 = vrot.lane.b32.xlu0 %v475, 52
        %v2024 = vpop.permute.xlu0 %2023
        %2025 = vrot.lane.b32.xlu0 %v476, 52
        %v2026 = vpop.permute.xlu0 %2025
        %vm2027 = vcmask 424960
        %v2028 = vsel %vm2027, %v1968, %v1970
        %v2029 = vsel %vm2027, %v1970, %v1972
        %v2030 = vsel %vm2027, %v1972, %v1974
        %v2031 = vsel %vm2027, %v1974, %v1976
        %v2032 = vsel %vm2027, %v1976, %v1978
        %v2033 = vsel %vm2027, %v1978, %v1980
        %v2034 = vsel %vm2027, %v1980, %v1982
        %v2035 = vsel %vm2027, %v1982, %v1984
        %v2036 = vsel %vm2027, %v1984, %v1986
        %v2037 = vsel %vm2027, %v1988, %v1990
        %v2038 = vsel %vm2027, %v1990, %v1992
        %v2039 = vsel %vm2027, %v1992, %v1994
        %v2040 = vsel %vm2027, %v1994, %v1996
        %v2041 = vsel %vm2027, %v1996, %v1998
        %v2042 = vsel %vm2027, %v1998, %v2000
        %v2043 = vsel %vm2027, %v2000, %v2002
        %v2044 = vsel %vm2027, %v2002, %v2004
        %v2045 = vsel %vm2027, %v2004, %v2006
        %v2046 = vsel %vm2027, %v2008, %v2010
        %v2047 = vsel %vm2027, %v2010, %v2012
        %v2048 = vsel %vm2027, %v2012, %v2014
        %v2049 = vsel %vm2027, %v2014, %v2016
        %v2050 = vsel %vm2027, %v2016, %v2018
        %v2051 = vsel %vm2027, %v2018, %v2020
        %v2052 = vsel %vm2027, %v2020, %v2022
        %v2053 = vsel %vm2027, %v2022, %v2024
        %v2054 = vsel %vm2027, %v2024, %v2026
        %2082 = vrot.lane.b32.xlu0 %v445, 20
        %v2083 = vpop.permute.xlu0 %2082
        %2084 = vrot.lane.b32.xlu0 %v446, 20
        %v2085 = vpop.permute.xlu0 %2084
        %2086 = vrot.lane.b32.xlu0 %v447, 20
        %v2087 = vpop.permute.xlu0 %2086
        %2088 = vrot.lane.b32.xlu0 %v448, 20
        %v2089 = vpop.permute.xlu0 %2088
        %2090 = vrot.lane.b32.xlu0 %v449, 20
        %v2091 = vpop.permute.xlu0 %2090
        %2092 = vrot.lane.b32.xlu0 %v450, 20
        %v2093 = vpop.permute.xlu0 %2092
        %2094 = vrot.lane.b32.xlu0 %v451, 20
        %v2095 = vpop.permute.xlu0 %2094
        %2096 = vrot.lane.b32.xlu0 %v452, 20
        %v2097 = vpop.permute.xlu0 %2096
        %2098 = vrot.lane.b32.xlu0 %v453, 20
        %v2099 = vpop.permute.xlu0 %2098
        %2100 = vrot.lane.b32.xlu0 %v454, 20
        %v2101 = vpop.permute.xlu0 %2100
        %2102 = vrot.lane.b32.xlu0 %v456, 20
        %v2103 = vpop.permute.xlu0 %2102
        %2104 = vrot.lane.b32.xlu0 %v457, 20
        %v2105 = vpop.permute.xlu0 %2104
        %2106 = vrot.lane.b32.xlu0 %v458, 20
        %v2107 = vpop.permute.xlu0 %2106
        %2108 = vrot.lane.b32.xlu0 %v459, 20
        %v2109 = vpop.permute.xlu0 %2108
        %2110 = vrot.lane.b32.xlu0 %v460, 20
        %v2111 = vpop.permute.xlu0 %2110
        %2112 = vrot.lane.b32.xlu0 %v461, 20
        %v2113 = vpop.permute.xlu0 %2112
        %2114 = vrot.lane.b32.xlu0 %v462, 20
        %v2115 = vpop.permute.xlu0 %2114
        %2116 = vrot.lane.b32.xlu0 %v463, 20
        %v2117 = vpop.permute.xlu0 %2116
        %2118 = vrot.lane.b32.xlu0 %v464, 20
        %v2119 = vpop.permute.xlu0 %2118
        %2120 = vrot.lane.b32.xlu0 %v465, 20
        %v2121 = vpop.permute.xlu0 %2120
        %2122 = vrot.lane.b32.xlu0 %v467, 20
        %v2123 = vpop.permute.xlu0 %2122
        %2124 = vrot.lane.b32.xlu0 %v468, 20
        %v2125 = vpop.permute.xlu0 %2124
        %2126 = vrot.lane.b32.xlu0 %v469, 20
        %v2127 = vpop.permute.xlu0 %2126
        %2128 = vrot.lane.b32.xlu0 %v470, 20
        %v2129 = vpop.permute.xlu0 %2128
        %2130 = vrot.lane.b32.xlu0 %v471, 20
        %v2131 = vpop.permute.xlu0 %2130
        %2132 = vrot.lane.b32.xlu0 %v472, 20
        %v2133 = vpop.permute.xlu0 %2132
        %2134 = vrot.lane.b32.xlu0 %v473, 20
        %v2135 = vpop.permute.xlu0 %2134
        %2136 = vrot.lane.b32.xlu0 %v474, 20
        %v2137 = vpop.permute.xlu0 %2136
        %2138 = vrot.lane.b32.xlu0 %v475, 20
        %v2139 = vpop.permute.xlu0 %2138
        %2140 = vrot.lane.b32.xlu0 %v476, 20
        %v2141 = vpop.permute.xlu0 %2140
        %vm2142 = vcmask 162816
        %v2143 = vsel %vm2142, %v2083, %v2085
        %v2144 = vsel %vm2142, %v2085, %v2087
        %v2145 = vsel %vm2142, %v2087, %v2089
        %v2146 = vsel %vm2142, %v2089, %v2091
        %v2147 = vsel %vm2142, %v2091, %v2093
        %v2148 = vsel %vm2142, %v2093, %v2095
        %v2149 = vsel %vm2142, %v2095, %v2097
        %v2150 = vsel %vm2142, %v2097, %v2099
        %v2151 = vsel %vm2142, %v2099, %v2101
        %v2152 = vsel %vm2142, %v2103, %v2105
        %v2153 = vsel %vm2142, %v2105, %v2107
        %v2154 = vsel %vm2142, %v2107, %v2109
        %v2155 = vsel %vm2142, %v2109, %v2111
        %v2156 = vsel %vm2142, %v2111, %v2113
        %v2157 = vsel %vm2142, %v2113, %v2115
        %v2158 = vsel %vm2142, %v2115, %v2117
        %v2159 = vsel %vm2142, %v2117, %v2119
        %v2160 = vsel %vm2142, %v2119, %v2121
        %v2161 = vsel %vm2142, %v2123, %v2125
        %v2162 = vsel %vm2142, %v2125, %v2127
        %v2163 = vsel %vm2142, %v2127, %v2129
        %v2164 = vsel %vm2142, %v2129, %v2131
        %v2165 = vsel %vm2142, %v2131, %v2133
        %v2166 = vsel %vm2142, %v2133, %v2135
        %v2167 = vsel %vm2142, %v2135, %v2137
        %v2168 = vsel %vm2142, %v2137, %v2139
        %v2169 = vsel %vm2142, %v2139, %v2141
        %2197 = vrot.lane.b32.xlu0 %v454, 127
        %v2198 = vpop.permute.xlu0 %2197
        %2199 = vrot.lane.b32.xlu0 %v465, 127
        %v2200 = vpop.permute.xlu0 %2199
        %2201 = vrot.lane.b32.xlu0 %v476, 127
        %v2202 = vpop.permute.xlu0 %2201
        %v2203 = vsel %vm559, %v522, %v2198
        %v2204 = vsel %vm559, %v540, %v2200
        %v2205 = vsel %vm559, %v558, %v2202
        %2206 = vrot.lane.b32.xlu0 %v454, 126
        %v2207 = vpop.permute.xlu0 %2206
        %2208 = vrot.lane.b32.xlu0 %v465, 126
        %v2209 = vpop.permute.xlu0 %2208
        %2210 = vrot.lane.b32.xlu0 %v476, 126
        %v2211 = vpop.permute.xlu0 %2210
        %v2212 = vsel %vm665, %v628, %v2207
        %v2213 = vsel %vm665, %v646, %v2209
        %v2214 = vsel %vm665, %v664, %v2211
        %2215 = vrot.lane.b32.xlu0 %v454, 125
        %v2216 = vpop.permute.xlu0 %2215
        %2217 = vrot.lane.b32.xlu0 %v465, 125
        %v2218 = vpop.permute.xlu0 %2217
        %2219 = vrot.lane.b32.xlu0 %v476, 125
        %v2220 = vpop.permute.xlu0 %2219
        %v2221 = vsel %vm771, %v734, %v2216
        %v2222 = vsel %vm771, %v752, %v2218
        %v2223 = vsel %vm771, %v770, %v2220
        %2227 = vrot.lane.b32.xlu0 %v446, 93
        %v2228 = vpop.permute.xlu0 %2227
        %2229 = vrot.lane.b32.xlu0 %v447, 93
        %v2230 = vpop.permute.xlu0 %2229
        %2231 = vrot.lane.b32.xlu0 %v448, 93
        %v2232 = vpop.permute.xlu0 %2231
        %2233 = vrot.lane.b32.xlu0 %v449, 93
        %v2234 = vpop.permute.xlu0 %2233
        %2235 = vrot.lane.b32.xlu0 %v450, 93
        %v2236 = vpop.permute.xlu0 %2235
        %2237 = vrot.lane.b32.xlu0 %v451, 93
        %v2238 = vpop.permute.xlu0 %2237
        %2239 = vrot.lane.b32.xlu0 %v452, 93
        %v2240 = vpop.permute.xlu0 %2239
        %2241 = vrot.lane.b32.xlu0 %v453, 93
        %v2242 = vpop.permute.xlu0 %2241
        %2243 = vrot.lane.b32.xlu0 %v454, 93
        %v2244 = vpop.permute.xlu0 %2243
        %2245 = vrot.lane.b32.xlu0 %v455, 93
        %v2246 = vpop.permute.xlu0 %2245
        %2247 = vrot.lane.b32.xlu0 %v457, 93
        %v2248 = vpop.permute.xlu0 %2247
        %2249 = vrot.lane.b32.xlu0 %v458, 93
        %v2250 = vpop.permute.xlu0 %2249
        %2251 = vrot.lane.b32.xlu0 %v459, 93
        %v2252 = vpop.permute.xlu0 %2251
        %2253 = vrot.lane.b32.xlu0 %v460, 93
        %v2254 = vpop.permute.xlu0 %2253
        %2255 = vrot.lane.b32.xlu0 %v461, 93
        %v2256 = vpop.permute.xlu0 %2255
        %2257 = vrot.lane.b32.xlu0 %v462, 93
        %v2258 = vpop.permute.xlu0 %2257
        %2259 = vrot.lane.b32.xlu0 %v463, 93
        %v2260 = vpop.permute.xlu0 %2259
        %2261 = vrot.lane.b32.xlu0 %v464, 93
        %v2262 = vpop.permute.xlu0 %2261
        %2263 = vrot.lane.b32.xlu0 %v465, 93
        %v2264 = vpop.permute.xlu0 %2263
        %2265 = vrot.lane.b32.xlu0 %v466, 93
        %v2266 = vpop.permute.xlu0 %2265
        %2267 = vrot.lane.b32.xlu0 %v468, 93
        %v2268 = vpop.permute.xlu0 %2267
        %2269 = vrot.lane.b32.xlu0 %v469, 93
        %v2270 = vpop.permute.xlu0 %2269
        %2271 = vrot.lane.b32.xlu0 %v470, 93
        %v2272 = vpop.permute.xlu0 %2271
        %2273 = vrot.lane.b32.xlu0 %v471, 93
        %v2274 = vpop.permute.xlu0 %2273
        %2275 = vrot.lane.b32.xlu0 %v472, 93
        %v2276 = vpop.permute.xlu0 %2275
        %2277 = vrot.lane.b32.xlu0 %v473, 93
        %v2278 = vpop.permute.xlu0 %2277
        %2279 = vrot.lane.b32.xlu0 %v474, 93
        %v2280 = vpop.permute.xlu0 %2279
        %2281 = vrot.lane.b32.xlu0 %v475, 93
        %v2282 = vpop.permute.xlu0 %2281
        %2283 = vrot.lane.b32.xlu0 %v476, 93
        %v2284 = vpop.permute.xlu0 %2283
        %2285 = vrot.lane.b32.xlu0 %v477, 93
        %v2286 = vpop.permute.xlu0 %2285
        %vm2287 = vcmask 760832
        %v2288 = vsel %vm2287, %v2228, %v2230
        %v2289 = vsel %vm2287, %v2230, %v2232
        %v2290 = vsel %vm2287, %v2232, %v2234
        %v2291 = vsel %vm2287, %v2234, %v2236
        %v2292 = vsel %vm2287, %v2236, %v2238
        %v2293 = vsel %vm2287, %v2238, %v2240
        %v2294 = vsel %vm2287, %v2240, %v2242
        %v2295 = vsel %vm2287, %v2242, %v2244
        %v2296 = vsel %vm2287, %v2244, %v2246
        %v2297 = vsel %vm2287, %v2248, %v2250
        %v2298 = vsel %vm2287, %v2250, %v2252
        %v2299 = vsel %vm2287, %v2252, %v2254
        %v2300 = vsel %vm2287, %v2254, %v2256
        %v2301 = vsel %vm2287, %v2256, %v2258
        %v2302 = vsel %vm2287, %v2258, %v2260
        %v2303 = vsel %vm2287, %v2260, %v2262
        %v2304 = vsel %vm2287, %v2262, %v2264
        %v2305 = vsel %vm2287, %v2264, %v2266
        %v2306 = vsel %vm2287, %v2268, %v2270
        %v2307 = vsel %vm2287, %v2270, %v2272
        %v2308 = vsel %vm2287, %v2272, %v2274
        %v2309 = vsel %vm2287, %v2274, %v2276
        %v2310 = vsel %vm2287, %v2276, %v2278
        %v2311 = vsel %vm2287, %v2278, %v2280
        %v2312 = vsel %vm2287, %v2280, %v2282
        %v2313 = vsel %vm2287, %v2282, %v2284
        %v2314 = vsel %vm2287, %v2284, %v2286
        %2315 = vrot.lane.b32.xlu0 %v455, 92
        %v2316 = vpop.permute.xlu0 %2315
        %2317 = vrot.lane.b32.xlu0 %v466, 92
        %v2318 = vpop.permute.xlu0 %2317
        %2319 = vrot.lane.b32.xlu0 %v477, 92
        %v2320 = vpop.permute.xlu0 %2319
        %v2321 = vsel %vm992, %v951, %v2316
        %v2322 = vsel %vm992, %v971, %v2318
        %v2323 = vsel %vm992, %v991, %v2320
        %2324 = vrot.lane.b32.xlu0 %v455, 91
        %v2325 = vpop.permute.xlu0 %2324
        %2326 = vrot.lane.b32.xlu0 %v466, 91
        %v2327 = vpop.permute.xlu0 %2326
        %2328 = vrot.lane.b32.xlu0 %v477, 91
        %v2329 = vpop.permute.xlu0 %2328
        %v2330 = vsel %vm1107, %v1066, %v2325
        %v2331 = vsel %vm1107, %v1086, %v2327
        %v2332 = vsel %vm1107, %v1106, %v2329
        %2333 = vrot.lane.b32.xlu0 %v455, 90
        %v2334 = vpop.permute.xlu0 %2333
        %2335 = vrot.lane.b32.xlu0 %v466, 90
        %v2336 = vpop.permute.xlu0 %2335
        %2337 = vrot.lane.b32.xlu0 %v477, 90
        %v2338 = vpop.permute.xlu0 %2337
        %v2339 = vsel %vm1222, %v1181, %v2334
        %v2340 = vsel %vm1222, %v1201, %v2336
        %v2341 = vsel %vm1222, %v1221, %v2338
        %2342 = vrot.lane.b32.xlu0 %v455, 89
        %v2343 = vpop.permute.xlu0 %2342
        %2344 = vrot.lane.b32.xlu0 %v466, 89
        %v2345 = vpop.permute.xlu0 %2344
        %2346 = vrot.lane.b32.xlu0 %v477, 89
        %v2347 = vpop.permute.xlu0 %2346
        %v2348 = vsel %vm1337, %v1296, %v2343
        %v2349 = vsel %vm1337, %v1316, %v2345
        %v2350 = vsel %vm1337, %v1336, %v2347
        %2351 = vrot.lane.b32.xlu0 %v445, 19
        %v2352 = vpop.permute.xlu0 %2351
        %2353 = vrot.lane.b32.xlu0 %v446, 19
        %v2354 = vpop.permute.xlu0 %2353
        %2355 = vrot.lane.b32.xlu0 %v447, 19
        %v2356 = vpop.permute.xlu0 %2355
        %2357 = vrot.lane.b32.xlu0 %v448, 19
        %v2358 = vpop.permute.xlu0 %2357
        %2359 = vrot.lane.b32.xlu0 %v449, 19
        %v2360 = vpop.permute.xlu0 %2359
        %2361 = vrot.lane.b32.xlu0 %v450, 19
        %v2362 = vpop.permute.xlu0 %2361
        %2363 = vrot.lane.b32.xlu0 %v451, 19
        %v2364 = vpop.permute.xlu0 %2363
        %2365 = vrot.lane.b32.xlu0 %v452, 19
        %v2366 = vpop.permute.xlu0 %2365
        %2367 = vrot.lane.b32.xlu0 %v453, 19
        %v2368 = vpop.permute.xlu0 %2367
        %2369 = vrot.lane.b32.xlu0 %v454, 19
        %v2370 = vpop.permute.xlu0 %2369
        %2371 = vrot.lane.b32.xlu0 %v456, 19
        %v2372 = vpop.permute.xlu0 %2371
        %2373 = vrot.lane.b32.xlu0 %v457, 19
        %v2374 = vpop.permute.xlu0 %2373
        %2375 = vrot.lane.b32.xlu0 %v458, 19
        %v2376 = vpop.permute.xlu0 %2375
        %2377 = vrot.lane.b32.xlu0 %v459, 19
        %v2378 = vpop.permute.xlu0 %2377
        %2379 = vrot.lane.b32.xlu0 %v460, 19
        %v2380 = vpop.permute.xlu0 %2379
        %2381 = vrot.lane.b32.xlu0 %v461, 19
        %v2382 = vpop.permute.xlu0 %2381
        %2383 = vrot.lane.b32.xlu0 %v462, 19
        %v2384 = vpop.permute.xlu0 %2383
        %2385 = vrot.lane.b32.xlu0 %v463, 19
        %v2386 = vpop.permute.xlu0 %2385
        %2387 = vrot.lane.b32.xlu0 %v464, 19
        %v2388 = vpop.permute.xlu0 %2387
        %2389 = vrot.lane.b32.xlu0 %v465, 19
        %v2390 = vpop.permute.xlu0 %2389
        %2391 = vrot.lane.b32.xlu0 %v467, 19
        %v2392 = vpop.permute.xlu0 %2391
        %2393 = vrot.lane.b32.xlu0 %v468, 19
        %v2394 = vpop.permute.xlu0 %2393
        %2395 = vrot.lane.b32.xlu0 %v469, 19
        %v2396 = vpop.permute.xlu0 %2395
        %2397 = vrot.lane.b32.xlu0 %v470, 19
        %v2398 = vpop.permute.xlu0 %2397
        %2399 = vrot.lane.b32.xlu0 %v471, 19
        %v2400 = vpop.permute.xlu0 %2399
        %2401 = vrot.lane.b32.xlu0 %v472, 19
        %v2402 = vpop.permute.xlu0 %2401
        %2403 = vrot.lane.b32.xlu0 %v473, 19
        %v2404 = vpop.permute.xlu0 %2403
        %2405 = vrot.lane.b32.xlu0 %v474, 19
        %v2406 = vpop.permute.xlu0 %2405
        %2407 = vrot.lane.b32.xlu0 %v475, 19
        %v2408 = vpop.permute.xlu0 %2407
        %2409 = vrot.lane.b32.xlu0 %v476, 19
        %v2410 = vpop.permute.xlu0 %2409
        %2411 = vrot.lane.b32.xlu0 %v560, 19
        %v2412 = vpop.permute.xlu0 %2411
        %2413 = vrot.lane.b32.xlu0 %v561, 19
        %v2414 = vpop.permute.xlu0 %2413
        %2415 = vrot.lane.b32.xlu0 %v562, 19
        %v2416 = vpop.permute.xlu0 %2415
        %2417 = vrot.lane.b32.xlu0 %v563, 19
        %v2418 = vpop.permute.xlu0 %2417
        %2419 = vrot.lane.b32.xlu0 %v564, 19
        %v2420 = vpop.permute.xlu0 %2419
        %2421 = vrot.lane.b32.xlu0 %v565, 19
        %v2422 = vpop.permute.xlu0 %2421
        %2423 = vrot.lane.b32.xlu0 %v566, 19
        %v2424 = vpop.permute.xlu0 %2423
        %2425 = vrot.lane.b32.xlu0 %v567, 19
        %v2426 = vpop.permute.xlu0 %2425
        %2427 = vrot.lane.b32.xlu0 %v2203, 19
        %v2428 = vpop.permute.xlu0 %2427
        %2429 = vrot.lane.b32.xlu0 %v2198, 19
        %v2430 = vpop.permute.xlu0 %2429
        %2431 = vrot.lane.b32.xlu0 %v568, 19
        %v2432 = vpop.permute.xlu0 %2431
        %2433 = vrot.lane.b32.xlu0 %v569, 19
        %v2434 = vpop.permute.xlu0 %2433
        %2435 = vrot.lane.b32.xlu0 %v570, 19
        %v2436 = vpop.permute.xlu0 %2435
        %2437 = vrot.lane.b32.xlu0 %v571, 19
        %v2438 = vpop.permute.xlu0 %2437
        %2439 = vrot.lane.b32.xlu0 %v572, 19
        %v2440 = vpop.permute.xlu0 %2439
        %2441 = vrot.lane.b32.xlu0 %v573, 19
        %v2442 = vpop.permute.xlu0 %2441
        %2443 = vrot.lane.b32.xlu0 %v574, 19
        %v2444 = vpop.permute.xlu0 %2443
        %2445 = vrot.lane.b32.xlu0 %v575, 19
        %v2446 = vpop.permute.xlu0 %2445
        %2447 = vrot.lane.b32.xlu0 %v2204, 19
        %v2448 = vpop.permute.xlu0 %2447
        %2449 = vrot.lane.b32.xlu0 %v2200, 19
        %v2450 = vpop.permute.xlu0 %2449
        %2451 = vrot.lane.b32.xlu0 %v576, 19
        %v2452 = vpop.permute.xlu0 %2451
        %2453 = vrot.lane.b32.xlu0 %v577, 19
        %v2454 = vpop.permute.xlu0 %2453
        %2455 = vrot.lane.b32.xlu0 %v578, 19
        %v2456 = vpop.permute.xlu0 %2455
        %2457 = vrot.lane.b32.xlu0 %v579, 19
        %v2458 = vpop.permute.xlu0 %2457
        %2459 = vrot.lane.b32.xlu0 %v580, 19
        %v2460 = vpop.permute.xlu0 %2459
        %2461 = vrot.lane.b32.xlu0 %v581, 19
        %v2462 = vpop.permute.xlu0 %2461
        %2463 = vrot.lane.b32.xlu0 %v582, 19
        %v2464 = vpop.permute.xlu0 %2463
        %2465 = vrot.lane.b32.xlu0 %v583, 19
        %v2466 = vpop.permute.xlu0 %2465
        %2467 = vrot.lane.b32.xlu0 %v2205, 19
        %v2468 = vpop.permute.xlu0 %2467
        %2469 = vrot.lane.b32.xlu0 %v2202, 19
        %v2470 = vpop.permute.xlu0 %2469
        %2471 = vrot.lane.b32.xlu0 %v666, 19
        %v2472 = vpop.permute.xlu0 %2471
        %2473 = vrot.lane.b32.xlu0 %v667, 19
        %v2474 = vpop.permute.xlu0 %2473
        %2475 = vrot.lane.b32.xlu0 %v668, 19
        %v2476 = vpop.permute.xlu0 %2475
        %2477 = vrot.lane.b32.xlu0 %v669, 19
        %v2478 = vpop.permute.xlu0 %2477
        %2479 = vrot.lane.b32.xlu0 %v670, 19
        %v2480 = vpop.permute.xlu0 %2479
        %2481 = vrot.lane.b32.xlu0 %v671, 19
        %v2482 = vpop.permute.xlu0 %2481
        %2483 = vrot.lane.b32.xlu0 %v672, 19
        %v2484 = vpop.permute.xlu0 %2483
        %2485 = vrot.lane.b32.xlu0 %v673, 19
        %v2486 = vpop.permute.xlu0 %2485
        %2487 = vrot.lane.b32.xlu0 %v2212, 19
        %v2488 = vpop.permute.xlu0 %2487
        %2489 = vrot.lane.b32.xlu0 %v2207, 19
        %v2490 = vpop.permute.xlu0 %2489
        %2491 = vrot.lane.b32.xlu0 %v674, 19
        %v2492 = vpop.permute.xlu0 %2491
        %2493 = vrot.lane.b32.xlu0 %v675, 19
        %v2494 = vpop.permute.xlu0 %2493
        %2495 = vrot.lane.b32.xlu0 %v676, 19
        %v2496 = vpop.permute.xlu0 %2495
        %2497 = vrot.lane.b32.xlu0 %v677, 19
        %v2498 = vpop.permute.xlu0 %2497
        %2499 = vrot.lane.b32.xlu0 %v678, 19
        %v2500 = vpop.permute.xlu0 %2499
        %2501 = vrot.lane.b32.xlu0 %v679, 19
        %v2502 = vpop.permute.xlu0 %2501
        %2503 = vrot.lane.b32.xlu0 %v680, 19
        %v2504 = vpop.permute.xlu0 %2503
        %2505 = vrot.lane.b32.xlu0 %v681, 19
        %v2506 = vpop.permute.xlu0 %2505
        %2507 = vrot.lane.b32.xlu0 %v2213, 19
        %v2508 = vpop.permute.xlu0 %2507
        %2509 = vrot.lane.b32.xlu0 %v2209, 19
        %v2510 = vpop.permute.xlu0 %2509
        %2511 = vrot.lane.b32.xlu0 %v682, 19
        %v2512 = vpop.permute.xlu0 %2511
        %2513 = vrot.lane.b32.xlu0 %v683, 19
        %v2514 = vpop.permute.xlu0 %2513
        %2515 = vrot.lane.b32.xlu0 %v684, 19
        %v2516 = vpop.permute.xlu0 %2515
        %2517 = vrot.lane.b32.xlu0 %v685, 19
        %v2518 = vpop.permute.xlu0 %2517
        %2519 = vrot.lane.b32.xlu0 %v686, 19
        %v2520 = vpop.permute.xlu0 %2519
        %2521 = vrot.lane.b32.xlu0 %v687, 19
        %v2522 = vpop.permute.xlu0 %2521
        %2523 = vrot.lane.b32.xlu0 %v688, 19
        %v2524 = vpop.permute.xlu0 %2523
        %2525 = vrot.lane.b32.xlu0 %v689, 19
        %v2526 = vpop.permute.xlu0 %2525
        %2527 = vrot.lane.b32.xlu0 %v2214, 19
        %v2528 = vpop.permute.xlu0 %2527
        %2529 = vrot.lane.b32.xlu0 %v2211, 19
        %v2530 = vpop.permute.xlu0 %2529
        %2531 = vrot.lane.b32.xlu0 %v772, 19
        %v2532 = vpop.permute.xlu0 %2531
        %2533 = vrot.lane.b32.xlu0 %v773, 19
        %v2534 = vpop.permute.xlu0 %2533
        %2535 = vrot.lane.b32.xlu0 %v774, 19
        %v2536 = vpop.permute.xlu0 %2535
        %2537 = vrot.lane.b32.xlu0 %v775, 19
        %v2538 = vpop.permute.xlu0 %2537
        %2539 = vrot.lane.b32.xlu0 %v776, 19
        %v2540 = vpop.permute.xlu0 %2539
        %2541 = vrot.lane.b32.xlu0 %v777, 19
        %v2542 = vpop.permute.xlu0 %2541
        %2543 = vrot.lane.b32.xlu0 %v778, 19
        %v2544 = vpop.permute.xlu0 %2543
        %2545 = vrot.lane.b32.xlu0 %v779, 19
        %v2546 = vpop.permute.xlu0 %2545
        %2547 = vrot.lane.b32.xlu0 %v2221, 19
        %v2548 = vpop.permute.xlu0 %2547
        %2549 = vrot.lane.b32.xlu0 %v2216, 19
        %v2550 = vpop.permute.xlu0 %2549
        %2551 = vrot.lane.b32.xlu0 %v780, 19
        %v2552 = vpop.permute.xlu0 %2551
        %2553 = vrot.lane.b32.xlu0 %v781, 19
        %v2554 = vpop.permute.xlu0 %2553
        %2555 = vrot.lane.b32.xlu0 %v782, 19
        %v2556 = vpop.permute.xlu0 %2555
        %2557 = vrot.lane.b32.xlu0 %v783, 19
        %v2558 = vpop.permute.xlu0 %2557
        %2559 = vrot.lane.b32.xlu0 %v784, 19
        %v2560 = vpop.permute.xlu0 %2559
        %2561 = vrot.lane.b32.xlu0 %v785, 19
        %v2562 = vpop.permute.xlu0 %2561
        %2563 = vrot.lane.b32.xlu0 %v786, 19
        %v2564 = vpop.permute.xlu0 %2563
        %2565 = vrot.lane.b32.xlu0 %v787, 19
        %v2566 = vpop.permute.xlu0 %2565
        %2567 = vrot.lane.b32.xlu0 %v2222, 19
        %v2568 = vpop.permute.xlu0 %2567
        %2569 = vrot.lane.b32.xlu0 %v2218, 19
        %v2570 = vpop.permute.xlu0 %2569
        %2571 = vrot.lane.b32.xlu0 %v788, 19
        %v2572 = vpop.permute.xlu0 %2571
        %2573 = vrot.lane.b32.xlu0 %v789, 19
        %v2574 = vpop.permute.xlu0 %2573
        %2575 = vrot.lane.b32.xlu0 %v790, 19
        %v2576 = vpop.permute.xlu0 %2575
        %2577 = vrot.lane.b32.xlu0 %v791, 19
        %v2578 = vpop.permute.xlu0 %2577
        %2579 = vrot.lane.b32.xlu0 %v792, 19
        %v2580 = vpop.permute.xlu0 %2579
        %2581 = vrot.lane.b32.xlu0 %v793, 19
        %v2582 = vpop.permute.xlu0 %2581
        %2583 = vrot.lane.b32.xlu0 %v794, 19
        %v2584 = vpop.permute.xlu0 %2583
        %2585 = vrot.lane.b32.xlu0 %v795, 19
        %v2586 = vpop.permute.xlu0 %2585
        %2587 = vrot.lane.b32.xlu0 %v2223, 19
        %v2588 = vpop.permute.xlu0 %2587
        %2589 = vrot.lane.b32.xlu0 %v2220, 19
        %v2590 = vpop.permute.xlu0 %2589
        %2591 = vrot.lane.b32.xlu0 %v2228, 19
        %v2592 = vpop.permute.xlu0 %2591
        %2593 = vrot.lane.b32.xlu0 %v2288, 19
        %v2594 = vpop.permute.xlu0 %2593
        %2595 = vrot.lane.b32.xlu0 %v2289, 19
        %v2596 = vpop.permute.xlu0 %2595
        %2597 = vrot.lane.b32.xlu0 %v2290, 19
        %v2598 = vpop.permute.xlu0 %2597
        %2599 = vrot.lane.b32.xlu0 %v2291, 19
        %v2600 = vpop.permute.xlu0 %2599
        %2601 = vrot.lane.b32.xlu0 %v2292, 19
        %v2602 = vpop.permute.xlu0 %2601
        %2603 = vrot.lane.b32.xlu0 %v2293, 19
        %v2604 = vpop.permute.xlu0 %2603
        %2605 = vrot.lane.b32.xlu0 %v2294, 19
        %v2606 = vpop.permute.xlu0 %2605
        %2607 = vrot.lane.b32.xlu0 %v2295, 19
        %v2608 = vpop.permute.xlu0 %2607
        %2609 = vrot.lane.b32.xlu0 %v2296, 19
        %v2610 = vpop.permute.xlu0 %2609
        %2611 = vrot.lane.b32.xlu0 %v2248, 19
        %v2612 = vpop.permute.xlu0 %2611
        %2613 = vrot.lane.b32.xlu0 %v2297, 19
        %v2614 = vpop.permute.xlu0 %2613
        %2615 = vrot.lane.b32.xlu0 %v2298, 19
        %v2616 = vpop.permute.xlu0 %2615
        %2617 = vrot.lane.b32.xlu0 %v2299, 19
        %v2618 = vpop.permute.xlu0 %2617
        %2619 = vrot.lane.b32.xlu0 %v2300, 19
        %v2620 = vpop.permute.xlu0 %2619
        %2621 = vrot.lane.b32.xlu0 %v2301, 19
        %v2622 = vpop.permute.xlu0 %2621
        %2623 = vrot.lane.b32.xlu0 %v2302, 19
        %v2624 = vpop.permute.xlu0 %2623
        %2625 = vrot.lane.b32.xlu0 %v2303, 19
        %v2626 = vpop.permute.xlu0 %2625
        %2627 = vrot.lane.b32.xlu0 %v2304, 19
        %v2628 = vpop.permute.xlu0 %2627
        %2629 = vrot.lane.b32.xlu0 %v2305, 19
        %v2630 = vpop.permute.xlu0 %2629
        %2631 = vrot.lane.b32.xlu0 %v2268, 19
        %v2632 = vpop.permute.xlu0 %2631
        %2633 = vrot.lane.b32.xlu0 %v2306, 19
        %v2634 = vpop.permute.xlu0 %2633
        %2635 = vrot.lane.b32.xlu0 %v2307, 19
        %v2636 = vpop.permute.xlu0 %2635
        %2637 = vrot.lane.b32.xlu0 %v2308, 19
        %v2638 = vpop.permute.xlu0 %2637
        %2639 = vrot.lane.b32.xlu0 %v2309, 19
        %v2640 = vpop.permute.xlu0 %2639
        %2641 = vrot.lane.b32.xlu0 %v2310, 19
        %v2642 = vpop.permute.xlu0 %2641
        %2643 = vrot.lane.b32.xlu0 %v2311, 19
        %v2644 = vpop.permute.xlu0 %2643
        %2645 = vrot.lane.b32.xlu0 %v2312, 19
        %v2646 = vpop.permute.xlu0 %2645
        %2647 = vrot.lane.b32.xlu0 %v2313, 19
        %v2648 = vpop.permute.xlu0 %2647
        %2649 = vrot.lane.b32.xlu0 %v2314, 19
        %v2650 = vpop.permute.xlu0 %2649
        %2651 = vrot.lane.b32.xlu0 %v935, 19
        %v2652 = vpop.permute.xlu0 %2651
        %2653 = vrot.lane.b32.xlu0 %v994, 19
        %v2654 = vpop.permute.xlu0 %2653
        %2655 = vrot.lane.b32.xlu0 %v995, 19
        %v2656 = vpop.permute.xlu0 %2655
        %2657 = vrot.lane.b32.xlu0 %v996, 19
        %v2658 = vpop.permute.xlu0 %2657
        %2659 = vrot.lane.b32.xlu0 %v997, 19
        %v2660 = vpop.permute.xlu0 %2659
        %2661 = vrot.lane.b32.xlu0 %v998, 19
        %v2662 = vpop.permute.xlu0 %2661
        %2663 = vrot.lane.b32.xlu0 %v999, 19
        %v2664 = vpop.permute.xlu0 %2663
        %2665 = vrot.lane.b32.xlu0 %v1000, 19
        %v2666 = vpop.permute.xlu0 %2665
        %2667 = vrot.lane.b32.xlu0 %v1001, 19
        %v2668 = vpop.permute.xlu0 %2667
        %2669 = vrot.lane.b32.xlu0 %v2321, 19
        %v2670 = vpop.permute.xlu0 %2669
        %2671 = vrot.lane.b32.xlu0 %v955, 19
        %v2672 = vpop.permute.xlu0 %2671
        %2673 = vrot.lane.b32.xlu0 %v1003, 19
        %v2674 = vpop.permute.xlu0 %2673
        %2675 = vrot.lane.b32.xlu0 %v1004, 19
        %v2676 = vpop.permute.xlu0 %2675
        %2677 = vrot.lane.b32.xlu0 %v1005, 19
        %v2678 = vpop.permute.xlu0 %2677
        %2679 = vrot.lane.b32.xlu0 %v1006, 19
        %v2680 = vpop.permute.xlu0 %2679
        %2681 = vrot.lane.b32.xlu0 %v1007, 19
        %v2682 = vpop.permute.xlu0 %2681
        %2683 = vrot.lane.b32.xlu0 %v1008, 19
        %v2684 = vpop.permute.xlu0 %2683
        %2685 = vrot.lane.b32.xlu0 %v1009, 19
        %v2686 = vpop.permute.xlu0 %2685
        %2687 = vrot.lane.b32.xlu0 %v1010, 19
        %v2688 = vpop.permute.xlu0 %2687
        %2689 = vrot.lane.b32.xlu0 %v2322, 19
        %v2690 = vpop.permute.xlu0 %2689
        %2691 = vrot.lane.b32.xlu0 %v975, 19
        %v2692 = vpop.permute.xlu0 %2691
        %2693 = vrot.lane.b32.xlu0 %v1012, 19
        %v2694 = vpop.permute.xlu0 %2693
        %2695 = vrot.lane.b32.xlu0 %v1013, 19
        %v2696 = vpop.permute.xlu0 %2695
        %2697 = vrot.lane.b32.xlu0 %v1014, 19
        %v2698 = vpop.permute.xlu0 %2697
        %2699 = vrot.lane.b32.xlu0 %v1015, 19
        %v2700 = vpop.permute.xlu0 %2699
        %2701 = vrot.lane.b32.xlu0 %v1016, 19
        %v2702 = vpop.permute.xlu0 %2701
        %2703 = vrot.lane.b32.xlu0 %v1017, 19
        %v2704 = vpop.permute.xlu0 %2703
        %2705 = vrot.lane.b32.xlu0 %v1018, 19
        %v2706 = vpop.permute.xlu0 %2705
        %2707 = vrot.lane.b32.xlu0 %v1019, 19
        %v2708 = vpop.permute.xlu0 %2707
        %2709 = vrot.lane.b32.xlu0 %v2323, 19
        %v2710 = vpop.permute.xlu0 %2709
        %2711 = vrot.lane.b32.xlu0 %v1050, 19
        %v2712 = vpop.permute.xlu0 %2711
        %2713 = vrot.lane.b32.xlu0 %v1109, 19
        %v2714 = vpop.permute.xlu0 %2713
        %2715 = vrot.lane.b32.xlu0 %v1110, 19
        %v2716 = vpop.permute.xlu0 %2715
        %2717 = vrot.lane.b32.xlu0 %v1111, 19
        %v2718 = vpop.permute.xlu0 %2717
        %2719 = vrot.lane.b32.xlu0 %v1112, 19
        %v2720 = vpop.permute.xlu0 %2719
        %2721 = vrot.lane.b32.xlu0 %v1113, 19
        %v2722 = vpop.permute.xlu0 %2721
        %2723 = vrot.lane.b32.xlu0 %v1114, 19
        %v2724 = vpop.permute.xlu0 %2723
        %2725 = vrot.lane.b32.xlu0 %v1115, 19
        %v2726 = vpop.permute.xlu0 %2725
        %2727 = vrot.lane.b32.xlu0 %v1116, 19
        %v2728 = vpop.permute.xlu0 %2727
        %2729 = vrot.lane.b32.xlu0 %v2330, 19
        %v2730 = vpop.permute.xlu0 %2729
        %2731 = vrot.lane.b32.xlu0 %v1070, 19
        %v2732 = vpop.permute.xlu0 %2731
        %2733 = vrot.lane.b32.xlu0 %v1118, 19
        %v2734 = vpop.permute.xlu0 %2733
        %2735 = vrot.lane.b32.xlu0 %v1119, 19
        %v2736 = vpop.permute.xlu0 %2735
        %2737 = vrot.lane.b32.xlu0 %v1120, 19
        %v2738 = vpop.permute.xlu0 %2737
        %2739 = vrot.lane.b32.xlu0 %v1121, 19
        %v2740 = vpop.permute.xlu0 %2739
        %2741 = vrot.lane.b32.xlu0 %v1122, 19
        %v2742 = vpop.permute.xlu0 %2741
        %2743 = vrot.lane.b32.xlu0 %v1123, 19
        %v2744 = vpop.permute.xlu0 %2743
        %2745 = vrot.lane.b32.xlu0 %v1124, 19
        %v2746 = vpop.permute.xlu0 %2745
        %2747 = vrot.lane.b32.xlu0 %v1125, 19
        %v2748 = vpop.permute.xlu0 %2747
        %2749 = vrot.lane.b32.xlu0 %v2331, 19
        %v2750 = vpop.permute.xlu0 %2749
        %2751 = vrot.lane.b32.xlu0 %v1090, 19
        %v2752 = vpop.permute.xlu0 %2751
        %2753 = vrot.lane.b32.xlu0 %v1127, 19
        %v2754 = vpop.permute.xlu0 %2753
        %2755 = vrot.lane.b32.xlu0 %v1128, 19
        %v2756 = vpop.permute.xlu0 %2755
        %2757 = vrot.lane.b32.xlu0 %v1129, 19
        %v2758 = vpop.permute.xlu0 %2757
        %2759 = vrot.lane.b32.xlu0 %v1130, 19
        %v2760 = vpop.permute.xlu0 %2759
        %2761 = vrot.lane.b32.xlu0 %v1131, 19
        %v2762 = vpop.permute.xlu0 %2761
        %2763 = vrot.lane.b32.xlu0 %v1132, 19
        %v2764 = vpop.permute.xlu0 %2763
        %2765 = vrot.lane.b32.xlu0 %v1133, 19
        %v2766 = vpop.permute.xlu0 %2765
        %2767 = vrot.lane.b32.xlu0 %v1134, 19
        %v2768 = vpop.permute.xlu0 %2767
        %2769 = vrot.lane.b32.xlu0 %v2332, 19
        %v2770 = vpop.permute.xlu0 %2769
        %2771 = vrot.lane.b32.xlu0 %v1165, 19
        %v2772 = vpop.permute.xlu0 %2771
        %2773 = vrot.lane.b32.xlu0 %v1224, 19
        %v2774 = vpop.permute.xlu0 %2773
        %2775 = vrot.lane.b32.xlu0 %v1225, 19
        %v2776 = vpop.permute.xlu0 %2775
        %2777 = vrot.lane.b32.xlu0 %v1226, 19
        %v2778 = vpop.permute.xlu0 %2777
        %2779 = vrot.lane.b32.xlu0 %v1227, 19
        %v2780 = vpop.permute.xlu0 %2779
        %2781 = vrot.lane.b32.xlu0 %v1228, 19
        %v2782 = vpop.permute.xlu0 %2781
        %2783 = vrot.lane.b32.xlu0 %v1229, 19
        %v2784 = vpop.permute.xlu0 %2783
        %2785 = vrot.lane.b32.xlu0 %v1230, 19
        %v2786 = vpop.permute.xlu0 %2785
        %2787 = vrot.lane.b32.xlu0 %v1231, 19
        %v2788 = vpop.permute.xlu0 %2787
        %2789 = vrot.lane.b32.xlu0 %v2339, 19
        %v2790 = vpop.permute.xlu0 %2789
        %2791 = vrot.lane.b32.xlu0 %v1185, 19
        %v2792 = vpop.permute.xlu0 %2791
        %2793 = vrot.lane.b32.xlu0 %v1233, 19
        %v2794 = vpop.permute.xlu0 %2793
        %2795 = vrot.lane.b32.xlu0 %v1234, 19
        %v2796 = vpop.permute.xlu0 %2795
        %2797 = vrot.lane.b32.xlu0 %v1235, 19
        %v2798 = vpop.permute.xlu0 %2797
        %2799 = vrot.lane.b32.xlu0 %v1236, 19
        %v2800 = vpop.permute.xlu0 %2799
        %2801 = vrot.lane.b32.xlu0 %v1237, 19
        %v2802 = vpop.permute.xlu0 %2801
        %2803 = vrot.lane.b32.xlu0 %v1238, 19
        %v2804 = vpop.permute.xlu0 %2803
        %2805 = vrot.lane.b32.xlu0 %v1239, 19
        %v2806 = vpop.permute.xlu0 %2805
        %2807 = vrot.lane.b32.xlu0 %v1240, 19
        %v2808 = vpop.permute.xlu0 %2807
        %2809 = vrot.lane.b32.xlu0 %v2340, 19
        %v2810 = vpop.permute.xlu0 %2809
        %2811 = vrot.lane.b32.xlu0 %v1205, 19
        %v2812 = vpop.permute.xlu0 %2811
        %2813 = vrot.lane.b32.xlu0 %v1242, 19
        %v2814 = vpop.permute.xlu0 %2813
        %2815 = vrot.lane.b32.xlu0 %v1243, 19
        %v2816 = vpop.permute.xlu0 %2815
        %2817 = vrot.lane.b32.xlu0 %v1244, 19
        %v2818 = vpop.permute.xlu0 %2817
        %2819 = vrot.lane.b32.xlu0 %v1245, 19
        %v2820 = vpop.permute.xlu0 %2819
        %2821 = vrot.lane.b32.xlu0 %v1246, 19
        %v2822 = vpop.permute.xlu0 %2821
        %2823 = vrot.lane.b32.xlu0 %v1247, 19
        %v2824 = vpop.permute.xlu0 %2823
        %2825 = vrot.lane.b32.xlu0 %v1248, 19
        %v2826 = vpop.permute.xlu0 %2825
        %2827 = vrot.lane.b32.xlu0 %v1249, 19
        %v2828 = vpop.permute.xlu0 %2827
        %2829 = vrot.lane.b32.xlu0 %v2341, 19
        %v2830 = vpop.permute.xlu0 %2829
        %2831 = vrot.lane.b32.xlu0 %v1280, 19
        %v2832 = vpop.permute.xlu0 %2831
        %2833 = vrot.lane.b32.xlu0 %v1339, 19
        %v2834 = vpop.permute.xlu0 %2833
        %2835 = vrot.lane.b32.xlu0 %v1340, 19
        %v2836 = vpop.permute.xlu0 %2835
        %2837 = vrot.lane.b32.xlu0 %v1341, 19
        %v2838 = vpop.permute.xlu0 %2837
        %2839 = vrot.lane.b32.xlu0 %v1342, 19
        %v2840 = vpop.permute.xlu0 %2839
        %2841 = vrot.lane.b32.xlu0 %v1343, 19
        %v2842 = vpop.permute.xlu0 %2841
        %2843 = vrot.lane.b32.xlu0 %v1344, 19
        %v2844 = vpop.permute.xlu0 %2843
        %2845 = vrot.lane.b32.xlu0 %v1345, 19
        %v2846 = vpop.permute.xlu0 %2845
        %2847 = vrot.lane.b32.xlu0 %v1346, 19
        %v2848 = vpop.permute.xlu0 %2847
        %2849 = vrot.lane.b32.xlu0 %v2348, 19
        %v2850 = vpop.permute.xlu0 %2849
        %2851 = vrot.lane.b32.xlu0 %v1300, 19
        %v2852 = vpop.permute.xlu0 %2851
        %2853 = vrot.lane.b32.xlu0 %v1348, 19
        %v2854 = vpop.permute.xlu0 %2853
        %2855 = vrot.lane.b32.xlu0 %v1349, 19
        %v2856 = vpop.permute.xlu0 %2855
        %2857 = vrot.lane.b32.xlu0 %v1350, 19
        %v2858 = vpop.permute.xlu0 %2857
        %2859 = vrot.lane.b32.xlu0 %v1351, 19
        %v2860 = vpop.permute.xlu0 %2859
        %2861 = vrot.lane.b32.xlu0 %v1352, 19
        %v2862 = vpop.permute.xlu0 %2861
        %2863 = vrot.lane.b32.xlu0 %v1353, 19
        %v2864 = vpop.permute.xlu0 %2863
        %2865 = vrot.lane.b32.xlu0 %v1354, 19
        %v2866 = vpop.permute.xlu0 %2865
        %2867 = vrot.lane.b32.xlu0 %v1355, 19
        %v2868 = vpop.permute.xlu0 %2867
        %2869 = vrot.lane.b32.xlu0 %v2349, 19
        %v2870 = vpop.permute.xlu0 %2869
        %2871 = vrot.lane.b32.xlu0 %v1320, 19
        %v2872 = vpop.permute.xlu0 %2871
        %2873 = vrot.lane.b32.xlu0 %v1357, 19
        %v2874 = vpop.permute.xlu0 %2873
        %2875 = vrot.lane.b32.xlu0 %v1358, 19
        %v2876 = vpop.permute.xlu0 %2875
        %2877 = vrot.lane.b32.xlu0 %v1359, 19
        %v2878 = vpop.permute.xlu0 %2877
        %2879 = vrot.lane.b32.xlu0 %v1360, 19
        %v2880 = vpop.permute.xlu0 %2879
        %2881 = vrot.lane.b32.xlu0 %v1361, 19
        %v2882 = vpop.permute.xlu0 %2881
        %2883 = vrot.lane.b32.xlu0 %v1362, 19
        %v2884 = vpop.permute.xlu0 %2883
        %2885 = vrot.lane.b32.xlu0 %v1363, 19
        %v2886 = vpop.permute.xlu0 %2885
        %2887 = vrot.lane.b32.xlu0 %v1364, 19
        %v2888 = vpop.permute.xlu0 %2887
        %2889 = vrot.lane.b32.xlu0 %v2350, 19
        %v2890 = vpop.permute.xlu0 %2889
        %vm2891 = vcmask 154624
        %v2892 = vsel %vm2891, %v2352, %v2354
        %v2893 = vsel %vm2891, %v2354, %v2356
        %v2894 = vsel %vm2891, %v2356, %v2358
        %v2895 = vsel %vm2891, %v2358, %v2360
        %v2896 = vsel %vm2891, %v2360, %v2362
        %v2897 = vsel %vm2891, %v2362, %v2364
        %v2898 = vsel %vm2891, %v2364, %v2366
        %v2899 = vsel %vm2891, %v2366, %v2368
        %v2900 = vsel %vm2891, %v2368, %v2370
        %v2901 = vsel %vm2891, %v2372, %v2374
        %v2902 = vsel %vm2891, %v2374, %v2376
        %v2903 = vsel %vm2891, %v2376, %v2378
        %v2904 = vsel %vm2891, %v2378, %v2380
        %v2905 = vsel %vm2891, %v2380, %v2382
        %v2906 = vsel %vm2891, %v2382, %v2384
        %v2907 = vsel %vm2891, %v2384, %v2386
        %v2908 = vsel %vm2891, %v2386, %v2388
        %v2909 = vsel %vm2891, %v2388, %v2390
        %v2910 = vsel %vm2891, %v2392, %v2394
        %v2911 = vsel %vm2891, %v2394, %v2396
        %v2912 = vsel %vm2891, %v2396, %v2398
        %v2913 = vsel %vm2891, %v2398, %v2400
        %v2914 = vsel %vm2891, %v2400, %v2402
        %v2915 = vsel %vm2891, %v2402, %v2404
        %v2916 = vsel %vm2891, %v2404, %v2406
        %v2917 = vsel %vm2891, %v2406, %v2408
        %v2918 = vsel %vm2891, %v2408, %v2410
        %v2919 = vsel %vm2891, %v2412, %v2414
        %v2920 = vsel %vm2891, %v2414, %v2416
        %v2921 = vsel %vm2891, %v2416, %v2418
        %v2922 = vsel %vm2891, %v2418, %v2420
        %v2923 = vsel %vm2891, %v2420, %v2422
        %v2924 = vsel %vm2891, %v2422, %v2424
        %v2925 = vsel %vm2891, %v2424, %v2426
        %v2926 = vsel %vm2891, %v2426, %v2428
        %v2927 = vsel %vm2891, %v2428, %v2430
        %v2928 = vsel %vm2891, %v2432, %v2434
        %v2929 = vsel %vm2891, %v2434, %v2436
        %v2930 = vsel %vm2891, %v2436, %v2438
        %v2931 = vsel %vm2891, %v2438, %v2440
        %v2932 = vsel %vm2891, %v2440, %v2442
        %v2933 = vsel %vm2891, %v2442, %v2444
        %v2934 = vsel %vm2891, %v2444, %v2446
        %v2935 = vsel %vm2891, %v2446, %v2448
        %v2936 = vsel %vm2891, %v2448, %v2450
        %v2937 = vsel %vm2891, %v2452, %v2454
        %v2938 = vsel %vm2891, %v2454, %v2456
        %v2939 = vsel %vm2891, %v2456, %v2458
        %v2940 = vsel %vm2891, %v2458, %v2460
        %v2941 = vsel %vm2891, %v2460, %v2462
        %v2942 = vsel %vm2891, %v2462, %v2464
        %v2943 = vsel %vm2891, %v2464, %v2466
        %v2944 = vsel %vm2891, %v2466, %v2468
        %v2945 = vsel %vm2891, %v2468, %v2470
        %v2946 = vsel %vm2891, %v2472, %v2474
        %v2947 = vsel %vm2891, %v2474, %v2476
        %v2948 = vsel %vm2891, %v2476, %v2478
        %v2949 = vsel %vm2891, %v2478, %v2480
        %v2950 = vsel %vm2891, %v2480, %v2482
        %v2951 = vsel %vm2891, %v2482, %v2484
        %v2952 = vsel %vm2891, %v2484, %v2486
        %v2953 = vsel %vm2891, %v2486, %v2488
        %v2954 = vsel %vm2891, %v2488, %v2490
        %v2955 = vsel %vm2891, %v2492, %v2494
        %v2956 = vsel %vm2891, %v2494, %v2496
        %v2957 = vsel %vm2891, %v2496, %v2498
        %v2958 = vsel %vm2891, %v2498, %v2500
        %v2959 = vsel %vm2891, %v2500, %v2502
        %v2960 = vsel %vm2891, %v2502, %v2504
        %v2961 = vsel %vm2891, %v2504, %v2506
        %v2962 = vsel %vm2891, %v2506, %v2508
        %v2963 = vsel %vm2891, %v2508, %v2510
        %v2964 = vsel %vm2891, %v2512, %v2514
        %v2965 = vsel %vm2891, %v2514, %v2516
        %v2966 = vsel %vm2891, %v2516, %v2518
        %v2967 = vsel %vm2891, %v2518, %v2520
        %v2968 = vsel %vm2891, %v2520, %v2522
        %v2969 = vsel %vm2891, %v2522, %v2524
        %v2970 = vsel %vm2891, %v2524, %v2526
        %v2971 = vsel %vm2891, %v2526, %v2528
        %v2972 = vsel %vm2891, %v2528, %v2530
        %v2973 = vsel %vm2891, %v2532, %v2534
        %v2974 = vsel %vm2891, %v2534, %v2536
        %v2975 = vsel %vm2891, %v2536, %v2538
        %v2976 = vsel %vm2891, %v2538, %v2540
        %v2977 = vsel %vm2891, %v2540, %v2542
        %v2978 = vsel %vm2891, %v2542, %v2544
        %v2979 = vsel %vm2891, %v2544, %v2546
        %v2980 = vsel %vm2891, %v2546, %v2548
        %v2981 = vsel %vm2891, %v2548, %v2550
        %v2982 = vsel %vm2891, %v2552, %v2554
        %v2983 = vsel %vm2891, %v2554, %v2556
        %v2984 = vsel %vm2891, %v2556, %v2558
        %v2985 = vsel %vm2891, %v2558, %v2560
        %v2986 = vsel %vm2891, %v2560, %v2562
        %v2987 = vsel %vm2891, %v2562, %v2564
        %v2988 = vsel %vm2891, %v2564, %v2566
        %v2989 = vsel %vm2891, %v2566, %v2568
        %v2990 = vsel %vm2891, %v2568, %v2570
        %v2991 = vsel %vm2891, %v2572, %v2574
        %v2992 = vsel %vm2891, %v2574, %v2576
        %v2993 = vsel %vm2891, %v2576, %v2578
        %v2994 = vsel %vm2891, %v2578, %v2580
        %v2995 = vsel %vm2891, %v2580, %v2582
        %v2996 = vsel %vm2891, %v2582, %v2584
        %v2997 = vsel %vm2891, %v2584, %v2586
        %v2998 = vsel %vm2891, %v2586, %v2588
        %v2999 = vsel %vm2891, %v2588, %v2590
        %v3000 = vsel %vm2891, %v2592, %v2594
        %v3001 = vsel %vm2891, %v2594, %v2596
        %v3002 = vsel %vm2891, %v2596, %v2598
        %v3003 = vsel %vm2891, %v2598, %v2600
        %v3004 = vsel %vm2891, %v2600, %v2602
        %v3005 = vsel %vm2891, %v2602, %v2604
        %v3006 = vsel %vm2891, %v2604, %v2606
        %v3007 = vsel %vm2891, %v2606, %v2608
        %v3008 = vsel %vm2891, %v2608, %v2610
        %v3009 = vsel %vm2891, %v2612, %v2614
        %v3010 = vsel %vm2891, %v2614, %v2616
        %v3011 = vsel %vm2891, %v2616, %v2618
        %v3012 = vsel %vm2891, %v2618, %v2620
        %v3013 = vsel %vm2891, %v2620, %v2622
        %v3014 = vsel %vm2891, %v2622, %v2624
        %v3015 = vsel %vm2891, %v2624, %v2626
        %v3016 = vsel %vm2891, %v2626, %v2628
        %v3017 = vsel %vm2891, %v2628, %v2630
        %v3018 = vsel %vm2891, %v2632, %v2634
        %v3019 = vsel %vm2891, %v2634, %v2636
        %v3020 = vsel %vm2891, %v2636, %v2638
        %v3021 = vsel %vm2891, %v2638, %v2640
        %v3022 = vsel %vm2891, %v2640, %v2642
        %v3023 = vsel %vm2891, %v2642, %v2644
        %v3024 = vsel %vm2891, %v2644, %v2646
        %v3025 = vsel %vm2891, %v2646, %v2648
        %v3026 = vsel %vm2891, %v2648, %v2650
        %v3027 = vsel %vm2891, %v2652, %v2654
        %v3028 = vsel %vm2891, %v2654, %v2656
        %v3029 = vsel %vm2891, %v2656, %v2658
        %v3030 = vsel %vm2891, %v2658, %v2660
        %v3031 = vsel %vm2891, %v2660, %v2662
        %v3032 = vsel %vm2891, %v2662, %v2664
        %v3033 = vsel %vm2891, %v2664, %v2666
        %v3034 = vsel %vm2891, %v2666, %v2668
        %v3035 = vsel %vm2891, %v2668, %v2670
        %v3036 = vsel %vm2891, %v2672, %v2674
        %v3037 = vsel %vm2891, %v2674, %v2676
        %v3038 = vsel %vm2891, %v2676, %v2678
        %v3039 = vsel %vm2891, %v2678, %v2680
        %v3040 = vsel %vm2891, %v2680, %v2682
        %v3041 = vsel %vm2891, %v2682, %v2684
        %v3042 = vsel %vm2891, %v2684, %v2686
        %v3043 = vsel %vm2891, %v2686, %v2688
        %v3044 = vsel %vm2891, %v2688, %v2690
        %v3045 = vsel %vm2891, %v2692, %v2694
        %v3046 = vsel %vm2891, %v2694, %v2696
        %v3047 = vsel %vm2891, %v2696, %v2698
        %v3048 = vsel %vm2891, %v2698, %v2700
        %v3049 = vsel %vm2891, %v2700, %v2702
        %v3050 = vsel %vm2891, %v2702, %v2704
        %v3051 = vsel %vm2891, %v2704, %v2706
        %v3052 = vsel %vm2891, %v2706, %v2708
        %v3053 = vsel %vm2891, %v2708, %v2710
        %v3054 = vsel %vm2891, %v2712, %v2714
        %v3055 = vsel %vm2891, %v2714, %v2716
        %v3056 = vsel %vm2891, %v2716, %v2718
        %v3057 = vsel %vm2891, %v2718, %v2720
        %v3058 = vsel %vm2891, %v2720, %v2722
        %v3059 = vsel %vm2891, %v2722, %v2724
        %v3060 = vsel %vm2891, %v2724, %v2726
        %v3061 = vsel %vm2891, %v2726, %v2728
        %v3062 = vsel %vm2891, %v2728, %v2730
        %v3063 = vsel %vm2891, %v2732, %v2734
        %v3064 = vsel %vm2891, %v2734, %v2736
        %v3065 = vsel %vm2891, %v2736, %v2738
        %v3066 = vsel %vm2891, %v2738, %v2740
        %v3067 = vsel %vm2891, %v2740, %v2742
        %v3068 = vsel %vm2891, %v2742, %v2744
        %v3069 = vsel %vm2891, %v2744, %v2746
        %v3070 = vsel %vm2891, %v2746, %v2748
        %v3071 = vsel %vm2891, %v2748, %v2750
        %v3072 = vsel %vm2891, %v2752, %v2754
        %v3073 = vsel %vm2891, %v2754, %v2756
        %v3074 = vsel %vm2891, %v2756, %v2758
        %v3075 = vsel %vm2891, %v2758, %v2760
        %v3076 = vsel %vm2891, %v2760, %v2762
        %v3077 = vsel %vm2891, %v2762, %v2764
        %v3078 = vsel %vm2891, %v2764, %v2766
        %v3079 = vsel %vm2891, %v2766, %v2768
        %v3080 = vsel %vm2891, %v2768, %v2770
        %v3081 = vsel %vm2891, %v2772, %v2774
        %v3082 = vsel %vm2891, %v2774, %v2776
        %v3083 = vsel %vm2891, %v2776, %v2778
        %v3084 = vsel %vm2891, %v2778, %v2780
        %v3085 = vsel %vm2891, %v2780, %v2782
        %v3086 = vsel %vm2891, %v2782, %v2784
        %v3087 = vsel %vm2891, %v2784, %v2786
        %v3088 = vsel %vm2891, %v2786, %v2788
        %v3089 = vsel %vm2891, %v2788, %v2790
        %v3090 = vsel %vm2891, %v2792, %v2794
        %v3091 = vsel %vm2891, %v2794, %v2796
        %v3092 = vsel %vm2891, %v2796, %v2798
        %v3093 = vsel %vm2891, %v2798, %v2800
        %v3094 = vsel %vm2891, %v2800, %v2802
        %v3095 = vsel %vm2891, %v2802, %v2804
        %v3096 = vsel %vm2891, %v2804, %v2806
        %v3097 = vsel %vm2891, %v2806, %v2808
        %v3098 = vsel %vm2891, %v2808, %v2810
        %v3099 = vsel %vm2891, %v2812, %v2814
        %v3100 = vsel %vm2891, %v2814, %v2816
        %v3101 = vsel %vm2891, %v2816, %v2818
        %v3102 = vsel %vm2891, %v2818, %v2820
        %v3103 = vsel %vm2891, %v2820, %v2822
        %v3104 = vsel %vm2891, %v2822, %v2824
        %v3105 = vsel %vm2891, %v2824, %v2826
        %v3106 = vsel %vm2891, %v2826, %v2828
        %v3107 = vsel %vm2891, %v2828, %v2830
        %v3108 = vsel %vm2891, %v2832, %v2834
        %v3109 = vsel %vm2891, %v2834, %v2836
        %v3110 = vsel %vm2891, %v2836, %v2838
        %v3111 = vsel %vm2891, %v2838, %v2840
        %v3112 = vsel %vm2891, %v2840, %v2842
        %v3113 = vsel %vm2891, %v2842, %v2844
        %v3114 = vsel %vm2891, %v2844, %v2846
        %v3115 = vsel %vm2891, %v2846, %v2848
        %v3116 = vsel %vm2891, %v2848, %v2850
        %v3117 = vsel %vm2891, %v2852, %v2854
        %v3118 = vsel %vm2891, %v2854, %v2856
        %v3119 = vsel %vm2891, %v2856, %v2858
        %v3120 = vsel %vm2891, %v2858, %v2860
        %v3121 = vsel %vm2891, %v2860, %v2862
        %v3122 = vsel %vm2891, %v2862, %v2864
        %v3123 = vsel %vm2891, %v2864, %v2866
        %v3124 = vsel %vm2891, %v2866, %v2868
        %v3125 = vsel %vm2891, %v2868, %v2870
        %v3126 = vsel %vm2891, %v2872, %v2874
        %v3127 = vsel %vm2891, %v2874, %v2876
        %v3128 = vsel %vm2891, %v2876, %v2878
        %v3129 = vsel %vm2891, %v2878, %v2880
        %v3130 = vsel %vm2891, %v2880, %v2882
        %v3131 = vsel %vm2891, %v2882, %v2884
        %v3132 = vsel %vm2891, %v2884, %v2886
        %v3133 = vsel %vm2891, %v2886, %v2888
        %v3134 = vsel %vm2891, %v2888, %v2890
        %v3378 = vld [vmem:[%s1] sm:$0xff]
        %v3379 = vld [vmem:[%s1 + $0x8] sm:$0xff]
        %v3380 = vld [vmem:[%s1 + $0x10] sm:$0xf]
        %v3381 = vld [vmem:[%s1 + $0x14] sm:$0xff]
        %v3382 = vld [vmem:[%s1 + $0x1c] sm:$0xff]
        %v3383 = vld [vmem:[%s1 + $0x24] sm:$0xf]
        %v3384 = vld [vmem:[%s1 + $0x28] sm:$0xff]
        %v3385 = vld [vmem:[%s1 + $0x30] sm:$0xff]
        %v3386 = vld [vmem:[%s1 + $0x38] sm:$0xf]
        %v3387 = vld [vmem:[%s1 + $0x3c] sm:$0xff]
        %v3388 = vld [vmem:[%s1 + $0x44] sm:$0xff]
        %v3389 = vld [vmem:[%s1 + $0x4c] sm:$0xf]
        %v3390 = vld [vmem:[%s1 + $0x50] sm:$0xff]
        %v3391 = vld [vmem:[%s1 + $0x58] sm:$0xff]
        %v3392 = vld [vmem:[%s1 + $0x60] sm:$0xf]
        %v3393 = vld [vmem:[%s1 + $0x64] sm:$0xff]
        %v3394 = vld [vmem:[%s1 + $0x6c] sm:$0xff]
        %v3395 = vld [vmem:[%s1 + $0x74] sm:$0xf]
        %v3396 = vpack.c.bf16 %v456, %v445
        %v3397 = vpack.c.bf16 %v457, %v446
        %v3398 = vpack.c.bf16 %v458, %v447
        %v3399 = vpack.c.bf16 %v459, %v448
        %v3400 = vpack.c.bf16 %v460, %v449
        %v3401 = vpack.c.bf16 %v461, %v450
        %v3402 = vpack.c.bf16 %v462, %v451
        %v3403 = vpack.c.bf16 %v463, %v452
        %v3404 = vpack.c.bf16 %v464, %v453
        %v3405 = vpack.c.bf16 %v560, %v467
        %v3406 = vpack.c.bf16 %v561, %v468
        %v3407 = vpack.c.bf16 %v562, %v469
        %v3408 = vpack.c.bf16 %v563, %v470
        %v3409 = vpack.c.bf16 %v564, %v471
        %v3410 = vpack.c.bf16 %v565, %v472
        %v3411 = vpack.c.bf16 %v566, %v473
        %v3412 = vpack.c.bf16 %v567, %v474
        %v3413 = vpack.c.bf16 %v522, %v475
        %v3414 = vpack.c.bf16 %v576, %v568
        %v3415 = vpack.c.bf16 %v577, %v569
        %v3416 = vpack.c.bf16 %v578, %v570
        %v3417 = vpack.c.bf16 %v579, %v571
        %v3418 = vpack.c.bf16 %v580, %v572
        %v3419 = vpack.c.bf16 %v581, %v573
        %v3420 = vpack.c.bf16 %v582, %v574
        %v3421 = vpack.c.bf16 %v583, %v575
        %v3422 = vpack.c.bf16 %v558, %v540
        %v3423 = vpack.c.bf16 %v674, %v666
        %v3424 = vpack.c.bf16 %v675, %v667
        %v3425 = vpack.c.bf16 %v676, %v668
        %v3426 = vpack.c.bf16 %v677, %v669
        %v3427 = vpack.c.bf16 %v678, %v670
        %v3428 = vpack.c.bf16 %v679, %v671
        %v3429 = vpack.c.bf16 %v680, %v672
        %v3430 = vpack.c.bf16 %v681, %v673
        %v3431 = vpack.c.bf16 %v646, %v628
        %v3432 = vpack.c.bf16 %v772, %v682
        %v3433 = vpack.c.bf16 %v773, %v683
        %v3434 = vpack.c.bf16 %v774, %v684
        %v3435 = vpack.c.bf16 %v775, %v685
        %v3436 = vpack.c.bf16 %v776, %v686
        %v3437 = vpack.c.bf16 %v777, %v687
        %v3438 = vpack.c.bf16 %v778, %v688
        %v3439 = vpack.c.bf16 %v779, %v689
        %v3440 = vpack.c.bf16 %v734, %v664
        %v3441 = vpack.c.bf16 %v788, %v780
        %v3442 = vpack.c.bf16 %v789, %v781
        %v3443 = vpack.c.bf16 %v790, %v782
        %v3444 = vpack.c.bf16 %v791, %v783
        %v3445 = vpack.c.bf16 %v792, %v784
        %v3446 = vpack.c.bf16 %v793, %v785
        %v3447 = vpack.c.bf16 %v794, %v786
        %v3448 = vpack.c.bf16 %v795, %v787
        %v3449 = vpack.c.bf16 %v770, %v752
        %v3450 = vpack.c.bf16 %v886, %v878
        %v3451 = vpack.c.bf16 %v887, %v879
        %v3452 = vpack.c.bf16 %v888, %v880
        %v3453 = vpack.c.bf16 %v889, %v881
        %v3454 = vpack.c.bf16 %v890, %v882
        %v3455 = vpack.c.bf16 %v891, %v883
        %v3456 = vpack.c.bf16 %v892, %v884
        %v3457 = vpack.c.bf16 %v893, %v885
        %v3458 = vpack.c.bf16 %v858, %v840
        %v3459 = vpack.c.bf16 %v993, %v894
        %v3460 = vpack.c.bf16 %v994, %v895
        %v3461 = vpack.c.bf16 %v995, %v896
        %v3462 = vpack.c.bf16 %v996, %v897
        %v3463 = vpack.c.bf16 %v997, %v898
        %v3464 = vpack.c.bf16 %v998, %v899
        %v3465 = vpack.c.bf16 %v999, %v900
        %v3466 = vpack.c.bf16 %v1000, %v901
        %v3467 = vpack.c.bf16 %v1001, %v876
        %v3468 = vpack.c.bf16 %v1011, %v1002
        %v3469 = vpack.c.bf16 %v1012, %v1003
        %v3470 = vpack.c.bf16 %v1013, %v1004
        %v3471 = vpack.c.bf16 %v1014, %v1005
        %v3472 = vpack.c.bf16 %v1015, %v1006
        %v3473 = vpack.c.bf16 %v1016, %v1007
        %v3474 = vpack.c.bf16 %v1017, %v1008
        %v3475 = vpack.c.bf16 %v1018, %v1009
        %v3476 = vpack.c.bf16 %v1019, %v1010
        %v3477 = vpack.c.bf16 %v1117, %v1108
        %v3478 = vpack.c.bf16 %v1118, %v1109
        %v3479 = vpack.c.bf16 %v1119, %v1110
        %v3480 = vpack.c.bf16 %v1120, %v1111
        %v3481 = vpack.c.bf16 %v1121, %v1112
        %v3482 = vpack.c.bf16 %v1122, %v1113
        %v3483 = vpack.c.bf16 %v1123, %v1114
        %v3484 = vpack.c.bf16 %v1124, %v1115
        %v3485 = vpack.c.bf16 %v1125, %v1116
        %v3486 = vpack.c.bf16 %v1223, %v1126
        %v3487 = vpack.c.bf16 %v1224, %v1127
        %v3488 = vpack.c.bf16 %v1225, %v1128
        %v3489 = vpack.c.bf16 %v1226, %v1129
        %v3490 = vpack.c.bf16 %v1227, %v1130
        %v3491 = vpack.c.bf16 %v1228, %v1131
        %v3492 = vpack.c.bf16 %v1229, %v1132
        %v3493 = vpack.c.bf16 %v1230, %v1133
        %v3494 = vpack.c.bf16 %v1231, %v1134
        %v3495 = vpack.c.bf16 %v1241, %v1232
        %v3496 = vpack.c.bf16 %v1242, %v1233
        %v3497 = vpack.c.bf16 %v1243, %v1234
        %v3498 = vpack.c.bf16 %v1244, %v1235
        %v3499 = vpack.c.bf16 %v1245, %v1236
        %v3500 = vpack.c.bf16 %v1246, %v1237
        %v3501 = vpack.c.bf16 %v1247, %v1238
        %v3502 = vpack.c.bf16 %v1248, %v1239
        %v3503 = vpack.c.bf16 %v1249, %v1240
        %v3504 = vpack.c.bf16 %v1347, %v1338
        %v3505 = vpack.c.bf16 %v1348, %v1339
        %v3506 = vpack.c.bf16 %v1349, %v1340
        %v3507 = vpack.c.bf16 %v1350, %v1341
        %v3508 = vpack.c.bf16 %v1351, %v1342
        %v3509 = vpack.c.bf16 %v1352, %v1343
        %v3510 = vpack.c.bf16 %v1353, %v1344
        %v3511 = vpack.c.bf16 %v1354, %v1345
        %v3512 = vpack.c.bf16 %v1355, %v1346
        %v3513 = vpack.c.bf16 %v1453, %v1356
        %v3514 = vpack.c.bf16 %v1454, %v1357
        %v3515 = vpack.c.bf16 %v1455, %v1358
        %v3516 = vpack.c.bf16 %v1456, %v1359
        %v3517 = vpack.c.bf16 %v1457, %v1360
        %v3518 = vpack.c.bf16 %v1458, %v1361
        %v3519 = vpack.c.bf16 %v1459, %v1362
        %v3520 = vpack.c.bf16 %v1460, %v1363
        %v3521 = vpack.c.bf16 %v1461, %v1364
        %v3522 = vpack.c.bf16 %v1471, %v1462
        %v3523 = vpack.c.bf16 %v1472, %v1463
        %v3524 = vpack.c.bf16 %v1473, %v1464
        %v3525 = vpack.c.bf16 %v1474, %v1465
        %v3526 = vpack.c.bf16 %v1475, %v1466
        %v3527 = vpack.c.bf16 %v1476, %v1467
        %v3528 = vpack.c.bf16 %v1477, %v1468
        %v3529 = vpack.c.bf16 %v1478, %v1469
        %v3530 = vpack.c.bf16 %v1479, %v1470
        %v3531 = vpack.c.bf16 %v1577, %v1568
        %v3532 = vpack.c.bf16 %v1578, %v1569
        %v3533 = vpack.c.bf16 %v1579, %v1570
        %v3534 = vpack.c.bf16 %v1580, %v1571
        %v3535 = vpack.c.bf16 %v1581, %v1572
        %v3536 = vpack.c.bf16 %v1582, %v1573
        %v3537 = vpack.c.bf16 %v1583, %v1574
        %v3538 = vpack.c.bf16 %v1584, %v1575
        %v3539 = vpack.c.bf16 %v1585, %v1576
        %v3540 = vpack.c.bf16 %v1683, %v1586
        %v3541 = vpack.c.bf16 %v1684, %v1587
        %v3542 = vpack.c.bf16 %v1685, %v1588
        %v3543 = vpack.c.bf16 %v1686, %v1589
        %v3544 = vpack.c.bf16 %v1687, %v1590
        %v3545 = vpack.c.bf16 %v1688, %v1591
        %v3546 = vpack.c.bf16 %v1689, %v1592
        %v3547 = vpack.c.bf16 %v1690, %v1593
        %v3548 = vpack.c.bf16 %v1691, %v1594
        %v3549 = vpack.c.bf16 %v1701, %v1692
        %v3550 = vpack.c.bf16 %v1702, %v1693
        %v3551 = vpack.c.bf16 %v1703, %v1694
        %v3552 = vpack.c.bf16 %v1704, %v1695
        %v3553 = vpack.c.bf16 %v1705, %v1696
        %v3554 = vpack.c.bf16 %v1706, %v1697
        %v3555 = vpack.c.bf16 %v1707, %v1698
        %v3556 = vpack.c.bf16 %v1708, %v1699
        %v3557 = vpack.c.bf16 %v1709, %v1700
        %v3558 = vpack.c.bf16 %v1807, %v1798
        %v3559 = vpack.c.bf16 %v1808, %v1799
        %v3560 = vpack.c.bf16 %v1809, %v1800
        %v3561 = vpack.c.bf16 %v1810, %v1801
        %v3562 = vpack.c.bf16 %v1811, %v1802
        %v3563 = vpack.c.bf16 %v1812, %v1803
        %v3564 = vpack.c.bf16 %v1813, %v1804
        %v3565 = vpack.c.bf16 %v1814, %v1805
        %v3566 = vpack.c.bf16 %v1815, %v1806
        %v3567 = vpack.c.bf16 %v1913, %v1816
        %v3568 = vpack.c.bf16 %v1914, %v1817
        %v3569 = vpack.c.bf16 %v1915, %v1818
        %v3570 = vpack.c.bf16 %v1916, %v1819
        %v3571 = vpack.c.bf16 %v1917, %v1820
        %v3572 = vpack.c.bf16 %v1918, %v1821
        %v3573 = vpack.c.bf16 %v1919, %v1822
        %v3574 = vpack.c.bf16 %v1920, %v1823
        %v3575 = vpack.c.bf16 %v1921, %v1824
        %v3576 = vpack.c.bf16 %v1931, %v1922
        %v3577 = vpack.c.bf16 %v1932, %v1923
        %v3578 = vpack.c.bf16 %v1933, %v1924
        %v3579 = vpack.c.bf16 %v1934, %v1925
        %v3580 = vpack.c.bf16 %v1935, %v1926
        %v3581 = vpack.c.bf16 %v1936, %v1927
        %v3582 = vpack.c.bf16 %v1937, %v1928
        %v3583 = vpack.c.bf16 %v1938, %v1929
        %v3584 = vpack.c.bf16 %v1939, %v1930
        %v3585 = vpack.c.bf16 %v2037, %v2028
        %v3586 = vpack.c.bf16 %v2038, %v2029
        %v3587 = vpack.c.bf16 %v2039, %v2030
        %v3588 = vpack.c.bf16 %v2040, %v2031
        %v3589 = vpack.c.bf16 %v2041, %v2032
        %v3590 = vpack.c.bf16 %v2042, %v2033
        %v3591 = vpack.c.bf16 %v2043, %v2034
        %v3592 = vpack.c.bf16 %v2044, %v2035
        %v3593 = vpack.c.bf16 %v2045, %v2036
        %v3594 = vpack.c.bf16 %v2143, %v2046
        %v3595 = vpack.c.bf16 %v2144, %v2047
        %v3596 = vpack.c.bf16 %v2145, %v2048
        %v3597 = vpack.c.bf16 %v2146, %v2049
        %v3598 = vpack.c.bf16 %v2147, %v2050
        %v3599 = vpack.c.bf16 %v2148, %v2051
        %v3600 = vpack.c.bf16 %v2149, %v2052
        %v3601 = vpack.c.bf16 %v2150, %v2053
        %v3602 = vpack.c.bf16 %v2151, %v2054
        %v3603 = vpack.c.bf16 %v2161, %v2152
        %v3604 = vpack.c.bf16 %v2162, %v2153
        %v3605 = vpack.c.bf16 %v2163, %v2154
        %v3606 = vpack.c.bf16 %v2164, %v2155
        %v3607 = vpack.c.bf16 %v2165, %v2156
        %v3608 = vpack.c.bf16 %v2166, %v2157
        %v3609 = vpack.c.bf16 %v2167, %v2158
        %v3610 = vpack.c.bf16 %v2168, %v2159
        %v3611 = vpack.c.bf16 %v2169, %v2160
        %v3612 = vpack.c.bf16 %v2901, %v2892
        %v3613 = vpack.c.bf16 %v2902, %v2893
        %v3614 = vpack.c.bf16 %v2903, %v2894
        %v3615 = vpack.c.bf16 %v2904, %v2895
        %v3616 = vpack.c.bf16 %v2905, %v2896
        %v3617 = vpack.c.bf16 %v2906, %v2897
        %v3618 = vpack.c.bf16 %v2907, %v2898
        %v3619 = vpack.c.bf16 %v2908, %v2899
        %v3620 = vpack.c.bf16 %v2909, %v2900
        %v3621 = vpack.c.bf16 %v2919, %v2910
        %v3622 = vpack.c.bf16 %v2920, %v2911
        %v3623 = vpack.c.bf16 %v2921, %v2912
        %v3624 = vpack.c.bf16 %v2922, %v2913
        %v3625 = vpack.c.bf16 %v2923, %v2914
        %v3626 = vpack.c.bf16 %v2924, %v2915
        %v3627 = vpack.c.bf16 %v2925, %v2916
        %v3628 = vpack.c.bf16 %v2926, %v2917
        %v3629 = vpack.c.bf16 %v2927, %v2918
        %v3630 = vpack.c.bf16 %v2937, %v2928
        %v3631 = vpack.c.bf16 %v2938, %v2929
        %v3632 = vpack.c.bf16 %v2939, %v2930
        %v3633 = vpack.c.bf16 %v2940, %v2931
        %v3634 = vpack.c.bf16 %v2941, %v2932
        %v3635 = vpack.c.bf16 %v2942, %v2933
        %v3636 = vpack.c.bf16 %v2943, %v2934
        %v3637 = vpack.c.bf16 %v2944, %v2935
        %v3638 = vpack.c.bf16 %v2945, %v2936
        %v3639 = vpack.c.bf16 %v2955, %v2946
        %v3640 = vpack.c.bf16 %v2956, %v2947
        %v3641 = vpack.c.bf16 %v2957, %v2948
        %v3642 = vpack.c.bf16 %v2958, %v2949
        %v3643 = vpack.c.bf16 %v2959, %v2950
        %v3644 = vpack.c.bf16 %v2960, %v2951
        %v3645 = vpack.c.bf16 %v2961, %v2952
        %v3646 = vpack.c.bf16 %v2962, %v2953
        %v3647 = vpack.c.bf16 %v2963, %v2954
        %v3648 = vpack.c.bf16 %v2973, %v2964
        %v3649 = vpack.c.bf16 %v2974, %v2965
        %v3650 = vpack.c.bf16 %v2975, %v2966
        %v3651 = vpack.c.bf16 %v2976, %v2967
        %v3652 = vpack.c.bf16 %v2977, %v2968
        %v3653 = vpack.c.bf16 %v2978, %v2969
        %v3654 = vpack.c.bf16 %v2979, %v2970
        %v3655 = vpack.c.bf16 %v2980, %v2971
        %v3656 = vpack.c.bf16 %v2981, %v2972
        %v3657 = vpack.c.bf16 %v2991, %v2982
        %v3658 = vpack.c.bf16 %v2992, %v2983
        %v3659 = vpack.c.bf16 %v2993, %v2984
        %v3660 = vpack.c.bf16 %v2994, %v2985
        %v3661 = vpack.c.bf16 %v2995, %v2986
        %v3662 = vpack.c.bf16 %v2996, %v2987
        %v3663 = vpack.c.bf16 %v2997, %v2988
        %v3664 = vpack.c.bf16 %v2998, %v2989
        %v3665 = vpack.c.bf16 %v2999, %v2990
        %v3666 = vpack.c.bf16 %v3009, %v3000
        %v3667 = vpack.c.bf16 %v3010, %v3001
        %v3668 = vpack.c.bf16 %v3011, %v3002
        %v3669 = vpack.c.bf16 %v3012, %v3003
        %v3670 = vpack.c.bf16 %v3013, %v3004
        %v3671 = vpack.c.bf16 %v3014, %v3005
        %v3672 = vpack.c.bf16 %v3015, %v3006
        %v3673 = vpack.c.bf16 %v3016, %v3007
        %v3674 = vpack.c.bf16 %v3017, %v3008
        %v3675 = vpack.c.bf16 %v3027, %v3018
        %v3676 = vpack.c.bf16 %v3028, %v3019
        %v3677 = vpack.c.bf16 %v3029, %v3020
        %v3678 = vpack.c.bf16 %v3030, %v3021
        %v3679 = vpack.c.bf16 %v3031, %v3022
        %v3680 = vpack.c.bf16 %v3032, %v3023
        %v3681 = vpack.c.bf16 %v3033, %v3024
        %v3682 = vpack.c.bf16 %v3034, %v3025
        %v3683 = vpack.c.bf16 %v3035, %v3026
        %v3684 = vpack.c.bf16 %v3045, %v3036
        %v3685 = vpack.c.bf16 %v3046, %v3037
        %v3686 = vpack.c.bf16 %v3047, %v3038
        %v3687 = vpack.c.bf16 %v3048, %v3039
        %v3688 = vpack.c.bf16 %v3049, %v3040
        %v3689 = vpack.c.bf16 %v3050, %v3041
        %v3690 = vpack.c.bf16 %v3051, %v3042
        %v3691 = vpack.c.bf16 %v3052, %v3043
        %v3692 = vpack.c.bf16 %v3053, %v3044
        %v3693 = vpack.c.bf16 %v3063, %v3054
        %v3694 = vpack.c.bf16 %v3064, %v3055
        %v3695 = vpack.c.bf16 %v3065, %v3056
        %v3696 = vpack.c.bf16 %v3066, %v3057
        %v3697 = vpack.c.bf16 %v3067, %v3058
        %v3698 = vpack.c.bf16 %v3068, %v3059
        %v3699 = vpack.c.bf16 %v3069, %v3060
        %v3700 = vpack.c.bf16 %v3070, %v3061
        %v3701 = vpack.c.bf16 %v3071, %v3062
        %v3702 = vpack.c.bf16 %v3081, %v3072
        %v3703 = vpack.c.bf16 %v3082, %v3073
        %v3704 = vpack.c.bf16 %v3083, %v3074
        %v3705 = vpack.c.bf16 %v3084, %v3075
        %v3706 = vpack.c.bf16 %v3085, %v3076
        %v3707 = vpack.c.bf16 %v3086, %v3077
        %v3708 = vpack.c.bf16 %v3087, %v3078
        %v3709 = vpack.c.bf16 %v3088, %v3079
        %v3710 = vpack.c.bf16 %v3089, %v3080
        %v3711 = vpack.c.bf16 %v3099, %v3090
        %v3712 = vpack.c.bf16 %v3100, %v3091
        %v3713 = vpack.c.bf16 %v3101, %v3092
        %v3714 = vpack.c.bf16 %v3102, %v3093
        %v3715 = vpack.c.bf16 %v3103, %v3094
        %v3716 = vpack.c.bf16 %v3104, %v3095
        %v3717 = vpack.c.bf16 %v3105, %v3096
        %v3718 = vpack.c.bf16 %v3106, %v3097
        %v3719 = vpack.c.bf16 %v3107, %v3098
        %v3720 = vpack.c.bf16 %v3117, %v3108
        %v3721 = vpack.c.bf16 %v3118, %v3109
        %v3722 = vpack.c.bf16 %v3119, %v3110
        %v3723 = vpack.c.bf16 %v3120, %v3111
        %v3724 = vpack.c.bf16 %v3121, %v3112
        %v3725 = vpack.c.bf16 %v3122, %v3113
        %v3726 = vpack.c.bf16 %v3123, %v3114
        %v3727 = vpack.c.bf16 %v3124, %v3115
        %v3728 = vpack.c.bf16 %v3125, %v3116
        %v3729 = vpack.c.bf16 %v3126, %v3126
        %v3730 = vpack.c.bf16 %v3127, %v3127
        %v3731 = vpack.c.bf16 %v3128, %v3128
        %v3732 = vpack.c.bf16 %v3129, %v3129
        %v3733 = vpack.c.bf16 %v3130, %v3130
        %v3734 = vpack.c.bf16 %v3131, %v3131
        %v3735 = vpack.c.bf16 %v3132, %v3132
        %v3736 = vpack.c.bf16 %v3133, %v3133
        %v3737 = vpack.c.bf16 %v3134, %v3134
        %v3738 = vld [vmem:[%s2] sm:$0xff]
        %v3739 = vld [vmem:[%s2 + $0x8] sm:$0xff]
        %v3740 = vld [vmem:[%s2 + $0x10] sm:$0xff]
        %v3741 = vld [vmem:[%s2 + $0x18] sm:$0xff]
        %v3742 = vld [vmem:[%s2 + $0x20] sm:$0xff]
        %v3743 = vld [vmem:[%s2 + $0x28] sm:$0xff]
        %3745 = vset.pattern.permute.xlu0 0
        %3746 = vperm.xlu0 %3745, %v3738
        %v3747 = vpop.permute.xlu0 %3746
        %3750 = vset.pattern.permute.xlu0 0
        %3751 = vperm.xlu0 %3750, %v3739
        %v3752 = vpop.permute.xlu0 %3751
        %3755 = vset.pattern.permute.xlu0 0
        %3756 = vperm.xlu0 %3755, %v3740
        %v3757 = vpop.permute.xlu0 %3756
        %3760 = vset.pattern.permute.xlu0 0
        %3761 = vperm.xlu0 %3760, %v3741
        %v3762 = vpop.permute.xlu0 %3761
        %3765 = vset.pattern.permute.xlu0 0
        %3766 = vperm.xlu0 %3765, %v3742
        %v3767 = vpop.permute.xlu0 %3766
        %3770 = vset.pattern.permute.xlu0 0
        %3771 = vperm.xlu0 %3770, %v3743
        %v3772 = vpop.permute.xlu0 %3771
        %v3792 = vunpack.c.l.b16 %v3378
        %v3793 = vunpack.c.h.b16 %v3378
        %v3794 = vunpack.c.l.b16 %v3379
        %v3795 = vunpack.c.h.b16 %v3379
        %v3796 = vunpack.c.l.b16 %v3380
        %v3797 = vunpack.c.l.b16 %v3381
        %v3798 = vunpack.c.h.b16 %v3381
        %v3799 = vunpack.c.l.b16 %v3382
        %v3800 = vunpack.c.h.b16 %v3382
        %v3801 = vunpack.c.l.b16 %v3383
        %v3802 = vunpack.c.l.b16 %v3384
        %v3803 = vunpack.c.h.b16 %v3384
        %v3804 = vunpack.c.l.b16 %v3385
        %v3805 = vunpack.c.h.b16 %v3385
        %v3806 = vunpack.c.l.b16 %v3386
        %v3807 = vunpack.c.l.b16 %v3387
        %v3808 = vunpack.c.h.b16 %v3387
        %v3809 = vunpack.c.l.b16 %v3388
        %v3810 = vunpack.c.h.b16 %v3388
        %v3811 = vunpack.c.l.b16 %v3389
        %v3812 = vunpack.c.l.b16 %v3390
        %v3813 = vunpack.c.h.b16 %v3390
        %v3814 = vunpack.c.l.b16 %v3391
        %v3815 = vunpack.c.h.b16 %v3391
        %v3816 = vunpack.c.l.b16 %v3392
        %v3817 = vunpack.c.l.b16 %v3393
        %v3818 = vunpack.c.h.b16 %v3393
        %v3819 = vunpack.c.l.b16 %v3394
        %v3820 = vunpack.c.h.b16 %v3394
        %v3821 = vunpack.c.l.b16 %v3395
        %v3822 = vpack.c.b16 %v3797, %v3792
        %v3823 = vpack.c.b16 %v3798, %v3793
        %v3824 = vpack.c.b16 %v3799, %v3794
        %v3825 = vpack.c.b16 %v3800, %v3795
        %v3826 = vpack.c.b16 %v3801, %v3796
        %v3827 = vpack.c.b16 %v3807, %v3802
        %v3828 = vpack.c.b16 %v3808, %v3803
        %v3829 = vpack.c.b16 %v3809, %v3804
        %v3830 = vpack.c.b16 %v3810, %v3805
        %v3831 = vpack.c.b16 %v3811, %v3806
        %v3832 = vpack.c.b16 %v3817, %v3812
        %v3833 = vpack.c.b16 %v3818, %v3813
        %v3834 = vpack.c.b16 %v3819, %v3814
        %v3835 = vpack.c.b16 %v3820, %v3815
        %v3836 = vpack.c.b16 %v3821, %v3816
        %v3850 = vsel %vm1452, %v3826, 0
        %v3853 = vsel %vm1452, %v3831, 0
        %v3856 = vsel %vm1452, %v3836, 0
        %vm3858 = vcmask 1043456
        %v3860 = vsel %vm3858, %v3729, 0
        %v3863 = vsel %vm3858, %v3730, 0
        %v3866 = vsel %vm3858, %v3731, 0
        %v3869 = vsel %vm3858, %v3732, 0
        %v3872 = vsel %vm3858, %v3733, 0
        %v3875 = vsel %vm3858, %v3734, 0
        %v3878 = vsel %vm3858, %v3735, 0
        %v3881 = vsel %vm3858, %v3736, 0
        %v3884 = vsel %vm3858, %v3737, 0
        %3886 = vmatprep.subr.bf16.mxu0 %v3397
        %3887 = vmatpush1.bf16.msra.mxu0 %v3396
        %3888 = vmatprep.subr.bf16.mxu0 %v3406
        %3889 = vmatpush1.bf16.msra.mxu0 %v3405
        %3890 = vmatprep.subr.bf16.mxu0 %v3415
        %3891 = vmatpush1.bf16.msra.mxu0 %v3414
        %3892 = vmatprep.subr.bf16.mxu0 %v3424
        %3893 = vmatpush1.bf16.msra.mxu0 %v3423
        %3894 = vmatprep.subr.bf16.mxu0 %v3433
        %3895 = vmatpush1.bf16.msra.mxu0 %v3432
        %3896 = vmatprep.subr.bf16.mxu0 %v3442
        %3897 = vmatpush1.bf16.msra.mxu0 %v3441
        %3898 = vmatprep.subr.bf16.mxu0 %v3451
        %3899 = vmatpush1.bf16.msra.mxu0 %v3450
        %3900 = vmatprep.subr.bf16.mxu0 %v3460
        %3901 = vmatpush1.bf16.msra.mxu0 %v3459
        %3902 = vmatprep.subr.bf16.mxu0 %v3469
        %3903 = vmatpush1.bf16.msra.mxu0 %v3468
        %3904 = vmatprep.subr.bf16.mxu0 %v3478
        %3905 = vmatpush1.bf16.msra.mxu0 %v3477
        %3906 = vmatprep.subr.bf16.mxu0 %v3487
        %3907 = vmatpush1.bf16.msra.mxu0 %v3486
        %3908 = vmatprep.subr.bf16.mxu0 %v3496
        %3909 = vmatpush1.bf16.msra.mxu0 %v3495
        %3910 = vmatprep.subr.bf16.mxu0 %v3505
        %3911 = vmatpush1.bf16.msra.mxu0 %v3504
        %3912 = vmatprep.subr.bf16.mxu0 %v3514
        %3913 = vmatpush1.bf16.msra.mxu0 %v3513
        %3914 = vmatprep.subr.bf16.mxu0 %v3523
        %3915 = vmatpush1.bf16.msra.mxu0 %v3522
        %3916 = vmatprep.subr.bf16.mxu0 %v3532
        %3917 = vmatpush1.bf16.msra.mxu0 %v3531
        %3918 = vmatprep.mubr.bf16.mxu0 %v3823
        %3919 = vmatmul.mubr.bf16.gmra.mrb[0].mxu0 %v3822
        %v3920 = vpop.f32.mrb[0].mxu0
        %v3921 = vadd.f32 %v3747, %v3920
        %v3922 = vpop.f32.mrb[0].mxu0
        %v3923 = vadd.f32 %v3747, %v3922
        %v3924 = vpop.f32.mrb[0].mxu0
        %v3925 = vadd.f32 %v3752, %v3924
        %v3926 = vpop.f32.mrb[0].mxu0
        %v3927 = vadd.f32 %v3752, %v3926
        %3928 = vmatprep.mubr.bf16.mxu0 %v3828
        %3929 = vmatmul.mubr.bf16.gmra.mrb[0].mxu0 %v3827
        %v3930 = vpop.f32.mrb[0].mxu0
        %v3931 = vadd.f32 %v3757, %v3930
        %v3932 = vpop.f32.mrb[0].mxu0
        %v3933 = vadd.f32 %v3757, %v3932
        %v3934 = vpop.f32.mrb[0].mxu0
        %v3935 = vadd.f32 %v3762, %v3934
        %v3936 = vpop.f32.mrb[0].mxu0
        %v3937 = vadd.f32 %v3762, %v3936
        %3938 = vmatprep.mubr.bf16.mxu0 %v3833
        %3939 = vmatmul.mubr.bf16.gmra.mrb[0].mxu0 %v3832
        %v3940 = vpop.f32.mrb[0].mxu0
        %v3941 = vadd.f32 %v3767, %v3940
        %v3942 = vpop.f32.mrb[0].mxu0
        %v3943 = vadd.f32 %v3767, %v3942
        %v3944 = vpop.f32.mrb[0].mxu0
        %v3945 = vadd.f32 %v3772, %v3944
        %v3946 = vpop.f32.mrb[0].mxu0
        %v3947 = vadd.f32 %v3772, %v3946
        %3948 = vdwg.mxu0
        %3949 = vmatprep.subr.bf16.mxu0 %v3541
        %3950 = vmatpush1.bf16.msra.mxu0 %v3540
        %3951 = vmatprep.subr.bf16.mxu0 %v3550
        %3952 = vmatpush1.bf16.msra.mxu0 %v3549
        %3953 = vmatprep.subr.bf16.mxu0 %v3559
        %3954 = vmatpush1.bf16.msra.mxu0 %v3558
        %3955 = vmatprep.subr.bf16.mxu0 %v3568
        %3956 = vmatpush1.bf16.msra.mxu0 %v3567
        %3957 = vmatprep.subr.bf16.mxu0 %v3577
        %3958 = vmatpush1.bf16.msra.mxu0 %v3576
        %3959 = vmatprep.subr.bf16.mxu0 %v3586
        %3960 = vmatpush1.bf16.msra.mxu0 %v3585
        %3961 = vmatprep.subr.bf16.mxu0 %v3595
        %3962 = vmatpush1.bf16.msra.mxu0 %v3594
        %3963 = vmatprep.subr.bf16.mxu0 %v3604
        %3964 = vmatpush1.bf16.msra.mxu0 %v3603
        %3965 = vmatprep.subr.bf16.mxu0 %v3613
        %3966 = vmatpush1.bf16.msra.mxu0 %v3612
        %3967 = vmatprep.subr.bf16.mxu0 %v3622
        %3968 = vmatpush1.bf16.msra.mxu0 %v3621
        %3969 = vmatprep.subr.bf16.mxu0 %v3631
        %3970 = vmatpush1.bf16.msra.mxu0 %v3630
        %3971 = vmatprep.subr.bf16.mxu0 %v3640
        %3972 = vmatpush1.bf16.msra.mxu0 %v3639
        %3973 = vmatprep.subr.bf16.mxu0 %v3649
        %3974 = vmatpush1.bf16.msra.mxu0 %v3648
        %3975 = vmatprep.subr.bf16.mxu0 %v3658
        %3976 = vmatpush1.bf16.msra.mxu0 %v3657
        %3977 = vmatprep.subr.bf16.mxu0 %v3667
        %3978 = vmatpush1.bf16.msra.mxu0 %v3666
        %3979 = vmatprep.subr.bf16.mxu0 %v3676
        %3980 = vmatpush1.bf16.msra.mxu0 %v3675
        %3981 = vmatprep.mubr.bf16.mxu0 %v3825
        %3982 = vmatmul.mubr.bf16.gmra.mrb[0].mxu0 %v3824
        %v3983 = vpop.f32.mrb[0].mxu0
        %v3984 = vadd.f32 %v3921, %v3983
        %v3985 = vpop.f32.mrb[0].mxu0
        %v3986 = vadd.f32 %v3923, %v3985
        %v3987 = vpop.f32.mrb[0].mxu0
        %v3988 = vadd.f32 %v3925, %v3987
        %v3989 = vpop.f32.mrb[0].mxu0
        %v3990 = vadd.f32 %v3927, %v3989
        %3991 = vmatprep.mubr.bf16.mxu0 %v3830
        %3992 = vmatmul.mubr.bf16.gmra.mrb[0].mxu0 %v3829
        %v3993 = vpop.f32.mrb[0].mxu0
        %v3994 = vadd.f32 %v3931, %v3993
        %v3995 = vpop.f32.mrb[0].mxu0
        %v3996 = vadd.f32 %v3933, %v3995
        %v3997 = vpop.f32.mrb[0].mxu0
        %v3998 = vadd.f32 %v3935, %v3997
        %v3999 = vpop.f32.mrb[0].mxu0
        %v4000 = vadd.f32 %v3937, %v3999
        %4001 = vmatprep.mubr.bf16.mxu0 %v3835
        %4002 = vmatmul.mubr.bf16.gmra.mrb[0].mxu0 %v3834
        %v4003 = vpop.f32.mrb[0].mxu0
        %v4004 = vadd.f32 %v3941, %v4003
        %v4005 = vpop.f32.mrb[0].mxu0
        %v4006 = vadd.f32 %v3943, %v4005
        %v4007 = vpop.f32.mrb[0].mxu0
        %v4008 = vadd.f32 %v3945, %v4007
        %v4009 = vpop.f32.mrb[0].mxu0
        %v4010 = vadd.f32 %v3947, %v4009
        %4011 = vdwg.mxu0
        %4012 = vmatprep.subr.bf16.mxu0 %v3685
        %4013 = vmatpush1.bf16.msra.mxu0 %v3684
        %4014 = vmatprep.subr.bf16.mxu0 %v3694
        %4015 = vmatpush1.bf16.msra.mxu0 %v3693
        %4016 = vmatprep.subr.bf16.mxu0 %v3703
        %4017 = vmatpush1.bf16.msra.mxu0 %v3702
        %4018 = vmatprep.subr.bf16.mxu0 %v3712
        %4019 = vmatpush1.bf16.msra.mxu0 %v3711
        %4020 = vmatprep.subr.bf16.mxu0 %v3721
        %4021 = vmatpush1.bf16.msra.mxu0 %v3720
        %4022 = vmatprep.subr.bf16.mxu0 %v3863
        %4023 = vmatpush1.bf16.msra.mxu0 %v3860
        %4024 = vmatprep.subr.bf16.mxu0 0
        %4025 = vmatpush1.bf16.msra.mxu0 0
        %4026 = vmatprep.subr.bf16.mxu0 0
        %4027 = vmatpush1.bf16.msra.mxu0 0
        %4028 = vmatprep.subr.bf16.mxu0 0
        %4029 = vmatpush1.bf16.msra.mxu0 0
        %4030 = vmatprep.subr.bf16.mxu0 0
        %4031 = vmatpush1.bf16.msra.mxu0 0
        %4032 = vmatprep.subr.bf16.mxu0 0
        %4033 = vmatpush1.bf16.msra.mxu0 0
        %4034 = vmatprep.subr.bf16.mxu0 0
        %4035 = vmatpush1.bf16.msra.mxu0 0
        %4036 = vmatprep.subr.bf16.mxu0 0
        %4037 = vmatpush1.bf16.msra.mxu0 0
        %4038 = vmatprep.subr.bf16.mxu0 0
        %4039 = vmatpush1.bf16.msra.mxu0 0
        %4040 = vmatprep.subr.bf16.mxu0 0
        %4041 = vmatpush1.bf16.msra.mxu0 0
        %4042 = vmatprep.subr.bf16.mxu0 0
        %4043 = vmatpush1.bf16.msra.mxu0 0
        %4044 = vmatprep.mubr.bf16.mxu0 0
        %4045 = vmatmul.mubr.bf16.gmra.mrb[0].mxu0 %v3850
        %v4046 = vpop.f32.mrb[0].mxu0
        %v4047 = vadd.f32 %v3984, %v4046
        %v4048 = vpop.f32.mrb[0].mxu0
        %v4049 = vadd.f32 %v3986, %v4048
        %v4050 = vpop.f32.mrb[0].mxu0
        %v4051 = vadd.f32 %v3988, %v4050
        %v4052 = vpop.f32.mrb[0].mxu0
        %v4053 = vadd.f32 %v3990, %v4052
        %4054 = vmatprep.mubr.bf16.mxu0 0
        %4055 = vmatmul.mubr.bf16.gmra.mrb[0].mxu0 %v3853
        %v4056 = vpop.f32.mrb[0].mxu0
        %v4057 = vadd.f32 %v3994, %v4056
        %v4058 = vpop.f32.mrb[0].mxu0
        %v4059 = vadd.f32 %v3996, %v4058
        %v4060 = vpop.f32.mrb[0].mxu0
        %v4061 = vadd.f32 %v3998, %v4060
        %v4062 = vpop.f32.mrb[0].mxu0
        %v4063 = vadd.f32 %v4000, %v4062
        %4064 = vmatprep.mubr.bf16.mxu0 0
        %4065 = vmatmul.mubr.bf16.gmra.mrb[0].mxu0 %v3856
        %v4066 = vpop.f32.mrb[0].mxu0
        %v4067 = vadd.f32 %v4004, %v4066
        %v4068 = vpop.f32.mrb[0].mxu0
        %v4069 = vadd.f32 %v4006, %v4068
        %v4070 = vpop.f32.mrb[0].mxu0
        %v4071 = vadd.f32 %v4008, %v4070
        %v4072 = vpop.f32.mrb[0].mxu0
        %v4073 = vadd.f32 %v4010, %v4072
        %4074 = vdwg.mxu0
        %4075 = vmatprep.subr.bf16.mxu0 %v3399
        %4076 = vmatpush1.bf16.msra.mxu0 %v3398
        %4077 = vmatprep.subr.bf16.mxu0 %v3408
        %4078 = vmatpush1.bf16.msra.mxu0 %v3407
        %4079 = vmatprep.subr.bf16.mxu0 %v3417
        %4080 = vmatpush1.bf16.msra.mxu0 %v3416
        %4081 = vmatprep.subr.bf16.mxu0 %v3426
        %4082 = vmatpush1.bf16.msra.mxu0 %v3425
        %4083 = vmatprep.subr.bf16.mxu0 %v3435
        %4084 = vmatpush1.bf16.msra.mxu0 %v3434
        %4085 = vmatprep.subr.bf16.mxu0 %v3444
        %4086 = vmatpush1.bf16.msra.mxu0 %v3443
        %4087 = vmatprep.subr.bf16.mxu0 %v3453
        %4088 = vmatpush1.bf16.msra.mxu0 %v3452
        %4089 = vmatprep.subr.bf16.mxu0 %v3462
        %4090 = vmatpush1.bf16.msra.mxu0 %v3461
        %4091 = vmatprep.subr.bf16.mxu0 %v3471
        %4092 = vmatpush1.bf16.msra.mxu0 %v3470
        %4093 = vmatprep.subr.bf16.mxu0 %v3480
        %4094 = vmatpush1.bf16.msra.mxu0 %v3479
        %4095 = vmatprep.subr.bf16.mxu0 %v3489
        %4096 = vmatpush1.bf16.msra.mxu0 %v3488
        %4097 = vmatprep.subr.bf16.mxu0 %v3498
        %4098 = vmatpush1.bf16.msra.mxu0 %v3497
        %4099 = vmatprep.subr.bf16.mxu0 %v3507
        %4100 = vmatpush1.bf16.msra.mxu0 %v3506
        %4101 = vmatprep.subr.bf16.mxu0 %v3516
        %4102 = vmatpush1.bf16.msra.mxu0 %v3515
        %4103 = vmatprep.subr.bf16.mxu0 %v3525
        %4104 = vmatpush1.bf16.msra.mxu0 %v3524
        %4105 = vmatprep.subr.bf16.mxu0 %v3534
        %4106 = vmatpush1.bf16.msra.mxu0 %v3533
        %4107 = vmatprep.mubr.bf16.mxu0 %v3823
        %4108 = vmatmul.mubr.bf16.gmra.mrb[0].mxu0 %v3822
        %v4109 = vpop.f32.mrb[0].mxu0
        %v4110 = vadd.f32 %v3747, %v4109
        %v4111 = vpop.f32.mrb[0].mxu0
        %v4112 = vadd.f32 %v3747, %v4111
        %v4113 = vpop.f32.mrb[0].mxu0
        %v4114 = vadd.f32 %v3752, %v4113
        %v4115 = vpop.f32.mrb[0].mxu0
        %v4116 = vadd.f32 %v3752, %v4115
        %4117 = vmatprep.mubr.bf16.mxu0 %v3828
        %4118 = vmatmul.mubr.bf16.gmra.mrb[0].mxu0 %v3827
        %v4119 = vpop.f32.mrb[0].mxu0
        %v4120 = vadd.f32 %v3757, %v4119
        %v4121 = vpop.f32.mrb[0].mxu0
        %v4122 = vadd.f32 %v3757, %v4121
        %v4123 = vpop.f32.mrb[0].mxu0
        %v4124 = vadd.f32 %v3762, %v4123
        %v4125 = vpop.f32.mrb[0].mxu0
        %v4126 = vadd.f32 %v3762, %v4125
        %4127 = vmatprep.mubr.bf16.mxu0 %v3833
        %4128 = vmatmul.mubr.bf16.gmra.mrb[0].mxu0 %v3832
        %v4129 = vpop.f32.mrb[0].mxu0
        %v4130 = vadd.f32 %v3767, %v4129
        %v4131 = vpop.f32.mrb[0].mxu0
        %v4132 = vadd.f32 %v3767, %v4131
        %v4133 = vpop.f32.mrb[0].mxu0
        %v4134 = vadd.f32 %v3772, %v4133
        %v4135 = vpop.f32.mrb[0].mxu0
        %v4136 = vadd.f32 %v3772, %v4135
        %4137 = vdwg.mxu0
        %4138 = vmatprep.subr.bf16.mxu0 %v3543
        %4139 = vmatpush1.bf16.msra.mxu0 %v3542
        %4140 = vmatprep.subr.bf16.mxu0 %v3552
        %4141 = vmatpush1.bf16.msra.mxu0 %v3551
        %4142 = vmatprep.subr.bf16.mxu0 %v3561
        %4143 = vmatpush1.bf16.msra.mxu0 %v3560
        %4144 = vmatprep.subr.bf16.mxu0 %v3570
        %4145 = vmatpush1.bf16.msra.mxu0 %v3569
        %4146 = vmatprep.subr.bf16.mxu0 %v3579
        %4147 = vmatpush1.bf16.msra.mxu0 %v3578
        %4148 = vmatprep.subr.bf16.mxu0 %v3588
        %4149 = vmatpush1.bf16.msra.mxu0 %v3587
        %4150 = vmatprep.subr.bf16.mxu0 %v3597
        %4151 = vmatpush1.bf16.msra.mxu0 %v3596
        %4152 = vmatprep.subr.bf16.mxu0 %v3606
        %4153 = vmatpush1.bf16.msra.mxu0 %v3605
        %4154 = vmatprep.subr.bf16.mxu0 %v3615
        %4155 = vmatpush1.bf16.msra.mxu0 %v3614
        %4156 = vmatprep.subr.bf16.mxu0 %v3624
        %4157 = vmatpush1.bf16.msra.mxu0 %v3623
        %4158 = vmatprep.subr.bf16.mxu0 %v3633
        %4159 = vmatpush1.bf16.msra.mxu0 %v3632
        %4160 = vmatprep.subr.bf16.mxu0 %v3642
        %4161 = vmatpush1.bf16.msra.mxu0 %v3641
        %4162 = vmatprep.subr.bf16.mxu0 %v3651
        %4163 = vmatpush1.bf16.msra.mxu0 %v3650
        %4164 = vmatprep.subr.bf16.mxu0 %v3660
        %4165 = vmatpush1.bf16.msra.mxu0 %v3659
        %4166 = vmatprep.subr.bf16.mxu0 %v3669
        %4167 = vmatpush1.bf16.msra.mxu0 %v3668
        %4168 = vmatprep.subr.bf16.mxu0 %v3678
        %4169 = vmatpush1.bf16.msra.mxu0 %v3677
        %4170 = vmatprep.mubr.bf16.mxu0 %v3825
        %4171 = vmatmul.mubr.bf16.gmra.mrb[0].mxu0 %v3824
        %v4172 = vpop.f32.mrb[0].mxu0
        %v4173 = vadd.f32 %v4110, %v4172
        %v4174 = vpop.f32.mrb[0].mxu0
        %v4175 = vadd.f32 %v4112, %v4174
        %v4176 = vpop.f32.mrb[0].mxu0
        %v4177 = vadd.f32 %v4114, %v4176
        %v4178 = vpop.f32.mrb[0].mxu0
        %v4179 = vadd.f32 %v4116, %v4178
        %4180 = vmatprep.mubr.bf16.mxu0 %v3830
        %4181 = vmatmul.mubr.bf16.gmra.mrb[0].mxu0 %v3829
        %v4182 = vpop.f32.mrb[0].mxu0
        %v4183 = vadd.f32 %v4120, %v4182
        %v4184 = vpop.f32.mrb[0].mxu0
        %v4185 = vadd.f32 %v4122, %v4184
        %v4186 = vpop.f32.mrb[0].mxu0
        %v4187 = vadd.f32 %v4124, %v4186
        %v4188 = vpop.f32.mrb[0].mxu0
        %v4189 = vadd.f32 %v4126, %v4188
        %4190 = vmatprep.mubr.bf16.mxu0 %v3835
        %4191 = vmatmul.mubr.bf16.gmra.mrb[0].mxu0 %v3834
        %v4192 = vpop.f32.mrb[0].mxu0
        %v4193 = vadd.f32 %v4130, %v4192
        %v4194 = vpop.f32.mrb[0].mxu0
        %v4195 = vadd.f32 %v4132, %v4194
        %v4196 = vpop.f32.mrb[0].mxu0
        %v4197 = vadd.f32 %v4134, %v4196
        %v4198 = vpop.f32.mrb[0].mxu0
        %v4199 = vadd.f32 %v4136, %v4198
        %4200 = vdwg.mxu0
        %4201 = vmatprep.subr.bf16.mxu0 %v3687
        %4202 = vmatpush1.bf16.msra.mxu0 %v3686
        %4203 = vmatprep.subr.bf16.mxu0 %v3696
        %4204 = vmatpush1.bf16.msra.mxu0 %v3695
        %4205 = vmatprep.subr.bf16.mxu0 %v3705
        %4206 = vmatpush1.bf16.msra.mxu0 %v3704
        %4207 = vmatprep.subr.bf16.mxu0 %v3714
        %4208 = vmatpush1.bf16.msra.mxu0 %v3713
        %4209 = vmatprep.subr.bf16.mxu0 %v3723
        %4210 = vmatpush1.bf16.msra.mxu0 %v3722
        %4211 = vmatprep.subr.bf16.mxu0 %v3869
        %4212 = vmatpush1.bf16.msra.mxu0 %v3866
        %4213 = vmatprep.subr.bf16.mxu0 0
        %4214 = vmatpush1.bf16.msra.mxu0 0
        %4215 = vmatprep.subr.bf16.mxu0 0
        %4216 = vmatpush1.bf16.msra.mxu0 0
        %4217 = vmatprep.subr.bf16.mxu0 0
        %4218 = vmatpush1.bf16.msra.mxu0 0
        %4219 = vmatprep.subr.bf16.mxu0 0
        %4220 = vmatpush1.bf16.msra.mxu0 0
        %4221 = vmatprep.subr.bf16.mxu0 0
        %4222 = vmatpush1.bf16.msra.mxu0 0
        %4223 = vmatprep.subr.bf16.mxu0 0
        %4224 = vmatpush1.bf16.msra.mxu0 0
        %4225 = vmatprep.subr.bf16.mxu0 0
        %4226 = vmatpush1.bf16.msra.mxu0 0
        %4227 = vmatprep.subr.bf16.mxu0 0
        %4228 = vmatpush1.bf16.msra.mxu0 0
        %4229 = vmatprep.subr.bf16.mxu0 0
        %4230 = vmatpush1.bf16.msra.mxu0 0
        %4231 = vmatprep.subr.bf16.mxu0 0
        %4232 = vmatpush1.bf16.msra.mxu0 0
        %4233 = vmatprep.mubr.bf16.mxu0 0
        %4234 = vmatmul.mubr.bf16.gmra.mrb[0].mxu0 %v3850
        %v4235 = vpop.f32.mrb[0].mxu0
        %v4236 = vadd.f32 %v4173, %v4235
        %v4237 = vpop.f32.mrb[0].mxu0
        %v4238 = vadd.f32 %v4175, %v4237
        %v4239 = vpop.f32.mrb[0].mxu0
        %v4240 = vadd.f32 %v4177, %v4239
        %v4241 = vpop.f32.mrb[0].mxu0
        %v4242 = vadd.f32 %v4179, %v4241
        %4243 = vmatprep.mubr.bf16.mxu0 0
        %4244 = vmatmul.mubr.bf16.gmra.mrb[0].mxu0 %v3853
        %v4245 = vpop.f32.mrb[0].mxu0
        %v4246 = vadd.f32 %v4183, %v4245
        %v4247 = vpop.f32.mrb[0].mxu0
        %v4248 = vadd.f32 %v4185, %v4247
        %v4249 = vpop.f32.mrb[0].mxu0
        %v4250 = vadd.f32 %v4187, %v4249
        %v4251 = vpop.f32.mrb[0].mxu0
        %v4252 = vadd.f32 %v4189, %v4251
        %4253 = vmatprep.mubr.bf16.mxu0 0
        %4254 = vmatmul.mubr.bf16.gmra.mrb[0].mxu0 %v3856
        %v4255 = vpop.f32.mrb[0].mxu0
        %v4256 = vadd.f32 %v4193, %v4255
        %v4257 = vpop.f32.mrb[0].mxu0
        %v4258 = vadd.f32 %v4195, %v4257
        %v4259 = vpop.f32.mrb[0].mxu0
        %v4260 = vadd.f32 %v4197, %v4259
        %v4261 = vpop.f32.mrb[0].mxu0
        %v4262 = vadd.f32 %v4199, %v4261
        %4263 = vdwg.mxu0
        %4264 = vmatprep.subr.bf16.mxu0 %v3401
        %4265 = vmatpush1.bf16.msra.mxu0 %v3400
        %4266 = vmatprep.subr.bf16.mxu0 %v3410
        %4267 = vmatpush1.bf16.msra.mxu0 %v3409
        %4268 = vmatprep.subr.bf16.mxu0 %v3419
        %4269 = vmatpush1.bf16.msra.mxu0 %v3418
        %4270 = vmatprep.subr.bf16.mxu0 %v3428
        %4271 = vmatpush1.bf16.msra.mxu0 %v3427
        %4272 = vmatprep.subr.bf16.mxu0 %v3437
        %4273 = vmatpush1.bf16.msra.mxu0 %v3436
        %4274 = vmatprep.subr.bf16.mxu0 %v3446
        %4275 = vmatpush1.bf16.msra.mxu0 %v3445
        %4276 = vmatprep.subr.bf16.mxu0 %v3455
        %4277 = vmatpush1.bf16.msra.mxu0 %v3454
        %4278 = vmatprep.subr.bf16.mxu0 %v3464
        %4279 = vmatpush1.bf16.msra.mxu0 %v3463
        %4280 = vmatprep.subr.bf16.mxu0 %v3473
        %4281 = vmatpush1.bf16.msra.mxu0 %v3472
        %4282 = vmatprep.subr.bf16.mxu0 %v3482
        %4283 = vmatpush1.bf16.msra.mxu0 %v3481
        %4284 = vmatprep.subr.bf16.mxu0 %v3491
        %4285 = vmatpush1.bf16.msra.mxu0 %v3490
        %4286 = vmatprep.subr.bf16.mxu0 %v3500
        %4287 = vmatpush1.bf16.msra.mxu0 %v3499
        %4288 = vmatprep.subr.bf16.mxu0 %v3509
        %4289 = vmatpush1.bf16.msra.mxu0 %v3508
        %4290 = vmatprep.subr.bf16.mxu0 %v3518
        %4291 = vmatpush1.bf16.msra.mxu0 %v3517
        %4292 = vmatprep.subr.bf16.mxu0 %v3527
        %4293 = vmatpush1.bf16.msra.mxu0 %v3526
        %4294 = vmatprep.subr.bf16.mxu0 %v3536
        %4295 = vmatpush1.bf16.msra.mxu0 %v3535
        %4296 = vmatprep.mubr.bf16.mxu0 %v3823
        %4297 = vmatmul.mubr.bf16.gmra.mrb[0].mxu0 %v3822
        %v4298 = vpop.f32.mrb[0].mxu0
        %v4299 = vadd.f32 %v3747, %v4298
        %v4300 = vpop.f32.mrb[0].mxu0
        %v4301 = vadd.f32 %v3747, %v4300
        %v4302 = vpop.f32.mrb[0].mxu0
        %v4303 = vadd.f32 %v3752, %v4302
        %v4304 = vpop.f32.mrb[0].mxu0
        %v4305 = vadd.f32 %v3752, %v4304
        %4306 = vmatprep.mubr.bf16.mxu0 %v3828
        %4307 = vmatmul.mubr.bf16.gmra.mrb[0].mxu0 %v3827
        %v4308 = vpop.f32.mrb[0].mxu0
        %v4309 = vadd.f32 %v3757, %v4308
        %v4310 = vpop.f32.mrb[0].mxu0
        %v4311 = vadd.f32 %v3757, %v4310
        %v4312 = vpop.f32.mrb[0].mxu0
        %v4313 = vadd.f32 %v3762, %v4312
        %v4314 = vpop.f32.mrb[0].mxu0
        %v4315 = vadd.f32 %v3762, %v4314
        %4316 = vmatprep.mubr.bf16.mxu0 %v3833
        %4317 = vmatmul.mubr.bf16.gmra.mrb[0].mxu0 %v3832
        %v4318 = vpop.f32.mrb[0].mxu0
        %v4319 = vadd.f32 %v3767, %v4318
        %v4320 = vpop.f32.mrb[0].mxu0
        %v4321 = vadd.f32 %v3767, %v4320
        %v4322 = vpop.f32.mrb[0].mxu0
        %v4323 = vadd.f32 %v3772, %v4322
        %v4324 = vpop.f32.mrb[0].mxu0
        %v4325 = vadd.f32 %v3772, %v4324
        %4326 = vdwg.mxu0
        %4327 = vmatprep.subr.bf16.mxu0 %v3545
        %4328 = vmatpush1.bf16.msra.mxu0 %v3544
        %4329 = vmatprep.subr.bf16.mxu0 %v3554
        %4330 = vmatpush1.bf16.msra.mxu0 %v3553
        %4331 = vmatprep.subr.bf16.mxu0 %v3563
        %4332 = vmatpush1.bf16.msra.mxu0 %v3562
        %4333 = vmatprep.subr.bf16.mxu0 %v3572
        %4334 = vmatpush1.bf16.msra.mxu0 %v3571
        %4335 = vmatprep.subr.bf16.mxu0 %v3581
        %4336 = vmatpush1.bf16.msra.mxu0 %v3580
        %4337 = vmatprep.subr.bf16.mxu0 %v3590
        %4338 = vmatpush1.bf16.msra.mxu0 %v3589
        %4339 = vmatprep.subr.bf16.mxu0 %v3599
        %4340 = vmatpush1.bf16.msra.mxu0 %v3598
        %4341 = vmatprep.subr.bf16.mxu0 %v3608
        %4342 = vmatpush1.bf16.msra.mxu0 %v3607
        %4343 = vmatprep.subr.bf16.mxu0 %v3617
        %4344 = vmatpush1.bf16.msra.mxu0 %v3616
        %4345 = vmatprep.subr.bf16.mxu0 %v3626
        %4346 = vmatpush1.bf16.msra.mxu0 %v3625
        %4347 = vmatprep.subr.bf16.mxu0 %v3635
        %4348 = vmatpush1.bf16.msra.mxu0 %v3634
        %4349 = vmatprep.subr.bf16.mxu0 %v3644
        %4350 = vmatpush1.bf16.msra.mxu0 %v3643
        %4351 = vmatprep.subr.bf16.mxu0 %v3653
        %4352 = vmatpush1.bf16.msra.mxu0 %v3652
        %4353 = vmatprep.subr.bf16.mxu0 %v3662
        %4354 = vmatpush1.bf16.msra.mxu0 %v3661
        %4355 = vmatprep.subr.bf16.mxu0 %v3671
        %4356 = vmatpush1.bf16.msra.mxu0 %v3670
        %4357 = vmatprep.subr.bf16.mxu0 %v3680
        %4358 = vmatpush1.bf16.msra.mxu0 %v3679
        %4359 = vmatprep.mubr.bf16.mxu0 %v3825
        %4360 = vmatmul.mubr.bf16.gmra.mrb[0].mxu0 %v3824
        %v4361 = vpop.f32.mrb[0].mxu0
        %v4362 = vadd.f32 %v4299, %v4361
        %v4363 = vpop.f32.mrb[0].mxu0
        %v4364 = vadd.f32 %v4301, %v4363
        %v4365 = vpop.f32.mrb[0].mxu0
        %v4366 = vadd.f32 %v4303, %v4365
        %v4367 = vpop.f32.mrb[0].mxu0
        %v4368 = vadd.f32 %v4305, %v4367
        %4369 = vmatprep.mubr.bf16.mxu0 %v3830
        %4370 = vmatmul.mubr.bf16.gmra.mrb[0].mxu0 %v3829
        %v4371 = vpop.f32.mrb[0].mxu0
        %v4372 = vadd.f32 %v4309, %v4371
        %v4373 = vpop.f32.mrb[0].mxu0
        %v4374 = vadd.f32 %v4311, %v4373
        %v4375 = vpop.f32.mrb[0].mxu0
        %v4376 = vadd.f32 %v4313, %v4375
        %v4377 = vpop.f32.mrb[0].mxu0
        %v4378 = vadd.f32 %v4315, %v4377
        %4379 = vmatprep.mubr.bf16.mxu0 %v3835
        %4380 = vmatmul.mubr.bf16.gmra.mrb[0].mxu0 %v3834
        %v4381 = vpop.f32.mrb[0].mxu0
        %v4382 = vadd.f32 %v4319, %v4381
        %v4383 = vpop.f32.mrb[0].mxu0
        %v4384 = vadd.f32 %v4321, %v4383
        %v4385 = vpop.f32.mrb[0].mxu0
        %v4386 = vadd.f32 %v4323, %v4385
        %v4387 = vpop.f32.mrb[0].mxu0
        %v4388 = vadd.f32 %v4325, %v4387
        %4389 = vdwg.mxu0
        %4390 = vmatprep.subr.bf16.mxu0 %v3689
        %4391 = vmatpush1.bf16.msra.mxu0 %v3688
        %4392 = vmatprep.subr.bf16.mxu0 %v3698
        %4393 = vmatpush1.bf16.msra.mxu0 %v3697
        %4394 = vmatprep.subr.bf16.mxu0 %v3707
        %4395 = vmatpush1.bf16.msra.mxu0 %v3706
        %4396 = vmatprep.subr.bf16.mxu0 %v3716
        %4397 = vmatpush1.bf16.msra.mxu0 %v3715
        %4398 = vmatprep.subr.bf16.mxu0 %v3725
        %4399 = vmatpush1.bf16.msra.mxu0 %v3724
        %4400 = vmatprep.subr.bf16.mxu0 %v3875
        %4401 = vmatpush1.bf16.msra.mxu0 %v3872
        %4402 = vmatprep.subr.bf16.mxu0 0
        %4403 = vmatpush1.bf16.msra.mxu0 0
        %4404 = vmatprep.subr.bf16.mxu0 0
        %4405 = vmatpush1.bf16.msra.mxu0 0
        %4406 = vmatprep.subr.bf16.mxu0 0
        %4407 = vmatpush1.bf16.msra.mxu0 0
        %4408 = vmatprep.subr.bf16.mxu0 0
        %4409 = vmatpush1.bf16.msra.mxu0 0
        %4410 = vmatprep.subr.bf16.mxu0 0
        %4411 = vmatpush1.bf16.msra.mxu0 0
        %4412 = vmatprep.subr.bf16.mxu0 0
        %4413 = vmatpush1.bf16.msra.mxu0 0
        %4414 = vmatprep.subr.bf16.mxu0 0
        %4415 = vmatpush1.bf16.msra.mxu0 0
        %4416 = vmatprep.subr.bf16.mxu0 0
        %4417 = vmatpush1.bf16.msra.mxu0 0
        %4418 = vmatprep.subr.bf16.mxu0 0
        %4419 = vmatpush1.bf16.msra.mxu0 0
        %4420 = vmatprep.subr.bf16.mxu0 0
        %4421 = vmatpush1.bf16.msra.mxu0 0
        %4422 = vmatprep.mubr.bf16.mxu0 0
        %4423 = vmatmul.mubr.bf16.gmra.mrb[0].mxu0 %v3850
        %v4424 = vpop.f32.mrb[0].mxu0
        %v4425 = vadd.f32 %v4362, %v4424
        %v4426 = vpop.f32.mrb[0].mxu0
        %v4427 = vadd.f32 %v4364, %v4426
        %v4428 = vpop.f32.mrb[0].mxu0
        %v4429 = vadd.f32 %v4366, %v4428
        %v4430 = vpop.f32.mrb[0].mxu0
        %v4431 = vadd.f32 %v4368, %v4430
        %4432 = vmatprep.mubr.bf16.mxu0 0
        %4433 = vmatmul.mubr.bf16.gmra.mrb[0].mxu0 %v3853
        %v4434 = vpop.f32.mrb[0].mxu0
        %v4435 = vadd.f32 %v4372, %v4434
        %v4436 = vpop.f32.mrb[0].mxu0
        %v4437 = vadd.f32 %v4374, %v4436
        %v4438 = vpop.f32.mrb[0].mxu0
        %v4439 = vadd.f32 %v4376, %v4438
        %v4440 = vpop.f32.mrb[0].mxu0
        %v4441 = vadd.f32 %v4378, %v4440
        %4442 = vmatprep.mubr.bf16.mxu0 0
        %4443 = vmatmul.mubr.bf16.gmra.mrb[0].mxu0 %v3856
        %v4444 = vpop.f32.mrb[0].mxu0
        %v4445 = vadd.f32 %v4382, %v4444
        %v4446 = vpop.f32.mrb[0].mxu0
        %v4447 = vadd.f32 %v4384, %v4446
        %v4448 = vpop.f32.mrb[0].mxu0
        %v4449 = vadd.f32 %v4386, %v4448
        %v4450 = vpop.f32.mrb[0].mxu0
        %v4451 = vadd.f32 %v4388, %v4450
        %4452 = vdwg.mxu0
        %4453 = vmatprep.subr.bf16.mxu0 %v3403
        %4454 = vmatpush1.bf16.msra.mxu0 %v3402
        %4455 = vmatprep.subr.bf16.mxu0 %v3412
        %4456 = vmatpush1.bf16.msra.mxu0 %v3411
        %4457 = vmatprep.subr.bf16.mxu0 %v3421
        %4458 = vmatpush1.bf16.msra.mxu0 %v3420
        %4459 = vmatprep.subr.bf16.mxu0 %v3430
        %4460 = vmatpush1.bf16.msra.mxu0 %v3429
        %4461 = vmatprep.subr.bf16.mxu0 %v3439
        %4462 = vmatpush1.bf16.msra.mxu0 %v3438
        %4463 = vmatprep.subr.bf16.mxu0 %v3448
        %4464 = vmatpush1.bf16.msra.mxu0 %v3447
        %4465 = vmatprep.subr.bf16.mxu0 %v3457
        %4466 = vmatpush1.bf16.msra.mxu0 %v3456
        %4467 = vmatprep.subr.bf16.mxu0 %v3466
        %4468 = vmatpush1.bf16.msra.mxu0 %v3465
        %4469 = vmatprep.subr.bf16.mxu0 %v3475
        %4470 = vmatpush1.bf16.msra.mxu0 %v3474
        %4471 = vmatprep.subr.bf16.mxu0 %v3484
        %4472 = vmatpush1.bf16.msra.mxu0 %v3483
        %4473 = vmatprep.subr.bf16.mxu0 %v3493
        %4474 = vmatpush1.bf16.msra.mxu0 %v3492
        %4475 = vmatprep.subr.bf16.mxu0 %v3502
        %4476 = vmatpush1.bf16.msra.mxu0 %v3501
        %4477 = vmatprep.subr.bf16.mxu0 %v3511
        %4478 = vmatpush1.bf16.msra.mxu0 %v3510
        %4479 = vmatprep.subr.bf16.mxu0 %v3520
        %4480 = vmatpush1.bf16.msra.mxu0 %v3519
        %4481 = vmatprep.subr.bf16.mxu0 %v3529
        %4482 = vmatpush1.bf16.msra.mxu0 %v3528
        %4483 = vmatprep.subr.bf16.mxu0 %v3538
        %4484 = vmatpush1.bf16.msra.mxu0 %v3537
        %4485 = vmatprep.mubr.bf16.mxu0 %v3823
        %4486 = vmatmul.mubr.bf16.gmra.mrb[0].mxu0 %v3822
        %v4487 = vpop.f32.mrb[0].mxu0
        %v4488 = vadd.f32 %v3747, %v4487
        %v4489 = vpop.f32.mrb[0].mxu0
        %v4490 = vadd.f32 %v3747, %v4489
        %v4491 = vpop.f32.mrb[0].mxu0
        %v4492 = vadd.f32 %v3752, %v4491
        %v4493 = vpop.f32.mrb[0].mxu0
        %v4494 = vadd.f32 %v3752, %v4493
        %4495 = vmatprep.mubr.bf16.mxu0 %v3828
        %4496 = vmatmul.mubr.bf16.gmra.mrb[0].mxu0 %v3827
        %v4497 = vpop.f32.mrb[0].mxu0
        %v4498 = vadd.f32 %v3757, %v4497
        %v4499 = vpop.f32.mrb[0].mxu0
        %v4500 = vadd.f32 %v3757, %v4499
        %v4501 = vpop.f32.mrb[0].mxu0
        %v4502 = vadd.f32 %v3762, %v4501
        %v4503 = vpop.f32.mrb[0].mxu0
        %v4504 = vadd.f32 %v3762, %v4503
        %4505 = vmatprep.mubr.bf16.mxu0 %v3833
        %4506 = vmatmul.mubr.bf16.gmra.mrb[0].mxu0 %v3832
        %v4507 = vpop.f32.mrb[0].mxu0
        %v4508 = vadd.f32 %v3767, %v4507
        %v4509 = vpop.f32.mrb[0].mxu0
        %v4510 = vadd.f32 %v3767, %v4509
        %v4511 = vpop.f32.mrb[0].mxu0
        %v4512 = vadd.f32 %v3772, %v4511
        %v4513 = vpop.f32.mrb[0].mxu0
        %v4514 = vadd.f32 %v3772, %v4513
        %4515 = vdwg.mxu0
        %4516 = vmatprep.subr.bf16.mxu0 %v3547
        %4517 = vmatpush1.bf16.msra.mxu0 %v3546
        %4518 = vmatprep.subr.bf16.mxu0 %v3556
        %4519 = vmatpush1.bf16.msra.mxu0 %v3555
        %4520 = vmatprep.subr.bf16.mxu0 %v3565
        %4521 = vmatpush1.bf16.msra.mxu0 %v3564
        %4522 = vmatprep.subr.bf16.mxu0 %v3574
        %4523 = vmatpush1.bf16.msra.mxu0 %v3573
        %4524 = vmatprep.subr.bf16.mxu0 %v3583
        %4525 = vmatpush1.bf16.msra.mxu0 %v3582
        %4526 = vmatprep.subr.bf16.mxu0 %v3592
        %4527 = vmatpush1.bf16.msra.mxu0 %v3591
        %4528 = vmatprep.subr.bf16.mxu0 %v3601
        %4529 = vmatpush1.bf16.msra.mxu0 %v3600
        %4530 = vmatprep.subr.bf16.mxu0 %v3610
        %4531 = vmatpush1.bf16.msra.mxu0 %v3609
        %4532 = vmatprep.subr.bf16.mxu0 %v3619
        %4533 = vmatpush1.bf16.msra.mxu0 %v3618
        %4534 = vmatprep.subr.bf16.mxu0 %v3628
        %4535 = vmatpush1.bf16.msra.mxu0 %v3627
        %4536 = vmatprep.subr.bf16.mxu0 %v3637
        %4537 = vmatpush1.bf16.msra.mxu0 %v3636
        %4538 = vmatprep.subr.bf16.mxu0 %v3646
        %4539 = vmatpush1.bf16.msra.mxu0 %v3645
        %4540 = vmatprep.subr.bf16.mxu0 %v3655
        %4541 = vmatpush1.bf16.msra.mxu0 %v3654
        %4542 = vmatprep.subr.bf16.mxu0 %v3664
        %4543 = vmatpush1.bf16.msra.mxu0 %v3663
        %4544 = vmatprep.subr.bf16.mxu0 %v3673
        %4545 = vmatpush1.bf16.msra.mxu0 %v3672
        %4546 = vmatprep.subr.bf16.mxu0 %v3682
        %4547 = vmatpush1.bf16.msra.mxu0 %v3681
        %4548 = vmatprep.mubr.bf16.mxu0 %v3825
        %4549 = vmatmul.mubr.bf16.gmra.mrb[0].mxu0 %v3824
        %v4550 = vpop.f32.mrb[0].mxu0
        %v4551 = vadd.f32 %v4488, %v4550
        %v4552 = vpop.f32.mrb[0].mxu0
        %v4553 = vadd.f32 %v4490, %v4552
        %v4554 = vpop.f32.mrb[0].mxu0
        %v4555 = vadd.f32 %v4492, %v4554
        %v4556 = vpop.f32.mrb[0].mxu0
        %v4557 = vadd.f32 %v4494, %v4556
        %4558 = vmatprep.mubr.bf16.mxu0 %v3830
        %4559 = vmatmul.mubr.bf16.gmra.mrb[0].mxu0 %v3829
        %v4560 = vpop.f32.mrb[0].mxu0
        %v4561 = vadd.f32 %v4498, %v4560
        %v4562 = vpop.f32.mrb[0].mxu0
        %v4563 = vadd.f32 %v4500, %v4562
        %v4564 = vpop.f32.mrb[0].mxu0
        %v4565 = vadd.f32 %v4502, %v4564
        %v4566 = vpop.f32.mrb[0].mxu0
        %v4567 = vadd.f32 %v4504, %v4566
        %4568 = vmatprep.mubr.bf16.mxu0 %v3835
        %4569 = vmatmul.mubr.bf16.gmra.mrb[0].mxu0 %v3834
        %v4570 = vpop.f32.mrb[0].mxu0
        %v4571 = vadd.f32 %v4508, %v4570
        %v4572 = vpop.f32.mrb[0].mxu0
        %v4573 = vadd.f32 %v4510, %v4572
        %v4574 = vpop.f32.mrb[0].mxu0
        %v4575 = vadd.f32 %v4512, %v4574
        %v4576 = vpop.f32.mrb[0].mxu0
        %v4577 = vadd.f32 %v4514, %v4576
        %4578 = vdwg.mxu0
        %4579 = vmatprep.subr.bf16.mxu0 %v3691
        %4580 = vmatpush1.bf16.msra.mxu0 %v3690
        %4581 = vmatprep.subr.bf16.mxu0 %v3700
        %4582 = vmatpush1.bf16.msra.mxu0 %v3699
        %4583 = vmatprep.subr.bf16.mxu0 %v3709
        %4584 = vmatpush1.bf16.msra.mxu0 %v3708
        %4585 = vmatprep.subr.bf16.mxu0 %v3718
        %4586 = vmatpush1.bf16.msra.mxu0 %v3717
        %4587 = vmatprep.subr.bf16.mxu0 %v3727
        %4588 = vmatpush1.bf16.msra.mxu0 %v3726
        %4589 = vmatprep.subr.bf16.mxu0 %v3881
        %4590 = vmatpush1.bf16.msra.mxu0 %v3878
        %4591 = vmatprep.subr.bf16.mxu0 0
        %4592 = vmatpush1.bf16.msra.mxu0 0
        %4593 = vmatprep.subr.bf16.mxu0 0
        %4594 = vmatpush1.bf16.msra.mxu0 0
        %4595 = vmatprep.subr.bf16.mxu0 0
        %4596 = vmatpush1.bf16.msra.mxu0 0
        %4597 = vmatprep.subr.bf16.mxu0 0
        %4598 = vmatpush1.bf16.msra.mxu0 0
        %4599 = vmatprep.subr.bf16.mxu0 0
        %4600 = vmatpush1.bf16.msra.mxu0 0
        %4601 = vmatprep.subr.bf16.mxu0 0
        %4602 = vmatpush1.bf16.msra.mxu0 0
        %4603 = vmatprep.subr.bf16.mxu0 0
        %4604 = vmatpush1.bf16.msra.mxu0 0
        %4605 = vmatprep.subr.bf16.mxu0 0
        %4606 = vmatpush1.bf16.msra.mxu0 0
        %4607 = vmatprep.subr.bf16.mxu0 0
        %4608 = vmatpush1.bf16.msra.mxu0 0
        %4609 = vmatprep.subr.bf16.mxu0 0
        %4610 = vmatpush1.bf16.msra.mxu0 0
        %4611 = vmatprep.mubr.bf16.mxu0 0
        %4612 = vmatmul.mubr.bf16.gmra.mrb[0].mxu0 %v3850
        %v4613 = vpop.f32.mrb[0].mxu0
        %v4614 = vadd.f32 %v4551, %v4613
        %v4615 = vpop.f32.mrb[0].mxu0
        %v4616 = vadd.f32 %v4553, %v4615
        %v4617 = vpop.f32.mrb[0].mxu0
        %v4618 = vadd.f32 %v4555, %v4617
        %v4619 = vpop.f32.mrb[0].mxu0
        %v4620 = vadd.f32 %v4557, %v4619
        %4621 = vmatprep.mubr.bf16.mxu0 0
        %4622 = vmatmul.mubr.bf16.gmra.mrb[0].mxu0 %v3853
        %v4623 = vpop.f32.mrb[0].mxu0
        %v4624 = vadd.f32 %v4561, %v4623
        %v4625 = vpop.f32.mrb[0].mxu0
        %v4626 = vadd.f32 %v4563, %v4625
        %v4627 = vpop.f32.mrb[0].mxu0
        %v4628 = vadd.f32 %v4565, %v4627
        %v4629 = vpop.f32.mrb[0].mxu0
        %v4630 = vadd.f32 %v4567, %v4629
        %4631 = vmatprep.mubr.bf16.mxu0 0
        %4632 = vmatmul.mubr.bf16.gmra.mrb[0].mxu0 %v3856
        %v4633 = vpop.f32.mrb[0].mxu0
        %v4634 = vadd.f32 %v4571, %v4633
        %v4635 = vpop.f32.mrb[0].mxu0
        %v4636 = vadd.f32 %v4573, %v4635
        %v4637 = vpop.f32.mrb[0].mxu0
        %v4638 = vadd.f32 %v4575, %v4637
        %v4639 = vpop.f32.mrb[0].mxu0
        %v4640 = vadd.f32 %v4577, %v4639
        %4641 = vdwg.mxu0
        %4642 = vmatprep.subr.bf16.mxu0 0
        %4643 = vmatpush1.bf16.msra.mxu0 %v3404
        %4644 = vmatprep.subr.bf16.mxu0 0
        %4645 = vmatpush1.bf16.msra.mxu0 %v3413
        %4646 = vmatprep.subr.bf16.mxu0 0
        %4647 = vmatpush1.bf16.msra.mxu0 %v3422
        %4648 = vmatprep.subr.bf16.mxu0 0
        %4649 = vmatpush1.bf16.msra.mxu0 %v3431
        %4650 = vmatprep.subr.bf16.mxu0 0
        %4651 = vmatpush1.bf16.msra.mxu0 %v3440
        %4652 = vmatprep.subr.bf16.mxu0 0
        %4653 = vmatpush1.bf16.msra.mxu0 %v3449
        %4654 = vmatprep.subr.bf16.mxu0 0
        %4655 = vmatpush1.bf16.msra.mxu0 %v3458
        %4656 = vmatprep.subr.bf16.mxu0 0
        %4657 = vmatpush1.bf16.msra.mxu0 %v3467
        %4658 = vmatprep.subr.bf16.mxu0 0
        %4659 = vmatpush1.bf16.msra.mxu0 %v3476
        %4660 = vmatprep.subr.bf16.mxu0 0
        %4661 = vmatpush1.bf16.msra.mxu0 %v3485
        %4662 = vmatprep.subr.bf16.mxu0 0
        %4663 = vmatpush1.bf16.msra.mxu0 %v3494
        %4664 = vmatprep.subr.bf16.mxu0 0
        %4665 = vmatpush1.bf16.msra.mxu0 %v3503
        %4666 = vmatprep.subr.bf16.mxu0 0
        %4667 = vmatpush1.bf16.msra.mxu0 %v3512
        %4668 = vmatprep.subr.bf16.mxu0 0
        %4669 = vmatpush1.bf16.msra.mxu0 %v3521
        %4670 = vmatprep.subr.bf16.mxu0 0
        %4671 = vmatpush1.bf16.msra.mxu0 %v3530
        %4672 = vmatprep.subr.bf16.mxu0 0
        %4673 = vmatpush1.bf16.msra.mxu0 %v3539
        %4674 = vmatprep.mubr.bf16.mxu0 %v3823
        %4675 = vmatmul.mubr.bf16.gmra.mrb[0].mxu0 %v3822
        %v4676 = vpop.f32.mrb[0].mxu0
        %v4677 = vadd.f32 %v3747, %v4676
        %v4678 = vpop.f32.mrb[0].mxu0
        %v4679 = vpop.f32.mrb[0].mxu0
        %v4680 = vadd.f32 %v3752, %v4679
        %v4681 = vpop.f32.mrb[0].mxu0
        %4682 = vmatprep.mubr.bf16.mxu0 %v3828
        %4683 = vmatmul.mubr.bf16.gmra.mrb[0].mxu0 %v3827
        %v4684 = vpop.f32.mrb[0].mxu0
        %v4685 = vadd.f32 %v3757, %v4684
        %v4686 = vpop.f32.mrb[0].mxu0
        %v4687 = vpop.f32.mrb[0].mxu0
        %v4688 = vadd.f32 %v3762, %v4687
        %v4689 = vpop.f32.mrb[0].mxu0
        %4690 = vmatprep.mubr.bf16.mxu0 %v3833
        %4691 = vmatmul.mubr.bf16.gmra.mrb[0].mxu0 %v3832
        %v4692 = vpop.f32.mrb[0].mxu0
        %v4693 = vadd.f32 %v3767, %v4692
        %v4694 = vpop.f32.mrb[0].mxu0
        %v4695 = vpop.f32.mrb[0].mxu0
        %v4696 = vadd.f32 %v3772, %v4695
        %v4697 = vpop.f32.mrb[0].mxu0
        %4698 = vdwg.mxu0
        %4699 = vmatprep.subr.bf16.mxu0 0
        %4700 = vmatpush1.bf16.msra.mxu0 %v3548
        %4701 = vmatprep.subr.bf16.mxu0 0
        %4702 = vmatpush1.bf16.msra.mxu0 %v3557
        %4703 = vmatprep.subr.bf16.mxu0 0
        %4704 = vmatpush1.bf16.msra.mxu0 %v3566
        %4705 = vmatprep.subr.bf16.mxu0 0
        %4706 = vmatpush1.bf16.msra.mxu0 %v3575
        %4707 = vmatprep.subr.bf16.mxu0 0
        %4708 = vmatpush1.bf16.msra.mxu0 %v3584
        %4709 = vmatprep.subr.bf16.mxu0 0
        %4710 = vmatpush1.bf16.msra.mxu0 %v3593
        %4711 = vmatprep.subr.bf16.mxu0 0
        %4712 = vmatpush1.bf16.msra.mxu0 %v3602
        %4713 = vmatprep.subr.bf16.mxu0 0
        %4714 = vmatpush1.bf16.msra.mxu0 %v3611
        %4715 = vmatprep.subr.bf16.mxu0 0
        %4716 = vmatpush1.bf16.msra.mxu0 %v3620
        %4717 = vmatprep.subr.bf16.mxu0 0
        %4718 = vmatpush1.bf16.msra.mxu0 %v3629
        %4719 = vmatprep.subr.bf16.mxu0 0
        %4720 = vmatpush1.bf16.msra.mxu0 %v3638
        %4721 = vmatprep.subr.bf16.mxu0 0
        %4722 = vmatpush1.bf16.msra.mxu0 %v3647
        %4723 = vmatprep.subr.bf16.mxu0 0
        %4724 = vmatpush1.bf16.msra.mxu0 %v3656
        %4725 = vmatprep.subr.bf16.mxu0 0
        %4726 = vmatpush1.bf16.msra.mxu0 %v3665
        %4727 = vmatprep.subr.bf16.mxu0 0
        %4728 = vmatpush1.bf16.msra.mxu0 %v3674
        %4729 = vmatprep.subr.bf16.mxu0 0
        %4730 = vmatpush1.bf16.msra.mxu0 %v3683
        %4731 = vmatprep.mubr.bf16.mxu0 %v3825
        %4732 = vmatmul.mubr.bf16.gmra.mrb[0].mxu0 %v3824
        %v4733 = vpop.f32.mrb[0].mxu0
        %v4734 = vadd.f32 %v4677, %v4733
        %v4735 = vpop.f32.mrb[0].mxu0
        %v4736 = vpop.f32.mrb[0].mxu0
        %v4737 = vadd.f32 %v4680, %v4736
        %v4738 = vpop.f32.mrb[0].mxu0
        %4739 = vmatprep.mubr.bf16.mxu0 %v3830
        %4740 = vmatmul.mubr.bf16.gmra.mrb[0].mxu0 %v3829
        %v4741 = vpop.f32.mrb[0].mxu0
        %v4742 = vadd.f32 %v4685, %v4741
        %v4743 = vpop.f32.mrb[0].mxu0
        %v4744 = vpop.f32.mrb[0].mxu0
        %v4745 = vadd.f32 %v4688, %v4744
        %v4746 = vpop.f32.mrb[0].mxu0
        %4747 = vmatprep.mubr.bf16.mxu0 %v3835
        %4748 = vmatmul.mubr.bf16.gmra.mrb[0].mxu0 %v3834
        %v4749 = vpop.f32.mrb[0].mxu0
        %v4750 = vadd.f32 %v4693, %v4749
        %v4751 = vpop.f32.mrb[0].mxu0
        %v4752 = vpop.f32.mrb[0].mxu0
        %v4753 = vadd.f32 %v4696, %v4752
        %v4754 = vpop.f32.mrb[0].mxu0
        %4755 = vdwg.mxu0
        %4756 = vmatprep.subr.bf16.mxu0 0
        %4757 = vmatpush1.bf16.msra.mxu0 %v3692
        %4758 = vmatprep.subr.bf16.mxu0 0
        %4759 = vmatpush1.bf16.msra.mxu0 %v3701
        %4760 = vmatprep.subr.bf16.mxu0 0
        %4761 = vmatpush1.bf16.msra.mxu0 %v3710
        %4762 = vmatprep.subr.bf16.mxu0 0
        %4763 = vmatpush1.bf16.msra.mxu0 %v3719
        %4764 = vmatprep.subr.bf16.mxu0 0
        %4765 = vmatpush1.bf16.msra.mxu0 %v3728
        %4766 = vmatprep.subr.bf16.mxu0 0
        %4767 = vmatpush1.bf16.msra.mxu0 %v3884
        %4768 = vmatprep.subr.bf16.mxu0 0
        %4769 = vmatpush1.bf16.msra.mxu0 0
        %4770 = vmatprep.subr.bf16.mxu0 0
        %4771 = vmatpush1.bf16.msra.mxu0 0
        %4772 = vmatprep.subr.bf16.mxu0 0
        %4773 = vmatpush1.bf16.msra.mxu0 0
        %4774 = vmatprep.subr.bf16.mxu0 0
        %4775 = vmatpush1.bf16.msra.mxu0 0
        %4776 = vmatprep.subr.bf16.mxu0 0
        %4777 = vmatpush1.bf16.msra.mxu0 0
        %4778 = vmatprep.subr.bf16.mxu0 0
        %4779 = vmatpush1.bf16.msra.mxu0 0
        %4780 = vmatprep.subr.bf16.mxu0 0
        %4781 = vmatpush1.bf16.msra.mxu0 0
        %4782 = vmatprep.subr.bf16.mxu0 0
        %4783 = vmatpush1.bf16.msra.mxu0 0
        %4784 = vmatprep.subr.bf16.mxu0 0
        %4785 = vmatpush1.bf16.msra.mxu0 0
        %4786 = vmatprep.subr.bf16.mxu0 0
        %4787 = vmatpush1.bf16.msra.mxu0 0
        %4788 = vmatprep.mubr.bf16.mxu0 0
        %4789 = vmatmul.mubr.bf16.gmra.mrb[0].mxu0 %v3850
        %v4790 = vpop.f32.mrb[0].mxu0
        %v4791 = vadd.f32 %v4734, %v4790
        %v4792 = vpop.f32.mrb[0].mxu0
        %v4793 = vpop.f32.mrb[0].mxu0
        %v4794 = vadd.f32 %v4737, %v4793
        %v4795 = vpop.f32.mrb[0].mxu0
        %4796 = vmatprep.mubr.bf16.mxu0 0
        %4797 = vmatmul.mubr.bf16.gmra.mrb[0].mxu0 %v3853
        %v4798 = vpop.f32.mrb[0].mxu0
        %v4799 = vadd.f32 %v4742, %v4798
        %v4800 = vpop.f32.mrb[0].mxu0
        %v4801 = vpop.f32.mrb[0].mxu0
        %v4802 = vadd.f32 %v4745, %v4801
        %v4803 = vpop.f32.mrb[0].mxu0
        %4804 = vmatprep.mubr.bf16.mxu0 0
        %4805 = vmatmul.mubr.bf16.gmra.mrb[0].mxu0 %v3856
        %v4806 = vpop.f32.mrb[0].mxu0
        %v4807 = vadd.f32 %v4750, %v4806
        %v4808 = vpop.f32.mrb[0].mxu0
        %v4809 = vpop.f32.mrb[0].mxu0
        %v4810 = vadd.f32 %v4753, %v4809
        %v4811 = vpop.f32.mrb[0].mxu0
        %4812 = vdwg.mxu0
        %v4813 = vtanh.pop %v4047
        %v4814 = vtanh.pop %v4049
        %v4815 = vtanh.pop %v4236
        %v4816 = vtanh.pop %v4238
        %v4817 = vtanh.pop %v4425
        %v4818 = vtanh.pop %v4427
        %v4819 = vtanh.pop %v4614
        %v4820 = vtanh.pop %v4616
        %v4821 = vtanh.pop %v4791
        %v4822 = vtanh.pop %v4051
        %v4823 = vtanh.pop %v4053
        %v4824 = vtanh.pop %v4240
        %v4825 = vtanh.pop %v4242
        %v4826 = vtanh.pop %v4429
        %v4827 = vtanh.pop %v4431
        %v4828 = vtanh.pop %v4618
        %v4829 = vtanh.pop %v4620
        %v4830 = vtanh.pop %v4794
        %v4831 = vtanh.pop %v4057
        %v4832 = vtanh.pop %v4059
        %v4833 = vtanh.pop %v4246
        %v4834 = vtanh.pop %v4248
        %v4835 = vtanh.pop %v4435
        %v4836 = vtanh.pop %v4437
        %v4837 = vtanh.pop %v4624
        %v4838 = vtanh.pop %v4626
        %v4839 = vtanh.pop %v4799
        %v4840 = vtanh.pop %v4061
        %v4841 = vtanh.pop %v4063
        %v4842 = vtanh.pop %v4250
        %v4843 = vtanh.pop %v4252
        %v4844 = vtanh.pop %v4439
        %v4845 = vtanh.pop %v4441
        %v4846 = vtanh.pop %v4628
        %v4847 = vtanh.pop %v4630
        %v4848 = vtanh.pop %v4802
        %v4849 = vtanh.pop %v4067
        %v4850 = vtanh.pop %v4069
        %v4851 = vtanh.pop %v4256
        %v4852 = vtanh.pop %v4258
        %v4853 = vtanh.pop %v4445
        %v4854 = vtanh.pop %v4447
        %v4855 = vtanh.pop %v4634
        %v4856 = vtanh.pop %v4636
        %v4857 = vtanh.pop %v4807
        %v4858 = vtanh.pop %v4071
        %v4859 = vtanh.pop %v4073
        %v4860 = vtanh.pop %v4260
        %v4861 = vtanh.pop %v4262
        %v4862 = vtanh.pop %v4449
        %v4863 = vtanh.pop %v4451
        %v4864 = vtanh.pop %v4638
        %v4865 = vtanh.pop %v4640
        %v4866 = vtanh.pop %v4810
        %v4867 = vpack.c.bf16 %v4822, %v4813
        %v4868 = vpack.c.bf16 %v4823, %v4814
        %v4869 = vpack.c.bf16 %v4824, %v4815
        %v4870 = vpack.c.bf16 %v4825, %v4816
        %v4871 = vpack.c.bf16 %v4826, %v4817
        %v4872 = vpack.c.bf16 %v4827, %v4818
        %v4873 = vpack.c.bf16 %v4828, %v4819
        %v4874 = vpack.c.bf16 %v4829, %v4820
        %v4875 = vpack.c.bf16 %v4830, %v4821
        %v4876 = vpack.c.bf16 %v4840, %v4831
        %v4877 = vpack.c.bf16 %v4841, %v4832
        %v4878 = vpack.c.bf16 %v4842, %v4833
        %v4879 = vpack.c.bf16 %v4843, %v4834
        %v4880 = vpack.c.bf16 %v4844, %v4835
        %v4881 = vpack.c.bf16 %v4845, %v4836
        %v4882 = vpack.c.bf16 %v4846, %v4837
        %v4883 = vpack.c.bf16 %v4847, %v4838
        %v4884 = vpack.c.bf16 %v4848, %v4839
        %v4885 = vpack.c.bf16 %v4858, %v4849
        %v4886 = vpack.c.bf16 %v4859, %v4850
        %v4887 = vpack.c.bf16 %v4860, %v4851
        %v4888 = vpack.c.bf16 %v4861, %v4852
        %v4889 = vpack.c.bf16 %v4862, %v4853
        %v4890 = vpack.c.bf16 %v4863, %v4854
        %v4891 = vpack.c.bf16 %v4864, %v4855
        %v4892 = vpack.c.bf16 %v4865, %v4856
        %v4893 = vpack.c.bf16 %v4866, %v4857
        %v4894 = vld [vmem:[%s5] sm:$0xff]
        %v4895 = vld [vmem:[%s5 + $0x8] sm:$0xff]
        %v4896 = vld [vmem:[%s5 + $0x10] sm:$0xff]
        %v4897 = vld [vmem:[%s5 + $0x18] sm:$0xff]
        %v4898 = vld [vmem:[%s5 + $0x20] sm:$0xff]
        %v4899 = vld [vmem:[%s5 + $0x28] sm:$0xff]
        %v4900 = vld [vmem:[%s5 + $0x30] sm:$0xff]
        %v4901 = vld [vmem:[%s5 + $0x38] sm:$0xff]
        %v4902 = vld [vmem:[%s5 + $0x40] sm:$0xff]
        %v4903 = vld [vmem:[%s5 + $0x48] sm:$0xff]
        %v4904 = vld [vmem:[%s5 + $0x50] sm:$0xff]
        %v4905 = vld [vmem:[%s5 + $0x58] sm:$0xff]
        %v4906 = vld [vmem:[%s5 + $0x60] sm:$0xff]
        %v4907 = vld [vmem:[%s5 + $0x68] sm:$0xff]
        %v4908 = vld [vmem:[%s5 + $0x70] sm:$0xff]
        %v4909 = vld [vmem:[%s5 + $0x78] sm:$0xff]
        %v4910 = vld [vmem:[%s5 + $0x80] sm:$0xff]
        %v4911 = vld [vmem:[%s5 + $0x88] sm:$0xff]
        %v4912 = vld [vmem:[%s5 + $0x90] sm:$0xff]
        %v4913 = vld [vmem:[%s5 + $0x98] sm:$0xff]
        %v4914 = vld [vmem:[%s5 + $0xa0] sm:$0xff]
        %v4915 = vld [vmem:[%s5 + $0xa8] sm:$0xff]
        %v4916 = vld [vmem:[%s5 + $0xb0] sm:$0xff]
        %v4917 = vld [vmem:[%s5 + $0xb8] sm:$0xff]
        %v4918 = vld [vmem:[%s5 + $0xc0] sm:$0xff]
        %v4919 = vld [vmem:[%s5 + $0xc8] sm:$0xff]
        %v4920 = vld [vmem:[%s5 + $0xd0] sm:$0xff]
        %v4921 = vld [vmem:[%s5 + $0xd8] sm:$0xff]
        %v4922 = vld [vmem:[%s5 + $0xe0] sm:$0xff]
        %v4923 = vld [vmem:[%s5 + $0xe8] sm:$0xff]
        %v4924 = vld [vmem:[%s5 + $0xf0] sm:$0xff]
        %v4925 = vld [vmem:[%s5 + $0xf8] sm:$0xff]
        %v4926 = vld [vmem:[%s5 + $0x100] sm:$0xff]
        %v4927 = vld [vmem:[%s5 + $0x108] sm:$0xff]
        %v4928 = vld [vmem:[%s5 + $0x110] sm:$0xff]
        %v4929 = vld [vmem:[%s5 + $0x118] sm:$0xff]
        %v4930 = vld [vmem:[%s5 + $0x120] sm:$0xff]
        %v4931 = vld [vmem:[%s5 + $0x128] sm:$0xff]
        %v4932 = vld [vmem:[%s5 + $0x130] sm:$0xff]
        %v4933 = vld [vmem:[%s5 + $0x138] sm:$0xff]
        %v4934 = vld [vmem:[%s5 + $0x140] sm:$0xff]
        %v4935 = vld [vmem:[%s5 + $0x148] sm:$0xff]
        %v4936 = vld [vmem:[%s5 + $0x150] sm:$0xff]
        %v4937 = vld [vmem:[%s5 + $0x158] sm:$0xff]
        %v4938 = vld [vmem:[%s5 + $0x160] sm:$0xff]
        %v4939 = vld [vmem:[%s5 + $0x168] sm:$0xff]
        %v4940 = vld [vmem:[%s5 + $0x170] sm:$0xff]
        %v4941 = vld [vmem:[%s5 + $0x178] sm:$0xff]
        %v4942 = vld [vmem:[%s5 + $0x180] sm:$0xff]
        %v4943 = vld [vmem:[%s5 + $0x188] sm:$0xff]
        %v4944 = vld [vmem:[%s5 + $0x190] sm:$0xff]
        %v4945 = vld [vmem:[%s5 + $0x198] sm:$0xff]
        %v4946 = vld [vmem:[%s5 + $0x1a0] sm:$0xff]
        %v4947 = vld [vmem:[%s5 + $0x1a8] sm:$0xff]
        %v4948 = vld [vmem:[%s5 + $0x1b0] sm:$0xff]
        %v4949 = vld [vmem:[%s5 + $0x1b8] sm:$0xff]
        %v4950 = vld [vmem:[%s5 + $0x1c0] sm:$0xff]
        %v4951 = vld [vmem:[%s5 + $0x1c8] sm:$0xff]
        %v4952 = vld [vmem:[%s5 + $0x1d0] sm:$0xff]
        %v4953 = vld [vmem:[%s5 + $0x1d8] sm:$0xff]
        %v4954 = vld [vmem:[%s5 + $0x1e0] sm:$0xff]
        %v4955 = vld [vmem:[%s5 + $0x1e8] sm:$0xff]
        %v4956 = vld [vmem:[%s5 + $0x1f0] sm:$0xff]
        %v4957 = vld [vmem:[%s5 + $0x1f8] sm:$0xff]
        %v4958 = vld [vmem:[%s5 + $0x200] sm:$0xff]
        %v4959 = vld [vmem:[%s5 + $0x208] sm:$0xff]
        %v4960 = vld [vmem:[%s5 + $0x210] sm:$0xff]
        %v4961 = vld [vmem:[%s5 + $0x218] sm:$0xff]
        %v4962 = vld [vmem:[%s5 + $0x220] sm:$0xff]
        %v4963 = vld [vmem:[%s5 + $0x228] sm:$0xff]
        %v4964 = vld [vmem:[%s5 + $0x230] sm:$0xff]
        %v4965 = vld [vmem:[%s5 + $0x238] sm:$0xff]
        %v4966 = vld [vmem:[%s5 + $0x240] sm:$0xff]
        %v4967 = vld [vmem:[%s5 + $0x248] sm:$0xff]
        %v4968 = vld [vmem:[%s5 + $0x250] sm:$0xff]
        %v4969 = vld [vmem:[%s5 + $0x258] sm:$0xff]
        %v4970 = vld [vmem:[%s5 + $0x260] sm:$0xff]
        %v4971 = vld [vmem:[%s5 + $0x268] sm:$0xff]
        %v4972 = vld [vmem:[%s5 + $0x270] sm:$0xff]
        %v4973 = vld [vmem:[%s5 + $0x278] sm:$0xff]
        %v4974 = vld [vmem:[%s5 + $0x280] sm:$0xff]
        %v4975 = vld [vmem:[%s5 + $0x288] sm:$0xff]
        %v4976 = vld [vmem:[%s5 + $0x290] sm:$0xff]
        %v4977 = vld [vmem:[%s5 + $0x298] sm:$0xff]
        %v4978 = vld [vmem:[%s5 + $0x2a0] sm:$0xff]
        %v4979 = vld [vmem:[%s5 + $0x2a8] sm:$0xff]
        %v4980 = vld [vmem:[%s5 + $0x2b0] sm:$0xff]
        %v4981 = vld [vmem:[%s5 + $0x2b8] sm:$0xff]
        %v4982 = vld [vmem:[%s5 + $0x2c0] sm:$0xff]
        %v4983 = vld [vmem:[%s5 + $0x2c8] sm:$0xff]
        %v4984 = vld [vmem:[%s5 + $0x2d0] sm:$0xff]
        %v4985 = vld [vmem:[%s5 + $0x2d8] sm:$0xff]
        %v4986 = vld [vmem:[%s5 + $0x2e0] sm:$0xff]
        %v4987 = vld [vmem:[%s5 + $0x2e8] sm:$0xff]
        %v4988 = vld [vmem:[%s5 + $0x2f0] sm:$0xff]
        %v4989 = vld [vmem:[%s5 + $0x2f8] sm:$0xff]
        %v4990 = vld [vmem:[%s5 + $0x300] sm:$0xff]
        %v4991 = vld [vmem:[%s5 + $0x308] sm:$0xff]
        %v4992 = vld [vmem:[%s5 + $0x310] sm:$0xff]
        %v4993 = vld [vmem:[%s5 + $0x318] sm:$0xff]
        %v4994 = vld [vmem:[%s5 + $0x320] sm:$0xff]
        %v4995 = vld [vmem:[%s5 + $0x328] sm:$0xff]
        %v4996 = vld [vmem:[%s5 + $0x330] sm:$0xff]
        %v4997 = vld [vmem:[%s5 + $0x338] sm:$0xff]
        %v4998 = vld [vmem:[%s5 + $0x340] sm:$0xff]
        %v4999 = vld [vmem:[%s5 + $0x348] sm:$0xff]
        %v5000 = vld [vmem:[%s5 + $0x350] sm:$0xff]
        %v5001 = vld [vmem:[%s5 + $0x358] sm:$0xff]
        %v5002 = vld [vmem:[%s5 + $0x360] sm:$0xff]
        %v5003 = vld [vmem:[%s5 + $0x368] sm:$0xff]
        %v5004 = vld [vmem:[%s5 + $0x370] sm:$0xff]
        %v5005 = vld [vmem:[%s5 + $0x378] sm:$0xff]
        %v5006 = vld [vmem:[%s5 + $0x380] sm:$0xff]
        %v5007 = vld [vmem:[%s5 + $0x388] sm:$0xff]
        %v5008 = vld [vmem:[%s5 + $0x390] sm:$0xff]
        %v5009 = vld [vmem:[%s5 + $0x398] sm:$0xff]
        %v5010 = vld [vmem:[%s5 + $0x3a0] sm:$0xff]
        %v5011 = vld [vmem:[%s5 + $0x3a8] sm:$0xff]
        %v5012 = vld [vmem:[%s5 + $0x3b0] sm:$0xff]
        %v5013 = vld [vmem:[%s5 + $0x3b8] sm:$0xff]
        %v5014 = vld [vmem:[%s5 + $0x3c0] sm:$0xff]
        %v5015 = vld [vmem:[%s5 + $0x3c8] sm:$0xff]
        %v5016 = vld [vmem:[%s5 + $0x3d0] sm:$0xff]
        %v5017 = vld [vmem:[%s5 + $0x3d8] sm:$0xff]
        %v5018 = vld [vmem:[%s5 + $0x3e0] sm:$0xff]
        %v5019 = vld [vmem:[%s5 + $0x3e8] sm:$0xff]
        %v5020 = vld [vmem:[%s5 + $0x3f0] sm:$0xff]
        %v5021 = vld [vmem:[%s5 + $0x3f8] sm:$0xff]
        %v5022 = vld [vmem:[%s5 + $0x400] sm:$0xff]
        %v5023 = vld [vmem:[%s5 + $0x408] sm:$0xff]
        %v5024 = vld [vmem:[%s5 + $0x410] sm:$0xff]
        %v5025 = vld [vmem:[%s5 + $0x418] sm:$0xff]
        %v5026 = vld [vmem:[%s5 + $0x420] sm:$0xff]
        %v5027 = vld [vmem:[%s5 + $0x428] sm:$0xff]
        %v5028 = vld [vmem:[%s5 + $0x430] sm:$0xff]
        %v5029 = vld [vmem:[%s5 + $0x438] sm:$0xff]
        %v5030 = vld [vmem:[%s5 + $0x440] sm:$0xff]
        %v5031 = vld [vmem:[%s5 + $0x448] sm:$0xff]
        %v5032 = vld [vmem:[%s5 + $0x450] sm:$0xff]
        %v5033 = vld [vmem:[%s5 + $0x458] sm:$0xff]
        %v5034 = vld [vmem:[%s5 + $0x460] sm:$0xff]
        %v5035 = vld [vmem:[%s5 + $0x468] sm:$0xff]
        %v5036 = vld [vmem:[%s5 + $0x470] sm:$0xff]
        %v5037 = vld [vmem:[%s5 + $0x478] sm:$0x33]
        %v5182 = vunpack.c.l.b16 %v4894
        %v5183 = vunpack.c.h.b16 %v4894
        %v5184 = vunpack.c.l.b16 %v4895
        %v5185 = vunpack.c.h.b16 %v4895
        %v5186 = vunpack.c.l.b16 %v4896
        %v5187 = vunpack.c.h.b16 %v4896
        %v5188 = vunpack.c.l.b16 %v4897
        %v5189 = vunpack.c.h.b16 %v4897
        %v5190 = vunpack.c.l.b16 %v4898
        %v5191 = vunpack.c.h.b16 %v4898
        %v5192 = vunpack.c.l.b16 %v4899
        %v5193 = vunpack.c.h.b16 %v4899
        %v5194 = vunpack.c.l.b16 %v4900
        %v5195 = vunpack.c.h.b16 %v4900
        %v5196 = vunpack.c.l.b16 %v4901
        %v5197 = vunpack.c.h.b16 %v4901
        %v5198 = vunpack.c.l.b16 %v4902
        %v5199 = vunpack.c.h.b16 %v4902
        %v5200 = vunpack.c.l.b16 %v4903
        %v5201 = vunpack.c.h.b16 %v4903
        %v5202 = vunpack.c.l.b16 %v4904
        %v5203 = vunpack.c.h.b16 %v4904
        %v5204 = vunpack.c.l.b16 %v4905
        %v5205 = vunpack.c.h.b16 %v4905
        %v5206 = vunpack.c.l.b16 %v4906
        %v5207 = vunpack.c.h.b16 %v4906
        %v5208 = vunpack.c.l.b16 %v4907
        %v5209 = vunpack.c.h.b16 %v4907
        %v5210 = vunpack.c.l.b16 %v4908
        %v5211 = vunpack.c.h.b16 %v4908
        %v5212 = vunpack.c.l.b16 %v4909
        %v5213 = vunpack.c.h.b16 %v4909
        %v5214 = vunpack.c.l.b16 %v4910
        %v5215 = vunpack.c.h.b16 %v4910
        %v5216 = vunpack.c.l.b16 %v4911
        %v5217 = vunpack.c.h.b16 %v4911
        %v5218 = vunpack.c.l.b16 %v4912
        %v5219 = vunpack.c.h.b16 %v4912
        %v5220 = vunpack.c.l.b16 %v4913
        %v5221 = vunpack.c.h.b16 %v4913
        %v5222 = vunpack.c.l.b16 %v4914
        %v5223 = vunpack.c.h.b16 %v4914
        %v5224 = vunpack.c.l.b16 %v4915
        %v5225 = vunpack.c.h.b16 %v4915
        %v5226 = vunpack.c.l.b16 %v4916
        %v5227 = vunpack.c.h.b16 %v4916
        %v5228 = vunpack.c.l.b16 %v4917
        %v5229 = vunpack.c.h.b16 %v4917
        %v5230 = vunpack.c.l.b16 %v4918
        %v5231 = vunpack.c.h.b16 %v4918
        %v5232 = vunpack.c.l.b16 %v4919
        %v5233 = vunpack.c.h.b16 %v4919
        %v5234 = vunpack.c.l.b16 %v4920
        %v5235 = vunpack.c.h.b16 %v4920
        %v5236 = vunpack.c.l.b16 %v4921
        %v5237 = vunpack.c.h.b16 %v4921
        %v5238 = vunpack.c.l.b16 %v4922
        %v5239 = vunpack.c.h.b16 %v4922
        %v5240 = vunpack.c.l.b16 %v4923
        %v5241 = vunpack.c.h.b16 %v4923
        %v5242 = vunpack.c.l.b16 %v4924
        %v5243 = vunpack.c.h.b16 %v4924
        %v5244 = vunpack.c.l.b16 %v4925
        %v5245 = vunpack.c.h.b16 %v4925
        %v5246 = vunpack.c.l.b16 %v4926
        %v5247 = vunpack.c.h.b16 %v4926
        %v5248 = vunpack.c.l.b16 %v4927
        %v5249 = vunpack.c.h.b16 %v4927
        %v5250 = vunpack.c.l.b16 %v4928
        %v5251 = vunpack.c.h.b16 %v4928
        %v5252 = vunpack.c.l.b16 %v4929
        %v5253 = vunpack.c.h.b16 %v4929
        %v5254 = vunpack.c.l.b16 %v4930
        %v5255 = vunpack.c.h.b16 %v4930
        %v5256 = vunpack.c.l.b16 %v4931
        %v5257 = vunpack.c.h.b16 %v4931
        %v5258 = vunpack.c.l.b16 %v4932
        %v5259 = vunpack.c.h.b16 %v4932
        %v5260 = vunpack.c.l.b16 %v4933
        %v5261 = vunpack.c.h.b16 %v4933
        %v5262 = vunpack.c.l.b16 %v4934
        %v5263 = vunpack.c.h.b16 %v4934
        %v5264 = vunpack.c.l.b16 %v4935
        %v5265 = vunpack.c.h.b16 %v4935
        %v5266 = vunpack.c.l.b16 %v4936
        %v5267 = vunpack.c.h.b16 %v4936
        %v5268 = vunpack.c.l.b16 %v4937
        %v5269 = vunpack.c.h.b16 %v4937
        %v5270 = vunpack.c.l.b16 %v4938
        %v5271 = vunpack.c.h.b16 %v4938
        %v5272 = vunpack.c.l.b16 %v4939
        %v5273 = vunpack.c.h.b16 %v4939
        %v5274 = vunpack.c.l.b16 %v4940
        %v5275 = vunpack.c.h.b16 %v4940
        %v5276 = vunpack.c.l.b16 %v4941
        %v5277 = vunpack.c.h.b16 %v4941
        %v5278 = vunpack.c.l.b16 %v4942
        %v5279 = vunpack.c.h.b16 %v4942
        %v5280 = vunpack.c.l.b16 %v4943
        %v5281 = vunpack.c.h.b16 %v4943
        %v5282 = vunpack.c.l.b16 %v4944
        %v5283 = vunpack.c.h.b16 %v4944
        %v5284 = vunpack.c.l.b16 %v4945
        %v5285 = vunpack.c.h.b16 %v4945
        %v5286 = vunpack.c.l.b16 %v4946
        %v5287 = vunpack.c.h.b16 %v4946
        %v5288 = vunpack.c.l.b16 %v4947
        %v5289 = vunpack.c.h.b16 %v4947
        %v5290 = vunpack.c.l.b16 %v4948
        %v5291 = vunpack.c.h.b16 %v4948
        %v5292 = vunpack.c.l.b16 %v4949
        %v5293 = vunpack.c.h.b16 %v4949
        %v5294 = vunpack.c.l.b16 %v4950
        %v5295 = vunpack.c.h.b16 %v4950
        %v5296 = vunpack.c.l.b16 %v4951
        %v5297 = vunpack.c.h.b16 %v4951
        %v5298 = vunpack.c.l.b16 %v4952
        %v5299 = vunpack.c.h.b16 %v4952
        %v5300 = vunpack.c.l.b16 %v4953
        %v5301 = vunpack.c.h.b16 %v4953
        %v5302 = vunpack.c.l.b16 %v4954
        %v5303 = vunpack.c.h.b16 %v4954
        %v5304 = vunpack.c.l.b16 %v4955
        %v5305 = vunpack.c.h.b16 %v4955
        %v5306 = vunpack.c.l.b16 %v4956
        %v5307 = vunpack.c.h.b16 %v4956
        %v5308 = vunpack.c.l.b16 %v4957
        %v5309 = vunpack.c.h.b16 %v4957
        %v5310 = vunpack.c.l.b16 %v4958
        %v5311 = vunpack.c.h.b16 %v4958
        %v5312 = vunpack.c.l.b16 %v4959
        %v5313 = vunpack.c.h.b16 %v4959
        %v5314 = vunpack.c.l.b16 %v4960
        %v5315 = vunpack.c.h.b16 %v4960
        %v5316 = vunpack.c.l.b16 %v4961
        %v5317 = vunpack.c.h.b16 %v4961
        %v5318 = vunpack.c.l.b16 %v4962
        %v5319 = vunpack.c.h.b16 %v4962
        %v5320 = vunpack.c.l.b16 %v4963
        %v5321 = vunpack.c.h.b16 %v4963
        %v5322 = vunpack.c.l.b16 %v4964
        %v5323 = vunpack.c.h.b16 %v4964
        %v5324 = vunpack.c.l.b16 %v4965
        %v5325 = vunpack.c.h.b16 %v4965
        %v5326 = vunpack.c.l.b16 %v4966
        %v5327 = vunpack.c.h.b16 %v4966
        %v5328 = vunpack.c.l.b16 %v4967
        %v5329 = vunpack.c.h.b16 %v4967
        %v5330 = vunpack.c.l.b16 %v4968
        %v5331 = vunpack.c.h.b16 %v4968
        %v5332 = vunpack.c.l.b16 %v4969
        %v5333 = vunpack.c.h.b16 %v4969
        %v5334 = vunpack.c.l.b16 %v4970
        %v5335 = vunpack.c.h.b16 %v4970
        %v5336 = vunpack.c.l.b16 %v4971
        %v5337 = vunpack.c.h.b16 %v4971
        %v5338 = vunpack.c.l.b16 %v4972
        %v5339 = vunpack.c.h.b16 %v4972
        %v5340 = vunpack.c.l.b16 %v4973
        %v5341 = vunpack.c.h.b16 %v4973
        %v5342 = vunpack.c.l.b16 %v4974
        %v5343 = vunpack.c.h.b16 %v4974
        %v5344 = vunpack.c.l.b16 %v4975
        %v5345 = vunpack.c.h.b16 %v4975
        %v5346 = vunpack.c.l.b16 %v4976
        %v5347 = vunpack.c.h.b16 %v4976
        %v5348 = vunpack.c.l.b16 %v4977
        %v5349 = vunpack.c.h.b16 %v4977
        %v5350 = vunpack.c.l.b16 %v4978
        %v5351 = vunpack.c.h.b16 %v4978
        %v5352 = vunpack.c.l.b16 %v4979
        %v5353 = vunpack.c.h.b16 %v4979
        %v5354 = vunpack.c.l.b16 %v4980
        %v5355 = vunpack.c.h.b16 %v4980
        %v5356 = vunpack.c.l.b16 %v4981
        %v5357 = vunpack.c.h.b16 %v4981
        %v5358 = vunpack.c.l.b16 %v4982
        %v5359 = vunpack.c.h.b16 %v4982
        %v5360 = vunpack.c.l.b16 %v4983
        %v5361 = vunpack.c.h.b16 %v4983
        %v5362 = vunpack.c.l.b16 %v4984
        %v5363 = vunpack.c.h.b16 %v4984
        %v5364 = vunpack.c.l.b16 %v4985
        %v5365 = vunpack.c.h.b16 %v4985
        %v5366 = vunpack.c.l.b16 %v4986
        %v5367 = vunpack.c.h.b16 %v4986
        %v5368 = vunpack.c.l.b16 %v4987
        %v5369 = vunpack.c.h.b16 %v4987
        %v5370 = vunpack.c.l.b16 %v4988
        %v5371 = vunpack.c.h.b16 %v4988
        %v5372 = vunpack.c.l.b16 %v4989
        %v5373 = vunpack.c.h.b16 %v4989
        %v5374 = vunpack.c.l.b16 %v4990
        %v5375 = vunpack.c.h.b16 %v4990
        %v5376 = vunpack.c.l.b16 %v4991
        %v5377 = vunpack.c.h.b16 %v4991
        %v5378 = vunpack.c.l.b16 %v4992
        %v5379 = vunpack.c.h.b16 %v4992
        %v5380 = vunpack.c.l.b16 %v4993
        %v5381 = vunpack.c.h.b16 %v4993
        %v5382 = vunpack.c.l.b16 %v4994
        %v5383 = vunpack.c.h.b16 %v4994
        %v5384 = vunpack.c.l.b16 %v4995
        %v5385 = vunpack.c.h.b16 %v4995
        %v5386 = vunpack.c.l.b16 %v4996
        %v5387 = vunpack.c.h.b16 %v4996
        %v5388 = vunpack.c.l.b16 %v4997
        %v5389 = vunpack.c.h.b16 %v4997
        %v5390 = vunpack.c.l.b16 %v4998
        %v5391 = vunpack.c.h.b16 %v4998
        %v5392 = vunpack.c.l.b16 %v4999
        %v5393 = vunpack.c.h.b16 %v4999
        %v5394 = vunpack.c.l.b16 %v5000
        %v5395 = vunpack.c.h.b16 %v5000
        %v5396 = vunpack.c.l.b16 %v5001
        %v5397 = vunpack.c.h.b16 %v5001
        %v5398 = vunpack.c.l.b16 %v5002
        %v5399 = vunpack.c.h.b16 %v5002
        %v5400 = vunpack.c.l.b16 %v5003
        %v5401 = vunpack.c.h.b16 %v5003
        %v5402 = vunpack.c.l.b16 %v5004
        %v5403 = vunpack.c.h.b16 %v5004
        %v5404 = vunpack.c.l.b16 %v5005
        %v5405 = vunpack.c.h.b16 %v5005
        %v5406 = vunpack.c.l.b16 %v5006
        %v5407 = vunpack.c.h.b16 %v5006
        %v5408 = vunpack.c.l.b16 %v5007
        %v5409 = vunpack.c.h.b16 %v5007
        %v5410 = vunpack.c.l.b16 %v5008
        %v5411 = vunpack.c.h.b16 %v5008
        %v5412 = vunpack.c.l.b16 %v5009
        %v5413 = vunpack.c.h.b16 %v5009
        %v5414 = vunpack.c.l.b16 %v5010
        %v5415 = vunpack.c.h.b16 %v5010
        %v5416 = vunpack.c.l.b16 %v5011
        %v5417 = vunpack.c.h.b16 %v5011
        %v5418 = vunpack.c.l.b16 %v5012
        %v5419 = vunpack.c.h.b16 %v5012
        %v5420 = vunpack.c.l.b16 %v5013
        %v5421 = vunpack.c.h.b16 %v5013
        %v5422 = vunpack.c.l.b16 %v5014
        %v5423 = vunpack.c.h.b16 %v5014
        %v5424 = vunpack.c.l.b16 %v5015
        %v5425 = vunpack.c.h.b16 %v5015
        %v5426 = vunpack.c.l.b16 %v5016
        %v5427 = vunpack.c.h.b16 %v5016
        %v5428 = vunpack.c.l.b16 %v5017
        %v5429 = vunpack.c.h.b16 %v5017
        %v5430 = vunpack.c.l.b16 %v5018
        %v5431 = vunpack.c.h.b16 %v5018
        %v5432 = vunpack.c.l.b16 %v5019
        %v5433 = vunpack.c.h.b16 %v5019
        %v5434 = vunpack.c.l.b16 %v5020
        %v5435 = vunpack.c.h.b16 %v5020
        %v5436 = vunpack.c.l.b16 %v5021
        %v5437 = vunpack.c.h.b16 %v5021
        %v5438 = vunpack.c.l.b16 %v5022
        %v5439 = vunpack.c.h.b16 %v5022
        %v5440 = vunpack.c.l.b16 %v5023
        %v5441 = vunpack.c.h.b16 %v5023
        %v5442 = vunpack.c.l.b16 %v5024
        %v5443 = vunpack.c.h.b16 %v5024
        %v5444 = vunpack.c.l.b16 %v5025
        %v5445 = vunpack.c.h.b16 %v5025
        %v5446 = vunpack.c.l.b16 %v5026
        %v5447 = vunpack.c.h.b16 %v5026
        %v5448 = vunpack.c.l.b16 %v5027
        %v5449 = vunpack.c.h.b16 %v5027
        %v5450 = vunpack.c.l.b16 %v5028
        %v5451 = vunpack.c.h.b16 %v5028
        %v5452 = vunpack.c.l.b16 %v5029
        %v5453 = vunpack.c.h.b16 %v5029
        %v5454 = vunpack.c.l.b16 %v5030
        %v5455 = vunpack.c.h.b16 %v5030
        %v5456 = vunpack.c.l.b16 %v5031
        %v5457 = vunpack.c.h.b16 %v5031
        %v5458 = vunpack.c.l.b16 %v5032
        %v5459 = vunpack.c.h.b16 %v5032
        %v5460 = vunpack.c.l.b16 %v5033
        %v5461 = vunpack.c.h.b16 %v5033
        %v5462 = vunpack.c.l.b16 %v5034
        %v5463 = vunpack.c.h.b16 %v5034
        %v5464 = vunpack.c.l.b16 %v5035
        %v5465 = vunpack.c.h.b16 %v5035
        %v5466 = vunpack.c.l.b16 %v5036
        %v5467 = vunpack.c.h.b16 %v5036
        %v5468 = vunpack.c.l.b16 %v5037
        %v5469 = vunpack.c.h.b16 %v5037
        %v5470 = vpack.c.b16 %v5184, %v5182
        %v5471 = vpack.c.b16 %v5185, %v5183
        %v5472 = vpack.c.b16 %v5188, %v5186
        %v5473 = vpack.c.b16 %v5189, %v5187
        %v5474 = vpack.c.b16 %v5192, %v5190
        %v5475 = vpack.c.b16 %v5193, %v5191
        %v5476 = vpack.c.b16 %v5196, %v5194
        %v5477 = vpack.c.b16 %v5197, %v5195
        %v5478 = vpack.c.b16 %v5200, %v5198
        %v5479 = vpack.c.b16 %v5201, %v5199
        %v5480 = vpack.c.b16 %v5204, %v5202
        %v5481 = vpack.c.b16 %v5205, %v5203
        %v5482 = vpack.c.b16 %v5208, %v5206
        %v5483 = vpack.c.b16 %v5209, %v5207
        %v5484 = vpack.c.b16 %v5212, %v5210
        %v5485 = vpack.c.b16 %v5213, %v5211
        %v5486 = vpack.c.b16 %v5216, %v5214
        %v5487 = vpack.c.b16 %v5217, %v5215
        %v5488 = vpack.c.b16 %v5220, %v5218
        %v5489 = vpack.c.b16 %v5221, %v5219
        %v5490 = vpack.c.b16 %v5224, %v5222
        %v5491 = vpack.c.b16 %v5225, %v5223
        %v5492 = vpack.c.b16 %v5228, %v5226
        %v5493 = vpack.c.b16 %v5229, %v5227
        %v5494 = vpack.c.b16 %v5232, %v5230
        %v5495 = vpack.c.b16 %v5233, %v5231
        %v5496 = vpack.c.b16 %v5236, %v5234
        %v5497 = vpack.c.b16 %v5237, %v5235
        %v5498 = vpack.c.b16 %v5240, %v5238
        %v5499 = vpack.c.b16 %v5241, %v5239
        %v5500 = vpack.c.b16 %v5244, %v5242
        %v5501 = vpack.c.b16 %v5245, %v5243
        %v5502 = vpack.c.b16 %v5248, %v5246
        %v5503 = vpack.c.b16 %v5249, %v5247
        %v5504 = vpack.c.b16 %v5252, %v5250
        %v5505 = vpack.c.b16 %v5253, %v5251
        %v5506 = vpack.c.b16 %v5256, %v5254
        %v5507 = vpack.c.b16 %v5257, %v5255
        %v5508 = vpack.c.b16 %v5260, %v5258
        %v5509 = vpack.c.b16 %v5261, %v5259
        %v5510 = vpack.c.b16 %v5264, %v5262
        %v5511 = vpack.c.b16 %v5265, %v5263
        %v5512 = vpack.c.b16 %v5268, %v5266
        %v5513 = vpack.c.b16 %v5269, %v5267
        %v5514 = vpack.c.b16 %v5272, %v5270
        %v5515 = vpack.c.b16 %v5273, %v5271
        %v5516 = vpack.c.b16 %v5276, %v5274
        %v5517 = vpack.c.b16 %v5277, %v5275
        %v5518 = vpack.c.b16 %v5280, %v5278
        %v5519 = vpack.c.b16 %v5281, %v5279
        %v5520 = vpack.c.b16 %v5284, %v5282
        %v5521 = vpack.c.b16 %v5285, %v5283
        %v5522 = vpack.c.b16 %v5288, %v5286
        %v5523 = vpack.c.b16 %v5289, %v5287
        %v5524 = vpack.c.b16 %v5292, %v5290
        %v5525 = vpack.c.b16 %v5293, %v5291
        %v5526 = vpack.c.b16 %v5296, %v5294
        %v5527 = vpack.c.b16 %v5297, %v5295
        %v5528 = vpack.c.b16 %v5300, %v5298
        %v5529 = vpack.c.b16 %v5301, %v5299
        %v5530 = vpack.c.b16 %v5304, %v5302
        %v5531 = vpack.c.b16 %v5305, %v5303
        %v5532 = vpack.c.b16 %v5308, %v5306
        %v5533 = vpack.c.b16 %v5309, %v5307
        %v5534 = vpack.c.b16 %v5312, %v5310
        %v5535 = vpack.c.b16 %v5313, %v5311
        %v5536 = vpack.c.b16 %v5316, %v5314
        %v5537 = vpack.c.b16 %v5317, %v5315
        %v5538 = vpack.c.b16 %v5320, %v5318
        %v5539 = vpack.c.b16 %v5321, %v5319
        %v5540 = vpack.c.b16 %v5324, %v5322
        %v5541 = vpack.c.b16 %v5325, %v5323
        %v5542 = vpack.c.b16 %v5328, %v5326
        %v5543 = vpack.c.b16 %v5329, %v5327
        %v5544 = vpack.c.b16 %v5332, %v5330
        %v5545 = vpack.c.b16 %v5333, %v5331
        %v5546 = vpack.c.b16 %v5336, %v5334
        %v5547 = vpack.c.b16 %v5337, %v5335
        %v5548 = vpack.c.b16 %v5340, %v5338
        %v5549 = vpack.c.b16 %v5341, %v5339
        %v5550 = vpack.c.b16 %v5344, %v5342
        %v5551 = vpack.c.b16 %v5345, %v5343
        %v5552 = vpack.c.b16 %v5348, %v5346
        %v5553 = vpack.c.b16 %v5349, %v5347
        %v5554 = vpack.c.b16 %v5352, %v5350
        %v5555 = vpack.c.b16 %v5353, %v5351
        %v5556 = vpack.c.b16 %v5356, %v5354
        %v5557 = vpack.c.b16 %v5357, %v5355
        %v5558 = vpack.c.b16 %v5360, %v5358
        %v5559 = vpack.c.b16 %v5361, %v5359
        %v5560 = vpack.c.b16 %v5364, %v5362
        %v5561 = vpack.c.b16 %v5365, %v5363
        %v5562 = vpack.c.b16 %v5368, %v5366
        %v5563 = vpack.c.b16 %v5369, %v5367
        %v5564 = vpack.c.b16 %v5372, %v5370
        %v5565 = vpack.c.b16 %v5373, %v5371
        %v5566 = vpack.c.b16 %v5376, %v5374
        %v5567 = vpack.c.b16 %v5377, %v5375
        %v5568 = vpack.c.b16 %v5380, %v5378
        %v5569 = vpack.c.b16 %v5381, %v5379
        %v5570 = vpack.c.b16 %v5384, %v5382
        %v5571 = vpack.c.b16 %v5385, %v5383
        %v5572 = vpack.c.b16 %v5388, %v5386
        %v5573 = vpack.c.b16 %v5389, %v5387
        %v5574 = vpack.c.b16 %v5392, %v5390
        %v5575 = vpack.c.b16 %v5393, %v5391
        %v5576 = vpack.c.b16 %v5396, %v5394
        %v5577 = vpack.c.b16 %v5397, %v5395
        %v5578 = vpack.c.b16 %v5400, %v5398
        %v5579 = vpack.c.b16 %v5401, %v5399
        %v5580 = vpack.c.b16 %v5404, %v5402
        %v5581 = vpack.c.b16 %v5405, %v5403
        %v5582 = vpack.c.b16 %v5408, %v5406
        %v5583 = vpack.c.b16 %v5409, %v5407
        %v5584 = vpack.c.b16 %v5412, %v5410
        %v5585 = vpack.c.b16 %v5413, %v5411
        %v5586 = vpack.c.b16 %v5416, %v5414
        %v5587 = vpack.c.b16 %v5417, %v5415
        %v5588 = vpack.c.b16 %v5420, %v5418
        %v5589 = vpack.c.b16 %v5421, %v5419
        %v5590 = vpack.c.b16 %v5424, %v5422
        %v5591 = vpack.c.b16 %v5425, %v5423
        %v5592 = vpack.c.b16 %v5428, %v5426
        %v5593 = vpack.c.b16 %v5429, %v5427
        %v5594 = vpack.c.b16 %v5432, %v5430
        %v5595 = vpack.c.b16 %v5433, %v5431
        %v5596 = vpack.c.b16 %v5436, %v5434
        %v5597 = vpack.c.b16 %v5437, %v5435
        %v5598 = vpack.c.b16 %v5440, %v5438
        %v5599 = vpack.c.b16 %v5441, %v5439
        %v5600 = vpack.c.b16 %v5444, %v5442
        %v5601 = vpack.c.b16 %v5445, %v5443
        %v5602 = vpack.c.b16 %v5448, %v5446
        %v5603 = vpack.c.b16 %v5449, %v5447
        %v5604 = vpack.c.b16 %v5452, %v5450
        %v5605 = vpack.c.b16 %v5453, %v5451
        %v5606 = vpack.c.b16 %v5456, %v5454
        %v5607 = vpack.c.b16 %v5457, %v5455
        %v5608 = vpack.c.b16 %v5460, %v5458
        %v5609 = vpack.c.b16 %v5461, %v5459
        %v5610 = vpack.c.b16 %v5464, %v5462
        %v5611 = vpack.c.b16 %v5465, %v5463
        %v5612 = vpack.c.b16 %v5468, %v5466
        %v5613 = vpack.c.b16 %v5469, %v5467
        %v5757 = vsel %vm877, %v4875, 0
        %v5760 = vsel %vm877, %v4884, 0
        %v5763 = vsel %vm877, %v4893, 0
        %vm5765 = vcmask 1045504
        %v5767 = vsel %vm5765, %v5612, 0
        %v5770 = vsel %vm5765, %v5613, 0
        %5772 = vmatprep.subr.bf16.mxu0 %v5471
        %5773 = vmatpush1.bf16.msra.mxu0 %v5470
        %5774 = vmatprep.subr.bf16.mxu0 %v5473
        %5775 = vmatpush1.bf16.msra.mxu0 %v5472
        %5776 = vmatprep.subr.bf16.mxu0 %v5475
        %5777 = vmatpush1.bf16.msra.mxu0 %v5474
        %5778 = vmatprep.subr.bf16.mxu0 %v5477
        %5779 = vmatpush1.bf16.msra.mxu0 %v5476
        %5780 = vmatprep.subr.bf16.mxu0 %v5479
        %5781 = vmatpush1.bf16.msra.mxu0 %v5478
        %5782 = vmatprep.subr.bf16.mxu0 %v5481
        %5783 = vmatpush1.bf16.msra.mxu0 %v5480
        %5784 = vmatprep.subr.bf16.mxu0 %v5483
        %5785 = vmatpush1.bf16.msra.mxu0 %v5482
        %5786 = vmatprep.subr.bf16.mxu0 %v5485
        %5787 = vmatpush1.bf16.msra.mxu0 %v5484
        %5788 = vmatprep.subr.bf16.mxu0 %v5487
        %5789 = vmatpush1.bf16.msra.mxu0 %v5486
        %5790 = vmatprep.subr.bf16.mxu0 %v5489
        %5791 = vmatpush1.bf16.msra.mxu0 %v5488
        %5792 = vmatprep.subr.bf16.mxu0 %v5491
        %5793 = vmatpush1.bf16.msra.mxu0 %v5490
        %5794 = vmatprep.subr.bf16.mxu0 %v5493
        %5795 = vmatpush1.bf16.msra.mxu0 %v5492
        %5796 = vmatprep.subr.bf16.mxu0 %v5495
        %5797 = vmatpush1.bf16.msra.mxu0 %v5494
        %5798 = vmatprep.subr.bf16.mxu0 %v5497
        %5799 = vmatpush1.bf16.msra.mxu0 %v5496
        %5800 = vmatprep.subr.bf16.mxu0 %v5499
        %5801 = vmatpush1.bf16.msra.mxu0 %v5498
        %5802 = vmatprep.subr.bf16.mxu0 %v5501
        %5803 = vmatpush1.bf16.msra.mxu0 %v5500
        %5804 = vmatprep.mubr.bf16.mxu0 %v4868
        %5805 = vmatmul.mubr.bf16.gmra.mrb[0].mxu0 %v4867
        %v5806 = vpop.f32.mrb[0].mxu0
        %v5807 = vadd.f32 0.0, %v5806
        %v5808 = vpop.f32.mrb[0].mxu0
        %v5809 = vadd.f32 0.0, %v5808
        %v5810 = vpop.f32.mrb[0].mxu0
        %v5811 = vadd.f32 0.0, %v5810
        %v5812 = vpop.f32.mrb[0].mxu0
        %v5813 = vadd.f32 0.0, %v5812
        %5814 = vmatprep.mubr.bf16.mxu0 %v4877
        %5815 = vmatmul.mubr.bf16.gmra.mrb[0].mxu0 %v4876
        %v5816 = vpop.f32.mrb[0].mxu0
        %v5817 = vadd.f32 0.0, %v5816
        %v5818 = vpop.f32.mrb[0].mxu0
        %v5819 = vadd.f32 0.0, %v5818
        %v5820 = vpop.f32.mrb[0].mxu0
        %v5821 = vadd.f32 0.0, %v5820
        %v5822 = vpop.f32.mrb[0].mxu0
        %v5823 = vadd.f32 0.0, %v5822
        %5824 = vmatprep.mubr.bf16.mxu0 %v4886
        %5825 = vmatmul.mubr.bf16.gmra.mrb[0].mxu0 %v4885
        %v5826 = vpop.f32.mrb[0].mxu0
        %v5827 = vadd.f32 0.0, %v5826
        %v5828 = vpop.f32.mrb[0].mxu0
        %v5829 = vadd.f32 0.0, %v5828
        %v5830 = vpop.f32.mrb[0].mxu0
        %v5831 = vadd.f32 0.0, %v5830
        %v5832 = vpop.f32.mrb[0].mxu0
        %v5833 = vadd.f32 0.0, %v5832
        %5834 = vdwg.mxu0
        %5835 = vmatprep.subr.bf16.mxu0 %v5503
        %5836 = vmatpush1.bf16.msra.mxu0 %v5502
        %5837 = vmatprep.subr.bf16.mxu0 %v5505
        %5838 = vmatpush1.bf16.msra.mxu0 %v5504
        %5839 = vmatprep.subr.bf16.mxu0 %v5507
        %5840 = vmatpush1.bf16.msra.mxu0 %v5506
        %5841 = vmatprep.subr.bf16.mxu0 %v5509
        %5842 = vmatpush1.bf16.msra.mxu0 %v5508
        %5843 = vmatprep.subr.bf16.mxu0 %v5511
        %5844 = vmatpush1.bf16.msra.mxu0 %v5510
        %5845 = vmatprep.subr.bf16.mxu0 %v5513
        %5846 = vmatpush1.bf16.msra.mxu0 %v5512
        %5847 = vmatprep.subr.bf16.mxu0 %v5515
        %5848 = vmatpush1.bf16.msra.mxu0 %v5514
        %5849 = vmatprep.subr.bf16.mxu0 %v5517
        %5850 = vmatpush1.bf16.msra.mxu0 %v5516
        %5851 = vmatprep.subr.bf16.mxu0 %v5519
        %5852 = vmatpush1.bf16.msra.mxu0 %v5518
        %5853 = vmatprep.subr.bf16.mxu0 %v5521
        %5854 = vmatpush1.bf16.msra.mxu0 %v5520
        %5855 = vmatprep.subr.bf16.mxu0 %v5523
        %5856 = vmatpush1.bf16.msra.mxu0 %v5522
        %5857 = vmatprep.subr.bf16.mxu0 %v5525
        %5858 = vmatpush1.bf16.msra.mxu0 %v5524
        %5859 = vmatprep.subr.bf16.mxu0 %v5527
        %5860 = vmatpush1.bf16.msra.mxu0 %v5526
        %5861 = vmatprep.subr.bf16.mxu0 %v5529
        %5862 = vmatpush1.bf16.msra.mxu0 %v5528
        %5863 = vmatprep.subr.bf16.mxu0 %v5531
        %5864 = vmatpush1.bf16.msra.mxu0 %v5530
        %5865 = vmatprep.subr.bf16.mxu0 %v5533
        %5866 = vmatpush1.bf16.msra.mxu0 %v5532
        %5867 = vmatprep.mubr.bf16.mxu0 %v4870
        %5868 = vmatmul.mubr.bf16.gmra.mrb[0].mxu0 %v4869
        %v5869 = vpop.f32.mrb[0].mxu0
        %v5870 = vadd.f32 %v5807, %v5869
        %v5871 = vpop.f32.mrb[0].mxu0
        %v5872 = vadd.f32 %v5809, %v5871
        %v5873 = vpop.f32.mrb[0].mxu0
        %v5874 = vadd.f32 %v5811, %v5873
        %v5875 = vpop.f32.mrb[0].mxu0
        %v5876 = vadd.f32 %v5813, %v5875
        %5877 = vmatprep.mubr.bf16.mxu0 %v4879
        %5878 = vmatmul.mubr.bf16.gmra.mrb[0].mxu0 %v4878
        %v5879 = vpop.f32.mrb[0].mxu0
        %v5880 = vadd.f32 %v5817, %v5879
        %v5881 = vpop.f32.mrb[0].mxu0
        %v5882 = vadd.f32 %v5819, %v5881
        %v5883 = vpop.f32.mrb[0].mxu0
        %v5884 = vadd.f32 %v5821, %v5883
        %v5885 = vpop.f32.mrb[0].mxu0
        %v5886 = vadd.f32 %v5823, %v5885
        %5887 = vmatprep.mubr.bf16.mxu0 %v4888
        %5888 = vmatmul.mubr.bf16.gmra.mrb[0].mxu0 %v4887
        %v5889 = vpop.f32.mrb[0].mxu0
        %v5890 = vadd.f32 %v5827, %v5889
        %v5891 = vpop.f32.mrb[0].mxu0
        %v5892 = vadd.f32 %v5829, %v5891
        %v5893 = vpop.f32.mrb[0].mxu0
        %v5894 = vadd.f32 %v5831, %v5893
        %v5895 = vpop.f32.mrb[0].mxu0
        %v5896 = vadd.f32 %v5833, %v5895
        %5897 = vdwg.mxu0
        %5898 = vmatprep.subr.bf16.mxu0 %v5535
        %5899 = vmatpush1.bf16.msra.mxu0 %v5534
        %5900 = vmatprep.subr.bf16.mxu0 %v5537
        %5901 = vmatpush1.bf16.msra.mxu0 %v5536
        %5902 = vmatprep.subr.bf16.mxu0 %v5539
        %5903 = vmatpush1.bf16.msra.mxu0 %v5538
        %5904 = vmatprep.subr.bf16.mxu0 %v5541
        %5905 = vmatpush1.bf16.msra.mxu0 %v5540
        %5906 = vmatprep.subr.bf16.mxu0 %v5543
        %5907 = vmatpush1.bf16.msra.mxu0 %v5542
        %5908 = vmatprep.subr.bf16.mxu0 %v5545
        %5909 = vmatpush1.bf16.msra.mxu0 %v5544
        %5910 = vmatprep.subr.bf16.mxu0 %v5547
        %5911 = vmatpush1.bf16.msra.mxu0 %v5546
        %5912 = vmatprep.subr.bf16.mxu0 %v5549
        %5913 = vmatpush1.bf16.msra.mxu0 %v5548
        %5914 = vmatprep.subr.bf16.mxu0 %v5551
        %5915 = vmatpush1.bf16.msra.mxu0 %v5550
        %5916 = vmatprep.subr.bf16.mxu0 %v5553
        %5917 = vmatpush1.bf16.msra.mxu0 %v5552
        %5918 = vmatprep.subr.bf16.mxu0 %v5555
        %5919 = vmatpush1.bf16.msra.mxu0 %v5554
        %5920 = vmatprep.subr.bf16.mxu0 %v5557
        %5921 = vmatpush1.bf16.msra.mxu0 %v5556
        %5922 = vmatprep.subr.bf16.mxu0 %v5559
        %5923 = vmatpush1.bf16.msra.mxu0 %v5558
        %5924 = vmatprep.subr.bf16.mxu0 %v5561
        %5925 = vmatpush1.bf16.msra.mxu0 %v5560
        %5926 = vmatprep.subr.bf16.mxu0 %v5563
        %5927 = vmatpush1.bf16.msra.mxu0 %v5562
        %5928 = vmatprep.subr.bf16.mxu0 %v5565
        %5929 = vmatpush1.bf16.msra.mxu0 %v5564
        %5930 = vmatprep.mubr.bf16.mxu0 %v4872
        %5931 = vmatmul.mubr.bf16.gmra.mrb[0].mxu0 %v4871
        %v5932 = vpop.f32.mrb[0].mxu0
        %v5933 = vadd.f32 %v5870, %v5932
        %v5934 = vpop.f32.mrb[0].mxu0
        %v5935 = vadd.f32 %v5872, %v5934
        %v5936 = vpop.f32.mrb[0].mxu0
        %v5937 = vadd.f32 %v5874, %v5936
        %v5938 = vpop.f32.mrb[0].mxu0
        %v5939 = vadd.f32 %v5876, %v5938
        %5940 = vmatprep.mubr.bf16.mxu0 %v4881
        %5941 = vmatmul.mubr.bf16.gmra.mrb[0].mxu0 %v4880
        %v5942 = vpop.f32.mrb[0].mxu0
        %v5943 = vadd.f32 %v5880, %v5942
        %v5944 = vpop.f32.mrb[0].mxu0
        %v5945 = vadd.f32 %v5882, %v5944
        %v5946 = vpop.f32.mrb[0].mxu0
        %v5947 = vadd.f32 %v5884, %v5946
        %v5948 = vpop.f32.mrb[0].mxu0
        %v5949 = vadd.f32 %v5886, %v5948
        %5950 = vmatprep.mubr.bf16.mxu0 %v4890
        %5951 = vmatmul.mubr.bf16.gmra.mrb[0].mxu0 %v4889
        %v5952 = vpop.f32.mrb[0].mxu0
        %v5953 = vadd.f32 %v5890, %v5952
        %v5954 = vpop.f32.mrb[0].mxu0
        %v5955 = vadd.f32 %v5892, %v5954
        %v5956 = vpop.f32.mrb[0].mxu0
        %v5957 = vadd.f32 %v5894, %v5956
        %v5958 = vpop.f32.mrb[0].mxu0
        %v5959 = vadd.f32 %v5896, %v5958
        %5960 = vdwg.mxu0
        %5961 = vmatprep.subr.bf16.mxu0 %v5567
        %5962 = vmatpush1.bf16.msra.mxu0 %v5566
        %5963 = vmatprep.subr.bf16.mxu0 %v5569
        %5964 = vmatpush1.bf16.msra.mxu0 %v5568
        %5965 = vmatprep.subr.bf16.mxu0 %v5571
        %5966 = vmatpush1.bf16.msra.mxu0 %v5570
        %5967 = vmatprep.subr.bf16.mxu0 %v5573
        %5968 = vmatpush1.bf16.msra.mxu0 %v5572
        %5969 = vmatprep.subr.bf16.mxu0 %v5575
        %5970 = vmatpush1.bf16.msra.mxu0 %v5574
        %5971 = vmatprep.subr.bf16.mxu0 %v5577
        %5972 = vmatpush1.bf16.msra.mxu0 %v5576
        %5973 = vmatprep.subr.bf16.mxu0 %v5579
        %5974 = vmatpush1.bf16.msra.mxu0 %v5578
        %5975 = vmatprep.subr.bf16.mxu0 %v5581
        %5976 = vmatpush1.bf16.msra.mxu0 %v5580
        %5977 = vmatprep.subr.bf16.mxu0 %v5583
        %5978 = vmatpush1.bf16.msra.mxu0 %v5582
        %5979 = vmatprep.subr.bf16.mxu0 %v5585
        %5980 = vmatpush1.bf16.msra.mxu0 %v5584
        %5981 = vmatprep.subr.bf16.mxu0 %v5587
        %5982 = vmatpush1.bf16.msra.mxu0 %v5586
        %5983 = vmatprep.subr.bf16.mxu0 %v5589
        %5984 = vmatpush1.bf16.msra.mxu0 %v5588
        %5985 = vmatprep.subr.bf16.mxu0 %v5591
        %5986 = vmatpush1.bf16.msra.mxu0 %v5590
        %5987 = vmatprep.subr.bf16.mxu0 %v5593
        %5988 = vmatpush1.bf16.msra.mxu0 %v5592
        %5989 = vmatprep.subr.bf16.mxu0 %v5595
        %5990 = vmatpush1.bf16.msra.mxu0 %v5594
        %5991 = vmatprep.subr.bf16.mxu0 %v5597
        %5992 = vmatpush1.bf16.msra.mxu0 %v5596
        %5993 = vmatprep.mubr.bf16.mxu0 %v4874
        %5994 = vmatmul.mubr.bf16.gmra.mrb[0].mxu0 %v4873
        %v5995 = vpop.f32.mrb[0].mxu0
        %v5996 = vadd.f32 %v5933, %v5995
        %v5997 = vpop.f32.mrb[0].mxu0
        %v5998 = vadd.f32 %v5935, %v5997
        %v5999 = vpop.f32.mrb[0].mxu0
        %v6000 = vadd.f32 %v5937, %v5999
        %v6001 = vpop.f32.mrb[0].mxu0
        %v6002 = vadd.f32 %v5939, %v6001
        %6003 = vmatprep.mubr.bf16.mxu0 %v4883
        %6004 = vmatmul.mubr.bf16.gmra.mrb[0].mxu0 %v4882
        %v6005 = vpop.f32.mrb[0].mxu0
        %v6006 = vadd.f32 %v5943, %v6005
        %v6007 = vpop.f32.mrb[0].mxu0
        %v6008 = vadd.f32 %v5945, %v6007
        %v6009 = vpop.f32.mrb[0].mxu0
        %v6010 = vadd.f32 %v5947, %v6009
        %v6011 = vpop.f32.mrb[0].mxu0
        %v6012 = vadd.f32 %v5949, %v6011
        %6013 = vmatprep.mubr.bf16.mxu0 %v4892
        %6014 = vmatmul.mubr.bf16.gmra.mrb[0].mxu0 %v4891
        %v6015 = vpop.f32.mrb[0].mxu0
        %v6016 = vadd.f32 %v5953, %v6015
        %v6017 = vpop.f32.mrb[0].mxu0
        %v6018 = vadd.f32 %v5955, %v6017
        %v6019 = vpop.f32.mrb[0].mxu0
        %v6020 = vadd.f32 %v5957, %v6019
        %v6021 = vpop.f32.mrb[0].mxu0
        %v6022 = vadd.f32 %v5959, %v6021
        %6023 = vdwg.mxu0
        %6024 = vmatprep.subr.bf16.mxu0 %v5599
        %6025 = vmatpush1.bf16.msra.mxu0 %v5598
        %6026 = vmatprep.subr.bf16.mxu0 %v5601
        %6027 = vmatpush1.bf16.msra.mxu0 %v5600
        %6028 = vmatprep.subr.bf16.mxu0 %v5603
        %6029 = vmatpush1.bf16.msra.mxu0 %v5602
        %6030 = vmatprep.subr.bf16.mxu0 %v5605
        %6031 = vmatpush1.bf16.msra.mxu0 %v5604
        %6032 = vmatprep.subr.bf16.mxu0 %v5607
        %6033 = vmatpush1.bf16.msra.mxu0 %v5606
        %6034 = vmatprep.subr.bf16.mxu0 %v5609
        %6035 = vmatpush1.bf16.msra.mxu0 %v5608
        %6036 = vmatprep.subr.bf16.mxu0 %v5611
        %6037 = vmatpush1.bf16.msra.mxu0 %v5610
        %6038 = vmatprep.subr.bf16.mxu0 %v5770
        %6039 = vmatpush1.bf16.msra.mxu0 %v5767
        %6040 = vmatprep.subr.bf16.mxu0 0
        %6041 = vmatpush1.bf16.msra.mxu0 0
        %6042 = vmatprep.subr.bf16.mxu0 0
        %6043 = vmatpush1.bf16.msra.mxu0 0
        %6044 = vmatprep.subr.bf16.mxu0 0
        %6045 = vmatpush1.bf16.msra.mxu0 0
        %6046 = vmatprep.subr.bf16.mxu0 0
        %6047 = vmatpush1.bf16.msra.mxu0 0
        %6048 = vmatprep.subr.bf16.mxu0 0
        %6049 = vmatpush1.bf16.msra.mxu0 0
        %6050 = vmatprep.subr.bf16.mxu0 0
        %6051 = vmatpush1.bf16.msra.mxu0 0
        %6052 = vmatprep.subr.bf16.mxu0 0
        %6053 = vmatpush1.bf16.msra.mxu0 0
        %6054 = vmatprep.subr.bf16.mxu0 0
        %6055 = vmatpush1.bf16.msra.mxu0 0
        %6056 = vmatprep.mubr.bf16.mxu0 0
        %6057 = vmatmul.mubr.bf16.gmra.mrb[0].mxu0 %v5757
        %v6058 = vpop.f32.mrb[0].mxu0
        %v6059 = vadd.f32 %v5996, %v6058
        %v6060 = vpop.f32.mrb[0].mxu0
        %v6061 = vadd.f32 %v5998, %v6060
        %v6062 = vpop.f32.mrb[0].mxu0
        %v6063 = vadd.f32 %v6000, %v6062
        %v6064 = vpop.f32.mrb[0].mxu0
        %v6065 = vadd.f32 %v6002, %v6064
        %6066 = vmatprep.mubr.bf16.mxu0 0
        %6067 = vmatmul.mubr.bf16.gmra.mrb[0].mxu0 %v5760
        %v6068 = vpop.f32.mrb[0].mxu0
        %v6069 = vadd.f32 %v6006, %v6068
        %v6070 = vpop.f32.mrb[0].mxu0
        %v6071 = vadd.f32 %v6008, %v6070
        %v6072 = vpop.f32.mrb[0].mxu0
        %v6073 = vadd.f32 %v6010, %v6072
        %v6074 = vpop.f32.mrb[0].mxu0
        %v6075 = vadd.f32 %v6012, %v6074
        %6076 = vmatprep.mubr.bf16.mxu0 0
        %6077 = vmatmul.mubr.bf16.gmra.mrb[0].mxu0 %v5763
        %v6078 = vpop.f32.mrb[0].mxu0
        %v6079 = vadd.f32 %v6016, %v6078
        %v6080 = vpop.f32.mrb[0].mxu0
        %v6081 = vadd.f32 %v6018, %v6080
        %v6082 = vpop.f32.mrb[0].mxu0
        %v6083 = vadd.f32 %v6020, %v6082
        %v6084 = vpop.f32.mrb[0].mxu0
        %v6085 = vadd.f32 %v6022, %v6084
        %6086 = vdwg.mxu0
        %6099 = vrot.lane.b32.xlu0 %v6059, 127
        %v6100 = vpop.permute.xlu0 %6099
        %6101 = vrot.lane.b32.xlu0 %v6061, 127
        %v6102 = vpop.permute.xlu0 %6101
        %6103 = vrot.lane.b32.xlu0 %v6063, 127
        %v6104 = vpop.permute.xlu0 %6103
        %6105 = vrot.lane.b32.xlu0 %v6065, 127
        %v6106 = vpop.permute.xlu0 %6105
        %6107 = vrot.lane.b32.xlu0 %v6069, 127
        %v6108 = vpop.permute.xlu0 %6107
        %6109 = vrot.lane.b32.xlu0 %v6071, 127
        %v6110 = vpop.permute.xlu0 %6109
        %6111 = vrot.lane.b32.xlu0 %v6073, 127
        %v6112 = vpop.permute.xlu0 %6111
        %6113 = vrot.lane.b32.xlu0 %v6075, 127
        %v6114 = vpop.permute.xlu0 %6113
        %6115 = vrot.lane.b32.xlu0 %v6079, 127
        %v6116 = vpop.permute.xlu0 %6115
        %6117 = vrot.lane.b32.xlu0 %v6081, 127
        %v6118 = vpop.permute.xlu0 %6117
        %6119 = vrot.lane.b32.xlu0 %v6083, 127
        %v6120 = vpop.permute.xlu0 %6119
        %6121 = vrot.lane.b32.xlu0 %v6085, 127
        %v6122 = vpop.permute.xlu0 %6121
        %v6123 = vsel %vm559, %v6100, %v6102
        %v6124 = vsel %vm559, %v6104, %v6106
        %v6125 = vsel %vm559, %v6108, %v6110
        %v6126 = vsel %vm559, %v6112, %v6114
        %v6127 = vsel %vm559, %v6116, %v6118
        %v6128 = vsel %vm559, %v6120, %v6122
        %6141 = vrot.lane.b32.xlu0 %v6059, 126
        %v6142 = vpop.permute.xlu0 %6141
        %6143 = vrot.lane.b32.xlu0 %v6061, 126
        %v6144 = vpop.permute.xlu0 %6143
        %6145 = vrot.lane.b32.xlu0 %v6063, 126
        %v6146 = vpop.permute.xlu0 %6145
        %6147 = vrot.lane.b32.xlu0 %v6065, 126
        %v6148 = vpop.permute.xlu0 %6147
        %6149 = vrot.lane.b32.xlu0 %v6069, 126
        %v6150 = vpop.permute.xlu0 %6149
        %6151 = vrot.lane.b32.xlu0 %v6071, 126
        %v6152 = vpop.permute.xlu0 %6151
        %6153 = vrot.lane.b32.xlu0 %v6073, 126
        %v6154 = vpop.permute.xlu0 %6153
        %6155 = vrot.lane.b32.xlu0 %v6075, 126
        %v6156 = vpop.permute.xlu0 %6155
        %6157 = vrot.lane.b32.xlu0 %v6079, 126
        %v6158 = vpop.permute.xlu0 %6157
        %6159 = vrot.lane.b32.xlu0 %v6081, 126
        %v6160 = vpop.permute.xlu0 %6159
        %6161 = vrot.lane.b32.xlu0 %v6083, 126
        %v6162 = vpop.permute.xlu0 %6161
        %6163 = vrot.lane.b32.xlu0 %v6085, 126
        %v6164 = vpop.permute.xlu0 %6163
        %v6165 = vsel %vm665, %v6142, %v6144
        %v6166 = vsel %vm665, %v6146, %v6148
        %v6167 = vsel %vm665, %v6150, %v6152
        %v6168 = vsel %vm665, %v6154, %v6156
        %v6169 = vsel %vm665, %v6158, %v6160
        %v6170 = vsel %vm665, %v6162, %v6164
        %6183 = vrot.lane.b32.xlu0 %v6059, 125
        %v6184 = vpop.permute.xlu0 %6183
        %6185 = vrot.lane.b32.xlu0 %v6061, 125
        %v6186 = vpop.permute.xlu0 %6185
        %6187 = vrot.lane.b32.xlu0 %v6063, 125
        %v6188 = vpop.permute.xlu0 %6187
        %6189 = vrot.lane.b32.xlu0 %v6065, 125
        %v6190 = vpop.permute.xlu0 %6189
        %6191 = vrot.lane.b32.xlu0 %v6069, 125
        %v6192 = vpop.permute.xlu0 %6191
        %6193 = vrot.lane.b32.xlu0 %v6071, 125
        %v6194 = vpop.permute.xlu0 %6193
        %6195 = vrot.lane.b32.xlu0 %v6073, 125
        %v6196 = vpop.permute.xlu0 %6195
        %6197 = vrot.lane.b32.xlu0 %v6075, 125
        %v6198 = vpop.permute.xlu0 %6197
        %6199 = vrot.lane.b32.xlu0 %v6079, 125
        %v6200 = vpop.permute.xlu0 %6199
        %6201 = vrot.lane.b32.xlu0 %v6081, 125
        %v6202 = vpop.permute.xlu0 %6201
        %6203 = vrot.lane.b32.xlu0 %v6083, 125
        %v6204 = vpop.permute.xlu0 %6203
        %6205 = vrot.lane.b32.xlu0 %v6085, 125
        %v6206 = vpop.permute.xlu0 %6205
        %v6207 = vsel %vm771, %v6184, %v6186
        %v6208 = vsel %vm771, %v6188, %v6190
        %v6209 = vsel %vm771, %v6192, %v6194
        %v6210 = vsel %vm771, %v6196, %v6198
        %v6211 = vsel %vm771, %v6200, %v6202
        %v6212 = vsel %vm771, %v6204, %v6206
        %6225 = vrot.lane.b32.xlu0 %v6059, 124
        %v6226 = vpop.permute.xlu0 %6225
        %6227 = vrot.lane.b32.xlu0 %v6061, 124
        %v6228 = vpop.permute.xlu0 %6227
        %6229 = vrot.lane.b32.xlu0 %v6063, 124
        %v6230 = vpop.permute.xlu0 %6229
        %6231 = vrot.lane.b32.xlu0 %v6065, 124
        %v6232 = vpop.permute.xlu0 %6231
        %6233 = vrot.lane.b32.xlu0 %v6069, 124
        %v6234 = vpop.permute.xlu0 %6233
        %6235 = vrot.lane.b32.xlu0 %v6071, 124
        %v6236 = vpop.permute.xlu0 %6235
        %6237 = vrot.lane.b32.xlu0 %v6073, 124
        %v6238 = vpop.permute.xlu0 %6237
        %6239 = vrot.lane.b32.xlu0 %v6075, 124
        %v6240 = vpop.permute.xlu0 %6239
        %6241 = vrot.lane.b32.xlu0 %v6079, 124
        %v6242 = vpop.permute.xlu0 %6241
        %6243 = vrot.lane.b32.xlu0 %v6081, 124
        %v6244 = vpop.permute.xlu0 %6243
        %6245 = vrot.lane.b32.xlu0 %v6083, 124
        %v6246 = vpop.permute.xlu0 %6245
        %6247 = vrot.lane.b32.xlu0 %v6085, 124
        %v6248 = vpop.permute.xlu0 %6247
        %v6249 = vsel %vm877, %v6226, %v6228
        %v6250 = vsel %vm877, %v6230, %v6232
        %v6251 = vsel %vm877, %v6234, %v6236
        %v6252 = vsel %vm877, %v6238, %v6240
        %v6253 = vsel %vm877, %v6242, %v6244
        %v6254 = vsel %vm877, %v6246, %v6248
        %6267 = vrot.lane.b32.xlu0 %v6059, 112
        %v6268 = vpop.permute.xlu0 %6267
        %6269 = vrot.lane.b32.xlu0 %v6061, 112
        %v6270 = vpop.permute.xlu0 %6269
        %6271 = vrot.lane.b32.xlu0 %v6063, 112
        %v6272 = vpop.permute.xlu0 %6271
        %6273 = vrot.lane.b32.xlu0 %v6065, 112
        %v6274 = vpop.permute.xlu0 %6273
        %6275 = vrot.lane.b32.xlu0 %v6069, 112
        %v6276 = vpop.permute.xlu0 %6275
        %6277 = vrot.lane.b32.xlu0 %v6071, 112
        %v6278 = vpop.permute.xlu0 %6277
        %6279 = vrot.lane.b32.xlu0 %v6073, 112
        %v6280 = vpop.permute.xlu0 %6279
        %6281 = vrot.lane.b32.xlu0 %v6075, 112
        %v6282 = vpop.permute.xlu0 %6281
        %6283 = vrot.lane.b32.xlu0 %v6079, 112
        %v6284 = vpop.permute.xlu0 %6283
        %6285 = vrot.lane.b32.xlu0 %v6081, 112
        %v6286 = vpop.permute.xlu0 %6285
        %6287 = vrot.lane.b32.xlu0 %v6083, 112
        %v6288 = vpop.permute.xlu0 %6287
        %6289 = vrot.lane.b32.xlu0 %v6085, 112
        %v6290 = vpop.permute.xlu0 %6289
        %vm6291 = vcmask 916480
        %v6292 = vsel %vm6291, %v6268, %v6270
        %v6293 = vsel %vm6291, %v6272, %v6274
        %v6294 = vsel %vm6291, %v6276, %v6278
        %v6295 = vsel %vm6291, %v6280, %v6282
        %v6296 = vsel %vm6291, %v6284, %v6286
        %v6297 = vsel %vm6291, %v6288, %v6290
        %6310 = vrot.lane.b32.xlu0 %v6059, 111
        %v6311 = vpop.permute.xlu0 %6310
        %6312 = vrot.lane.b32.xlu0 %v6061, 111
        %v6313 = vpop.permute.xlu0 %6312
        %6314 = vrot.lane.b32.xlu0 %v6063, 111
        %v6315 = vpop.permute.xlu0 %6314
        %6316 = vrot.lane.b32.xlu0 %v6065, 111
        %v6317 = vpop.permute.xlu0 %6316
        %6318 = vrot.lane.b32.xlu0 %v6069, 111
        %v6319 = vpop.permute.xlu0 %6318
        %6320 = vrot.lane.b32.xlu0 %v6071, 111
        %v6321 = vpop.permute.xlu0 %6320
        %6322 = vrot.lane.b32.xlu0 %v6073, 111
        %v6323 = vpop.permute.xlu0 %6322
        %6324 = vrot.lane.b32.xlu0 %v6075, 111
        %v6325 = vpop.permute.xlu0 %6324
        %6326 = vrot.lane.b32.xlu0 %v6079, 111
        %v6327 = vpop.permute.xlu0 %6326
        %6328 = vrot.lane.b32.xlu0 %v6081, 111
        %v6329 = vpop.permute.xlu0 %6328
        %6330 = vrot.lane.b32.xlu0 %v6083, 111
        %v6331 = vpop.permute.xlu0 %6330
        %6332 = vrot.lane.b32.xlu0 %v6085, 111
        %v6333 = vpop.permute.xlu0 %6332
        %vm6334 = vcmask 908288
        %v6335 = vsel %vm6334, %v6311, %v6313
        %v6336 = vsel %vm6334, %v6315, %v6317
        %v6337 = vsel %vm6334, %v6319, %v6321
        %v6338 = vsel %vm6334, %v6323, %v6325
        %v6339 = vsel %vm6334, %v6327, %v6329
        %v6340 = vsel %vm6334, %v6331, %v6333
        %6353 = vrot.lane.b32.xlu0 %v6059, 110
        %v6354 = vpop.permute.xlu0 %6353
        %6355 = vrot.lane.b32.xlu0 %v6061, 110
        %v6356 = vpop.permute.xlu0 %6355
        %6357 = vrot.lane.b32.xlu0 %v6063, 110
        %v6358 = vpop.permute.xlu0 %6357
        %6359 = vrot.lane.b32.xlu0 %v6065, 110
        %v6360 = vpop.permute.xlu0 %6359
        %6361 = vrot.lane.b32.xlu0 %v6069, 110
        %v6362 = vpop.permute.xlu0 %6361
        %6363 = vrot.lane.b32.xlu0 %v6071, 110
        %v6364 = vpop.permute.xlu0 %6363
        %6365 = vrot.lane.b32.xlu0 %v6073, 110
        %v6366 = vpop.permute.xlu0 %6365
        %6367 = vrot.lane.b32.xlu0 %v6075, 110
        %v6368 = vpop.permute.xlu0 %6367
        %6369 = vrot.lane.b32.xlu0 %v6079, 110
        %v6370 = vpop.permute.xlu0 %6369
        %6371 = vrot.lane.b32.xlu0 %v6081, 110
        %v6372 = vpop.permute.xlu0 %6371
        %6373 = vrot.lane.b32.xlu0 %v6083, 110
        %v6374 = vpop.permute.xlu0 %6373
        %6375 = vrot.lane.b32.xlu0 %v6085, 110
        %v6376 = vpop.permute.xlu0 %6375
        %vm6377 = vcmask 900096
        %v6378 = vsel %vm6377, %v6354, %v6356
        %v6379 = vsel %vm6377, %v6358, %v6360
        %v6380 = vsel %vm6377, %v6362, %v6364
        %v6381 = vsel %vm6377, %v6366, %v6368
        %v6382 = vsel %vm6377, %v6370, %v6372
        %v6383 = vsel %vm6377, %v6374, %v6376
        %6396 = vrot.lane.b32.xlu0 %v6059, 109
        %v6397 = vpop.permute.xlu0 %6396
        %6398 = vrot.lane.b32.xlu0 %v6061, 109
        %v6399 = vpop.permute.xlu0 %6398
        %6400 = vrot.lane.b32.xlu0 %v6063, 109
        %v6401 = vpop.permute.xlu0 %6400
        %6402 = vrot.lane.b32.xlu0 %v6065, 109
        %v6403 = vpop.permute.xlu0 %6402
        %6404 = vrot.lane.b32.xlu0 %v6069, 109
        %v6405 = vpop.permute.xlu0 %6404
        %6406 = vrot.lane.b32.xlu0 %v6071, 109
        %v6407 = vpop.permute.xlu0 %6406
        %6408 = vrot.lane.b32.xlu0 %v6073, 109
        %v6409 = vpop.permute.xlu0 %6408
        %6410 = vrot.lane.b32.xlu0 %v6075, 109
        %v6411 = vpop.permute.xlu0 %6410
        %6412 = vrot.lane.b32.xlu0 %v6079, 109
        %v6413 = vpop.permute.xlu0 %6412
        %6414 = vrot.lane.b32.xlu0 %v6081, 109
        %v6415 = vpop.permute.xlu0 %6414
        %6416 = vrot.lane.b32.xlu0 %v6083, 109
        %v6417 = vpop.permute.xlu0 %6416
        %6418 = vrot.lane.b32.xlu0 %v6085, 109
        %v6419 = vpop.permute.xlu0 %6418
        %vm6420 = vcmask 891904
        %v6421 = vsel %vm6420, %v6397, %v6399
        %v6422 = vsel %vm6420, %v6401, %v6403
        %v6423 = vsel %vm6420, %v6405, %v6407
        %v6424 = vsel %vm6420, %v6409, %v6411
        %v6425 = vsel %vm6420, %v6413, %v6415
        %v6426 = vsel %vm6420, %v6417, %v6419
        %6439 = vrot.lane.b32.xlu0 %v6059, 108
        %v6440 = vpop.permute.xlu0 %6439
        %6441 = vrot.lane.b32.xlu0 %v6061, 108
        %v6442 = vpop.permute.xlu0 %6441
        %6443 = vrot.lane.b32.xlu0 %v6063, 108
        %v6444 = vpop.permute.xlu0 %6443
        %6445 = vrot.lane.b32.xlu0 %v6065, 108
        %v6446 = vpop.permute.xlu0 %6445
        %6447 = vrot.lane.b32.xlu0 %v6069, 108
        %v6448 = vpop.permute.xlu0 %6447
        %6449 = vrot.lane.b32.xlu0 %v6071, 108
        %v6450 = vpop.permute.xlu0 %6449
        %6451 = vrot.lane.b32.xlu0 %v6073, 108
        %v6452 = vpop.permute.xlu0 %6451
        %6453 = vrot.lane.b32.xlu0 %v6075, 108
        %v6454 = vpop.permute.xlu0 %6453
        %6455 = vrot.lane.b32.xlu0 %v6079, 108
        %v6456 = vpop.permute.xlu0 %6455
        %6457 = vrot.lane.b32.xlu0 %v6081, 108
        %v6458 = vpop.permute.xlu0 %6457
        %6459 = vrot.lane.b32.xlu0 %v6083, 108
        %v6460 = vpop.permute.xlu0 %6459
        %6461 = vrot.lane.b32.xlu0 %v6085, 108
        %v6462 = vpop.permute.xlu0 %6461
        %vm6463 = vcmask 883712
        %v6464 = vsel %vm6463, %v6440, %v6442
        %v6465 = vsel %vm6463, %v6444, %v6446
        %v6466 = vsel %vm6463, %v6448, %v6450
        %v6467 = vsel %vm6463, %v6452, %v6454
        %v6468 = vsel %vm6463, %v6456, %v6458
        %v6469 = vsel %vm6463, %v6460, %v6462
        %6482 = vrot.lane.b32.xlu0 %v6059, 96
        %v6483 = vpop.permute.xlu0 %6482
        %6484 = vrot.lane.b32.xlu0 %v6061, 96
        %v6485 = vpop.permute.xlu0 %6484
        %6486 = vrot.lane.b32.xlu0 %v6063, 96
        %v6487 = vpop.permute.xlu0 %6486
        %6488 = vrot.lane.b32.xlu0 %v6065, 96
        %v6489 = vpop.permute.xlu0 %6488
        %6490 = vrot.lane.b32.xlu0 %v6069, 96
        %v6491 = vpop.permute.xlu0 %6490
        %6492 = vrot.lane.b32.xlu0 %v6071, 96
        %v6493 = vpop.permute.xlu0 %6492
        %6494 = vrot.lane.b32.xlu0 %v6073, 96
        %v6495 = vpop.permute.xlu0 %6494
        %6496 = vrot.lane.b32.xlu0 %v6075, 96
        %v6497 = vpop.permute.xlu0 %6496
        %6498 = vrot.lane.b32.xlu0 %v6079, 96
        %v6499 = vpop.permute.xlu0 %6498
        %6500 = vrot.lane.b32.xlu0 %v6081, 96
        %v6501 = vpop.permute.xlu0 %6500
        %6502 = vrot.lane.b32.xlu0 %v6083, 96
        %v6503 = vpop.permute.xlu0 %6502
        %6504 = vrot.lane.b32.xlu0 %v6085, 96
        %v6505 = vpop.permute.xlu0 %6504
        %vm6506 = vcmask 785408
        %v6507 = vsel %vm6506, %v6483, %v6485
        %v6508 = vsel %vm6506, %v6487, %v6489
        %v6509 = vsel %vm6506, %v6491, %v6493
        %v6510 = vsel %vm6506, %v6495, %v6497
        %v6511 = vsel %vm6506, %v6499, %v6501
        %v6512 = vsel %vm6506, %v6503, %v6505
        %6525 = vrot.lane.b32.xlu0 %v6059, 95
        %v6526 = vpop.permute.xlu0 %6525
        %6527 = vrot.lane.b32.xlu0 %v6061, 95
        %v6528 = vpop.permute.xlu0 %6527
        %6529 = vrot.lane.b32.xlu0 %v6063, 95
        %v6530 = vpop.permute.xlu0 %6529
        %6531 = vrot.lane.b32.xlu0 %v6065, 95
        %v6532 = vpop.permute.xlu0 %6531
        %6533 = vrot.lane.b32.xlu0 %v6069, 95
        %v6534 = vpop.permute.xlu0 %6533
        %6535 = vrot.lane.b32.xlu0 %v6071, 95
        %v6536 = vpop.permute.xlu0 %6535
        %6537 = vrot.lane.b32.xlu0 %v6073, 95
        %v6538 = vpop.permute.xlu0 %6537
        %6539 = vrot.lane.b32.xlu0 %v6075, 95
        %v6540 = vpop.permute.xlu0 %6539
        %6541 = vrot.lane.b32.xlu0 %v6079, 95
        %v6542 = vpop.permute.xlu0 %6541
        %6543 = vrot.lane.b32.xlu0 %v6081, 95
        %v6544 = vpop.permute.xlu0 %6543
        %6545 = vrot.lane.b32.xlu0 %v6083, 95
        %v6546 = vpop.permute.xlu0 %6545
        %6547 = vrot.lane.b32.xlu0 %v6085, 95
        %v6548 = vpop.permute.xlu0 %6547
        %vm6549 = vcmask 777216
        %v6550 = vsel %vm6549, %v6526, %v6528
        %v6551 = vsel %vm6549, %v6530, %v6532
        %v6552 = vsel %vm6549, %v6534, %v6536
        %v6553 = vsel %vm6549, %v6538, %v6540
        %v6554 = vsel %vm6549, %v6542, %v6544
        %v6555 = vsel %vm6549, %v6546, %v6548
        %6568 = vrot.lane.b32.xlu0 %v6059, 94
        %v6569 = vpop.permute.xlu0 %6568
        %6570 = vrot.lane.b32.xlu0 %v6061, 94
        %v6571 = vpop.permute.xlu0 %6570
        %6572 = vrot.lane.b32.xlu0 %v6063, 94
        %v6573 = vpop.permute.xlu0 %6572
        %6574 = vrot.lane.b32.xlu0 %v6065, 94
        %v6575 = vpop.permute.xlu0 %6574
        %6576 = vrot.lane.b32.xlu0 %v6069, 94
        %v6577 = vpop.permute.xlu0 %6576
        %6578 = vrot.lane.b32.xlu0 %v6071, 94
        %v6579 = vpop.permute.xlu0 %6578
        %6580 = vrot.lane.b32.xlu0 %v6073, 94
        %v6581 = vpop.permute.xlu0 %6580
        %6582 = vrot.lane.b32.xlu0 %v6075, 94
        %v6583 = vpop.permute.xlu0 %6582
        %6584 = vrot.lane.b32.xlu0 %v6079, 94
        %v6585 = vpop.permute.xlu0 %6584
        %6586 = vrot.lane.b32.xlu0 %v6081, 94
        %v6587 = vpop.permute.xlu0 %6586
        %6588 = vrot.lane.b32.xlu0 %v6083, 94
        %v6589 = vpop.permute.xlu0 %6588
        %6590 = vrot.lane.b32.xlu0 %v6085, 94
        %v6591 = vpop.permute.xlu0 %6590
        %vm6592 = vcmask 769024
        %v6593 = vsel %vm6592, %v6569, %v6571
        %v6594 = vsel %vm6592, %v6573, %v6575
        %v6595 = vsel %vm6592, %v6577, %v6579
        %v6596 = vsel %vm6592, %v6581, %v6583
        %v6597 = vsel %vm6592, %v6585, %v6587
        %v6598 = vsel %vm6592, %v6589, %v6591
        %6611 = vrot.lane.b32.xlu0 %v6059, 93
        %v6612 = vpop.permute.xlu0 %6611
        %6613 = vrot.lane.b32.xlu0 %v6061, 93
        %v6614 = vpop.permute.xlu0 %6613
        %6615 = vrot.lane.b32.xlu0 %v6063, 93
        %v6616 = vpop.permute.xlu0 %6615
        %6617 = vrot.lane.b32.xlu0 %v6065, 93
        %v6618 = vpop.permute.xlu0 %6617
        %6619 = vrot.lane.b32.xlu0 %v6069, 93
        %v6620 = vpop.permute.xlu0 %6619
        %6621 = vrot.lane.b32.xlu0 %v6071, 93
        %v6622 = vpop.permute.xlu0 %6621
        %6623 = vrot.lane.b32.xlu0 %v6073, 93
        %v6624 = vpop.permute.xlu0 %6623
        %6625 = vrot.lane.b32.xlu0 %v6075, 93
        %v6626 = vpop.permute.xlu0 %6625
        %6627 = vrot.lane.b32.xlu0 %v6079, 93
        %v6628 = vpop.permute.xlu0 %6627
        %6629 = vrot.lane.b32.xlu0 %v6081, 93
        %v6630 = vpop.permute.xlu0 %6629
        %6631 = vrot.lane.b32.xlu0 %v6083, 93
        %v6632 = vpop.permute.xlu0 %6631
        %6633 = vrot.lane.b32.xlu0 %v6085, 93
        %v6634 = vpop.permute.xlu0 %6633
        %v6635 = vsel %vm2287, %v6612, %v6614
        %v6636 = vsel %vm2287, %v6616, %v6618
        %v6637 = vsel %vm2287, %v6620, %v6622
        %v6638 = vsel %vm2287, %v6624, %v6626
        %v6639 = vsel %vm2287, %v6628, %v6630
        %v6640 = vsel %vm2287, %v6632, %v6634
        %6653 = vrot.lane.b32.xlu0 %v6059, 92
        %v6654 = vpop.permute.xlu0 %6653
        %6655 = vrot.lane.b32.xlu0 %v6061, 92
        %v6656 = vpop.permute.xlu0 %6655
        %6657 = vrot.lane.b32.xlu0 %v6063, 92
        %v6658 = vpop.permute.xlu0 %6657
        %6659 = vrot.lane.b32.xlu0 %v6065, 92
        %v6660 = vpop.permute.xlu0 %6659
        %6661 = vrot.lane.b32.xlu0 %v6069, 92
        %v6662 = vpop.permute.xlu0 %6661
        %6663 = vrot.lane.b32.xlu0 %v6071, 92
        %v6664 = vpop.permute.xlu0 %6663
        %6665 = vrot.lane.b32.xlu0 %v6073, 92
        %v6666 = vpop.permute.xlu0 %6665
        %6667 = vrot.lane.b32.xlu0 %v6075, 92
        %v6668 = vpop.permute.xlu0 %6667
        %6669 = vrot.lane.b32.xlu0 %v6079, 92
        %v6670 = vpop.permute.xlu0 %6669
        %6671 = vrot.lane.b32.xlu0 %v6081, 92
        %v6672 = vpop.permute.xlu0 %6671
        %6673 = vrot.lane.b32.xlu0 %v6083, 92
        %v6674 = vpop.permute.xlu0 %6673
        %6675 = vrot.lane.b32.xlu0 %v6085, 92
        %v6676 = vpop.permute.xlu0 %6675
        %v6677 = vsel %vm992, %v6654, %v6656
        %v6678 = vsel %vm992, %v6658, %v6660
        %v6679 = vsel %vm992, %v6662, %v6664
        %v6680 = vsel %vm992, %v6666, %v6668
        %v6681 = vsel %vm992, %v6670, %v6672
        %v6682 = vsel %vm992, %v6674, %v6676
        %6695 = vrot.lane.b32.xlu0 %v6059, 80
        %v6696 = vpop.permute.xlu0 %6695
        %6697 = vrot.lane.b32.xlu0 %v6061, 80
        %v6698 = vpop.permute.xlu0 %6697
        %6699 = vrot.lane.b32.xlu0 %v6063, 80
        %v6700 = vpop.permute.xlu0 %6699
        %6701 = vrot.lane.b32.xlu0 %v6065, 80
        %v6702 = vpop.permute.xlu0 %6701
        %6703 = vrot.lane.b32.xlu0 %v6069, 80
        %v6704 = vpop.permute.xlu0 %6703
        %6705 = vrot.lane.b32.xlu0 %v6071, 80
        %v6706 = vpop.permute.xlu0 %6705
        %6707 = vrot.lane.b32.xlu0 %v6073, 80
        %v6708 = vpop.permute.xlu0 %6707
        %6709 = vrot.lane.b32.xlu0 %v6075, 80
        %v6710 = vpop.permute.xlu0 %6709
        %6711 = vrot.lane.b32.xlu0 %v6079, 80
        %v6712 = vpop.permute.xlu0 %6711
        %6713 = vrot.lane.b32.xlu0 %v6081, 80
        %v6714 = vpop.permute.xlu0 %6713
        %6715 = vrot.lane.b32.xlu0 %v6083, 80
        %v6716 = vpop.permute.xlu0 %6715
        %6717 = vrot.lane.b32.xlu0 %v6085, 80
        %v6718 = vpop.permute.xlu0 %6717
        %vm6719 = vcmask 654336
        %v6720 = vsel %vm6719, %v6696, %v6698
        %v6721 = vsel %vm6719, %v6700, %v6702
        %v6722 = vsel %vm6719, %v6704, %v6706
        %v6723 = vsel %vm6719, %v6708, %v6710
        %v6724 = vsel %vm6719, %v6712, %v6714
        %v6725 = vsel %vm6719, %v6716, %v6718
        %6738 = vrot.lane.b32.xlu0 %v6059, 113
        %v6739 = vpop.permute.xlu0 %6738
        %6740 = vrot.lane.b32.xlu0 %v6061, 113
        %v6741 = vpop.permute.xlu0 %6740
        %6742 = vrot.lane.b32.xlu0 %v6063, 113
        %v6743 = vpop.permute.xlu0 %6742
        %6744 = vrot.lane.b32.xlu0 %v6065, 113
        %v6745 = vpop.permute.xlu0 %6744
        %6746 = vrot.lane.b32.xlu0 %v6069, 113
        %v6747 = vpop.permute.xlu0 %6746
        %6748 = vrot.lane.b32.xlu0 %v6071, 113
        %v6749 = vpop.permute.xlu0 %6748
        %6750 = vrot.lane.b32.xlu0 %v6073, 113
        %v6751 = vpop.permute.xlu0 %6750
        %6752 = vrot.lane.b32.xlu0 %v6075, 113
        %v6753 = vpop.permute.xlu0 %6752
        %6754 = vrot.lane.b32.xlu0 %v6079, 113
        %v6755 = vpop.permute.xlu0 %6754
        %6756 = vrot.lane.b32.xlu0 %v6081, 113
        %v6757 = vpop.permute.xlu0 %6756
        %6758 = vrot.lane.b32.xlu0 %v6083, 113
        %v6759 = vpop.permute.xlu0 %6758
        %6760 = vrot.lane.b32.xlu0 %v6085, 113
        %v6761 = vpop.permute.xlu0 %6760
        %vm6762 = vcmask 924672
        %v6763 = vsel %vm6762, %v6739, %v6741
        %v6764 = vsel %vm6762, %v6743, %v6745
        %v6765 = vsel %vm6762, %v6747, %v6749
        %v6766 = vsel %vm6762, %v6751, %v6753
        %v6767 = vsel %vm6762, %v6755, %v6757
        %v6768 = vsel %vm6762, %v6759, %v6761
        %6769 = vrot.lane.b32.xlu0 %v6059, 79
        %v6770 = vpop.permute.xlu0 %6769
        %6771 = vrot.lane.b32.xlu0 %v6061, 79
        %v6772 = vpop.permute.xlu0 %6771
        %6773 = vrot.lane.b32.xlu0 %v6063, 79
        %v6774 = vpop.permute.xlu0 %6773
        %6775 = vrot.lane.b32.xlu0 %v6065, 79
        %v6776 = vpop.permute.xlu0 %6775
        %6777 = vrot.lane.b32.xlu0 %v6069, 79
        %v6778 = vpop.permute.xlu0 %6777
        %6779 = vrot.lane.b32.xlu0 %v6071, 79
        %v6780 = vpop.permute.xlu0 %6779
        %6781 = vrot.lane.b32.xlu0 %v6073, 79
        %v6782 = vpop.permute.xlu0 %6781
        %6783 = vrot.lane.b32.xlu0 %v6075, 79
        %v6784 = vpop.permute.xlu0 %6783
        %6785 = vrot.lane.b32.xlu0 %v6079, 79
        %v6786 = vpop.permute.xlu0 %6785
        %6787 = vrot.lane.b32.xlu0 %v6081, 79
        %v6788 = vpop.permute.xlu0 %6787
        %6789 = vrot.lane.b32.xlu0 %v6083, 79
        %v6790 = vpop.permute.xlu0 %6789
        %6791 = vrot.lane.b32.xlu0 %v6085, 79
        %v6792 = vpop.permute.xlu0 %6791
        %6793 = vrot.lane.b32.xlu0 %v6123, 79
        %v6794 = vpop.permute.xlu0 %6793
        %6795 = vrot.lane.b32.xlu0 %v6102, 79
        %v6796 = vpop.permute.xlu0 %6795
        %6797 = vrot.lane.b32.xlu0 %v6124, 79
        %v6798 = vpop.permute.xlu0 %6797
        %6799 = vrot.lane.b32.xlu0 %v6106, 79
        %v6800 = vpop.permute.xlu0 %6799
        %6801 = vrot.lane.b32.xlu0 %v6125, 79
        %v6802 = vpop.permute.xlu0 %6801
        %6803 = vrot.lane.b32.xlu0 %v6110, 79
        %v6804 = vpop.permute.xlu0 %6803
        %6805 = vrot.lane.b32.xlu0 %v6126, 79
        %v6806 = vpop.permute.xlu0 %6805
        %6807 = vrot.lane.b32.xlu0 %v6114, 79
        %v6808 = vpop.permute.xlu0 %6807
        %6809 = vrot.lane.b32.xlu0 %v6127, 79
        %v6810 = vpop.permute.xlu0 %6809
        %6811 = vrot.lane.b32.xlu0 %v6118, 79
        %v6812 = vpop.permute.xlu0 %6811
        %6813 = vrot.lane.b32.xlu0 %v6128, 79
        %v6814 = vpop.permute.xlu0 %6813
        %6815 = vrot.lane.b32.xlu0 %v6122, 79
        %v6816 = vpop.permute.xlu0 %6815
        %6817 = vrot.lane.b32.xlu0 %v6165, 79
        %v6818 = vpop.permute.xlu0 %6817
        %6819 = vrot.lane.b32.xlu0 %v6144, 79
        %v6820 = vpop.permute.xlu0 %6819
        %6821 = vrot.lane.b32.xlu0 %v6166, 79
        %v6822 = vpop.permute.xlu0 %6821
        %6823 = vrot.lane.b32.xlu0 %v6148, 79
        %v6824 = vpop.permute.xlu0 %6823
        %6825 = vrot.lane.b32.xlu0 %v6167, 79
        %v6826 = vpop.permute.xlu0 %6825
        %6827 = vrot.lane.b32.xlu0 %v6152, 79
        %v6828 = vpop.permute.xlu0 %6827
        %6829 = vrot.lane.b32.xlu0 %v6168, 79
        %v6830 = vpop.permute.xlu0 %6829
        %6831 = vrot.lane.b32.xlu0 %v6156, 79
        %v6832 = vpop.permute.xlu0 %6831
        %6833 = vrot.lane.b32.xlu0 %v6169, 79
        %v6834 = vpop.permute.xlu0 %6833
        %6835 = vrot.lane.b32.xlu0 %v6160, 79
        %v6836 = vpop.permute.xlu0 %6835
        %6837 = vrot.lane.b32.xlu0 %v6170, 79
        %v6838 = vpop.permute.xlu0 %6837
        %6839 = vrot.lane.b32.xlu0 %v6164, 79
        %v6840 = vpop.permute.xlu0 %6839
        %6841 = vrot.lane.b32.xlu0 %v6207, 79
        %v6842 = vpop.permute.xlu0 %6841
        %6843 = vrot.lane.b32.xlu0 %v6186, 79
        %v6844 = vpop.permute.xlu0 %6843
        %6845 = vrot.lane.b32.xlu0 %v6208, 79
        %v6846 = vpop.permute.xlu0 %6845
        %6847 = vrot.lane.b32.xlu0 %v6190, 79
        %v6848 = vpop.permute.xlu0 %6847
        %6849 = vrot.lane.b32.xlu0 %v6209, 79
        %v6850 = vpop.permute.xlu0 %6849
        %6851 = vrot.lane.b32.xlu0 %v6194, 79
        %v6852 = vpop.permute.xlu0 %6851
        %6853 = vrot.lane.b32.xlu0 %v6210, 79
        %v6854 = vpop.permute.xlu0 %6853
        %6855 = vrot.lane.b32.xlu0 %v6198, 79
        %v6856 = vpop.permute.xlu0 %6855
        %6857 = vrot.lane.b32.xlu0 %v6211, 79
        %v6858 = vpop.permute.xlu0 %6857
        %6859 = vrot.lane.b32.xlu0 %v6202, 79
        %v6860 = vpop.permute.xlu0 %6859
        %6861 = vrot.lane.b32.xlu0 %v6212, 79
        %v6862 = vpop.permute.xlu0 %6861
        %6863 = vrot.lane.b32.xlu0 %v6206, 79
        %v6864 = vpop.permute.xlu0 %6863
        %6865 = vrot.lane.b32.xlu0 %v6763, 79
        %v6866 = vpop.permute.xlu0 %6865
        %6867 = vrot.lane.b32.xlu0 %v6741, 79
        %v6868 = vpop.permute.xlu0 %6867
        %6869 = vrot.lane.b32.xlu0 %v6764, 79
        %v6870 = vpop.permute.xlu0 %6869
        %6871 = vrot.lane.b32.xlu0 %v6745, 79
        %v6872 = vpop.permute.xlu0 %6871
        %6873 = vrot.lane.b32.xlu0 %v6765, 79
        %v6874 = vpop.permute.xlu0 %6873
        %6875 = vrot.lane.b32.xlu0 %v6749, 79
        %v6876 = vpop.permute.xlu0 %6875
        %6877 = vrot.lane.b32.xlu0 %v6766, 79
        %v6878 = vpop.permute.xlu0 %6877
        %6879 = vrot.lane.b32.xlu0 %v6753, 79
        %v6880 = vpop.permute.xlu0 %6879
        %6881 = vrot.lane.b32.xlu0 %v6767, 79
        %v6882 = vpop.permute.xlu0 %6881
        %6883 = vrot.lane.b32.xlu0 %v6757, 79
        %v6884 = vpop.permute.xlu0 %6883
        %6885 = vrot.lane.b32.xlu0 %v6768, 79
        %v6886 = vpop.permute.xlu0 %6885
        %6887 = vrot.lane.b32.xlu0 %v6761, 79
        %v6888 = vpop.permute.xlu0 %6887
        %6889 = vrot.lane.b32.xlu0 %v6292, 79
        %v6890 = vpop.permute.xlu0 %6889
        %6891 = vrot.lane.b32.xlu0 %v6270, 79
        %v6892 = vpop.permute.xlu0 %6891
        %6893 = vrot.lane.b32.xlu0 %v6293, 79
        %v6894 = vpop.permute.xlu0 %6893
        %6895 = vrot.lane.b32.xlu0 %v6274, 79
        %v6896 = vpop.permute.xlu0 %6895
        %6897 = vrot.lane.b32.xlu0 %v6294, 79
        %v6898 = vpop.permute.xlu0 %6897
        %6899 = vrot.lane.b32.xlu0 %v6278, 79
        %v6900 = vpop.permute.xlu0 %6899
        %6901 = vrot.lane.b32.xlu0 %v6295, 79
        %v6902 = vpop.permute.xlu0 %6901
        %6903 = vrot.lane.b32.xlu0 %v6282, 79
        %v6904 = vpop.permute.xlu0 %6903
        %6905 = vrot.lane.b32.xlu0 %v6296, 79
        %v6906 = vpop.permute.xlu0 %6905
        %6907 = vrot.lane.b32.xlu0 %v6286, 79
        %v6908 = vpop.permute.xlu0 %6907
        %6909 = vrot.lane.b32.xlu0 %v6297, 79
        %v6910 = vpop.permute.xlu0 %6909
        %6911 = vrot.lane.b32.xlu0 %v6290, 79
        %v6912 = vpop.permute.xlu0 %6911
        %6913 = vrot.lane.b32.xlu0 %v6335, 79
        %v6914 = vpop.permute.xlu0 %6913
        %6915 = vrot.lane.b32.xlu0 %v6313, 79
        %v6916 = vpop.permute.xlu0 %6915
        %6917 = vrot.lane.b32.xlu0 %v6336, 79
        %v6918 = vpop.permute.xlu0 %6917
        %6919 = vrot.lane.b32.xlu0 %v6317, 79
        %v6920 = vpop.permute.xlu0 %6919
        %6921 = vrot.lane.b32.xlu0 %v6337, 79
        %v6922 = vpop.permute.xlu0 %6921
        %6923 = vrot.lane.b32.xlu0 %v6321, 79
        %v6924 = vpop.permute.xlu0 %6923
        %6925 = vrot.lane.b32.xlu0 %v6338, 79
        %v6926 = vpop.permute.xlu0 %6925
        %6927 = vrot.lane.b32.xlu0 %v6325, 79
        %v6928 = vpop.permute.xlu0 %6927
        %6929 = vrot.lane.b32.xlu0 %v6339, 79
        %v6930 = vpop.permute.xlu0 %6929
        %6931 = vrot.lane.b32.xlu0 %v6329, 79
        %v6932 = vpop.permute.xlu0 %6931
        %6933 = vrot.lane.b32.xlu0 %v6340, 79
        %v6934 = vpop.permute.xlu0 %6933
        %6935 = vrot.lane.b32.xlu0 %v6333, 79
        %v6936 = vpop.permute.xlu0 %6935
        %6937 = vrot.lane.b32.xlu0 %v6378, 79
        %v6938 = vpop.permute.xlu0 %6937
        %6939 = vrot.lane.b32.xlu0 %v6356, 79
        %v6940 = vpop.permute.xlu0 %6939
        %6941 = vrot.lane.b32.xlu0 %v6379, 79
        %v6942 = vpop.permute.xlu0 %6941
        %6943 = vrot.lane.b32.xlu0 %v6360, 79
        %v6944 = vpop.permute.xlu0 %6943
        %6945 = vrot.lane.b32.xlu0 %v6380, 79
        %v6946 = vpop.permute.xlu0 %6945
        %6947 = vrot.lane.b32.xlu0 %v6364, 79
        %v6948 = vpop.permute.xlu0 %6947
        %6949 = vrot.lane.b32.xlu0 %v6381, 79
        %v6950 = vpop.permute.xlu0 %6949
        %6951 = vrot.lane.b32.xlu0 %v6368, 79
        %v6952 = vpop.permute.xlu0 %6951
        %6953 = vrot.lane.b32.xlu0 %v6382, 79
        %v6954 = vpop.permute.xlu0 %6953
        %6955 = vrot.lane.b32.xlu0 %v6372, 79
        %v6956 = vpop.permute.xlu0 %6955
        %6957 = vrot.lane.b32.xlu0 %v6383, 79
        %v6958 = vpop.permute.xlu0 %6957
        %6959 = vrot.lane.b32.xlu0 %v6376, 79
        %v6960 = vpop.permute.xlu0 %6959
        %6961 = vrot.lane.b32.xlu0 %v6421, 79
        %v6962 = vpop.permute.xlu0 %6961
        %6963 = vrot.lane.b32.xlu0 %v6399, 79
        %v6964 = vpop.permute.xlu0 %6963
        %6965 = vrot.lane.b32.xlu0 %v6422, 79
        %v6966 = vpop.permute.xlu0 %6965
        %6967 = vrot.lane.b32.xlu0 %v6403, 79
        %v6968 = vpop.permute.xlu0 %6967
        %6969 = vrot.lane.b32.xlu0 %v6423, 79
        %v6970 = vpop.permute.xlu0 %6969
        %6971 = vrot.lane.b32.xlu0 %v6407, 79
        %v6972 = vpop.permute.xlu0 %6971
        %6973 = vrot.lane.b32.xlu0 %v6424, 79
        %v6974 = vpop.permute.xlu0 %6973
        %6975 = vrot.lane.b32.xlu0 %v6411, 79
        %v6976 = vpop.permute.xlu0 %6975
        %6977 = vrot.lane.b32.xlu0 %v6425, 79
        %v6978 = vpop.permute.xlu0 %6977
        %6979 = vrot.lane.b32.xlu0 %v6415, 79
        %v6980 = vpop.permute.xlu0 %6979
        %6981 = vrot.lane.b32.xlu0 %v6426, 79
        %v6982 = vpop.permute.xlu0 %6981
        %6983 = vrot.lane.b32.xlu0 %v6419, 79
        %v6984 = vpop.permute.xlu0 %6983
        %vm6985 = vcmask 646144
        %v6986 = vsel %vm6985, %v6770, %v6772
        %v6987 = vsel %vm6985, %v6774, %v6776
        %v6988 = vsel %vm6985, %v6778, %v6780
        %v6989 = vsel %vm6985, %v6782, %v6784
        %v6990 = vsel %vm6985, %v6786, %v6788
        %v6991 = vsel %vm6985, %v6790, %v6792
        %v6992 = vsel %vm6985, %v6794, %v6796
        %v6993 = vsel %vm6985, %v6798, %v6800
        %v6994 = vsel %vm6985, %v6802, %v6804
        %v6995 = vsel %vm6985, %v6806, %v6808
        %v6996 = vsel %vm6985, %v6810, %v6812
        %v6997 = vsel %vm6985, %v6814, %v6816
        %v6998 = vsel %vm6985, %v6818, %v6820
        %v6999 = vsel %vm6985, %v6822, %v6824
        %v7000 = vsel %vm6985, %v6826, %v6828
        %v7001 = vsel %vm6985, %v6830, %v6832
        %v7002 = vsel %vm6985, %v6834, %v6836
        %v7003 = vsel %vm6985, %v6838, %v6840
        %v7004 = vsel %vm6985, %v6842, %v6844
        %v7005 = vsel %vm6985, %v6846, %v6848
        %v7006 = vsel %vm6985, %v6850, %v6852
        %v7007 = vsel %vm6985, %v6854, %v6856
        %v7008 = vsel %vm6985, %v6858, %v6860
        %v7009 = vsel %vm6985, %v6862, %v6864
        %v7010 = vsel %vm6985, %v6866, %v6868
        %v7011 = vsel %vm6985, %v6870, %v6872
        %v7012 = vsel %vm6985, %v6874, %v6876
        %v7013 = vsel %vm6985, %v6878, %v6880
        %v7014 = vsel %vm6985, %v6882, %v6884
        %v7015 = vsel %vm6985, %v6886, %v6888
        %v7016 = vsel %vm6985, %v6890, %v6892
        %v7017 = vsel %vm6985, %v6894, %v6896
        %v7018 = vsel %vm6985, %v6898, %v6900
        %v7019 = vsel %vm6985, %v6902, %v6904
        %v7020 = vsel %vm6985, %v6906, %v6908
        %v7021 = vsel %vm6985, %v6910, %v6912
        %v7022 = vsel %vm6985, %v6914, %v6916
        %v7023 = vsel %vm6985, %v6918, %v6920
        %v7024 = vsel %vm6985, %v6922, %v6924
        %v7025 = vsel %vm6985, %v6926, %v6928
        %v7026 = vsel %vm6985, %v6930, %v6932
        %v7027 = vsel %vm6985, %v6934, %v6936
        %v7028 = vsel %vm6985, %v6938, %v6940
        %v7029 = vsel %vm6985, %v6942, %v6944
        %v7030 = vsel %vm6985, %v6946, %v6948
        %v7031 = vsel %vm6985, %v6950, %v6952
        %v7032 = vsel %vm6985, %v6954, %v6956
        %v7033 = vsel %vm6985, %v6958, %v6960
        %v7034 = vsel %vm6985, %v6962, %v6964
        %v7035 = vsel %vm6985, %v6966, %v6968
        %v7036 = vsel %vm6985, %v6970, %v6972
        %v7037 = vsel %vm6985, %v6974, %v6976
        %v7038 = vsel %vm6985, %v6978, %v6980
        %v7039 = vsel %vm6985, %v6982, %v6984
        %v7148 = vld [vmem:[%s3] sm:$0xff]
        %v7149 = vld [vmem:[%s3 + $0x8] sm:$0xff]
        %v7150 = vld [vmem:[%s3 + $0x10] sm:$0xff]
        %v7151 = vld [vmem:[%s3 + $0x18] sm:$0xff]
        %v7152 = vld [vmem:[%s3 + $0x20] sm:$0xff]
        %v7153 = vld [vmem:[%s3 + $0x28] sm:$0xff]
        %v7154 = vld [vmem:[%s3 + $0x30] sm:$0xff]
        %v7155 = vld [vmem:[%s3 + $0x38] sm:$0xff]
        %v7156 = vld [vmem:[%s3 + $0x40] sm:$0xff]
        %v7157 = vld [vmem:[%s3 + $0x48] sm:$0xff]
        %v7158 = vld [vmem:[%s3 + $0x50] sm:$0xff]
        %v7159 = vld [vmem:[%s3 + $0x58] sm:$0xff]
        %v7160 = vld [vmem:[%s3 + $0x60] sm:$0xff]
        %v7161 = vld [vmem:[%s3 + $0x68] sm:$0xff]
        %v7162 = vld [vmem:[%s3 + $0x70] sm:$0xff]
        %v7163 = vld [vmem:[%s3 + $0x78] sm:$0xff]
        %v7164 = vld [vmem:[%s3 + $0x80] sm:$0xff]
        %v7165 = vld [vmem:[%s3 + $0x88] sm:$0xff]
        %v7166 = vld [vmem:[%s3 + $0x90] sm:$0xff]
        %v7167 = vld [vmem:[%s3 + $0x98] sm:$0xff]
        %v7168 = vld [vmem:[%s3 + $0xa0] sm:$0xff]
        %v7169 = vld [vmem:[%s3 + $0xa8] sm:$0xff]
        %v7170 = vld [vmem:[%s3 + $0xb0] sm:$0xff]
        %v7171 = vld [vmem:[%s3 + $0xb8] sm:$0xff]
        %v7172 = vld [vmem:[%s3 + $0xc0] sm:$0xff]
        %v7173 = vld [vmem:[%s3 + $0xc8] sm:$0xff]
        %v7174 = vld [vmem:[%s3 + $0xd0] sm:$0xff]
        %v7175 = vld [vmem:[%s3 + $0xd8] sm:$0xff]
        %v7176 = vld [vmem:[%s3 + $0xe0] sm:$0xff]
        %v7177 = vld [vmem:[%s3 + $0xe8] sm:$0xff]
        %v7178 = vld [vmem:[%s3 + $0xf0] sm:$0xff]
        %v7179 = vld [vmem:[%s3 + $0xf8] sm:$0xff]
        %v7180 = vld [vmem:[%s3 + $0x100] sm:$0xff]
        %v7181 = vld [vmem:[%s3 + $0x108] sm:$0xff]
        %v7182 = vld [vmem:[%s3 + $0x110] sm:$0xff]
        %v7183 = vld [vmem:[%s3 + $0x118] sm:$0xff]
        %v7184 = vld [vmem:[%s3 + $0x120] sm:$0xff]
        %v7185 = vld [vmem:[%s3 + $0x128] sm:$0xff]
        %v7186 = vld [vmem:[%s3 + $0x130] sm:$0xff]
        %v7187 = vld [vmem:[%s3 + $0x138] sm:$0xff]
        %v7188 = vld [vmem:[%s3 + $0x140] sm:$0xff]
        %v7189 = vld [vmem:[%s3 + $0x148] sm:$0xff]
        %v7190 = vld [vmem:[%s3 + $0x150] sm:$0xff]
        %v7191 = vld [vmem:[%s3 + $0x158] sm:$0xff]
        %v7192 = vld [vmem:[%s3 + $0x160] sm:$0xff]
        %v7193 = vld [vmem:[%s3 + $0x168] sm:$0xff]
        %v7194 = vld [vmem:[%s3 + $0x170] sm:$0xff]
        %v7195 = vld [vmem:[%s3 + $0x178] sm:$0xff]
        %v7196 = vld [vmem:[%s3 + $0x180] sm:$0xff]
        %v7197 = vld [vmem:[%s3 + $0x188] sm:$0xff]
        %v7198 = vld [vmem:[%s3 + $0x190] sm:$0xff]
        %v7199 = vld [vmem:[%s3 + $0x198] sm:$0xff]
        %v7200 = vld [vmem:[%s3 + $0x1a0] sm:$0xff]
        %v7201 = vld [vmem:[%s3 + $0x1a8] sm:$0xff]
        %v7202 = vld [vmem:[%s3 + $0x1b0] sm:$0xff]
        %v7203 = vld [vmem:[%s3 + $0x1b8] sm:$0xff]
        %v7204 = vld [vmem:[%s3 + $0x1c0] sm:$0xff]
        %v7205 = vld [vmem:[%s3 + $0x1c8] sm:$0xff]
        %v7206 = vld [vmem:[%s3 + $0x1d0] sm:$0xff]
        %v7207 = vld [vmem:[%s3 + $0x1d8] sm:$0xff]
        %v7208 = vld [vmem:[%s3 + $0x1e0] sm:$0xff]
        %v7209 = vld [vmem:[%s3 + $0x1e8] sm:$0xff]
        %v7210 = vld [vmem:[%s3 + $0x1f0] sm:$0xff]
        %v7211 = vld [vmem:[%s3 + $0x1f8] sm:$0xff]
        %v7212 = vld [vmem:[%s3 + $0x200] sm:$0xff]
        %v7213 = vld [vmem:[%s3 + $0x208] sm:$0xff]
        %v7214 = vld [vmem:[%s3 + $0x210] sm:$0xff]
        %v7215 = vld [vmem:[%s3 + $0x218] sm:$0xff]
        %v7216 = vld [vmem:[%s3 + $0x220] sm:$0xff]
        %v7217 = vld [vmem:[%s3 + $0x228] sm:$0xff]
        %v7218 = vld [vmem:[%s3 + $0x230] sm:$0xff]
        %v7219 = vld [vmem:[%s3 + $0x238] sm:$0xff]
        %v7220 = vld [vmem:[%s3 + $0x240] sm:$0xff]
        %v7221 = vld [vmem:[%s3 + $0x248] sm:$0xff]
        %v7222 = vld [vmem:[%s3 + $0x250] sm:$0xff]
        %v7223 = vld [vmem:[%s3 + $0x258] sm:$0xff]
        %v7224 = vld [vmem:[%s3 + $0x260] sm:$0xff]
        %v7225 = vld [vmem:[%s3 + $0x268] sm:$0xff]
        %v7226 = vld [vmem:[%s3 + $0x270] sm:$0xff]
        %v7227 = vld [vmem:[%s3 + $0x278] sm:$0xff]
        %v7228 = vpack.c.bf16 %v6063, %v6059
        %v7229 = vpack.c.bf16 %v6065, %v6061
        %v7230 = vpack.c.bf16 %v6073, %v6069
        %v7231 = vpack.c.bf16 %v6075, %v6071
        %v7232 = vpack.c.bf16 %v6083, %v6079
        %v7233 = vpack.c.bf16 %v6085, %v6081
        %v7234 = vpack.c.bf16 %v6124, %v6123
        %v7235 = vpack.c.bf16 %v6106, %v6102
        %v7236 = vpack.c.bf16 %v6126, %v6125
        %v7237 = vpack.c.bf16 %v6114, %v6110
        %v7238 = vpack.c.bf16 %v6128, %v6127
        %v7239 = vpack.c.bf16 %v6122, %v6118
        %v7240 = vpack.c.bf16 %v6166, %v6165
        %v7241 = vpack.c.bf16 %v6148, %v6144
        %v7242 = vpack.c.bf16 %v6168, %v6167
        %v7243 = vpack.c.bf16 %v6156, %v6152
        %v7244 = vpack.c.bf16 %v6170, %v6169
        %v7245 = vpack.c.bf16 %v6164, %v6160
        %v7246 = vpack.c.bf16 %v6208, %v6207
        %v7247 = vpack.c.bf16 %v6190, %v6186
        %v7248 = vpack.c.bf16 %v6210, %v6209
        %v7249 = vpack.c.bf16 %v6198, %v6194
        %v7250 = vpack.c.bf16 %v6212, %v6211
        %v7251 = vpack.c.bf16 %v6206, %v6202
        %v7252 = vpack.c.bf16 %v6250, %v6249
        %v7253 = vpack.c.bf16 %v6232, %v6228
        %v7254 = vpack.c.bf16 %v6252, %v6251
        %v7255 = vpack.c.bf16 %v6240, %v6236
        %v7256 = vpack.c.bf16 %v6254, %v6253
        %v7257 = vpack.c.bf16 %v6248, %v6244
        %v7258 = vpack.c.bf16 %v6293, %v6292
        %v7259 = vpack.c.bf16 %v6274, %v6270
        %v7260 = vpack.c.bf16 %v6295, %v6294
        %v7261 = vpack.c.bf16 %v6282, %v6278
        %v7262 = vpack.c.bf16 %v6297, %v6296
        %v7263 = vpack.c.bf16 %v6290, %v6286
        %v7264 = vpack.c.bf16 %v6336, %v6335
        %v7265 = vpack.c.bf16 %v6317, %v6313
        %v7266 = vpack.c.bf16 %v6338, %v6337
        %v7267 = vpack.c.bf16 %v6325, %v6321
        %v7268 = vpack.c.bf16 %v6340, %v6339
        %v7269 = vpack.c.bf16 %v6333, %v6329
        %v7270 = vpack.c.bf16 %v6379, %v6378
        %v7271 = vpack.c.bf16 %v6360, %v6356
        %v7272 = vpack.c.bf16 %v6381, %v6380
        %v7273 = vpack.c.bf16 %v6368, %v6364
        %v7274 = vpack.c.bf16 %v6383, %v6382
        %v7275 = vpack.c.bf16 %v6376, %v6372
        %v7276 = vpack.c.bf16 %v6422, %v6421
        %v7277 = vpack.c.bf16 %v6403, %v6399
        %v7278 = vpack.c.bf16 %v6424, %v6423
        %v7279 = vpack.c.bf16 %v6411, %v6407
        %v7280 = vpack.c.bf16 %v6426, %v6425
        %v7281 = vpack.c.bf16 %v6419, %v6415
        %v7282 = vpack.c.bf16 %v6465, %v6464
        %v7283 = vpack.c.bf16 %v6446, %v6442
        %v7284 = vpack.c.bf16 %v6467, %v6466
        %v7285 = vpack.c.bf16 %v6454, %v6450
        %v7286 = vpack.c.bf16 %v6469, %v6468
        %v7287 = vpack.c.bf16 %v6462, %v6458
        %v7288 = vpack.c.bf16 %v6508, %v6507
        %v7289 = vpack.c.bf16 %v6489, %v6485
        %v7290 = vpack.c.bf16 %v6510, %v6509
        %v7291 = vpack.c.bf16 %v6497, %v6493
        %v7292 = vpack.c.bf16 %v6512, %v6511
        %v7293 = vpack.c.bf16 %v6505, %v6501
        %v7294 = vpack.c.bf16 %v6551, %v6550
        %v7295 = vpack.c.bf16 %v6532, %v6528
        %v7296 = vpack.c.bf16 %v6553, %v6552
        %v7297 = vpack.c.bf16 %v6540, %v6536
        %v7298 = vpack.c.bf16 %v6555, %v6554
        %v7299 = vpack.c.bf16 %v6548, %v6544
        %v7300 = vpack.c.bf16 %v6594, %v6593
        %v7301 = vpack.c.bf16 %v6575, %v6571
        %v7302 = vpack.c.bf16 %v6596, %v6595
        %v7303 = vpack.c.bf16 %v6583, %v6579
        %v7304 = vpack.c.bf16 %v6598, %v6597
        %v7305 = vpack.c.bf16 %v6591, %v6587
        %v7306 = vpack.c.bf16 %v6636, %v6635
        %v7307 = vpack.c.bf16 %v6618, %v6614
        %v7308 = vpack.c.bf16 %v6638, %v6637
        %v7309 = vpack.c.bf16 %v6626, %v6622
        %v7310 = vpack.c.bf16 %v6640, %v6639
        %v7311 = vpack.c.bf16 %v6634, %v6630
        %v7312 = vpack.c.bf16 %v6678, %v6677
        %v7313 = vpack.c.bf16 %v6660, %v6656
        %v7314 = vpack.c.bf16 %v6680, %v6679
        %v7315 = vpack.c.bf16 %v6668, %v6664
        %v7316 = vpack.c.bf16 %v6682, %v6681
        %v7317 = vpack.c.bf16 %v6676, %v6672
        %v7318 = vpack.c.bf16 %v6721, %v6720
        %v7319 = vpack.c.bf16 %v6702, %v6698
        %v7320 = vpack.c.bf16 %v6723, %v6722
        %v7321 = vpack.c.bf16 %v6710, %v6706
        %v7322 = vpack.c.bf16 %v6725, %v6724
        %v7323 = vpack.c.bf16 %v6718, %v6714
        %v7324 = vpack.c.bf16 %v6987, %v6986
        %v7325 = vpack.c.bf16 %v6776, %v6772
        %v7326 = vpack.c.bf16 %v6989, %v6988
        %v7327 = vpack.c.bf16 %v6784, %v6780
        %v7328 = vpack.c.bf16 %v6991, %v6990
        %v7329 = vpack.c.bf16 %v6792, %v6788
        %v7330 = vpack.c.bf16 %v6993, %v6992
        %v7331 = vpack.c.bf16 %v6800, %v6796
        %v7332 = vpack.c.bf16 %v6995, %v6994
        %v7333 = vpack.c.bf16 %v6808, %v6804
        %v7334 = vpack.c.bf16 %v6997, %v6996
        %v7335 = vpack.c.bf16 %v6816, %v6812
        %v7336 = vpack.c.bf16 %v6999, %v6998
        %v7337 = vpack.c.bf16 %v6824, %v6820
        %v7338 = vpack.c.bf16 %v7001, %v7000
        %v7339 = vpack.c.bf16 %v6832, %v6828
        %v7340 = vpack.c.bf16 %v7003, %v7002
        %v7341 = vpack.c.bf16 %v6840, %v6836
        %v7342 = vpack.c.bf16 %v7005, %v7004
        %v7343 = vpack.c.bf16 %v6848, %v6844
        %v7344 = vpack.c.bf16 %v7007, %v7006
        %v7345 = vpack.c.bf16 %v6856, %v6852
        %v7346 = vpack.c.bf16 %v7009, %v7008
        %v7347 = vpack.c.bf16 %v6864, %v6860
        %v7348 = vpack.c.bf16 %v7011, %v7010
        %v7349 = vpack.c.bf16 %v6872, %v6868
        %v7350 = vpack.c.bf16 %v7013, %v7012
        %v7351 = vpack.c.bf16 %v6880, %v6876
        %v7352 = vpack.c.bf16 %v7015, %v7014
        %v7353 = vpack.c.bf16 %v6888, %v6884
        %v7354 = vpack.c.bf16 %v7017, %v7016
        %v7355 = vpack.c.bf16 %v6896, %v6892
        %v7356 = vpack.c.bf16 %v7019, %v7018
        %v7357 = vpack.c.bf16 %v6904, %v6900
        %v7358 = vpack.c.bf16 %v7021, %v7020
        %v7359 = vpack.c.bf16 %v6912, %v6908
        %v7360 = vpack.c.bf16 %v7023, %v7022
        %v7361 = vpack.c.bf16 %v6920, %v6916
        %v7362 = vpack.c.bf16 %v7025, %v7024
        %v7363 = vpack.c.bf16 %v6928, %v6924
        %v7364 = vpack.c.bf16 %v7027, %v7026
        %v7365 = vpack.c.bf16 %v6936, %v6932
        %v7366 = vpack.c.bf16 %v7029, %v7028
        %v7367 = vpack.c.bf16 %v6944, %v6940
        %v7368 = vpack.c.bf16 %v7031, %v7030
        %v7369 = vpack.c.bf16 %v6952, %v6948
        %v7370 = vpack.c.bf16 %v7033, %v7032
        %v7371 = vpack.c.bf16 %v6960, %v6956
        %v7372 = vpack.c.bf16 %v7035, %v7034
        %v7373 = vpack.c.bf16 %v6968, %v6964
        %v7374 = vpack.c.bf16 %v7037, %v7036
        %v7375 = vpack.c.bf16 %v6976, %v6972
        %v7376 = vpack.c.bf16 %v7039, %v7038
        %v7377 = vpack.c.bf16 %v6984, %v6980
        %v7378 = vld [vmem:[%s4] sm:$0xff]
        %v7379 = vld [vmem:[%s4 + $0x8] sm:$0xff]
        %v7380 = vld [vmem:[%s4 + $0x10] sm:$0xff]
        %v7381 = vld [vmem:[%s4 + $0x18] sm:$0xff]
        %v7382 = vld [vmem:[%s4 + $0x20] sm:$0xff]
        %v7383 = vld [vmem:[%s4 + $0x28] sm:$0xff]
        %v7384 = vld [vmem:[%s4 + $0x30] sm:$0xff]
        %v7385 = vld [vmem:[%s4 + $0x38] sm:$0xff]
        %v7386 = vld [vmem:[%s4 + $0x40] sm:$0xff]
        %v7387 = vld [vmem:[%s4 + $0x48] sm:$0xff]
        %v7388 = vld [vmem:[%s4 + $0x50] sm:$0xff]
        %v7389 = vld [vmem:[%s4 + $0x58] sm:$0xff]
        %v7390 = vld [vmem:[%s4 + $0x60] sm:$0xff]
        %v7391 = vld [vmem:[%s4 + $0x68] sm:$0xff]
        %v7392 = vld [vmem:[%s4 + $0x70] sm:$0xff]
        %v7393 = vld [vmem:[%s4 + $0x78] sm:$0xff]
        %7395 = vset.pattern.permute.xlu0 0
        %7396 = vperm.xlu0 %7395, %v7378
        %v7397 = vpop.permute.xlu0 %7396
        %7400 = vset.pattern.permute.xlu0 0
        %7401 = vperm.xlu0 %7400, %v7379
        %v7402 = vpop.permute.xlu0 %7401
        %7405 = vset.pattern.permute.xlu0 0
        %7406 = vperm.xlu0 %7405, %v7380
        %v7407 = vpop.permute.xlu0 %7406
        %7410 = vset.pattern.permute.xlu0 0
        %7411 = vperm.xlu0 %7410, %v7381
        %v7412 = vpop.permute.xlu0 %7411
        %7415 = vset.pattern.permute.xlu0 0
        %7416 = vperm.xlu0 %7415, %v7382
        %v7417 = vpop.permute.xlu0 %7416
        %7420 = vset.pattern.permute.xlu0 0
        %7421 = vperm.xlu0 %7420, %v7383
        %v7422 = vpop.permute.xlu0 %7421
        %7425 = vset.pattern.permute.xlu0 0
        %7426 = vperm.xlu0 %7425, %v7384
        %v7427 = vpop.permute.xlu0 %7426
        %7430 = vset.pattern.permute.xlu0 0
        %7431 = vperm.xlu0 %7430, %v7385
        %v7432 = vpop.permute.xlu0 %7431
        %7435 = vset.pattern.permute.xlu0 0
        %7436 = vperm.xlu0 %7435, %v7386
        %v7437 = vpop.permute.xlu0 %7436
        %7440 = vset.pattern.permute.xlu0 0
        %7441 = vperm.xlu0 %7440, %v7387
        %v7442 = vpop.permute.xlu0 %7441
        %7445 = vset.pattern.permute.xlu0 0
        %7446 = vperm.xlu0 %7445, %v7388
        %v7447 = vpop.permute.xlu0 %7446
        %7450 = vset.pattern.permute.xlu0 0
        %7451 = vperm.xlu0 %7450, %v7389
        %v7452 = vpop.permute.xlu0 %7451
        %7455 = vset.pattern.permute.xlu0 0
        %7456 = vperm.xlu0 %7455, %v7390
        %v7457 = vpop.permute.xlu0 %7456
        %7460 = vset.pattern.permute.xlu0 0
        %7461 = vperm.xlu0 %7460, %v7391
        %v7462 = vpop.permute.xlu0 %7461
        %7465 = vset.pattern.permute.xlu0 0
        %7466 = vperm.xlu0 %7465, %v7392
        %v7467 = vpop.permute.xlu0 %7466
        %7470 = vset.pattern.permute.xlu0 0
        %7471 = vperm.xlu0 %7470, %v7393
        %v7472 = vpop.permute.xlu0 %7471
        %v7554 = vunpack.c.l.b16 %v7148
        %v7555 = vunpack.c.h.b16 %v7148
        %v7556 = vunpack.c.l.b16 %v7149
        %v7557 = vunpack.c.h.b16 %v7149
        %v7558 = vunpack.c.l.b16 %v7150
        %v7559 = vunpack.c.h.b16 %v7150
        %v7560 = vunpack.c.l.b16 %v7151
        %v7561 = vunpack.c.h.b16 %v7151
        %v7562 = vunpack.c.l.b16 %v7152
        %v7563 = vunpack.c.h.b16 %v7152
        %v7564 = vunpack.c.l.b16 %v7153
        %v7565 = vunpack.c.h.b16 %v7153
        %v7566 = vunpack.c.l.b16 %v7154
        %v7567 = vunpack.c.h.b16 %v7154
        %v7568 = vunpack.c.l.b16 %v7155
        %v7569 = vunpack.c.h.b16 %v7155
        %v7570 = vunpack.c.l.b16 %v7156
        %v7571 = vunpack.c.h.b16 %v7156
        %v7572 = vunpack.c.l.b16 %v7157
        %v7573 = vunpack.c.h.b16 %v7157
        %v7574 = vunpack.c.l.b16 %v7158
        %v7575 = vunpack.c.h.b16 %v7158
        %v7576 = vunpack.c.l.b16 %v7159
        %v7577 = vunpack.c.h.b16 %v7159
        %v7578 = vunpack.c.l.b16 %v7160
        %v7579 = vunpack.c.h.b16 %v7160
        %v7580 = vunpack.c.l.b16 %v7161
        %v7581 = vunpack.c.h.b16 %v7161
        %v7582 = vunpack.c.l.b16 %v7162
        %v7583 = vunpack.c.h.b16 %v7162
        %v7584 = vunpack.c.l.b16 %v7163
        %v7585 = vunpack.c.h.b16 %v7163
        %v7586 = vunpack.c.l.b16 %v7164
        %v7587 = vunpack.c.h.b16 %v7164
        %v7588 = vunpack.c.l.b16 %v7165
        %v7589 = vunpack.c.h.b16 %v7165
        %v7590 = vunpack.c.l.b16 %v7166
        %v7591 = vunpack.c.h.b16 %v7166
        %v7592 = vunpack.c.l.b16 %v7167
        %v7593 = vunpack.c.h.b16 %v7167
        %v7594 = vunpack.c.l.b16 %v7168
        %v7595 = vunpack.c.h.b16 %v7168
        %v7596 = vunpack.c.l.b16 %v7169
        %v7597 = vunpack.c.h.b16 %v7169
        %v7598 = vunpack.c.l.b16 %v7170
        %v7599 = vunpack.c.h.b16 %v7170
        %v7600 = vunpack.c.l.b16 %v7171
        %v7601 = vunpack.c.h.b16 %v7171
        %v7602 = vunpack.c.l.b16 %v7172
        %v7603 = vunpack.c.h.b16 %v7172
        %v7604 = vunpack.c.l.b16 %v7173
        %v7605 = vunpack.c.h.b16 %v7173
        %v7606 = vunpack.c.l.b16 %v7174
        %v7607 = vunpack.c.h.b16 %v7174
        %v7608 = vunpack.c.l.b16 %v7175
        %v7609 = vunpack.c.h.b16 %v7175
        %v7610 = vunpack.c.l.b16 %v7176
        %v7611 = vunpack.c.h.b16 %v7176
        %v7612 = vunpack.c.l.b16 %v7177
        %v7613 = vunpack.c.h.b16 %v7177
        %v7614 = vunpack.c.l.b16 %v7178
        %v7615 = vunpack.c.h.b16 %v7178
        %v7616 = vunpack.c.l.b16 %v7179
        %v7617 = vunpack.c.h.b16 %v7179
        %v7618 = vunpack.c.l.b16 %v7180
        %v7619 = vunpack.c.h.b16 %v7180
        %v7620 = vunpack.c.l.b16 %v7181
        %v7621 = vunpack.c.h.b16 %v7181
        %v7622 = vunpack.c.l.b16 %v7182
        %v7623 = vunpack.c.h.b16 %v7182
        %v7624 = vunpack.c.l.b16 %v7183
        %v7625 = vunpack.c.h.b16 %v7183
        %v7626 = vunpack.c.l.b16 %v7184
        %v7627 = vunpack.c.h.b16 %v7184
        %v7628 = vunpack.c.l.b16 %v7185
        %v7629 = vunpack.c.h.b16 %v7185
        %v7630 = vunpack.c.l.b16 %v7186
        %v7631 = vunpack.c.h.b16 %v7186
        %v7632 = vunpack.c.l.b16 %v7187
        %v7633 = vunpack.c.h.b16 %v7187
        %v7634 = vunpack.c.l.b16 %v7188
        %v7635 = vunpack.c.h.b16 %v7188
        %v7636 = vunpack.c.l.b16 %v7189
        %v7637 = vunpack.c.h.b16 %v7189
        %v7638 = vunpack.c.l.b16 %v7190
        %v7639 = vunpack.c.h.b16 %v7190
        %v7640 = vunpack.c.l.b16 %v7191
        %v7641 = vunpack.c.h.b16 %v7191
        %v7642 = vunpack.c.l.b16 %v7192
        %v7643 = vunpack.c.h.b16 %v7192
        %v7644 = vunpack.c.l.b16 %v7193
        %v7645 = vunpack.c.h.b16 %v7193
        %v7646 = vunpack.c.l.b16 %v7194
        %v7647 = vunpack.c.h.b16 %v7194
        %v7648 = vunpack.c.l.b16 %v7195
        %v7649 = vunpack.c.h.b16 %v7195
        %v7650 = vunpack.c.l.b16 %v7196
        %v7651 = vunpack.c.h.b16 %v7196
        %v7652 = vunpack.c.l.b16 %v7197
        %v7653 = vunpack.c.h.b16 %v7197
        %v7654 = vunpack.c.l.b16 %v7198
        %v7655 = vunpack.c.h.b16 %v7198
        %v7656 = vunpack.c.l.b16 %v7199
        %v7657 = vunpack.c.h.b16 %v7199
        %v7658 = vunpack.c.l.b16 %v7200
        %v7659 = vunpack.c.h.b16 %v7200
        %v7660 = vunpack.c.l.b16 %v7201
        %v7661 = vunpack.c.h.b16 %v7201
        %v7662 = vunpack.c.l.b16 %v7202
        %v7663 = vunpack.c.h.b16 %v7202
        %v7664 = vunpack.c.l.b16 %v7203
        %v7665 = vunpack.c.h.b16 %v7203
        %v7666 = vunpack.c.l.b16 %v7204
        %v7667 = vunpack.c.h.b16 %v7204
        %v7668 = vunpack.c.l.b16 %v7205
        %v7669 = vunpack.c.h.b16 %v7205
        %v7670 = vunpack.c.l.b16 %v7206
        %v7671 = vunpack.c.h.b16 %v7206
        %v7672 = vunpack.c.l.b16 %v7207
        %v7673 = vunpack.c.h.b16 %v7207
        %v7674 = vunpack.c.l.b16 %v7208
        %v7675 = vunpack.c.h.b16 %v7208
        %v7676 = vunpack.c.l.b16 %v7209
        %v7677 = vunpack.c.h.b16 %v7209
        %v7678 = vunpack.c.l.b16 %v7210
        %v7679 = vunpack.c.h.b16 %v7210
        %v7680 = vunpack.c.l.b16 %v7211
        %v7681 = vunpack.c.h.b16 %v7211
        %v7682 = vunpack.c.l.b16 %v7212
        %v7683 = vunpack.c.h.b16 %v7212
        %v7684 = vunpack.c.l.b16 %v7213
        %v7685 = vunpack.c.h.b16 %v7213
        %v7686 = vunpack.c.l.b16 %v7214
        %v7687 = vunpack.c.h.b16 %v7214
        %v7688 = vunpack.c.l.b16 %v7215
        %v7689 = vunpack.c.h.b16 %v7215
        %v7690 = vunpack.c.l.b16 %v7216
        %v7691 = vunpack.c.h.b16 %v7216
        %v7692 = vunpack.c.l.b16 %v7217
        %v7693 = vunpack.c.h.b16 %v7217
        %v7694 = vunpack.c.l.b16 %v7218
        %v7695 = vunpack.c.h.b16 %v7218
        %v7696 = vunpack.c.l.b16 %v7219
        %v7697 = vunpack.c.h.b16 %v7219
        %v7698 = vunpack.c.l.b16 %v7220
        %v7699 = vunpack.c.h.b16 %v7220
        %v7700 = vunpack.c.l.b16 %v7221
        %v7701 = vunpack.c.h.b16 %v7221
        %v7702 = vunpack.c.l.b16 %v7222
        %v7703 = vunpack.c.h.b16 %v7222
        %v7704 = vunpack.c.l.b16 %v7223
        %v7705 = vunpack.c.h.b16 %v7223
        %v7706 = vunpack.c.l.b16 %v7224
        %v7707 = vunpack.c.h.b16 %v7224
        %v7708 = vunpack.c.l.b16 %v7225
        %v7709 = vunpack.c.h.b16 %v7225
        %v7710 = vunpack.c.l.b16 %v7226
        %v7711 = vunpack.c.h.b16 %v7226
        %v7712 = vunpack.c.l.b16 %v7227
        %v7713 = vunpack.c.h.b16 %v7227
        %v7714 = vpack.c.b16 %v7564, %v7554
        %v7715 = vpack.c.b16 %v7565, %v7555
        %v7716 = vpack.c.b16 %v7566, %v7556
        %v7717 = vpack.c.b16 %v7567, %v7557
        %v7718 = vpack.c.b16 %v7568, %v7558
        %v7719 = vpack.c.b16 %v7569, %v7559
        %v7720 = vpack.c.b16 %v7570, %v7560
        %v7721 = vpack.c.b16 %v7571, %v7561
        %v7722 = vpack.c.b16 %v7572, %v7562
        %v7723 = vpack.c.b16 %v7573, %v7563
        %v7724 = vpack.c.b16 %v7584, %v7574
        %v7725 = vpack.c.b16 %v7585, %v7575
        %v7726 = vpack.c.b16 %v7586, %v7576
        %v7727 = vpack.c.b16 %v7587, %v7577
        %v7728 = vpack.c.b16 %v7588, %v7578
        %v7729 = vpack.c.b16 %v7589, %v7579
        %v7730 = vpack.c.b16 %v7590, %v7580
        %v7731 = vpack.c.b16 %v7591, %v7581
        %v7732 = vpack.c.b16 %v7592, %v7582
        %v7733 = vpack.c.b16 %v7593, %v7583
        %v7734 = vpack.c.b16 %v7604, %v7594
        %v7735 = vpack.c.b16 %v7605, %v7595
        %v7736 = vpack.c.b16 %v7606, %v7596
        %v7737 = vpack.c.b16 %v7607, %v7597
        %v7738 = vpack.c.b16 %v7608, %v7598
        %v7739 = vpack.c.b16 %v7609, %v7599
        %v7740 = vpack.c.b16 %v7610, %v7600
        %v7741 = vpack.c.b16 %v7611, %v7601
        %v7742 = vpack.c.b16 %v7612, %v7602
        %v7743 = vpack.c.b16 %v7613, %v7603
        %v7744 = vpack.c.b16 %v7624, %v7614
        %v7745 = vpack.c.b16 %v7625, %v7615
        %v7746 = vpack.c.b16 %v7626, %v7616
        %v7747 = vpack.c.b16 %v7627, %v7617
        %v7748 = vpack.c.b16 %v7628, %v7618
        %v7749 = vpack.c.b16 %v7629, %v7619
        %v7750 = vpack.c.b16 %v7630, %v7620
        %v7751 = vpack.c.b16 %v7631, %v7621
        %v7752 = vpack.c.b16 %v7632, %v7622
        %v7753 = vpack.c.b16 %v7633, %v7623
        %v7754 = vpack.c.b16 %v7644, %v7634
        %v7755 = vpack.c.b16 %v7645, %v7635
        %v7756 = vpack.c.b16 %v7646, %v7636
        %v7757 = vpack.c.b16 %v7647, %v7637
        %v7758 = vpack.c.b16 %v7648, %v7638
        %v7759 = vpack.c.b16 %v7649, %v7639
        %v7760 = vpack.c.b16 %v7650, %v7640
        %v7761 = vpack.c.b16 %v7651, %v7641
        %v7762 = vpack.c.b16 %v7652, %v7642
        %v7763 = vpack.c.b16 %v7653, %v7643
        %v7764 = vpack.c.b16 %v7664, %v7654
        %v7765 = vpack.c.b16 %v7665, %v7655
        %v7766 = vpack.c.b16 %v7666, %v7656
        %v7767 = vpack.c.b16 %v7667, %v7657
        %v7768 = vpack.c.b16 %v7668, %v7658
        %v7769 = vpack.c.b16 %v7669, %v7659
        %v7770 = vpack.c.b16 %v7670, %v7660
        %v7771 = vpack.c.b16 %v7671, %v7661
        %v7772 = vpack.c.b16 %v7672, %v7662
        %v7773 = vpack.c.b16 %v7673, %v7663
        %v7774 = vpack.c.b16 %v7684, %v7674
        %v7775 = vpack.c.b16 %v7685, %v7675
        %v7776 = vpack.c.b16 %v7686, %v7676
        %v7777 = vpack.c.b16 %v7687, %v7677
        %v7778 = vpack.c.b16 %v7688, %v7678
        %v7779 = vpack.c.b16 %v7689, %v7679
        %v7780 = vpack.c.b16 %v7690, %v7680
        %v7781 = vpack.c.b16 %v7691, %v7681
        %v7782 = vpack.c.b16 %v7692, %v7682
        %v7783 = vpack.c.b16 %v7693, %v7683
        %v7784 = vpack.c.b16 %v7704, %v7694
        %v7785 = vpack.c.b16 %v7705, %v7695
        %v7786 = vpack.c.b16 %v7706, %v7696
        %v7787 = vpack.c.b16 %v7707, %v7697
        %v7788 = vpack.c.b16 %v7708, %v7698
        %v7789 = vpack.c.b16 %v7709, %v7699
        %v7790 = vpack.c.b16 %v7710, %v7700
        %v7791 = vpack.c.b16 %v7711, %v7701
        %v7792 = vpack.c.b16 %v7712, %v7702
        %v7793 = vpack.c.b16 %v7713, %v7703
        %vm7866 = vcmask 392192
        %v7868 = vsel %vm7866, %v7723, 0
        %v7871 = vsel %vm7866, %v7733, 0
        %v7874 = vsel %vm7866, %v7743, 0
        %v7877 = vsel %vm7866, %v7753, 0
        %v7880 = vsel %vm7866, %v7763, 0
        %v7883 = vsel %vm7866, %v7773, 0
        %v7886 = vsel %vm7866, %v7783, 0
        %v7889 = vsel %vm7866, %v7793, 0
        %7891 = vmatprep.subr.bf16.mxu0 %v7229
        %7892 = vmatpush1.bf16.msra.mxu0 %v7228
        %7893 = vmatprep.subr.bf16.mxu0 %v7231
        %7894 = vmatpush1.bf16.msra.mxu0 %v7230
        %7895 = vmatprep.subr.bf16.mxu0 %v7233
        %7896 = vmatpush1.bf16.msra.mxu0 %v7232
        %7897 = vmatprep.subr.bf16.mxu0 %v7235
        %7898 = vmatpush1.bf16.msra.mxu0 %v7234
        %7899 = vmatprep.subr.bf16.mxu0 %v7237
        %7900 = vmatpush1.bf16.msra.mxu0 %v7236
        %7901 = vmatprep.subr.bf16.mxu0 %v7239
        %7902 = vmatpush1.bf16.msra.mxu0 %v7238
        %7903 = vmatprep.subr.bf16.mxu0 %v7241
        %7904 = vmatpush1.bf16.msra.mxu0 %v7240
        %7905 = vmatprep.subr.bf16.mxu0 %v7243
        %7906 = vmatpush1.bf16.msra.mxu0 %v7242
        %7907 = vmatprep.subr.bf16.mxu0 %v7245
        %7908 = vmatpush1.bf16.msra.mxu0 %v7244
        %7909 = vmatprep.subr.bf16.mxu0 %v7247
        %7910 = vmatpush1.bf16.msra.mxu0 %v7246
        %7911 = vmatprep.subr.bf16.mxu0 %v7249
        %7912 = vmatpush1.bf16.msra.mxu0 %v7248
        %7913 = vmatprep.subr.bf16.mxu0 %v7251
        %7914 = vmatpush1.bf16.msra.mxu0 %v7250
        %7915 = vmatprep.subr.bf16.mxu0 %v7253
        %7916 = vmatpush1.bf16.msra.mxu0 %v7252
        %7917 = vmatprep.subr.bf16.mxu0 %v7255
        %7918 = vmatpush1.bf16.msra.mxu0 %v7254
        %7919 = vmatprep.subr.bf16.mxu0 %v7257
        %7920 = vmatpush1.bf16.msra.mxu0 %v7256
        %7921 = vmatprep.subr.bf16.mxu0 %v7259
        %7922 = vmatpush1.bf16.msra.mxu0 %v7258
        %7923 = vmatprep.mubr.bf16.mxu0 %v7715
        %7924 = vmatmul.mubr.bf16.gmra.mrb[0].mxu0 %v7714
        %v7925 = vpop.f32.mrb[0].mxu0
        %v7926 = vadd.f32 %v7397, %v7925
        %v7927 = vpop.f32.mrb[0].mxu0
        %v7928 = vadd.f32 %v7397, %v7927
        %v7929 = vpop.f32.mrb[0].mxu0
        %v7930 = vadd.f32 %v7402, %v7929
        %v7931 = vpop.f32.mrb[0].mxu0
        %v7932 = vadd.f32 %v7402, %v7931
        %7933 = vmatprep.mubr.bf16.mxu0 %v7725
        %7934 = vmatmul.mubr.bf16.gmra.mrb[0].mxu0 %v7724
        %v7935 = vpop.f32.mrb[0].mxu0
        %v7936 = vadd.f32 %v7407, %v7935
        %v7937 = vpop.f32.mrb[0].mxu0
        %v7938 = vadd.f32 %v7407, %v7937
        %v7939 = vpop.f32.mrb[0].mxu0
        %v7940 = vadd.f32 %v7412, %v7939
        %v7941 = vpop.f32.mrb[0].mxu0
        %v7942 = vadd.f32 %v7412, %v7941
        %7943 = vmatprep.mubr.bf16.mxu0 %v7735
        %7944 = vmatmul.mubr.bf16.gmra.mrb[0].mxu0 %v7734
        %v7945 = vpop.f32.mrb[0].mxu0
        %v7946 = vadd.f32 %v7417, %v7945
        %v7947 = vpop.f32.mrb[0].mxu0
        %v7948 = vadd.f32 %v7417, %v7947
        %v7949 = vpop.f32.mrb[0].mxu0
        %v7950 = vadd.f32 %v7422, %v7949
        %v7951 = vpop.f32.mrb[0].mxu0
        %v7952 = vadd.f32 %v7422, %v7951
        %7953 = vmatprep.mubr.bf16.mxu0 %v7745
        %7954 = vmatmul.mubr.bf16.gmra.mrb[0].mxu0 %v7744
        %v7955 = vpop.f32.mrb[0].mxu0
        %v7956 = vadd.f32 %v7427, %v7955
        %v7957 = vpop.f32.mrb[0].mxu0
        %v7958 = vadd.f32 %v7427, %v7957
        %v7959 = vpop.f32.mrb[0].mxu0
        %v7960 = vadd.f32 %v7432, %v7959
        %v7961 = vpop.f32.mrb[0].mxu0
        %v7962 = vadd.f32 %v7432, %v7961
        %7963 = vmatprep.mubr.bf16.mxu0 %v7755
        %7964 = vmatmul.mubr.bf16.gmra.mrb[0].mxu0 %v7754
        %v7965 = vpop.f32.mrb[0].mxu0
        %v7966 = vadd.f32 %v7437, %v7965
        %v7967 = vpop.f32.mrb[0].mxu0
        %v7968 = vadd.f32 %v7437, %v7967
        %v7969 = vpop.f32.mrb[0].mxu0
        %v7970 = vadd.f32 %v7442, %v7969
        %v7971 = vpop.f32.mrb[0].mxu0
        %v7972 = vadd.f32 %v7442, %v7971
        %7973 = vmatprep.mubr.bf16.mxu0 %v7765
        %7974 = vmatmul.mubr.bf16.gmra.mrb[0].mxu0 %v7764
        %v7975 = vpop.f32.mrb[0].mxu0
        %v7976 = vadd.f32 %v7447, %v7975
        %v7977 = vpop.f32.mrb[0].mxu0
        %v7978 = vadd.f32 %v7447, %v7977
        %v7979 = vpop.f32.mrb[0].mxu0
        %v7980 = vadd.f32 %v7452, %v7979
        %v7981 = vpop.f32.mrb[0].mxu0
        %v7982 = vadd.f32 %v7452, %v7981
        %7983 = vmatprep.mubr.bf16.mxu0 %v7775
        %7984 = vmatmul.mubr.bf16.gmra.mrb[0].mxu0 %v7774
        %v7985 = vpop.f32.mrb[0].mxu0
        %v7986 = vadd.f32 %v7457, %v7985
        %v7987 = vpop.f32.mrb[0].mxu0
        %v7988 = vadd.f32 %v7457, %v7987
        %v7989 = vpop.f32.mrb[0].mxu0
        %v7990 = vadd.f32 %v7462, %v7989
        %v7991 = vpop.f32.mrb[0].mxu0
        %v7992 = vadd.f32 %v7462, %v7991
        %7993 = vmatprep.mubr.bf16.mxu0 %v7785
        %7994 = vmatmul.mubr.bf16.gmra.mrb[0].mxu0 %v7784
        %v7995 = vpop.f32.mrb[0].mxu0
        %v7996 = vadd.f32 %v7467, %v7995
        %v7997 = vpop.f32.mrb[0].mxu0
        %v7998 = vadd.f32 %v7467, %v7997
        %v7999 = vpop.f32.mrb[0].mxu0
        %v8000 = vadd.f32 %v7472, %v7999
        %v8001 = vpop.f32.mrb[0].mxu0
        %v8002 = vadd.f32 %v7472, %v8001
        %8003 = vdwg.mxu0
        %8004 = vmatprep.subr.bf16.mxu0 %v7261
        %8005 = vmatpush1.bf16.msra.mxu0 %v7260
        %8006 = vmatprep.subr.bf16.mxu0 %v7263
        %8007 = vmatpush1.bf16.msra.mxu0 %v7262
        %8008 = vmatprep.subr.bf16.mxu0 %v7265
        %8009 = vmatpush1.bf16.msra.mxu0 %v7264
        %8010 = vmatprep.subr.bf16.mxu0 %v7267
        %8011 = vmatpush1.bf16.msra.mxu0 %v7266
        %8012 = vmatprep.subr.bf16.mxu0 %v7269
        %8013 = vmatpush1.bf16.msra.mxu0 %v7268
        %8014 = vmatprep.subr.bf16.mxu0 %v7271
        %8015 = vmatpush1.bf16.msra.mxu0 %v7270
        %8016 = vmatprep.subr.bf16.mxu0 %v7273
        %8017 = vmatpush1.bf16.msra.mxu0 %v7272
        %8018 = vmatprep.subr.bf16.mxu0 %v7275
        %8019 = vmatpush1.bf16.msra.mxu0 %v7274
        %8020 = vmatprep.subr.bf16.mxu0 %v7277
        %8021 = vmatpush1.bf16.msra.mxu0 %v7276
        %8022 = vmatprep.subr.bf16.mxu0 %v7279
        %8023 = vmatpush1.bf16.msra.mxu0 %v7278
        %8024 = vmatprep.subr.bf16.mxu0 %v7281
        %8025 = vmatpush1.bf16.msra.mxu0 %v7280
        %8026 = vmatprep.subr.bf16.mxu0 %v7283
        %8027 = vmatpush1.bf16.msra.mxu0 %v7282
        %8028 = vmatprep.subr.bf16.mxu0 %v7285
        %8029 = vmatpush1.bf16.msra.mxu0 %v7284
        %8030 = vmatprep.subr.bf16.mxu0 %v7287
        %8031 = vmatpush1.bf16.msra.mxu0 %v7286
        %8032 = vmatprep.subr.bf16.mxu0 %v7289
        %8033 = vmatpush1.bf16.msra.mxu0 %v7288
        %8034 = vmatprep.subr.bf16.mxu0 %v7291
        %8035 = vmatpush1.bf16.msra.mxu0 %v7290
        %8036 = vmatprep.mubr.bf16.mxu0 %v7717
        %8037 = vmatmul.mubr.bf16.gmra.mrb[0].mxu0 %v7716
        %v8038 = vpop.f32.mrb[0].mxu0
        %v8039 = vadd.f32 %v7926, %v8038
        %v8040 = vpop.f32.mrb[0].mxu0
        %v8041 = vadd.f32 %v7928, %v8040
        %v8042 = vpop.f32.mrb[0].mxu0
        %v8043 = vadd.f32 %v7930, %v8042
        %v8044 = vpop.f32.mrb[0].mxu0
        %v8045 = vadd.f32 %v7932, %v8044
        %8046 = vmatprep.mubr.bf16.mxu0 %v7727
        %8047 = vmatmul.mubr.bf16.gmra.mrb[0].mxu0 %v7726
        %v8048 = vpop.f32.mrb[0].mxu0
        %v8049 = vadd.f32 %v7936, %v8048
        %v8050 = vpop.f32.mrb[0].mxu0
        %v8051 = vadd.f32 %v7938, %v8050
        %v8052 = vpop.f32.mrb[0].mxu0
        %v8053 = vadd.f32 %v7940, %v8052
        %v8054 = vpop.f32.mrb[0].mxu0
        %v8055 = vadd.f32 %v7942, %v8054
        %8056 = vmatprep.mubr.bf16.mxu0 %v7737
        %8057 = vmatmul.mubr.bf16.gmra.mrb[0].mxu0 %v7736
        %v8058 = vpop.f32.mrb[0].mxu0
        %v8059 = vadd.f32 %v7946, %v8058
        %v8060 = vpop.f32.mrb[0].mxu0
        %v8061 = vadd.f32 %v7948, %v8060
        %v8062 = vpop.f32.mrb[0].mxu0
        %v8063 = vadd.f32 %v7950, %v8062
        %v8064 = vpop.f32.mrb[0].mxu0
        %v8065 = vadd.f32 %v7952, %v8064
        %8066 = vmatprep.mubr.bf16.mxu0 %v7747
        %8067 = vmatmul.mubr.bf16.gmra.mrb[0].mxu0 %v7746
        %v8068 = vpop.f32.mrb[0].mxu0
        %v8069 = vadd.f32 %v7956, %v8068
        %v8070 = vpop.f32.mrb[0].mxu0
        %v8071 = vadd.f32 %v7958, %v8070
        %v8072 = vpop.f32.mrb[0].mxu0
        %v8073 = vadd.f32 %v7960, %v8072
        %v8074 = vpop.f32.mrb[0].mxu0
        %v8075 = vadd.f32 %v7962, %v8074
        %8076 = vmatprep.mubr.bf16.mxu0 %v7757
        %8077 = vmatmul.mubr.bf16.gmra.mrb[0].mxu0 %v7756
        %v8078 = vpop.f32.mrb[0].mxu0
        %v8079 = vadd.f32 %v7966, %v8078
        %v8080 = vpop.f32.mrb[0].mxu0
        %v8081 = vadd.f32 %v7968, %v8080
        %v8082 = vpop.f32.mrb[0].mxu0
        %v8083 = vadd.f32 %v7970, %v8082
        %v8084 = vpop.f32.mrb[0].mxu0
        %v8085 = vadd.f32 %v7972, %v8084
        %8086 = vmatprep.mubr.bf16.mxu0 %v7767
        %8087 = vmatmul.mubr.bf16.gmra.mrb[0].mxu0 %v7766
        %v8088 = vpop.f32.mrb[0].mxu0
        %v8089 = vadd.f32 %v7976, %v8088
        %v8090 = vpop.f32.mrb[0].mxu0
        %v8091 = vadd.f32 %v7978, %v8090
        %v8092 = vpop.f32.mrb[0].mxu0
        %v8093 = vadd.f32 %v7980, %v8092
        %v8094 = vpop.f32.mrb[0].mxu0
        %v8095 = vadd.f32 %v7982, %v8094
        %8096 = vmatprep.mubr.bf16.mxu0 %v7777
        %8097 = vmatmul.mubr.bf16.gmra.mrb[0].mxu0 %v7776
        %v8098 = vpop.f32.mrb[0].mxu0
        %v8099 = vadd.f32 %v7986, %v8098
        %v8100 = vpop.f32.mrb[0].mxu0
        %v8101 = vadd.f32 %v7988, %v8100
        %v8102 = vpop.f32.mrb[0].mxu0
        %v8103 = vadd.f32 %v7990, %v8102
        %v8104 = vpop.f32.mrb[0].mxu0
        %v8105 = vadd.f32 %v7992, %v8104
        %8106 = vmatprep.mubr.bf16.mxu0 %v7787
        %8107 = vmatmul.mubr.bf16.gmra.mrb[0].mxu0 %v7786
        %v8108 = vpop.f32.mrb[0].mxu0
        %v8109 = vadd.f32 %v7996, %v8108
        %v8110 = vpop.f32.mrb[0].mxu0
        %v8111 = vadd.f32 %v7998, %v8110
        %v8112 = vpop.f32.mrb[0].mxu0
        %v8113 = vadd.f32 %v8000, %v8112
        %v8114 = vpop.f32.mrb[0].mxu0
        %v8115 = vadd.f32 %v8002, %v8114
        %8116 = vdwg.mxu0
        %8117 = vmatprep.subr.bf16.mxu0 %v7293
        %8118 = vmatpush1.bf16.msra.mxu0 %v7292
        %8119 = vmatprep.subr.bf16.mxu0 %v7295
        %8120 = vmatpush1.bf16.msra.mxu0 %v7294
        %8121 = vmatprep.subr.bf16.mxu0 %v7297
        %8122 = vmatpush1.bf16.msra.mxu0 %v7296
        %8123 = vmatprep.subr.bf16.mxu0 %v7299
        %8124 = vmatpush1.bf16.msra.mxu0 %v7298
        %8125 = vmatprep.subr.bf16.mxu0 %v7301
        %8126 = vmatpush1.bf16.msra.mxu0 %v7300
        %8127 = vmatprep.subr.bf16.mxu0 %v7303
        %8128 = vmatpush1.bf16.msra.mxu0 %v7302
        %8129 = vmatprep.subr.bf16.mxu0 %v7305
        %8130 = vmatpush1.bf16.msra.mxu0 %v7304
        %8131 = vmatprep.subr.bf16.mxu0 %v7307
        %8132 = vmatpush1.bf16.msra.mxu0 %v7306
        %8133 = vmatprep.subr.bf16.mxu0 %v7309
        %8134 = vmatpush1.bf16.msra.mxu0 %v7308
        %8135 = vmatprep.subr.bf16.mxu0 %v7311
        %8136 = vmatpush1.bf16.msra.mxu0 %v7310
        %8137 = vmatprep.subr.bf16.mxu0 %v7313
        %8138 = vmatpush1.bf16.msra.mxu0 %v7312
        %8139 = vmatprep.subr.bf16.mxu0 %v7315
        %8140 = vmatpush1.bf16.msra.mxu0 %v7314
        %8141 = vmatprep.subr.bf16.mxu0 %v7317
        %8142 = vmatpush1.bf16.msra.mxu0 %v7316
        %8143 = vmatprep.subr.bf16.mxu0 %v7319
        %8144 = vmatpush1.bf16.msra.mxu0 %v7318
        %8145 = vmatprep.subr.bf16.mxu0 %v7321
        %8146 = vmatpush1.bf16.msra.mxu0 %v7320
        %8147 = vmatprep.subr.bf16.mxu0 %v7323
        %8148 = vmatpush1.bf16.msra.mxu0 %v7322
        %8149 = vmatprep.mubr.bf16.mxu0 %v7719
        %8150 = vmatmul.mubr.bf16.gmra.mrb[0].mxu0 %v7718
        %v8151 = vpop.f32.mrb[0].mxu0
        %v8152 = vadd.f32 %v8039, %v8151
        %v8153 = vpop.f32.mrb[0].mxu0
        %v8154 = vadd.f32 %v8041, %v8153
        %v8155 = vpop.f32.mrb[0].mxu0
        %v8156 = vadd.f32 %v8043, %v8155
        %v8157 = vpop.f32.mrb[0].mxu0
        %v8158 = vadd.f32 %v8045, %v8157
        %8159 = vmatprep.mubr.bf16.mxu0 %v7729
        %8160 = vmatmul.mubr.bf16.gmra.mrb[0].mxu0 %v7728
        %v8161 = vpop.f32.mrb[0].mxu0
        %v8162 = vadd.f32 %v8049, %v8161
        %v8163 = vpop.f32.mrb[0].mxu0
        %v8164 = vadd.f32 %v8051, %v8163
        %v8165 = vpop.f32.mrb[0].mxu0
        %v8166 = vadd.f32 %v8053, %v8165
        %v8167 = vpop.f32.mrb[0].mxu0
        %v8168 = vadd.f32 %v8055, %v8167
        %8169 = vmatprep.mubr.bf16.mxu0 %v7739
        %8170 = vmatmul.mubr.bf16.gmra.mrb[0].mxu0 %v7738
        %v8171 = vpop.f32.mrb[0].mxu0
        %v8172 = vadd.f32 %v8059, %v8171
        %v8173 = vpop.f32.mrb[0].mxu0
        %v8174 = vadd.f32 %v8061, %v8173
        %v8175 = vpop.f32.mrb[0].mxu0
        %v8176 = vadd.f32 %v8063, %v8175
        %v8177 = vpop.f32.mrb[0].mxu0
        %v8178 = vadd.f32 %v8065, %v8177
        %8179 = vmatprep.mubr.bf16.mxu0 %v7749
        %8180 = vmatmul.mubr.bf16.gmra.mrb[0].mxu0 %v7748
        %v8181 = vpop.f32.mrb[0].mxu0
        %v8182 = vadd.f32 %v8069, %v8181
        %v8183 = vpop.f32.mrb[0].mxu0
        %v8184 = vadd.f32 %v8071, %v8183
        %v8185 = vpop.f32.mrb[0].mxu0
        %v8186 = vadd.f32 %v8073, %v8185
        %v8187 = vpop.f32.mrb[0].mxu0
        %v8188 = vadd.f32 %v8075, %v8187
        %8189 = vmatprep.mubr.bf16.mxu0 %v7759
        %8190 = vmatmul.mubr.bf16.gmra.mrb[0].mxu0 %v7758
        %v8191 = vpop.f32.mrb[0].mxu0
        %v8192 = vadd.f32 %v8079, %v8191
        %v8193 = vpop.f32.mrb[0].mxu0
        %v8194 = vadd.f32 %v8081, %v8193
        %v8195 = vpop.f32.mrb[0].mxu0
        %v8196 = vadd.f32 %v8083, %v8195
        %v8197 = vpop.f32.mrb[0].mxu0
        %v8198 = vadd.f32 %v8085, %v8197
        %8199 = vmatprep.mubr.bf16.mxu0 %v7769
        %8200 = vmatmul.mubr.bf16.gmra.mrb[0].mxu0 %v7768
        %v8201 = vpop.f32.mrb[0].mxu0
        %v8202 = vadd.f32 %v8089, %v8201
        %v8203 = vpop.f32.mrb[0].mxu0
        %v8204 = vadd.f32 %v8091, %v8203
        %v8205 = vpop.f32.mrb[0].mxu0
        %v8206 = vadd.f32 %v8093, %v8205
        %v8207 = vpop.f32.mrb[0].mxu0
        %v8208 = vadd.f32 %v8095, %v8207
        %8209 = vmatprep.mubr.bf16.mxu0 %v7779
        %8210 = vmatmul.mubr.bf16.gmra.mrb[0].mxu0 %v7778
        %v8211 = vpop.f32.mrb[0].mxu0
        %v8212 = vadd.f32 %v8099, %v8211
        %v8213 = vpop.f32.mrb[0].mxu0
        %v8214 = vadd.f32 %v8101, %v8213
        %v8215 = vpop.f32.mrb[0].mxu0
        %v8216 = vadd.f32 %v8103, %v8215
        %v8217 = vpop.f32.mrb[0].mxu0
        %v8218 = vadd.f32 %v8105, %v8217
        %8219 = vmatprep.mubr.bf16.mxu0 %v7789
        %8220 = vmatmul.mubr.bf16.gmra.mrb[0].mxu0 %v7788
        %v8221 = vpop.f32.mrb[0].mxu0
        %v8222 = vadd.f32 %v8109, %v8221
        %v8223 = vpop.f32.mrb[0].mxu0
        %v8224 = vadd.f32 %v8111, %v8223
        %v8225 = vpop.f32.mrb[0].mxu0
        %v8226 = vadd.f32 %v8113, %v8225
        %v8227 = vpop.f32.mrb[0].mxu0
        %v8228 = vadd.f32 %v8115, %v8227
        %8229 = vdwg.mxu0
        %8230 = vmatprep.subr.bf16.mxu0 %v7325
        %8231 = vmatpush1.bf16.msra.mxu0 %v7324
        %8232 = vmatprep.subr.bf16.mxu0 %v7327
        %8233 = vmatpush1.bf16.msra.mxu0 %v7326
        %8234 = vmatprep.subr.bf16.mxu0 %v7329
        %8235 = vmatpush1.bf16.msra.mxu0 %v7328
        %8236 = vmatprep.subr.bf16.mxu0 %v7331
        %8237 = vmatpush1.bf16.msra.mxu0 %v7330
        %8238 = vmatprep.subr.bf16.mxu0 %v7333
        %8239 = vmatpush1.bf16.msra.mxu0 %v7332
        %8240 = vmatprep.subr.bf16.mxu0 %v7335
        %8241 = vmatpush1.bf16.msra.mxu0 %v7334
        %8242 = vmatprep.subr.bf16.mxu0 %v7337
        %8243 = vmatpush1.bf16.msra.mxu0 %v7336
        %8244 = vmatprep.subr.bf16.mxu0 %v7339
        %8245 = vmatpush1.bf16.msra.mxu0 %v7338
        %8246 = vmatprep.subr.bf16.mxu0 %v7341
        %8247 = vmatpush1.bf16.msra.mxu0 %v7340
        %8248 = vmatprep.subr.bf16.mxu0 %v7343
        %8249 = vmatpush1.bf16.msra.mxu0 %v7342
        %8250 = vmatprep.subr.bf16.mxu0 %v7345
        %8251 = vmatpush1.bf16.msra.mxu0 %v7344
        %8252 = vmatprep.subr.bf16.mxu0 %v7347
        %8253 = vmatpush1.bf16.msra.mxu0 %v7346
        %8254 = vmatprep.subr.bf16.mxu0 %v7349
        %8255 = vmatpush1.bf16.msra.mxu0 %v7348
        %8256 = vmatprep.subr.bf16.mxu0 %v7351
        %8257 = vmatpush1.bf16.msra.mxu0 %v7350
        %8258 = vmatprep.subr.bf16.mxu0 %v7353
        %8259 = vmatpush1.bf16.msra.mxu0 %v7352
        %8260 = vmatprep.subr.bf16.mxu0 %v7355
        %8261 = vmatpush1.bf16.msra.mxu0 %v7354
        %8262 = vmatprep.mubr.bf16.mxu0 %v7721
        %8263 = vmatmul.mubr.bf16.gmra.mrb[0].mxu0 %v7720
        %v8264 = vpop.f32.mrb[0].mxu0
        %v8265 = vadd.f32 %v8152, %v8264
        %v8266 = vpop.f32.mrb[0].mxu0
        %v8267 = vadd.f32 %v8154, %v8266
        %v8268 = vpop.f32.mrb[0].mxu0
        %v8269 = vadd.f32 %v8156, %v8268
        %v8270 = vpop.f32.mrb[0].mxu0
        %v8271 = vadd.f32 %v8158, %v8270
        %8272 = vmatprep.mubr.bf16.mxu0 %v7731
        %8273 = vmatmul.mubr.bf16.gmra.mrb[0].mxu0 %v7730
        %v8274 = vpop.f32.mrb[0].mxu0
        %v8275 = vadd.f32 %v8162, %v8274
        %v8276 = vpop.f32.mrb[0].mxu0
        %v8277 = vadd.f32 %v8164, %v8276
        %v8278 = vpop.f32.mrb[0].mxu0
        %v8279 = vadd.f32 %v8166, %v8278
        %v8280 = vpop.f32.mrb[0].mxu0
        %v8281 = vadd.f32 %v8168, %v8280
        %8282 = vmatprep.mubr.bf16.mxu0 %v7741
        %8283 = vmatmul.mubr.bf16.gmra.mrb[0].mxu0 %v7740
        %v8284 = vpop.f32.mrb[0].mxu0
        %v8285 = vadd.f32 %v8172, %v8284
        %v8286 = vpop.f32.mrb[0].mxu0
        %v8287 = vadd.f32 %v8174, %v8286
        %v8288 = vpop.f32.mrb[0].mxu0
        %v8289 = vadd.f32 %v8176, %v8288
        %v8290 = vpop.f32.mrb[0].mxu0
        %v8291 = vadd.f32 %v8178, %v8290
        %8292 = vmatprep.mubr.bf16.mxu0 %v7751
        %8293 = vmatmul.mubr.bf16.gmra.mrb[0].mxu0 %v7750
        %v8294 = vpop.f32.mrb[0].mxu0
        %v8295 = vadd.f32 %v8182, %v8294
        %v8296 = vpop.f32.mrb[0].mxu0
        %v8297 = vadd.f32 %v8184, %v8296
        %v8298 = vpop.f32.mrb[0].mxu0
        %v8299 = vadd.f32 %v8186, %v8298
        %v8300 = vpop.f32.mrb[0].mxu0
        %v8301 = vadd.f32 %v8188, %v8300
        %8302 = vmatprep.mubr.bf16.mxu0 %v7761
        %8303 = vmatmul.mubr.bf16.gmra.mrb[0].mxu0 %v7760
        %v8304 = vpop.f32.mrb[0].mxu0
        %v8305 = vadd.f32 %v8192, %v8304
        %v8306 = vpop.f32.mrb[0].mxu0
        %v8307 = vadd.f32 %v8194, %v8306
        %v8308 = vpop.f32.mrb[0].mxu0
        %v8309 = vadd.f32 %v8196, %v8308
        %v8310 = vpop.f32.mrb[0].mxu0
        %v8311 = vadd.f32 %v8198, %v8310
        %8312 = vmatprep.mubr.bf16.mxu0 %v7771
        %8313 = vmatmul.mubr.bf16.gmra.mrb[0].mxu0 %v7770
        %v8314 = vpop.f32.mrb[0].mxu0
        %v8315 = vadd.f32 %v8202, %v8314
        %v8316 = vpop.f32.mrb[0].mxu0
        %v8317 = vadd.f32 %v8204, %v8316
        %v8318 = vpop.f32.mrb[0].mxu0
        %v8319 = vadd.f32 %v8206, %v8318
        %v8320 = vpop.f32.mrb[0].mxu0
        %v8321 = vadd.f32 %v8208, %v8320
        %8322 = vmatprep.mubr.bf16.mxu0 %v7781
        %8323 = vmatmul.mubr.bf16.gmra.mrb[0].mxu0 %v7780
        %v8324 = vpop.f32.mrb[0].mxu0
        %v8325 = vadd.f32 %v8212, %v8324
        %v8326 = vpop.f32.mrb[0].mxu0
        %v8327 = vadd.f32 %v8214, %v8326
        %v8328 = vpop.f32.mrb[0].mxu0
        %v8329 = vadd.f32 %v8216, %v8328
        %v8330 = vpop.f32.mrb[0].mxu0
        %v8331 = vadd.f32 %v8218, %v8330
        %8332 = vmatprep.mubr.bf16.mxu0 %v7791
        %8333 = vmatmul.mubr.bf16.gmra.mrb[0].mxu0 %v7790
        %v8334 = vpop.f32.mrb[0].mxu0
        %v8335 = vadd.f32 %v8222, %v8334
        %v8336 = vpop.f32.mrb[0].mxu0
        %v8337 = vadd.f32 %v8224, %v8336
        %v8338 = vpop.f32.mrb[0].mxu0
        %v8339 = vadd.f32 %v8226, %v8338
        %v8340 = vpop.f32.mrb[0].mxu0
        %v8341 = vadd.f32 %v8228, %v8340
        %8342 = vdwg.mxu0
        %8343 = vmatprep.subr.bf16.mxu0 %v7357
        %8344 = vmatpush1.bf16.msra.mxu0 %v7356
        %8345 = vmatprep.subr.bf16.mxu0 %v7359
        %8346 = vmatpush1.bf16.msra.mxu0 %v7358
        %8347 = vmatprep.subr.bf16.mxu0 %v7361
        %8348 = vmatpush1.bf16.msra.mxu0 %v7360
        %8349 = vmatprep.subr.bf16.mxu0 %v7363
        %8350 = vmatpush1.bf16.msra.mxu0 %v7362
        %8351 = vmatprep.subr.bf16.mxu0 %v7365
        %8352 = vmatpush1.bf16.msra.mxu0 %v7364
        %8353 = vmatprep.subr.bf16.mxu0 %v7367
        %8354 = vmatpush1.bf16.msra.mxu0 %v7366
        %8355 = vmatprep.subr.bf16.mxu0 %v7369
        %8356 = vmatpush1.bf16.msra.mxu0 %v7368
        %8357 = vmatprep.subr.bf16.mxu0 %v7371
        %8358 = vmatpush1.bf16.msra.mxu0 %v7370
        %8359 = vmatprep.subr.bf16.mxu0 %v7373
        %8360 = vmatpush1.bf16.msra.mxu0 %v7372
        %8361 = vmatprep.subr.bf16.mxu0 %v7375
        %8362 = vmatpush1.bf16.msra.mxu0 %v7374
        %8363 = vmatprep.subr.bf16.mxu0 %v7377
        %8364 = vmatpush1.bf16.msra.mxu0 %v7376
        %8365 = vmatprep.subr.bf16.mxu0 0
        %8366 = vmatpush1.bf16.msra.mxu0 0
        %8367 = vmatprep.subr.bf16.mxu0 0
        %8368 = vmatpush1.bf16.msra.mxu0 0
        %8369 = vmatprep.subr.bf16.mxu0 0
        %8370 = vmatpush1.bf16.msra.mxu0 0
        %8371 = vmatprep.subr.bf16.mxu0 0
        %8372 = vmatpush1.bf16.msra.mxu0 0
        %8373 = vmatprep.subr.bf16.mxu0 0
        %8374 = vmatpush1.bf16.msra.mxu0 0
        %8375 = vmatprep.mubr.bf16.mxu0 %v7868
        %8376 = vmatmul.mubr.bf16.gmra.mrb[0].mxu0 %v7722
        %v8377 = vpop.f32.mrb[0].mxu0
        %v8378 = vadd.f32 %v8265, %v8377
        %v8379 = vpop.f32.mrb[0].mxu0
        %v8380 = vadd.f32 %v8267, %v8379
        %v8381 = vpop.f32.mrb[0].mxu0
        %v8382 = vadd.f32 %v8269, %v8381
        %v8383 = vpop.f32.mrb[0].mxu0
        %v8384 = vadd.f32 %v8271, %v8383
        %8385 = vmatprep.mubr.bf16.mxu0 %v7871
        %8386 = vmatmul.mubr.bf16.gmra.mrb[0].mxu0 %v7732
        %v8387 = vpop.f32.mrb[0].mxu0
        %v8388 = vadd.f32 %v8275, %v8387
        %v8389 = vpop.f32.mrb[0].mxu0
        %v8390 = vadd.f32 %v8277, %v8389
        %v8391 = vpop.f32.mrb[0].mxu0
        %v8392 = vadd.f32 %v8279, %v8391
        %v8393 = vpop.f32.mrb[0].mxu0
        %v8394 = vadd.f32 %v8281, %v8393
        %8395 = vmatprep.mubr.bf16.mxu0 %v7874
        %8396 = vmatmul.mubr.bf16.gmra.mrb[0].mxu0 %v7742
        %v8397 = vpop.f32.mrb[0].mxu0
        %v8398 = vadd.f32 %v8285, %v8397
        %v8399 = vpop.f32.mrb[0].mxu0
        %v8400 = vadd.f32 %v8287, %v8399
        %v8401 = vpop.f32.mrb[0].mxu0
        %v8402 = vadd.f32 %v8289, %v8401
        %v8403 = vpop.f32.mrb[0].mxu0
        %v8404 = vadd.f32 %v8291, %v8403
        %8405 = vmatprep.mubr.bf16.mxu0 %v7877
        %8406 = vmatmul.mubr.bf16.gmra.mrb[0].mxu0 %v7752
        %v8407 = vpop.f32.mrb[0].mxu0
        %v8408 = vadd.f32 %v8295, %v8407
        %v8409 = vpop.f32.mrb[0].mxu0
        %v8410 = vadd.f32 %v8297, %v8409
        %v8411 = vpop.f32.mrb[0].mxu0
        %v8412 = vadd.f32 %v8299, %v8411
        %v8413 = vpop.f32.mrb[0].mxu0
        %v8414 = vadd.f32 %v8301, %v8413
        %8415 = vmatprep.mubr.bf16.mxu0 %v7880
        %8416 = vmatmul.mubr.bf16.gmra.mrb[0].mxu0 %v7762
        %v8417 = vpop.f32.mrb[0].mxu0
        %v8418 = vadd.f32 %v8305, %v8417
        %v8419 = vpop.f32.mrb[0].mxu0
        %v8420 = vadd.f32 %v8307, %v8419
        %v8421 = vpop.f32.mrb[0].mxu0
        %v8422 = vadd.f32 %v8309, %v8421
        %v8423 = vpop.f32.mrb[0].mxu0
        %v8424 = vadd.f32 %v8311, %v8423
        %8425 = vmatprep.mubr.bf16.mxu0 %v7883
        %8426 = vmatmul.mubr.bf16.gmra.mrb[0].mxu0 %v7772
        %v8427 = vpop.f32.mrb[0].mxu0
        %v8428 = vadd.f32 %v8315, %v8427
        %v8429 = vpop.f32.mrb[0].mxu0
        %v8430 = vadd.f32 %v8317, %v8429
        %v8431 = vpop.f32.mrb[0].mxu0
        %v8432 = vadd.f32 %v8319, %v8431
        %v8433 = vpop.f32.mrb[0].mxu0
        %v8434 = vadd.f32 %v8321, %v8433
        %8435 = vmatprep.mubr.bf16.mxu0 %v7886
        %8436 = vmatmul.mubr.bf16.gmra.mrb[0].mxu0 %v7782
        %v8437 = vpop.f32.mrb[0].mxu0
        %v8438 = vadd.f32 %v8325, %v8437
        %v8439 = vpop.f32.mrb[0].mxu0
        %v8440 = vadd.f32 %v8327, %v8439
        %v8441 = vpop.f32.mrb[0].mxu0
        %v8442 = vadd.f32 %v8329, %v8441
        %v8443 = vpop.f32.mrb[0].mxu0
        %v8444 = vadd.f32 %v8331, %v8443
        %8445 = vmatprep.mubr.bf16.mxu0 %v7889
        %8446 = vmatmul.mubr.bf16.gmra.mrb[0].mxu0 %v7792
        %v8447 = vpop.f32.mrb[0].mxu0
        %v8448 = vadd.f32 %v8335, %v8447
        %v8449 = vpop.f32.mrb[0].mxu0
        %v8450 = vadd.f32 %v8337, %v8449
        %v8451 = vpop.f32.mrb[0].mxu0
        %v8452 = vadd.f32 %v8339, %v8451
        %v8453 = vpop.f32.mrb[0].mxu0
        %v8454 = vadd.f32 %v8341, %v8453
        %8455 = vdwg.mxu0
        %v8456 = vtanh.pop %v8378
        %v8457 = vtanh.pop %v8380
        %v8458 = vtanh.pop %v8382
        %v8459 = vtanh.pop %v8384
        %v8460 = vtanh.pop %v8388
        %v8461 = vtanh.pop %v8390
        %v8462 = vtanh.pop %v8392
        %v8463 = vtanh.pop %v8394
        %v8464 = vtanh.pop %v8398
        %v8465 = vtanh.pop %v8400
        %v8466 = vtanh.pop %v8402
        %v8467 = vtanh.pop %v8404
        %v8468 = vtanh.pop %v8408
        %v8469 = vtanh.pop %v8410
        %v8470 = vtanh.pop %v8412
        %v8471 = vtanh.pop %v8414
        %v8472 = vtanh.pop %v8418
        %v8473 = vtanh.pop %v8420
        %v8474 = vtanh.pop %v8422
        %v8475 = vtanh.pop %v8424
        %v8476 = vtanh.pop %v8428
        %v8477 = vtanh.pop %v8430
        %v8478 = vtanh.pop %v8432
        %v8479 = vtanh.pop %v8434
        %v8480 = vtanh.pop %v8438
        %v8481 = vtanh.pop %v8440
        %v8482 = vtanh.pop %v8442
        %v8483 = vtanh.pop %v8444
        %v8484 = vtanh.pop %v8448
        %v8485 = vtanh.pop %v8450
        %v8486 = vtanh.pop %v8452
        %v8487 = vtanh.pop %v8454
        %v8488 = vpack.c.bf16 %v8458, %v8456
        %v8489 = vpack.c.bf16 %v8459, %v8457
        %v8490 = vpack.c.bf16 %v8462, %v8460
        %v8491 = vpack.c.bf16 %v8463, %v8461
        %v8492 = vpack.c.bf16 %v8466, %v8464
        %v8493 = vpack.c.bf16 %v8467, %v8465
        %v8494 = vpack.c.bf16 %v8470, %v8468
        %v8495 = vpack.c.bf16 %v8471, %v8469
        %v8496 = vpack.c.bf16 %v8474, %v8472
        %v8497 = vpack.c.bf16 %v8475, %v8473
        %v8498 = vpack.c.bf16 %v8478, %v8476
        %v8499 = vpack.c.bf16 %v8479, %v8477
        %v8500 = vpack.c.bf16 %v8482, %v8480
        %v8501 = vpack.c.bf16 %v8483, %v8481
        %v8502 = vpack.c.bf16 %v8486, %v8484
        %v8503 = vpack.c.bf16 %v8487, %v8485
        %v8504 = vld [vmem:[%s6] sm:$0xf]
        %v8505 = vld [vmem:[%s6 + $0x4] sm:$0xf]
        %v8506 = vld [vmem:[%s6 + $0x8] sm:$0xf]
        %v8507 = vld [vmem:[%s6 + $0xc] sm:$0xf]
        %v8508 = vld [vmem:[%s6 + $0x10] sm:$0xf]
        %v8509 = vld [vmem:[%s6 + $0x14] sm:$0xf]
        %v8510 = vld [vmem:[%s6 + $0x18] sm:$0xf]
        %v8511 = vld [vmem:[%s6 + $0x1c] sm:$0xf]
        %v8512 = vld [vmem:[%s6 + $0x20] sm:$0xf]
        %v8513 = vld [vmem:[%s6 + $0x24] sm:$0xf]
        %v8514 = vld [vmem:[%s6 + $0x28] sm:$0xf]
        %v8515 = vld [vmem:[%s6 + $0x2c] sm:$0xf]
        %v8516 = vld [vmem:[%s6 + $0x30] sm:$0xf]
        %v8517 = vld [vmem:[%s6 + $0x34] sm:$0xf]
        %v8518 = vld [vmem:[%s6 + $0x38] sm:$0xf]
        %v8519 = vld [vmem:[%s6 + $0x3c] sm:$0xf]
        %v8520 = vld [vmem:[%s6 + $0x40] sm:$0xf]
        %v8521 = vld [vmem:[%s6 + $0x44] sm:$0xf]
        %v8522 = vld [vmem:[%s6 + $0x48] sm:$0xf]
        %v8523 = vld [vmem:[%s6 + $0x4c] sm:$0xf]
        %v8524 = vld [vmem:[%s6 + $0x50] sm:$0xf]
        %v8525 = vld [vmem:[%s6 + $0x54] sm:$0xf]
        %v8526 = vld [vmem:[%s6 + $0x58] sm:$0xf]
        %v8527 = vld [vmem:[%s6 + $0x5c] sm:$0x3]
        %v8552 = vunpack.c.l.b16 %v8504
        %v8553 = vunpack.c.l.b16 %v8505
        %v8554 = vunpack.c.l.b16 %v8506
        %v8555 = vunpack.c.l.b16 %v8507
        %v8556 = vunpack.c.l.b16 %v8508
        %v8557 = vunpack.c.l.b16 %v8509
        %v8558 = vunpack.c.l.b16 %v8510
        %v8559 = vunpack.c.l.b16 %v8511
        %v8560 = vunpack.c.l.b16 %v8512
        %v8561 = vunpack.c.l.b16 %v8513
        %v8562 = vunpack.c.l.b16 %v8514
        %v8563 = vunpack.c.l.b16 %v8515
        %v8564 = vunpack.c.l.b16 %v8516
        %v8565 = vunpack.c.l.b16 %v8517
        %v8566 = vunpack.c.l.b16 %v8518
        %v8567 = vunpack.c.l.b16 %v8519
        %v8568 = vunpack.c.l.b16 %v8520
        %v8569 = vunpack.c.l.b16 %v8521
        %v8570 = vunpack.c.l.b16 %v8522
        %v8571 = vunpack.c.l.b16 %v8523
        %v8572 = vunpack.c.l.b16 %v8524
        %v8573 = vunpack.c.l.b16 %v8525
        %v8574 = vunpack.c.l.b16 %v8526
        %v8575 = vunpack.c.l.b16 %v8527
        %v8576 = vpack.c.b16 %v8553, %v8552
        %v8577 = vpack.c.b16 %v8555, %v8554
        %v8578 = vpack.c.b16 %v8557, %v8556
        %v8579 = vpack.c.b16 %v8559, %v8558
        %v8580 = vpack.c.b16 %v8561, %v8560
        %v8581 = vpack.c.b16 %v8563, %v8562
        %v8582 = vpack.c.b16 %v8565, %v8564
        %v8583 = vpack.c.b16 %v8567, %v8566
        %v8584 = vpack.c.b16 %v8569, %v8568
        %v8585 = vpack.c.b16 %v8571, %v8570
        %v8586 = vpack.c.b16 %v8573, %v8572
        %v8587 = vpack.c.b16 %v8575, %v8574
        %vm8599 = vcmask 490496
        %v8601 = vsel %vm8599, %v8489, 0
        %v8604 = vsel %vm8599, %v8491, 0
        %v8607 = vsel %vm8599, %v8493, 0
        %v8610 = vsel %vm8599, %v8495, 0
        %v8613 = vsel %vm8599, %v8497, 0
        %v8616 = vsel %vm8599, %v8499, 0
        %v8619 = vsel %vm8599, %v8501, 0
        %v8622 = vsel %vm8599, %v8503, 0
        %v8625 = vsel %vm5765, %v8587, 0
        %8627 = vmatprep.subr.bf16.mxu0 0
        %8628 = vmatpush1.bf16.msra.mxu0 %v8576
        %8629 = vmatprep.subr.bf16.mxu0 0
        %8630 = vmatpush1.bf16.msra.mxu0 %v8577
        %8631 = vmatprep.subr.bf16.mxu0 0
        %8632 = vmatpush1.bf16.msra.mxu0 %v8578
        %8633 = vmatprep.subr.bf16.mxu0 0
        %8634 = vmatpush1.bf16.msra.mxu0 %v8579
        %8635 = vmatprep.subr.bf16.mxu0 0
        %8636 = vmatpush1.bf16.msra.mxu0 %v8580
        %8637 = vmatprep.subr.bf16.mxu0 0
        %8638 = vmatpush1.bf16.msra.mxu0 %v8581
        %8639 = vmatprep.subr.bf16.mxu0 0
        %8640 = vmatpush1.bf16.msra.mxu0 %v8582
        %8641 = vmatprep.subr.bf16.mxu0 0
        %8642 = vmatpush1.bf16.msra.mxu0 %v8583
        %8643 = vmatprep.subr.bf16.mxu0 0
        %8644 = vmatpush1.bf16.msra.mxu0 %v8584
        %8645 = vmatprep.subr.bf16.mxu0 0
        %8646 = vmatpush1.bf16.msra.mxu0 %v8585
        %8647 = vmatprep.subr.bf16.mxu0 0
        %8648 = vmatpush1.bf16.msra.mxu0 %v8586
        %8649 = vmatprep.subr.bf16.mxu0 0
        %8650 = vmatpush1.bf16.msra.mxu0 %v8625
        %8651 = vmatprep.subr.bf16.mxu0 0
        %8652 = vmatpush1.bf16.msra.mxu0 0
        %8653 = vmatprep.subr.bf16.mxu0 0
        %8654 = vmatpush1.bf16.msra.mxu0 0
        %8655 = vmatprep.subr.bf16.mxu0 0
        %8656 = vmatpush1.bf16.msra.mxu0 0
        %8657 = vmatprep.subr.bf16.mxu0 0
        %8658 = vmatpush1.bf16.msra.mxu0 0
        %8659 = vmatprep.mubr.bf16.mxu0 %v8601
        %8660 = vmatmul.mubr.bf16.gmra.mrb[0].mxu0 %v8488
        %v8661 = vpop.f32.mrb[0].mxu0
        %v8662 = vadd.f32 0.0, %v8661
        %v8663 = vpop.f32.mrb[0].mxu0
        %v8664 = vpop.f32.mrb[0].mxu0
        %v8665 = vadd.f32 0.0, %v8664
        %v8666 = vpop.f32.mrb[0].mxu0
        %8667 = vmatprep.mubr.bf16.mxu0 %v8604
        %8668 = vmatmul.mubr.bf16.gmra.mrb[0].mxu0 %v8490
        %v8669 = vpop.f32.mrb[0].mxu0
        %v8670 = vadd.f32 0.0, %v8669
        %v8671 = vpop.f32.mrb[0].mxu0
        %v8672 = vpop.f32.mrb[0].mxu0
        %v8673 = vadd.f32 0.0, %v8672
        %v8674 = vpop.f32.mrb[0].mxu0
        %8675 = vmatprep.mubr.bf16.mxu0 %v8607
        %8676 = vmatmul.mubr.bf16.gmra.mrb[0].mxu0 %v8492
        %v8677 = vpop.f32.mrb[0].mxu0
        %v8678 = vadd.f32 0.0, %v8677
        %v8679 = vpop.f32.mrb[0].mxu0
        %v8680 = vpop.f32.mrb[0].mxu0
        %v8681 = vadd.f32 0.0, %v8680
        %v8682 = vpop.f32.mrb[0].mxu0
        %8683 = vmatprep.mubr.bf16.mxu0 %v8610
        %8684 = vmatmul.mubr.bf16.gmra.mrb[0].mxu0 %v8494
        %v8685 = vpop.f32.mrb[0].mxu0
        %v8686 = vadd.f32 0.0, %v8685
        %v8687 = vpop.f32.mrb[0].mxu0
        %v8688 = vpop.f32.mrb[0].mxu0
        %v8689 = vadd.f32 0.0, %v8688
        %v8690 = vpop.f32.mrb[0].mxu0
        %8691 = vmatprep.mubr.bf16.mxu0 %v8613
        %8692 = vmatmul.mubr.bf16.gmra.mrb[0].mxu0 %v8496
        %v8693 = vpop.f32.mrb[0].mxu0
        %v8694 = vadd.f32 0.0, %v8693
        %v8695 = vpop.f32.mrb[0].mxu0
        %v8696 = vpop.f32.mrb[0].mxu0
        %v8697 = vadd.f32 0.0, %v8696
        %v8698 = vpop.f32.mrb[0].mxu0
        %8699 = vmatprep.mubr.bf16.mxu0 %v8616
        %8700 = vmatmul.mubr.bf16.gmra.mrb[0].mxu0 %v8498
        %v8701 = vpop.f32.mrb[0].mxu0
        %v8702 = vadd.f32 0.0, %v8701
        %v8703 = vpop.f32.mrb[0].mxu0
        %v8704 = vpop.f32.mrb[0].mxu0
        %v8705 = vadd.f32 0.0, %v8704
        %v8706 = vpop.f32.mrb[0].mxu0
        %8707 = vmatprep.mubr.bf16.mxu0 %v8619
        %8708 = vmatmul.mubr.bf16.gmra.mrb[0].mxu0 %v8500
        %v8709 = vpop.f32.mrb[0].mxu0
        %v8710 = vadd.f32 0.0, %v8709
        %v8711 = vpop.f32.mrb[0].mxu0
        %v8712 = vpop.f32.mrb[0].mxu0
        %v8713 = vadd.f32 0.0, %v8712
        %v8714 = vpop.f32.mrb[0].mxu0
        %8715 = vmatprep.mubr.bf16.mxu0 %v8622
        %8716 = vmatmul.mubr.bf16.gmra.mrb[0].mxu0 %v8502
        %v8717 = vpop.f32.mrb[0].mxu0
        %v8718 = vadd.f32 0.0, %v8717
        %v8719 = vpop.f32.mrb[0].mxu0
        %v8720 = vpop.f32.mrb[0].mxu0
        %v8721 = vadd.f32 0.0, %v8720
        %v8722 = vpop.f32.mrb[0].mxu0
        %8723 = vdwg.mxu0
        %v8732 = vrot.slane %v8670, 7
        %vm8733 = vcmask 1041409
        %v8734 = vsel %vm8733, %v8732, %v8662
        %v8735 = vrot.slane %v8678, 6
        %vm8736 = vcmask 1042434
        %v8737 = vsel %vm8736, %v8735, %v8734
        %v8738 = vrot.slane %v8686, 5
        %vm8739 = vcmask 1043459
        %v8740 = vsel %vm8739, %v8738, %v8737
        %v8741 = vrot.slane %v8694, 4
        %vm8742 = vcmask 1044484
        %v8743 = vsel %vm8742, %v8741, %v8740
        %v8744 = vrot.slane %v8702, 3
        %vm8745 = vcmask 1045509
        %v8746 = vsel %vm8745, %v8744, %v8743
        %v8747 = vrot.slane %v8710, 2
        %vm8748 = vcmask 1046534
        %v8749 = vsel %vm8748, %v8747, %v8746
        %v8750 = vrot.slane %v8718, 1
        %vm8751 = vcmask 1047559
        %v8752 = vsel %vm8751, %v8750, %v8749
        %v8754 = vrot.slane %v8662, 1
        %v8755 = vsel %vm8733, %v8670, %v8754
        %v8756 = vrot.slane %v8678, 7
        %v8757 = vsel %vm8736, %v8756, %v8755
        %v8758 = vrot.slane %v8686, 6
        %v8759 = vsel %vm8739, %v8758, %v8757
        %v8760 = vrot.slane %v8694, 5
        %v8761 = vsel %vm8742, %v8760, %v8759
        %v8762 = vrot.slane %v8702, 4
        %v8763 = vsel %vm8745, %v8762, %v8761
        %v8764 = vrot.slane %v8710, 3
        %v8765 = vsel %vm8748, %v8764, %v8763
        %v8766 = vrot.slane %v8718, 2
        %v8767 = vsel %vm8751, %v8766, %v8765
        %8768 = vrot.lane.b32.xlu0 %v8767, 36
        %v8769 = vpop.permute.xlu0 %8768
        %v8771 = vrot.slane %v8662, 2
        %v8772 = vrot.slane %v8670, 1
        %v8773 = vsel %vm8733, %v8772, %v8771
        %v8774 = vsel %vm8736, %v8678, %v8773
        %v8775 = vrot.slane %v8686, 7
        %v8776 = vsel %vm8739, %v8775, %v8774
        %v8777 = vrot.slane %v8694, 6
        %v8778 = vsel %vm8742, %v8777, %v8776
        %v8779 = vrot.slane %v8702, 5
        %v8780 = vsel %vm8745, %v8779, %v8778
        %v8781 = vrot.slane %v8710, 4
        %v8782 = vsel %vm8748, %v8781, %v8780
        %v8783 = vrot.slane %v8718, 3
        %v8784 = vsel %vm8751, %v8783, %v8782
        %8785 = vrot.lane.b32.xlu0 %v8784, 72
        %v8786 = vpop.permute.xlu0 %8785
        %v8788 = vrot.slane %v8662, 3
        %v8789 = vrot.slane %v8670, 2
        %v8790 = vsel %vm8733, %v8789, %v8788
        %v8791 = vrot.slane %v8678, 1
        %v8792 = vsel %vm8736, %v8791, %v8790
        %v8793 = vsel %vm8739, %v8686, %v8792
        %v8794 = vrot.slane %v8694, 7
        %v8795 = vsel %vm8742, %v8794, %v8793
        %v8796 = vrot.slane %v8702, 6
        %v8797 = vsel %vm8745, %v8796, %v8795
        %v8798 = vrot.slane %v8710, 5
        %v8799 = vsel %vm8748, %v8798, %v8797
        %v8800 = vrot.slane %v8718, 4
        %v8801 = vsel %vm8751, %v8800, %v8799
        %8802 = vrot.lane.b32.xlu0 %v8801, 108
        %v8803 = vpop.permute.xlu0 %8802
        %v8805 = vrot.slane %v8662, 4
        %v8806 = vrot.slane %v8670, 3
        %v8807 = vsel %vm8733, %v8806, %v8805
        %v8808 = vrot.slane %v8678, 2
        %v8809 = vsel %vm8736, %v8808, %v8807
        %v8810 = vrot.slane %v8686, 1
        %v8811 = vsel %vm8739, %v8810, %v8809
        %v8812 = vsel %vm8742, %v8694, %v8811
        %v8813 = vrot.slane %v8702, 7
        %v8814 = vsel %vm8745, %v8813, %v8812
        %v8815 = vrot.slane %v8710, 6
        %v8816 = vsel %vm8748, %v8815, %v8814
        %v8817 = vrot.slane %v8718, 5
        %v8818 = vsel %vm8751, %v8817, %v8816
        %8819 = vrot.lane.b32.xlu0 %v8818, 16
        %v8820 = vpop.permute.xlu0 %8819
        %v8822 = vrot.slane %v8662, 5
        %v8823 = vrot.slane %v8670, 4
        %v8824 = vsel %vm8733, %v8823, %v8822
        %v8825 = vrot.slane %v8678, 3
        %v8826 = vsel %vm8736, %v8825, %v8824
        %v8827 = vrot.slane %v8686, 2
        %v8828 = vsel %vm8739, %v8827, %v8826
        %v8829 = vrot.slane %v8694, 1
        %v8830 = vsel %vm8742, %v8829, %v8828
        %v8831 = vsel %vm8745, %v8702, %v8830
        %v8832 = vrot.slane %v8710, 7
        %v8833 = vsel %vm8748, %v8832, %v8831
        %v8834 = vrot.slane %v8718, 6
        %v8835 = vsel %vm8751, %v8834, %v8833
        %8836 = vrot.lane.b32.xlu0 %v8835, 52
        %v8837 = vpop.permute.xlu0 %8836
        %v8839 = vrot.slane %v8662, 6
        %v8840 = vrot.slane %v8670, 5
        %v8841 = vsel %vm8733, %v8840, %v8839
        %v8842 = vrot.slane %v8678, 4
        %v8843 = vsel %vm8736, %v8842, %v8841
        %v8844 = vrot.slane %v8686, 3
        %v8845 = vsel %vm8739, %v8844, %v8843
        %v8846 = vrot.slane %v8694, 2
        %v8847 = vsel %vm8742, %v8846, %v8845
        %v8848 = vrot.slane %v8702, 1
        %v8849 = vsel %vm8745, %v8848, %v8847
        %v8850 = vsel %vm8748, %v8710, %v8849
        %v8851 = vrot.slane %v8718, 7
        %v8852 = vsel %vm8751, %v8851, %v8850
        %8853 = vrot.lane.b32.xlu0 %v8852, 88
        %v8854 = vpop.permute.xlu0 %8853
        %v8856 = vrot.slane %v8662, 7
        %v8857 = vrot.slane %v8670, 6
        %v8858 = vsel %vm8733, %v8857, %v8856
        %v8859 = vrot.slane %v8678, 5
        %v8860 = vsel %vm8736, %v8859, %v8858
        %v8861 = vrot.slane %v8686, 4
        %v8862 = vsel %vm8739, %v8861, %v8860
        %v8863 = vrot.slane %v8694, 3
        %v8864 = vsel %vm8742, %v8863, %v8862
        %v8865 = vrot.slane %v8702, 2
        %v8866 = vsel %vm8745, %v8865, %v8864
        %v8867 = vrot.slane %v8710, 1
        %v8868 = vsel %vm8748, %v8867, %v8866
        %v8869 = vsel %vm8751, %v8718, %v8868
        %8870 = vrot.lane.b32.xlu0 %v8869, 124
        %v8871 = vpop.permute.xlu0 %8870
        %v8881 = vrot.slane %v8673, 7
        %v8882 = vsel %vm8733, %v8881, %v8665
        %v8883 = vrot.slane %v8681, 6
        %v8884 = vsel %vm8736, %v8883, %v8882
        %v8885 = vrot.slane %v8689, 5
        %v8886 = vsel %vm8739, %v8885, %v8884
        %v8887 = vrot.slane %v8697, 4
        %v8888 = vsel %vm8742, %v8887, %v8886
        %v8889 = vrot.slane %v8705, 3
        %v8890 = vsel %vm8745, %v8889, %v8888
        %v8891 = vrot.slane %v8713, 2
        %v8892 = vsel %vm8748, %v8891, %v8890
        %v8893 = vrot.slane %v8721, 1
        %v8894 = vsel %vm8751, %v8893, %v8892
        %8895 = vrot.lane.b32.xlu0 %v8894, 32
        %v8896 = vpop.permute.xlu0 %8895
        %v8898 = vrot.slane %v8665, 1
        %v8899 = vsel %vm8733, %v8673, %v8898
        %v8900 = vrot.slane %v8681, 7
        %v8901 = vsel %vm8736, %v8900, %v8899
        %v8902 = vrot.slane %v8689, 6
        %v8903 = vsel %vm8739, %v8902, %v8901
        %v8904 = vrot.slane %v8697, 5
        %v8905 = vsel %vm8742, %v8904, %v8903
        %v8906 = vrot.slane %v8705, 4
        %v8907 = vsel %vm8745, %v8906, %v8905
        %v8908 = vrot.slane %v8713, 3
        %v8909 = vsel %vm8748, %v8908, %v8907
        %v8910 = vrot.slane %v8721, 2
        %v8911 = vsel %vm8751, %v8910, %v8909
        %8912 = vrot.lane.b32.xlu0 %v8911, 68
        %v8913 = vpop.permute.xlu0 %8912
        %v8915 = vrot.slane %v8665, 2
        %v8916 = vrot.slane %v8673, 1
        %v8917 = vsel %vm8733, %v8916, %v8915
        %v8918 = vsel %vm8736, %v8681, %v8917
        %v8919 = vrot.slane %v8689, 7
        %v8920 = vsel %vm8739, %v8919, %v8918
        %v8921 = vrot.slane %v8697, 6
        %v8922 = vsel %vm8742, %v8921, %v8920
        %v8923 = vrot.slane %v8705, 5
        %v8924 = vsel %vm8745, %v8923, %v8922
        %v8925 = vrot.slane %v8713, 4
        %v8926 = vsel %vm8748, %v8925, %v8924
        %v8927 = vrot.slane %v8721, 3
        %v8928 = vsel %vm8751, %v8927, %v8926
        %8929 = vrot.lane.b32.xlu0 %v8928, 104
        %v8930 = vpop.permute.xlu0 %8929
        %v8932 = vrot.slane %v8665, 3
        %v8933 = vrot.slane %v8673, 2
        %v8934 = vsel %vm8733, %v8933, %v8932
        %v8935 = vrot.slane %v8681, 1
        %v8936 = vsel %vm8736, %v8935, %v8934
        %v8937 = vsel %vm8739, %v8689, %v8936
        %v8938 = vrot.slane %v8697, 7
        %v8939 = vsel %vm8742, %v8938, %v8937
        %v8940 = vrot.slane %v8705, 6
        %v8941 = vsel %vm8745, %v8940, %v8939
        %v8942 = vrot.slane %v8713, 5
        %v8943 = vsel %vm8748, %v8942, %v8941
        %v8944 = vrot.slane %v8721, 4
        %v8945 = vsel %vm8751, %v8944, %v8943
        %8946 = vrot.lane.b32.xlu0 %v8945, 12
        %v8947 = vpop.permute.xlu0 %8946
        %v8949 = vrot.slane %v8665, 4
        %v8950 = vrot.slane %v8673, 3
        %v8951 = vsel %vm8733, %v8950, %v8949
        %v8952 = vrot.slane %v8681, 2
        %v8953 = vsel %vm8736, %v8952, %v8951
        %v8954 = vrot.slane %v8689, 1
        %v8955 = vsel %vm8739, %v8954, %v8953
        %v8956 = vsel %vm8742, %v8697, %v8955
        %v8957 = vrot.slane %v8705, 7
        %v8958 = vsel %vm8745, %v8957, %v8956
        %v8959 = vrot.slane %v8713, 6
        %v8960 = vsel %vm8748, %v8959, %v8958
        %v8961 = vrot.slane %v8721, 5
        %v8962 = vsel %vm8751, %v8961, %v8960
        %8963 = vrot.lane.b32.xlu0 %v8962, 48
        %v8964 = vpop.permute.xlu0 %8963
        %v8966 = vrot.slane %v8665, 5
        %v8967 = vrot.slane %v8673, 4
        %v8968 = vsel %vm8733, %v8967, %v8966
        %v8969 = vrot.slane %v8681, 3
        %v8970 = vsel %vm8736, %v8969, %v8968
        %v8971 = vrot.slane %v8689, 2
        %v8972 = vsel %vm8739, %v8971, %v8970
        %v8973 = vrot.slane %v8697, 1
        %v8974 = vsel %vm8742, %v8973, %v8972
        %v8975 = vsel %vm8745, %v8705, %v8974
        %v8976 = vrot.slane %v8713, 7
        %v8977 = vsel %vm8748, %v8976, %v8975
        %v8978 = vrot.slane %v8721, 6
        %v8979 = vsel %vm8751, %v8978, %v8977
        %8980 = vrot.lane.b32.xlu0 %v8979, 84
        %v8981 = vpop.permute.xlu0 %8980
        %v8983 = vrot.slane %v8665, 6
        %v8984 = vrot.slane %v8673, 5
        %v8985 = vsel %vm8733, %v8984, %v8983
        %v8986 = vrot.slane %v8681, 4
        %v8987 = vsel %vm8736, %v8986, %v8985
        %v8988 = vrot.slane %v8689, 3
        %v8989 = vsel %vm8739, %v8988, %v8987
        %v8990 = vrot.slane %v8697, 2
        %v8991 = vsel %vm8742, %v8990, %v8989
        %v8992 = vrot.slane %v8705, 1
        %v8993 = vsel %vm8745, %v8992, %v8991
        %v8994 = vsel %vm8748, %v8713, %v8993
        %v8995 = vrot.slane %v8721, 7
        %v8996 = vsel %vm8751, %v8995, %v8994
        %8997 = vrot.lane.b32.xlu0 %v8996, 120
        %v8998 = vpop.permute.xlu0 %8997
        %v9000 = vrot.slane %v8665, 7
        %v9001 = vrot.slane %v8673, 6
        %v9002 = vsel %vm8733, %v9001, %v9000
        %v9003 = vrot.slane %v8681, 5
        %v9004 = vsel %vm8736, %v9003, %v9002
        %v9005 = vrot.slane %v8689, 4
        %v9006 = vsel %vm8739, %v9005, %v9004
        %v9007 = vrot.slane %v8697, 3
        %v9008 = vsel %vm8742, %v9007, %v9006
        %v9009 = vrot.slane %v8705, 2
        %v9010 = vsel %vm8745, %v9009, %v9008
        %v9011 = vrot.slane %v8713, 1
        %v9012 = vsel %vm8748, %v9011, %v9010
        %v9013 = vsel %vm8751, %v8721, %v9012
        %9014 = vrot.lane.b32.xlu0 %v9013, 28
        %v9015 = vpop.permute.xlu0 %9014
        %vm9017 = vcmask 293888
        %v9018 = vsel %vm9017, %v8752, %v8769
        %vm9019 = vcmask 588800
        %v9020 = vsel %vm9019, %v9018, %v8786
        %v9021 = vsel %vm6463, %v9020, %v8803
        %vm9022 = vcmask 130048
        %v9023 = vsel %vm9022, %v8803, %v8820
        %v9024 = vsel %vm2027, %v9023, %v8837
        %v9025 = vsel %vm1452, %v9024, %v8854
        %v9026 = vsel %vm877, %v9025, %v8871
        %vm9027 = vcmask 261120
        %v9028 = vsel %vm9027, %v8871, %v8896
        %vm9029 = vcmask 556032
        %v9030 = vsel %vm9029, %v9028, %v8913
        %vm9031 = vcmask 850944
        %v9032 = vsel %vm9031, %v9030, %v8930
        %vm9033 = vcmask 97280
        %v9034 = vsel %vm9033, %v8930, %v8947
        %v9035 = vsel %vm7866, %v9034, %v8964
        %vm9036 = vcmask 687104
        %v9037 = vsel %vm9036, %v9035, %v8981
        %vm9038 = vcmask 982016
        %v9039 = vsel %vm9038, %v9037, %v8998
        %vm9040 = vcmask 228352
        %v9041 = vsel %vm9040, %v8998, %v9015
        %v9042 = vpack.c.bf16 %v9021, %v9021
        %v9043 = vpack.c.bf16 %v9026, %v9026
        %v9044 = vpack.c.bf16 %v9032, %v9032
        %v9045 = vpack.c.bf16 %v9039, %v9039
        %v9046 = vpack.c.bf16 %v9041, %v9041
        %v9047 = vld [vmem:[%s7] sm:$0xf]
        %v9048 = vld [vmem:[%s7 + $0x4] sm:$0xf]
        %v9049 = vld [vmem:[%s7 + $0x8] sm:$0xf]
        %v9050 = vld [vmem:[%s7 + $0xc] sm:$0xf]
        %v9051 = vld [vmem:[%s7 + $0x10] sm:$0xf]
        %v9052 = vld [vmem:[%s7 + $0x14] sm:$0xf]
        %v9053 = vld [vmem:[%s7 + $0x18] sm:$0xf]
        %v9054 = vld [vmem:[%s7 + $0x1c] sm:$0xf]
        %v9055 = vld [vmem:[%s7 + $0x20] sm:$0xf]
        %v9056 = vld [vmem:[%s7 + $0x24] sm:$0xf]
        %v9057 = vld [vmem:[%s7 + $0x28] sm:$0xf]
        %v9058 = vld [vmem:[%s7 + $0x2c] sm:$0xf]
        %v9059 = vld [vmem:[%s7 + $0x30] sm:$0xf]
        %v9060 = vld [vmem:[%s7 + $0x34] sm:$0xf]
        %v9061 = vld [vmem:[%s7 + $0x38] sm:$0xf]
        %v9062 = vld [vmem:[%s7 + $0x3c] sm:$0xf]
        %v9063 = vld [vmem:[%s7 + $0x40] sm:$0xf]
        %v9064 = vld [vmem:[%s7 + $0x44] sm:$0xf]
        %v9065 = vld [vmem:[%s7 + $0x48] sm:$0xf]
        %v9066 = vld [vmem:[%s7 + $0x4c] sm:$0xf]
        %v9067 = vld [vmem:[%s7 + $0x50] sm:$0xf]
        %v9068 = vld [vmem:[%s7 + $0x54] sm:$0xf]
        %v9069 = vld [vmem:[%s7 + $0x58] sm:$0xf]
        %v9070 = vld [vmem:[%s7 + $0x5c] sm:$0xf]
        %v9071 = vld [vmem:[%s7 + $0x60] sm:$0xf]
        %v9072 = vld [vmem:[%s7 + $0x64] sm:$0xf]
        %v9073 = vld [vmem:[%s7 + $0x68] sm:$0xf]
        %v9074 = vld [vmem:[%s7 + $0x6c] sm:$0xf]
        %v9075 = vld [vmem:[%s7 + $0x70] sm:$0xf]
        %v9076 = vld [vmem:[%s7 + $0x74] sm:$0xf]
        %v9077 = vld [vmem:[%s7 + $0x78] sm:$0xf]
        %v9078 = vld [vmem:[%s7 + $0x7c] sm:$0xf]
        %v9079 = vld [vmem:[%s7 + $0x80] sm:$0xf]
        %v9080 = vld [vmem:[%s7 + $0x84] sm:$0xf]
        %v9081 = vld [vmem:[%s7 + $0x88] sm:$0xf]
        %v9082 = vld [vmem:[%s7 + $0x8c] sm:$0xf]
        %v9083 = vld [vmem:[%s7 + $0x90] sm:$0xf]
        %v9084 = vld [vmem:[%s7 + $0x94] sm:$0xf]
        %v9085 = vld [vmem:[%s7 + $0x98] sm:$0xf]
        %v9086 = vld [vmem:[%s7 + $0x9c] sm:$0xf]
        %v9087 = vld [vmem:[%s7 + $0xa0] sm:$0xf]
        %v9088 = vld [vmem:[%s7 + $0xa4] sm:$0xf]
        %v9089 = vld [vmem:[%s7 + $0xa8] sm:$0xf]
        %v9090 = vld [vmem:[%s7 + $0xac] sm:$0xf]
        %v9091 = vld [vmem:[%s7 + $0xb0] sm:$0xf]
        %v9092 = vld [vmem:[%s7 + $0xb4] sm:$0xf]
        %v9093 = vld [vmem:[%s7 + $0xb8] sm:$0xf]
        %v9094 = vld [vmem:[%s7 + $0xbc] sm:$0xf]
        %v9095 = vld [vmem:[%s7 + $0xc0] sm:$0xf]
        %v9096 = vld [vmem:[%s7 + $0xc4] sm:$0xf]
        %v9097 = vld [vmem:[%s7 + $0xc8] sm:$0xf]
        %v9098 = vld [vmem:[%s7 + $0xcc] sm:$0xf]
        %v9099 = vld [vmem:[%s7 + $0xd0] sm:$0xf]
        %v9100 = vld [vmem:[%s7 + $0xd4] sm:$0xf]
        %v9101 = vld [vmem:[%s7 + $0xd8] sm:$0xf]
        %v9102 = vld [vmem:[%s7 + $0xdc] sm:$0xf]
        %v9103 = vld [vmem:[%s7 + $0xe0] sm:$0xf]
        %v9104 = vld [vmem:[%s7 + $0xe4] sm:$0xf]
        %v9105 = vld [vmem:[%s7 + $0xe8] sm:$0xf]
        %v9106 = vld [vmem:[%s7 + $0xec] sm:$0xf]
        %v9107 = vld [vmem:[%s7 + $0xf0] sm:$0xf]
        %v9108 = vld [vmem:[%s7 + $0xf4] sm:$0xf]
        %v9109 = vld [vmem:[%s7 + $0xf8] sm:$0xf]
        %v9110 = vld [vmem:[%s7 + $0xfc] sm:$0xf]
        %v9111 = vld [vmem:[%s7 + $0x100] sm:$0xf]
        %v9112 = vld [vmem:[%s7 + $0x104] sm:$0xf]
        %v9113 = vld [vmem:[%s7 + $0x108] sm:$0xf]
        %v9114 = vld [vmem:[%s7 + $0x10c] sm:$0xf]
        %v9115 = vld [vmem:[%s7 + $0x110] sm:$0xf]
        %v9116 = vld [vmem:[%s7 + $0x114] sm:$0xf]
        %v9117 = vld [vmem:[%s7 + $0x118] sm:$0xf]
        %v9118 = vld [vmem:[%s7 + $0x11c] sm:$0xf]
        %v9119 = vld [vmem:[%s8] sm:$0x1]
        %v9121 = vlaneseq
        %v9122 = vshrl.u32 %v9121, 7
        %v9123 = vsub.s32 0, %v9122
        %v9124 = vrot.slane %v9119, %v9123
        %v9198 = vunpack.c.l.b16 %v9047
        %v9199 = vunpack.c.l.b16 %v9048
        %v9200 = vunpack.c.l.b16 %v9049
        %v9201 = vunpack.c.l.b16 %v9050
        %v9202 = vunpack.c.l.b16 %v9051
        %v9203 = vunpack.c.l.b16 %v9052
        %v9204 = vunpack.c.l.b16 %v9053
        %v9205 = vunpack.c.l.b16 %v9054
        %v9206 = vunpack.c.l.b16 %v9055
        %v9207 = vunpack.c.l.b16 %v9056
        %v9208 = vunpack.c.l.b16 %v9057
        %v9209 = vunpack.c.l.b16 %v9058
        %v9210 = vunpack.c.l.b16 %v9059
        %v9211 = vunpack.c.l.b16 %v9060
        %v9212 = vunpack.c.l.b16 %v9061
        %v9213 = vunpack.c.l.b16 %v9062
        %v9214 = vunpack.c.l.b16 %v9063
        %v9215 = vunpack.c.l.b16 %v9064
        %v9216 = vunpack.c.l.b16 %v9065
        %v9217 = vunpack.c.l.b16 %v9066
        %v9218 = vunpack.c.l.b16 %v9067
        %v9219 = vunpack.c.l.b16 %v9068
        %v9220 = vunpack.c.l.b16 %v9069
        %v9221 = vunpack.c.l.b16 %v9070
        %v9222 = vunpack.c.l.b16 %v9071
        %v9223 = vunpack.c.l.b16 %v9072
        %v9224 = vunpack.c.l.b16 %v9073
        %v9225 = vunpack.c.l.b16 %v9074
        %v9226 = vunpack.c.l.b16 %v9075
        %v9227 = vunpack.c.l.b16 %v9076
        %v9228 = vunpack.c.l.b16 %v9077
        %v9229 = vunpack.c.l.b16 %v9078
        %v9230 = vunpack.c.l.b16 %v9079
        %v9231 = vunpack.c.l.b16 %v9080
        %v9232 = vunpack.c.l.b16 %v9081
        %v9233 = vunpack.c.l.b16 %v9082
        %v9234 = vunpack.c.l.b16 %v9083
        %v9235 = vunpack.c.l.b16 %v9084
        %v9236 = vunpack.c.l.b16 %v9085
        %v9237 = vunpack.c.l.b16 %v9086
        %v9238 = vunpack.c.l.b16 %v9087
        %v9239 = vunpack.c.l.b16 %v9088
        %v9240 = vunpack.c.l.b16 %v9089
        %v9241 = vunpack.c.l.b16 %v9090
        %v9242 = vunpack.c.l.b16 %v9091
        %v9243 = vunpack.c.l.b16 %v9092
        %v9244 = vunpack.c.l.b16 %v9093
        %v9245 = vunpack.c.l.b16 %v9094
        %v9246 = vunpack.c.l.b16 %v9095
        %v9247 = vunpack.c.l.b16 %v9096
        %v9248 = vunpack.c.l.b16 %v9097
        %v9249 = vunpack.c.l.b16 %v9098
        %v9250 = vunpack.c.l.b16 %v9099
        %v9251 = vunpack.c.l.b16 %v9100
        %v9252 = vunpack.c.l.b16 %v9101
        %v9253 = vunpack.c.l.b16 %v9102
        %v9254 = vunpack.c.l.b16 %v9103
        %v9255 = vunpack.c.l.b16 %v9104
        %v9256 = vunpack.c.l.b16 %v9105
        %v9257 = vunpack.c.l.b16 %v9106
        %v9258 = vunpack.c.l.b16 %v9107
        %v9259 = vunpack.c.l.b16 %v9108
        %v9260 = vunpack.c.l.b16 %v9109
        %v9261 = vunpack.c.l.b16 %v9110
        %v9262 = vunpack.c.l.b16 %v9111
        %v9263 = vunpack.c.l.b16 %v9112
        %v9264 = vunpack.c.l.b16 %v9113
        %v9265 = vunpack.c.l.b16 %v9114
        %v9266 = vunpack.c.l.b16 %v9115
        %v9267 = vunpack.c.l.b16 %v9116
        %v9268 = vunpack.c.l.b16 %v9117
        %v9269 = vunpack.c.l.b16 %v9118
        %v9270 = vpack.c.b16 %v9199, %v9198
        %v9271 = vpack.c.b16 %v9201, %v9200
        %v9272 = vpack.c.b16 %v9203, %v9202
        %v9273 = vpack.c.b16 %v9205, %v9204
        %v9274 = vpack.c.b16 %v9207, %v9206
        %v9275 = vpack.c.b16 %v9209, %v9208
        %v9276 = vpack.c.b16 %v9211, %v9210
        %v9277 = vpack.c.b16 %v9213, %v9212
        %v9278 = vpack.c.b16 %v9215, %v9214
        %v9279 = vpack.c.b16 %v9217, %v9216
        %v9280 = vpack.c.b16 %v9219, %v9218
        %v9281 = vpack.c.b16 %v9221, %v9220
        %v9282 = vpack.c.b16 %v9223, %v9222
        %v9283 = vpack.c.b16 %v9225, %v9224
        %v9284 = vpack.c.b16 %v9227, %v9226
        %v9285 = vpack.c.b16 %v9229, %v9228
        %v9286 = vpack.c.b16 %v9231, %v9230
        %v9287 = vpack.c.b16 %v9233, %v9232
        %v9288 = vpack.c.b16 %v9235, %v9234
        %v9289 = vpack.c.b16 %v9237, %v9236
        %v9290 = vpack.c.b16 %v9239, %v9238
        %v9291 = vpack.c.b16 %v9241, %v9240
        %v9292 = vpack.c.b16 %v9243, %v9242
        %v9293 = vpack.c.b16 %v9245, %v9244
        %v9294 = vpack.c.b16 %v9247, %v9246
        %v9295 = vpack.c.b16 %v9249, %v9248
        %v9296 = vpack.c.b16 %v9251, %v9250
        %v9297 = vpack.c.b16 %v9253, %v9252
        %v9298 = vpack.c.b16 %v9255, %v9254
        %v9299 = vpack.c.b16 %v9257, %v9256
        %v9300 = vpack.c.b16 %v9259, %v9258
        %v9301 = vpack.c.b16 %v9261, %v9260
        %v9302 = vpack.c.b16 %v9263, %v9262
        %v9303 = vpack.c.b16 %v9265, %v9264
        %v9304 = vpack.c.b16 %v9267, %v9266
        %v9305 = vpack.c.b16 %v9269, %v9268
        %vm9342 = vcmask 523264
        %v9344 = vsel %vm9342, %v9046, 0
        %9346 = vmatprep.subr.bf16.mxu0 0
        %9347 = vmatpush1.bf16.msra.mxu0 %v9270
        %9348 = vmatprep.subr.bf16.mxu0 0
        %9349 = vmatpush1.bf16.msra.mxu0 %v9271
        %9350 = vmatprep.subr.bf16.mxu0 0
        %9351 = vmatpush1.bf16.msra.mxu0 %v9272
        %9352 = vmatprep.subr.bf16.mxu0 0
        %9353 = vmatpush1.bf16.msra.mxu0 %v9273
        %9354 = vmatprep.subr.bf16.mxu0 0
        %9355 = vmatpush1.bf16.msra.mxu0 %v9274
        %9356 = vmatprep.subr.bf16.mxu0 0
        %9357 = vmatpush1.bf16.msra.mxu0 %v9275
        %9358 = vmatprep.subr.bf16.mxu0 0
        %9359 = vmatpush1.bf16.msra.mxu0 %v9276
        %9360 = vmatprep.subr.bf16.mxu0 0
        %9361 = vmatpush1.bf16.msra.mxu0 %v9277
        %9362 = vmatprep.subr.bf16.mxu0 0
        %9363 = vmatpush1.bf16.msra.mxu0 %v9278
        %9364 = vmatprep.subr.bf16.mxu0 0
        %9365 = vmatpush1.bf16.msra.mxu0 %v9279
        %9366 = vmatprep.subr.bf16.mxu0 0
        %9367 = vmatpush1.bf16.msra.mxu0 %v9280
        %9368 = vmatprep.subr.bf16.mxu0 0
        %9369 = vmatpush1.bf16.msra.mxu0 %v9281
        %9370 = vmatprep.subr.bf16.mxu0 0
        %9371 = vmatpush1.bf16.msra.mxu0 %v9282
        %9372 = vmatprep.subr.bf16.mxu0 0
        %9373 = vmatpush1.bf16.msra.mxu0 %v9283
        %9374 = vmatprep.subr.bf16.mxu0 0
        %9375 = vmatpush1.bf16.msra.mxu0 %v9284
        %9376 = vmatprep.subr.bf16.mxu0 0
        %9377 = vmatpush1.bf16.msra.mxu0 %v9285
        %9378 = vmatprep.mubr.bf16.mxu0 %v9043
        %9379 = vmatmul.mubr.bf16.gmra.mrb[0].mxu0 %v9042
        %v9380 = vpop.f32.mrb[0].mxu0
        %v9381 = vadd.f32 %v9124, %v9380
        %v9382 = vpop.f32.mrb[0].mxu0
        %v9383 = vpop.f32.mrb[0].mxu0
        %v9384 = vpop.f32.mrb[0].mxu0
        %9385 = vdwg.mxu0
        %9386 = vmatprep.subr.bf16.mxu0 0
        %9387 = vmatpush1.bf16.msra.mxu0 %v9286
        %9388 = vmatprep.subr.bf16.mxu0 0
        %9389 = vmatpush1.bf16.msra.mxu0 %v9287
        %9390 = vmatprep.subr.bf16.mxu0 0
        %9391 = vmatpush1.bf16.msra.mxu0 %v9288
        %9392 = vmatprep.subr.bf16.mxu0 0
        %9393 = vmatpush1.bf16.msra.mxu0 %v9289
        %9394 = vmatprep.subr.bf16.mxu0 0
        %9395 = vmatpush1.bf16.msra.mxu0 %v9290
        %9396 = vmatprep.subr.bf16.mxu0 0
        %9397 = vmatpush1.bf16.msra.mxu0 %v9291
        %9398 = vmatprep.subr.bf16.mxu0 0
        %9399 = vmatpush1.bf16.msra.mxu0 %v9292
        %9400 = vmatprep.subr.bf16.mxu0 0
        %9401 = vmatpush1.bf16.msra.mxu0 %v9293
        %9402 = vmatprep.subr.bf16.mxu0 0
        %9403 = vmatpush1.bf16.msra.mxu0 %v9294
        %9404 = vmatprep.subr.bf16.mxu0 0
        %9405 = vmatpush1.bf16.msra.mxu0 %v9295
        %9406 = vmatprep.subr.bf16.mxu0 0
        %9407 = vmatpush1.bf16.msra.mxu0 %v9296
        %9408 = vmatprep.subr.bf16.mxu0 0
        %9409 = vmatpush1.bf16.msra.mxu0 %v9297
        %9410 = vmatprep.subr.bf16.mxu0 0
        %9411 = vmatpush1.bf16.msra.mxu0 %v9298
        %9412 = vmatprep.subr.bf16.mxu0 0
        %9413 = vmatpush1.bf16.msra.mxu0 %v9299
        %9414 = vmatprep.subr.bf16.mxu0 0
        %9415 = vmatpush1.bf16.msra.mxu0 %v9300
        %9416 = vmatprep.subr.bf16.mxu0 0
        %9417 = vmatpush1.bf16.msra.mxu0 %v9301
        %9418 = vmatprep.mubr.bf16.mxu0 %v9045
        %9419 = vmatmul.mubr.bf16.gmra.mrb[0].mxu0 %v9044
        %v9420 = vpop.f32.mrb[0].mxu0
        %v9421 = vadd.f32 %v9381, %v9420
        %v9422 = vpop.f32.mrb[0].mxu0
        %v9423 = vpop.f32.mrb[0].mxu0
        %v9424 = vpop.f32.mrb[0].mxu0
        %9425 = vdwg.mxu0
        %9426 = vmatprep.subr.bf16.mxu0 0
        %9427 = vmatpush1.bf16.msra.mxu0 %v9302
        %9428 = vmatprep.subr.bf16.mxu0 0
        %9429 = vmatpush1.bf16.msra.mxu0 %v9303
        %9430 = vmatprep.subr.bf16.mxu0 0
        %9431 = vmatpush1.bf16.msra.mxu0 %v9304
        %9432 = vmatprep.subr.bf16.mxu0 0
        %9433 = vmatpush1.bf16.msra.mxu0 %v9305
        %9434 = vmatprep.subr.bf16.mxu0 0
        %9435 = vmatpush1.bf16.msra.mxu0 0
        %9436 = vmatprep.subr.bf16.mxu0 0
        %9437 = vmatpush1.bf16.msra.mxu0 0
        %9438 = vmatprep.subr.bf16.mxu0 0
        %9439 = vmatpush1.bf16.msra.mxu0 0
        %9440 = vmatprep.subr.bf16.mxu0 0
        %9441 = vmatpush1.bf16.msra.mxu0 0
        %9442 = vmatprep.subr.bf16.mxu0 0
        %9443 = vmatpush1.bf16.msra.mxu0 0
        %9444 = vmatprep.subr.bf16.mxu0 0
        %9445 = vmatpush1.bf16.msra.mxu0 0
        %9446 = vmatprep.subr.bf16.mxu0 0
        %9447 = vmatpush1.bf16.msra.mxu0 0
        %9448 = vmatprep.subr.bf16.mxu0 0
        %9449 = vmatpush1.bf16.msra.mxu0 0
        %9450 = vmatprep.subr.bf16.mxu0 0
        %9451 = vmatpush1.bf16.msra.mxu0 0
        %9452 = vmatprep.subr.bf16.mxu0 0
        %9453 = vmatpush1.bf16.msra.mxu0 0
        %9454 = vmatprep.subr.bf16.mxu0 0
        %9455 = vmatpush1.bf16.msra.mxu0 0
        %9456 = vmatprep.subr.bf16.mxu0 0
        %9457 = vmatpush1.bf16.msra.mxu0 0
        %9458 = vmatprep.mubr.bf16.mxu0 0
        %9459 = vmatmul.mubr.bf16.gmra.mrb[0].mxu0 %v9344
        %v9460 = vpop.f32.mrb[0].mxu0
        %v9461 = vadd.f32 %v9421, %v9460
        %v9462 = vpop.f32.mrb[0].mxu0
        %v9463 = vpop.f32.mrb[0].mxu0
        %v9464 = vpop.f32.mrb[0].mxu0
        %9465 = vdwg.mxu0
        %v9466 = vtanh.pop %v9461
        %v9467 = vpack.c.bf16 %v9466, %v9466
        %v9468 = vld [vmem:[%s9] sm:$0xf]
        %v9469 = vld [vmem:[%s9 + $0x4] sm:$0xf]
        %v9470 = vld [vmem:[%s9 + $0x8] sm:$0xf]
        %v9471 = vld [vmem:[%s9 + $0xc] sm:$0xf]
        %v9472 = vld [vmem:[%s9 + $0x10] sm:$0xf]
        %v9473 = vld [vmem:[%s9 + $0x14] sm:$0xf]
        %v9474 = vld [vmem:[%s9 + $0x18] sm:$0xf]
        %v9475 = vld [vmem:[%s9 + $0x1c] sm:$0xf]
        %v9476 = vld [vmem:[%s9 + $0x20] sm:$0xf]
        %v9477 = vld [vmem:[%s9 + $0x24] sm:$0xf]
        %v9478 = vld [vmem:[%s9 + $0x28] sm:$0xf]
        %v9479 = vld [vmem:[%s9 + $0x2c] sm:$0xf]
        %v9480 = vld [vmem:[%s9 + $0x30] sm:$0xf]
        %v9481 = vld [vmem:[%s9 + $0x34] sm:$0xf]
        %v9482 = vld [vmem:[%s9 + $0x38] sm:$0xf]
        %v9483 = vld [vmem:[%s10] sm:$0x1]
        %v9485 = vlaneseq
        %v9486 = vshrl.u32 %v9485, 7
        %v9487 = vsub.s32 0, %v9486
        %v9488 = vrot.slane %v9483, %v9487
        %v9505 = vunpack.c.l.b16 %v9468
        %v9506 = vunpack.c.l.b16 %v9469
        %v9507 = vunpack.c.l.b16 %v9470
        %v9508 = vunpack.c.l.b16 %v9471
        %v9509 = vunpack.c.l.b16 %v9472
        %v9510 = vunpack.c.l.b16 %v9473
        %v9511 = vunpack.c.l.b16 %v9474
        %v9512 = vunpack.c.l.b16 %v9475
        %v9513 = vunpack.c.l.b16 %v9476
        %v9514 = vunpack.c.l.b16 %v9477
        %v9515 = vunpack.c.l.b16 %v9478
        %v9516 = vunpack.c.l.b16 %v9479
        %v9517 = vunpack.c.l.b16 %v9480
        %v9518 = vunpack.c.l.b16 %v9481
        %v9519 = vunpack.c.l.b16 %v9482
        %v9520 = vpack.c.b16 %v9506, %v9505
        %v9521 = vpack.c.b16 %v9508, %v9507
        %v9522 = vpack.c.b16 %v9510, %v9509
        %v9523 = vpack.c.b16 %v9512, %v9511
        %v9524 = vpack.c.b16 %v9514, %v9513
        %v9525 = vpack.c.b16 %v9516, %v9515
        %v9526 = vpack.c.b16 %v9518, %v9517
        %v9527 = vpack.c.b16 %v9519, %v9519
        %v9536 = vsel %vm9038, %v9467, 0
        %v9539 = vsel %vm3858, %v9527, 0
        %9541 = vmatprep.subr.bf16.mxu0 0
        %9542 = vmatpush1.bf16.msra.mxu0 %v9520
        %9543 = vmatprep.subr.bf16.mxu0 0
        %9544 = vmatpush1.bf16.msra.mxu0 %v9521
        %9545 = vmatprep.subr.bf16.mxu0 0
        %9546 = vmatpush1.bf16.msra.mxu0 %v9522
        %9547 = vmatprep.subr.bf16.mxu0 0
        %9548 = vmatpush1.bf16.msra.mxu0 %v9523
        %9549 = vmatprep.subr.bf16.mxu0 0
        %9550 = vmatpush1.bf16.msra.mxu0 %v9524
        %9551 = vmatprep.subr.bf16.mxu0 0
        %9552 = vmatpush1.bf16.msra.mxu0 %v9525
        %9553 = vmatprep.subr.bf16.mxu0 0
        %9554 = vmatpush1.bf16.msra.mxu0 %v9526
        %9555 = vmatprep.subr.bf16.mxu0 0
        %9556 = vmatpush1.bf16.msra.mxu0 %v9539
        %9557 = vmatprep.subr.bf16.mxu0 0
        %9558 = vmatpush1.bf16.msra.mxu0 0
        %9559 = vmatprep.subr.bf16.mxu0 0
        %9560 = vmatpush1.bf16.msra.mxu0 0
        %9561 = vmatprep.subr.bf16.mxu0 0
        %9562 = vmatpush1.bf16.msra.mxu0 0
        %9563 = vmatprep.subr.bf16.mxu0 0
        %9564 = vmatpush1.bf16.msra.mxu0 0
        %9565 = vmatprep.subr.bf16.mxu0 0
        %9566 = vmatpush1.bf16.msra.mxu0 0
        %9567 = vmatprep.subr.bf16.mxu0 0
        %9568 = vmatpush1.bf16.msra.mxu0 0
        %9569 = vmatprep.subr.bf16.mxu0 0
        %9570 = vmatpush1.bf16.msra.mxu0 0
        %9571 = vmatprep.subr.bf16.mxu0 0
        %9572 = vmatpush1.bf16.msra.mxu0 0
        %9573 = vmatprep.mubr.bf16.mxu0 0
        %9574 = vmatmul.mubr.bf16.gmra.mrb[0].mxu0 %v9536
        %v9575 = vpop.f32.mrb[0].mxu0
        %v9576 = vadd.f32 %v9488, %v9575
        %v9577 = vpop.f32.mrb[0].mxu0
        %v9578 = vpop.f32.mrb[0].mxu0
        %v9579 = vpop.f32.mrb[0].mxu0
        %9580 = vdwg.mxu0
        %v9581 = vtanh.pop %v9576
        %v9582 = vpack.c.bf16 %v9581, %v9581
        %v9583 = vld [vmem:[%s11] sm:$0xf]
        %v9584 = vld [vmem:[%s11 + $0x4] sm:$0xf]
        %v9585 = vld [vmem:[%s11 + $0x8] sm:$0xf]
        %v9586 = vld [vmem:[%s11 + $0xc] sm:$0xf]
        %v9587 = vld [vmem:[%s11 + $0x10] sm:$0xf]
        %v9588 = vld [vmem:[%s11 + $0x14] sm:$0xf]
        %v9589 = vld [vmem:[%s11 + $0x18] sm:$0xf]
        %v9590 = vld [vmem:[%s11 + $0x1c] sm:$0xf]
        %v9591 = vld [vmem:[%s11 + $0x20] sm:$0xf]
        %v9592 = vld [vmem:[%s11 + $0x24] sm:$0xf]
        %v9593 = vld [vmem:[%s11 + $0x28] sm:$0x3]
        %v9594 = vld [vmem:[%s12] sm:$0x1]
        %v9596 = vlaneseq
        %v9597 = vshrl.u32 %v9596, 7
        %v9598 = vsub.s32 0, %v9597
        %v9599 = vrot.slane %v9594, %v9598
        %v9612 = vunpack.c.l.b16 %v9583
        %v9613 = vunpack.c.l.b16 %v9584
        %v9614 = vunpack.c.l.b16 %v9585
        %v9615 = vunpack.c.l.b16 %v9586
        %v9616 = vunpack.c.l.b16 %v9587
        %v9617 = vunpack.c.l.b16 %v9588
        %v9618 = vunpack.c.l.b16 %v9589
        %v9619 = vunpack.c.l.b16 %v9590
        %v9620 = vunpack.c.l.b16 %v9591
        %v9621 = vunpack.c.l.b16 %v9592
        %v9622 = vunpack.c.l.b16 %v9593
        %v9623 = vpack.c.b16 %v9613, %v9612
        %v9624 = vpack.c.b16 %v9615, %v9614
        %v9625 = vpack.c.b16 %v9617, %v9616
        %v9626 = vpack.c.b16 %v9619, %v9618
        %v9627 = vpack.c.b16 %v9621, %v9620
        %v9628 = vpack.c.b16 %v9622, %v9622
        %v9635 = vsel %vm9036, %v9582, 0
        %vm9637 = vcmask 1041408
        %v9639 = vsel %vm9637, %v9628, 0
        %9641 = vmatprep.subr.bf16.mxu0 0
        %9642 = vmatpush1.bf16.msra.mxu0 %v9623
        %9643 = vmatprep.subr.bf16.mxu0 0
        %9644 = vmatpush1.bf16.msra.mxu0 %v9624
        %9645 = vmatprep.subr.bf16.mxu0 0
        %9646 = vmatpush1.bf16.msra.mxu0 %v9625
        %9647 = vmatprep.subr.bf16.mxu0 0
        %9648 = vmatpush1.bf16.msra.mxu0 %v9626
        %9649 = vmatprep.subr.bf16.mxu0 0
        %9650 = vmatpush1.bf16.msra.mxu0 %v9627
        %9651 = vmatprep.subr.bf16.mxu0 0
        %9652 = vmatpush1.bf16.msra.mxu0 %v9639
        %9653 = vmatprep.subr.bf16.mxu0 0
        %9654 = vmatpush1.bf16.msra.mxu0 0
        %9655 = vmatprep.subr.bf16.mxu0 0
        %9656 = vmatpush1.bf16.msra.mxu0 0
        %9657 = vmatprep.subr.bf16.mxu0 0
        %9658 = vmatpush1.bf16.msra.mxu0 0
        %9659 = vmatprep.subr.bf16.mxu0 0
        %9660 = vmatpush1.bf16.msra.mxu0 0
        %9661 = vmatprep.subr.bf16.mxu0 0
        %9662 = vmatpush1.bf16.msra.mxu0 0
        %9663 = vmatprep.subr.bf16.mxu0 0
        %9664 = vmatpush1.bf16.msra.mxu0 0
        %9665 = vmatprep.subr.bf16.mxu0 0
        %9666 = vmatpush1.bf16.msra.mxu0 0
        %9667 = vmatprep.subr.bf16.mxu0 0
        %9668 = vmatpush1.bf16.msra.mxu0 0
        %9669 = vmatprep.subr.bf16.mxu0 0
        %9670 = vmatpush1.bf16.msra.mxu0 0
        %9671 = vmatprep.subr.bf16.mxu0 0
        %9672 = vmatpush1.bf16.msra.mxu0 0
        %9673 = vmatprep.mubr.bf16.mxu0 0
        %9674 = vmatmul.mubr.bf16.gmra.mrb[0].mxu0 %v9635
        %v9675 = vpop.f32.mrb[0].mxu0
        %v9676 = vadd.f32 %v9599, %v9675
        %v9677 = vpop.f32.mrb[0].mxu0
        %v9678 = vpop.f32.mrb[0].mxu0
        %v9679 = vpop.f32.mrb[0].mxu0
        %9680 = vdwg.mxu0
        %9681 = vst [vmem:[%s436] sm:$0xff] %v9676
        %s9682 = sand.u32 %s313, 1
        %s9683 = scalar_lea.sflag [#allocation3], %s9682
        %s9684 = sand.u32 %s313, 1
        %s9685 = smul.addr %s9684, 8
        %s9686 = scalar_lea.vmem [#allocation2], %s9685
        // Predicated region
        $region73: #{lenet_forward.1} parent=71 // pred_check
          %p9687 = pneg %p323
        $region74: #{lenet_forward.1} parent=71 // pred_check_branch
          %9689 = sbr.rel (%p9687) target = $region76
        $region75: #{lenet_forward.1} parent=71 // pred_region
          %s9691 = ssub.s32 128, 128
          %9692 = vsyncadd %s9683, %s9691
          %s9693 = smul.addr %s27, 128
          %s9694 = scalar_lea.hbm %s13, %s9693
          %s9696 = sshll.u32 %s9686, 4
          %s9697 = int_to_ptr.vmem [resolvable:$true] %s9696
          %9699 = dma.vmem_to_hbm [thread:$0]  %s9697, 128, %s9694, %s9683
        $region76: #{lenet_forward.1} parent=71 // pred_fallthru
          _
      $region72: #{lenet_forward.1} parent=5 // pred_fallthru
        _
      %p9700 = scmp.le.s32.totalorder 2, %s22
      // Predicated region
      $region77: #{lenet_forward.1} parent=5 // pred_check
        %p9701 = pneg %p9700
      $region78: #{lenet_forward.1} parent=5 // pred_check_branch
        %9703 = sbr.rel (%p9701) target = $region80
      $region79: #{lenet_forward.1} parent=5 // pred_region
        %s9704 = ssub.s32 %s22, 2
        // Predicated region
        $region81: #{lenet_forward.1} parent=79 // pred_check
          %p9705 = pneg %p329
        $region82: #{lenet_forward.1} parent=79 // pred_check_branch
          %9707 = sbr.rel (%p9705) target = $region84
        $region83: #{lenet_forward.1} parent=79 // pred_region
          %s9708 = sand.u32 %s314, 1
          %s9709 = scalar_lea.sflag [#allocation3], %s9708
          %s9710 = sand.u32 %s314, 1
          %s9711 = smul.addr %s9710, 8
          %s9712 = scalar_lea.vmem [#allocation2], %s9711
          %9713 = dma.done %s9709, 128
        $region84: #{lenet_forward.1} parent=79 // pred_fallthru
          _
      $region80: #{lenet_forward.1} parent=5 // pred_fallthru
        _
    $region6: #{lenet_forward.1} parent=1 // loop_footer
      %s26 = sadd.s32 1, %s22
    $region7: #{lenet_forward.1} parent=1 // loop_footer_branch
      %21 = sbr.rel target = $region3
    $region8: #{lenet_forward.1} parent=1 // loop_exit
      _
    %9714 = vsyncpa [#allocation3], 1
    %s9715 = scalar_lea.sflag [#allocation3], 1
    %9716 = vsyncpa %s9715, 1

</llo_original>
